<compile_context>
chip_gen: v6e
topology: v6e:2x2x1
jax: 0.10.0
libtpu: 0.0.40
codegen_flags: <defaults>
</compile_context>

<pallas_src>
import functools

import numpy as np
import jax
import jax.numpy as jnp
from jax import lax
from jax.experimental import pallas as pl
from jax.experimental.pallas import tpu as pltpu


# ---------------------------------------------------------------------------
# In-kernel helpers (trace-time Python, fully unrolled inside the kernel body)
# ---------------------------------------------------------------------------
def _col_masks(H, W):
    """(1, H*W) f32 masks: output columns with a valid left / right neighbour
    (used for the ox = -1 / ox = +1 conv taps)."""
    S = H * W
    sidx = lax.broadcasted_iota(jnp.int32, (1, S), 1)
    if (W & (W - 1)) == 0:                       # power of two -> cheap AND
        col = jnp.bitwise_and(sidx, W - 1)
    else:
        col = lax.rem(sidx, W)
    m_left = (col >= 1).astype(jnp.float32)      # ox = -1 valid
    m_right = (col < (W - 1)).astype(jnp.float32)  # ox = +1 valid
    return m_left, m_right


def _conv3x3_bn_relu(x, w2d, bias, H, W, masks):
    """Fused Conv2d(3x3, pad=1, bias=False) + folded BatchNorm(eval) + ReLU.

    Layout: channels on sublanes, flattened spatial (row-major y*W+x) on lanes.
      x:    (Cin, H*W)    float32
      w2d:  (Cout, 9*Cin) bfloat16   (BN scale folded in; tap-major, cin-minor)
      bias: (Cout, 1)     float32
    returns (Cout, H*W) float32.
    """
    C, S = x.shape
    m_left, m_right = masks
    pad = W + 1                                   # covers the largest tap shift
    z = jnp.zeros((C, pad), x.dtype)
    xe = jnp.concatenate([z, x, z], axis=1)       # (C, S + 2*(W+1)) zero-extended

    # im2col via flat-spatial shifts: tap (oy, ox) reads x[:, s + oy*W + ox]
    # (zero outside the image).  The zero extension handles all row overflow;
    # the column masks handle wrap-around at the left/right image edges.
    pieces = []
    for oy in (-1, 0, 1):
        for ox in (-1, 0, 1):
            off = pad + oy * W + ox
            t = xe[:, off:off + S]
            if ox == -1:
                t = t * m_left
            elif ox == 1:
                t = t * m_right
            pieces.append(t)
    patches = jnp.concatenate(pieces, axis=0)     # (9*Cin, S)
    acc = jnp.dot(w2d, patches.astype(jnp.bfloat16),
                  preferred_element_type=jnp.float32)   # MXU: (Cout, S), lane-dense
    return jnp.maximum(acc + bias, 0.0)           # folded-BN bias + ReLU


def _unet_decoder_kernel(*refs, cfgs, n_feat, n_up):
    nblk = len(cfgs)
    feat_refs = refs[:n_feat]                     # head + skips, (1, C, S) each
    up_refs = refs[n_feat:n_feat + n_up]          # 0/1 upsample matrices (bf16)
    wb_refs = refs[n_feat + n_up:n_feat + n_up + 4 * nblk]   # (w1,b1,w2,b2)*nblk
    o_ref = refs[-1]                              # (1, Cout_last, S_last)

    x = feat_refs[0][0]                           # head: (C_head, S0) f32
    skip_i, up_i = 1, 0
    for i, (H, W, has_skip, use_up_mat) in enumerate(cfgs):
        S = H * W
        # ---- nearest-neighbour 2x upsample -------------------------------
        if use_up_mat:
            u = up_refs[up_i][...]                # (S_in, S) bf16 0/1 matrix
            up_i += 1
            x = jnp.dot(x.astype(jnp.bfloat16), u,
                        preferred_element_type=jnp.float32)
        else:                                     # 1x1 -> 2x2: lane broadcast
            x = jnp.broadcast_to(x, (x.shape[0], S))
        # ---- skip concat: torch.cat([x, skip], dim=1) --------------------
        if has_skip:
            x = jnp.concatenate([x, feat_refs[skip_i][0]], axis=0)
            skip_i += 1
        # attention1 / attention2 = Identity (attention_type=None)
        masks = _col_masks(H, W)
        w1, b1 = wb_refs[4 * i][...], wb_refs[4 * i + 1][...]
        w2, b2 = wb_refs[4 * i + 2][...], wb_refs[4 * i + 3][...]
        x = _conv3x3_bn_relu(x, w1, b1, H, W, masks)
        x = _conv3x3_bn_relu(x, w2, b2, H, W, masks)
    o_ref[0] = x.astype(o_ref.dtype)              # lane-dense (Cout, H*W) store


# ---------------------------------------------------------------------------
# Parameter construction (matches the module's __init__ channel arithmetic).
# BN (eval) is folded: scale into the conv weight, bias kept separately.
# ---------------------------------------------------------------------------
def _init_conv_bn(key, cin, cout):
    kw, kg, kb, km, kv = jax.random.split(key, 5)
    w = jax.random.normal(kw, (3, 3, cin, cout), jnp.float32) * (
        1.0 / np.sqrt(9.0 * cin))
    gamma = jax.random.uniform(kg, (cout,), minval=0.5, maxval=1.5,
                               dtype=jnp.float32)
    beta = jax.random.normal(kb, (cout,), jnp.float32) * 0.1
    mean = jax.random.normal(km, (cout,), jnp.float32) * 0.1
    var = jax.random.uniform(kv, (cout,), minval=0.5, maxval=1.5,
                             dtype=jnp.float32)
    eps = 1e-5
    scale = gamma / jnp.sqrt(var + eps)
    bias = beta - mean * scale
    w_folded = w * scale[None, None, None, :]          # fold BN scale into conv
    # tap-major / cin-minor 2-D weight for the in-kernel im2col contraction
    w2d = jnp.transpose(w_folded, (3, 0, 1, 2)).reshape(cout, 9 * cin)
    return w2d.astype(jnp.bfloat16), bias.reshape(cout, 1).astype(jnp.float32)


def build_unet_decoder_params(key, encoder_channels, decoder_channels,
                              num_coam_layers=0):
    enc = list(encoder_channels[1:])[::-1]
    head_channels = enc[0]
    in_channels = ([(1 + int(num_coam_layers > 0)) * head_channels]
                   + list(decoder_channels[:-1]))
    skip_channels = list(enc[1:]) + [0]
    for i in range(0, num_coam_layers - 1):
        skip_channels[i] *= 2
    out_channels = list(decoder_channels)

    blocks = []
    for ic, sc, oc in zip(in_channels, skip_channels, out_channels):
        key, k1, k2 = jax.random.split(key, 3)
        blocks.append({"conv1": _init_conv_bn(k1, ic + sc, oc),
                       "conv2": _init_conv_bn(k2, oc, oc)})
    # center=False -> Identity; attention_type=None -> Identity
    return {"blocks": blocks}


# ---------------------------------------------------------------------------
# UnetDecoder forward (single fused pallas_call)
# ---------------------------------------------------------------------------
def unet_decoder_forward(features_nchw, params, return_features=False):
    if return_features:
        # TODO(synk): emitting the per-block decoded features from the fused
        # kernel (extra outputs) is not wired up; only the final map is returned.
        raise NotImplementedError("return_features=True is not supported")

    feats = list(features_nchw)[1:][::-1]         # drop input image, deepest first
    head, skips = feats[0], feats[1:]
    blocks = params["blocks"]
    n_blocks = len(blocks)
    N, c_head, h, w = head.shape

    # center = Identity.  NCHW -> (N, C, H*W): free reshape, channels stay on
    # sublanes and the flattened spatial axis lands on the 128-lane axis.
    feat_arrays = [head.reshape(N, c_head, h * w)]
    feat_specs = [pl.BlockSpec((1, c_head, h * w), lambda n: (n, 0, 0))]

    up_arrays, up_specs, cfgs = [], [], []
    cur_h, cur_w = h, w
    for i in range(n_blocks):
        oh, ow = 2 * cur_h, 2 * cur_w
        s_in, s_out = cur_h * cur_w, oh * ow
        use_up_mat = s_in > 1
        if use_up_mat:
            # nearest-neighbour 2x upsample as a static 0/1 matrix (runs on MXU)
            U = np.zeros((s_in, s_out), np.float32)
            for yy in range(oh):
                for xx in range(ow):
                    U[(yy // 2) * cur_w + (xx // 2), yy * ow + xx] = 1.0
            up_arrays.append(jnp.asarray(U, dtype=jnp.bfloat16))
            up_specs.append(pl.BlockSpec((s_in, s_out), lambda n: (0, 0)))
        has_skip = i < len(skips)
        if has_skip:
            sN, sC, sH, sW = skips[i].shape
            assert (sH, sW) == (oh, ow) and sN == N
            feat_arrays.append(skips[i].reshape(N, sC, s_out))
            feat_specs.append(pl.BlockSpec((1, sC, s_out), lambda n: (n, 0, 0)))
        cfgs.append((oh, ow, has_skip, use_up_mat))
        cur_h, cur_w = oh, ow

    wb_arrays, wb_specs = [], []
    for blk in blocks:
        for w2d, b in (blk["conv1"], blk["conv2"]):
            wb_arrays.append(w2d)
            wb_specs.append(pl.BlockSpec(tuple(w2d.shape), lambda n: (0, 0)))
            wb_arrays.append(b)
            wb_specs.append(pl.BlockSpec(tuple(b.shape), lambda n: (0, 0)))

    c_out = blocks[-1]["conv2"][0].shape[0]
    s_final = cur_h * cur_w

    kernel = functools.partial(_unet_decoder_kernel, cfgs=tuple(cfgs),
                               n_feat=len(feat_arrays), n_up=len(up_arrays))

    out_flat = pl.pallas_call(
        kernel,
        out_shape=jax.ShapeDtypeStruct((N, c_out, s_final), jnp.float32),
        grid=(N,),                                # batch axis: parallel so v7x
        in_specs=feat_specs + up_specs + wb_specs,  # shards it across its 2 TCs
        out_specs=pl.BlockSpec((1, c_out, s_final), lambda n: (n, 0, 0)),
        compiler_params=pltpu.CompilerParams(
            dimension_semantics=("parallel",)),
    )(*feat_arrays, *up_arrays, *wb_arrays)

    return out_flat.reshape(N, c_out, cur_h, cur_w)   # NCHW, free reshape


# ---------------------------------------------------------------------------
if __name__ == "__main__":
    key = jax.random.PRNGKey(0)
    kp, kf = jax.random.split(key)

    encoder_channels = (3, 8, 16, 32, 64, 64)     # encoder channel spec
    decoder_channels = (32, 32, 16, 16, 8)        # n_blocks = 5

    params = build_unet_decoder_params(kp, encoder_channels, decoder_channels)

    # features as produced by an encoder on a 32x32 input (NCHW):
    #   [input_image, f1@16, f2@8, f3@4, f4@2, f5@1]
    shapes = [(2, 3, 32, 32), (2, 8, 16, 16), (2, 16, 8, 8),
              (2, 32, 4, 4), (2, 64, 2, 2), (2, 64, 1, 1)]
    keys = jax.random.split(kf, len(shapes))
    features = [jax.random.normal(k, s, jnp.float32)
                for k, s in zip(keys, shapes)]

    out = unet_decoder_forward(features, params)
    out = jax.block_until_ready(out)
    assert out.shape == (2, 8, 32, 32), out.shape
    assert out.dtype == jnp.float32
    assert bool(jnp.all(out >= 0.0)) and bool(jnp.all(jnp.isfinite(out)))
    print("KERNEL_OK")
</pallas_src>

<mosaic_0001>
module attributes {stable_mosaic.version = 11 : i64} {
  func.func @_unet_decoder_kernel(%arg0: i32, %arg1: memref<1x64x1xf32, #tpu.memory_space<vmem>>, %arg2: memref<1x64x4xf32, #tpu.memory_space<vmem>>, %arg3: memref<1x32x16xf32, #tpu.memory_space<vmem>>, %arg4: memref<1x16x64xf32, #tpu.memory_space<vmem>>, %arg5: memref<1x8x256xf32, #tpu.memory_space<vmem>>, %arg6: memref<4x16xbf16, #tpu.memory_space<vmem>>, %arg7: memref<16x64xbf16, #tpu.memory_space<vmem>>, %arg8: memref<64x256xbf16, #tpu.memory_space<vmem>>, %arg9: memref<256x1024xbf16, #tpu.memory_space<vmem>>, %arg10: memref<32x1152xbf16, #tpu.memory_space<vmem>>, %arg11: memref<32x1xf32, #tpu.memory_space<vmem>>, %arg12: memref<32x288xbf16, #tpu.memory_space<vmem>>, %arg13: memref<32x1xf32, #tpu.memory_space<vmem>>, %arg14: memref<32x576xbf16, #tpu.memory_space<vmem>>, %arg15: memref<32x1xf32, #tpu.memory_space<vmem>>, %arg16: memref<32x288xbf16, #tpu.memory_space<vmem>>, %arg17: memref<32x1xf32, #tpu.memory_space<vmem>>, %arg18: memref<16x432xbf16, #tpu.memory_space<vmem>>, %arg19: memref<16x1xf32, #tpu.memory_space<vmem>>, %arg20: memref<16x144xbf16, #tpu.memory_space<vmem>>, %arg21: memref<16x1xf32, #tpu.memory_space<vmem>>, %arg22: memref<16x216xbf16, #tpu.memory_space<vmem>>, %arg23: memref<16x1xf32, #tpu.memory_space<vmem>>, %arg24: memref<16x144xbf16, #tpu.memory_space<vmem>>, %arg25: memref<16x1xf32, #tpu.memory_space<vmem>>, %arg26: memref<8x144xbf16, #tpu.memory_space<vmem>>, %arg27: memref<8x1xf32, #tpu.memory_space<vmem>>, %arg28: memref<8x72xbf16, #tpu.memory_space<vmem>>, %arg29: memref<8x1xf32, #tpu.memory_space<vmem>>, %arg30: memref<1x8x1024xf32, #tpu.memory_space<vmem>>) attributes {dimension_semantics = [#tpu.dimension_semantics<parallel>], iteration_bounds = array<i64: 2>, scalar_prefetch = 0 : i64, scratch_operands = 0 : i64, tpu.core_type = #tpu.core_type<tc>, window_params = [{transform_indices = @transform_0, window_bounds = array<i64: 1, 64, 1>}, {transform_indices = @transform_1, window_bounds = array<i64: 1, 64, 4>}, {transform_indices = @transform_2, window_bounds = array<i64: 1, 32, 16>}, {transform_indices = @transform_3, window_bounds = array<i64: 1, 16, 64>}, {transform_indices = @transform_4, window_bounds = array<i64: 1, 8, 256>}, {pipeline_mode = #tpu.pipeline_mode<synchronous>, transform_indices = @transform_5, window_bounds = array<i64: 4, 16>}, {pipeline_mode = #tpu.pipeline_mode<synchronous>, transform_indices = @transform_6, window_bounds = array<i64: 16, 64>}, {pipeline_mode = #tpu.pipeline_mode<synchronous>, transform_indices = @transform_7, window_bounds = array<i64: 64, 256>}, {pipeline_mode = #tpu.pipeline_mode<synchronous>, transform_indices = @transform_8, window_bounds = array<i64: 256, 1024>}, {pipeline_mode = #tpu.pipeline_mode<synchronous>, transform_indices = @transform_9, window_bounds = array<i64: 32, 1152>}, {pipeline_mode = #tpu.pipeline_mode<synchronous>, transform_indices = @transform_10, window_bounds = array<i64: 32, 1>}, {pipeline_mode = #tpu.pipeline_mode<synchronous>, transform_indices = @transform_11, window_bounds = array<i64: 32, 288>}, {pipeline_mode = #tpu.pipeline_mode<synchronous>, transform_indices = @transform_12, window_bounds = array<i64: 32, 1>}, {pipeline_mode = #tpu.pipeline_mode<synchronous>, transform_indices = @transform_13, window_bounds = array<i64: 32, 576>}, {pipeline_mode = #tpu.pipeline_mode<synchronous>, transform_indices = @transform_14, window_bounds = array<i64: 32, 1>}, {pipeline_mode = #tpu.pipeline_mode<synchronous>, transform_indices = @transform_15, window_bounds = array<i64: 32, 288>}, {pipeline_mode = #tpu.pipeline_mode<synchronous>, transform_indices = @transform_16, window_bounds = array<i64: 32, 1>}, {pipeline_mode = #tpu.pipeline_mode<synchronous>, transform_indices = @transform_17, window_bounds = array<i64: 16, 432>}, {pipeline_mode = #tpu.pipeline_mode<synchronous>, transform_indices = @transform_18, window_bounds = array<i64: 16, 1>}, {pipeline_mode = #tpu.pipeline_mode<synchronous>, transform_indices = @transform_19, window_bounds = array<i64: 16, 144>}, {pipeline_mode = #tpu.pipeline_mode<synchronous>, transform_indices = @transform_20, window_bounds = array<i64: 16, 1>}, {pipeline_mode = #tpu.pipeline_mode<synchronous>, transform_indices = @transform_21, window_bounds = array<i64: 16, 216>}, {pipeline_mode = #tpu.pipeline_mode<synchronous>, transform_indices = @transform_22, window_bounds = array<i64: 16, 1>}, {pipeline_mode = #tpu.pipeline_mode<synchronous>, transform_indices = @transform_23, window_bounds = array<i64: 16, 144>}, {pipeline_mode = #tpu.pipeline_mode<synchronous>, transform_indices = @transform_24, window_bounds = array<i64: 16, 1>}, {pipeline_mode = #tpu.pipeline_mode<synchronous>, transform_indices = @transform_25, window_bounds = array<i64: 8, 144>}, {pipeline_mode = #tpu.pipeline_mode<synchronous>, transform_indices = @transform_26, window_bounds = array<i64: 8, 1>}, {pipeline_mode = #tpu.pipeline_mode<synchronous>, transform_indices = @transform_27, window_bounds = array<i64: 8, 72>}, {pipeline_mode = #tpu.pipeline_mode<synchronous>, transform_indices = @transform_28, window_bounds = array<i64: 8, 1>}, {transform_indices = @transform_29, window_bounds = array<i64: 1, 8, 1024>}]} {
    %c0 = arith.constant 0 : index
    %c0_0 = arith.constant 0 : index
    %c0_1 = arith.constant 0 : index
    %0 = vector.load %arg1[%c0, %c0_0, %c0_1] : memref<1x64x1xf32, #tpu.memory_space<vmem>>, vector<1x64x1xf32>
    %1 = vector.shape_cast %0 : vector<1x64x1xf32> to vector<64x1xf32>
    %2 = vector.shape_cast %1 : vector<64x1xf32> to vector<64x1xf32>
    %3 = vector.broadcast %2 : vector<64x1xf32> to vector<64x4xf32>
    %c0_2 = arith.constant 0 : index
    %c0_3 = arith.constant 0 : index
    %c0_4 = arith.constant 0 : index
    %4 = vector.load %arg2[%c0_2, %c0_3, %c0_4] : memref<1x64x4xf32, #tpu.memory_space<vmem>>, vector<1x64x4xf32>
    %5 = vector.shape_cast %4 : vector<1x64x4xf32> to vector<64x4xf32>
    %6 = tpu.concatenate %3, %5 in 0 : vector<64x4xf32>, vector<64x4xf32> -> vector<128x4xf32>
    %7 = tpu.iota {dimensions = array<i32: 1>} : vector<1x4xi32>
    %c1_i32 = arith.constant 1 : i32
    %8 = vector.broadcast %c1_i32 : i32 to vector<1x4xi32>
    %9 = arith.andi %7, %8 : vector<1x4xi32>
    %c1_i32_5 = arith.constant 1 : i32
    %10 = vector.broadcast %c1_i32_5 : i32 to vector<1x4xi32>
    %11 = arith.cmpi sge, %9, %10 : vector<1x4xi32>
    %12 = arith.extui %11 : vector<1x4xi1> to vector<1x4xi32>
    %13 = arith.sitofp %12 : vector<1x4xi32> to vector<1x4xf32>
    %c1_i32_6 = arith.constant 1 : i32
    %14 = vector.broadcast %c1_i32_6 : i32 to vector<1x4xi32>
    %15 = arith.cmpi slt, %9, %14 : vector<1x4xi32>
    %16 = arith.extui %15 : vector<1x4xi1> to vector<1x4xi32>
    %17 = arith.sitofp %16 : vector<1x4xi32> to vector<1x4xf32>
    %c0_7 = arith.constant 0 : index
    %c0_8 = arith.constant 0 : index
    %18 = vector.load %arg10[%c0_7, %c0_8] : memref<32x1152xbf16, #tpu.memory_space<vmem>>, vector<32x1152xbf16>
    %c0_9 = arith.constant 0 : index
    %c0_10 = arith.constant 0 : index
    %19 = vector.load %arg11[%c0_9, %c0_10] : memref<32x1xf32, #tpu.memory_space<vmem>>, vector<32x1xf32>
    %c0_11 = arith.constant 0 : index
    %c0_12 = arith.constant 0 : index
    %20 = vector.load %arg12[%c0_11, %c0_12] : memref<32x288xbf16, #tpu.memory_space<vmem>>, vector<32x288xbf16>
    %c0_13 = arith.constant 0 : index
    %c0_14 = arith.constant 0 : index
    %21 = vector.load %arg13[%c0_13, %c0_14] : memref<32x1xf32, #tpu.memory_space<vmem>>, vector<32x1xf32>
    %cst = arith.constant 0.000000e+00 : f32
    %22 = vector.broadcast %cst : f32 to vector<128x3xf32>
    %23 = tpu.concatenate %22, %6, %22 in 1 : vector<128x3xf32>, vector<128x4xf32>, vector<128x3xf32> -> vector<128x10xf32>
    %24 = vector.extract_strided_slice %23 {offsets = [0, 0], sizes = [128, 4], strides = [1, 1]} : vector<128x10xf32> to vector<128x4xf32>
    %25 = vector.broadcast %13 : vector<1x4xf32> to vector<128x4xf32>
    %26 = arith.mulf %24, %25 : vector<128x4xf32>
    %27 = vector.extract_strided_slice %23 {offsets = [0, 1], sizes = [128, 4], strides = [1, 1]} : vector<128x10xf32> to vector<128x4xf32>
    %28 = vector.extract_strided_slice %23 {offsets = [0, 2], sizes = [128, 4], strides = [1, 1]} : vector<128x10xf32> to vector<128x4xf32>
    %29 = vector.broadcast %17 : vector<1x4xf32> to vector<128x4xf32>
    %30 = arith.mulf %28, %29 : vector<128x4xf32>
    %31 = vector.extract_strided_slice %23 {offsets = [0, 2], sizes = [128, 4], strides = [1, 1]} : vector<128x10xf32> to vector<128x4xf32>
    %32 = vector.broadcast %13 : vector<1x4xf32> to vector<128x4xf32>
    %33 = arith.mulf %31, %32 : vector<128x4xf32>
    %34 = vector.extract_strided_slice %23 {offsets = [0, 3], sizes = [128, 4], strides = [1, 1]} : vector<128x10xf32> to vector<128x4xf32>
    %35 = vector.extract_strided_slice %23 {offsets = [0, 4], sizes = [128, 4], strides = [1, 1]} : vector<128x10xf32> to vector<128x4xf32>
    %36 = vector.broadcast %17 : vector<1x4xf32> to vector<128x4xf32>
    %37 = arith.mulf %35, %36 : vector<128x4xf32>
    %38 = vector.extract_strided_slice %23 {offsets = [0, 4], sizes = [128, 4], strides = [1, 1]} : vector<128x10xf32> to vector<128x4xf32>
    %39 = vector.broadcast %13 : vector<1x4xf32> to vector<128x4xf32>
    %40 = arith.mulf %38, %39 : vector<128x4xf32>
    %41 = vector.extract_strided_slice %23 {offsets = [0, 5], sizes = [128, 4], strides = [1, 1]} : vector<128x10xf32> to vector<128x4xf32>
    %42 = vector.extract_strided_slice %23 {offsets = [0, 6], sizes = [128, 4], strides = [1, 1]} : vector<128x10xf32> to vector<128x4xf32>
    %43 = vector.broadcast %17 : vector<1x4xf32> to vector<128x4xf32>
    %44 = arith.mulf %42, %43 : vector<128x4xf32>
    %45 = tpu.concatenate %26, %27, %30, %33, %34, %37, %40, %41, %44 in 0 : vector<128x4xf32>, vector<128x4xf32>, vector<128x4xf32>, vector<128x4xf32>, vector<128x4xf32>, vector<128x4xf32>, vector<128x4xf32>, vector<128x4xf32>, vector<128x4xf32> -> vector<1152x4xf32>
    %46 = arith.truncf %45 : vector<1152x4xf32> to vector<1152x4xbf16>
    %cst_15 = arith.constant dense<0.000000e+00> : vector<32x4xf32>
    %47 = tpu.matmul %18, %46, %cst_15 {dimension_numbers = #tpu.dot_dimension_numbers<[1], [0], [0], [1], [0, 0, 1, 1], [], []>} : vector<32x1152xbf16>, vector<1152x4xbf16>, vector<32x4xf32> -> vector<32x4xf32>
    %48 = vector.broadcast %19 : vector<32x1xf32> to vector<32x4xf32>
    %49 = arith.addf %47, %48 : vector<32x4xf32>
    %cst_16 = arith.constant 0.000000e+00 : f32
    %50 = vector.broadcast %cst_16 : f32 to vector<32x4xf32>
    %51 = arith.maximumf %49, %50 : vector<32x4xf32>
    %cst_17 = arith.constant 0.000000e+00 : f32
    %52 = vector.broadcast %cst_17 : f32 to vector<32x3xf32>
    %53 = tpu.concatenate %52, %51, %52 in 1 : vector<32x3xf32>, vector<32x4xf32>, vector<32x3xf32> -> vector<32x10xf32>
    %54 = vector.extract_strided_slice %53 {offsets = [0, 0], sizes = [32, 4], strides = [1, 1]} : vector<32x10xf32> to vector<32x4xf32>
    %55 = vector.broadcast %13 : vector<1x4xf32> to vector<32x4xf32>
    %56 = arith.mulf %54, %55 : vector<32x4xf32>
    %57 = vector.extract_strided_slice %53 {offsets = [0, 1], sizes = [32, 4], strides = [1, 1]} : vector<32x10xf32> to vector<32x4xf32>
    %58 = vector.extract_strided_slice %53 {offsets = [0, 2], sizes = [32, 4], strides = [1, 1]} : vector<32x10xf32> to vector<32x4xf32>
    %59 = vector.broadcast %17 : vector<1x4xf32> to vector<32x4xf32>
    %60 = arith.mulf %58, %59 : vector<32x4xf32>
    %61 = vector.extract_strided_slice %53 {offsets = [0, 2], sizes = [32, 4], strides = [1, 1]} : vector<32x10xf32> to vector<32x4xf32>
    %62 = vector.broadcast %13 : vector<1x4xf32> to vector<32x4xf32>
    %63 = arith.mulf %61, %62 : vector<32x4xf32>
    %64 = vector.extract_strided_slice %53 {offsets = [0, 3], sizes = [32, 4], strides = [1, 1]} : vector<32x10xf32> to vector<32x4xf32>
    %65 = vector.extract_strided_slice %53 {offsets = [0, 4], sizes = [32, 4], strides = [1, 1]} : vector<32x10xf32> to vector<32x4xf32>
    %66 = vector.broadcast %17 : vector<1x4xf32> to vector<32x4xf32>
    %67 = arith.mulf %65, %66 : vector<32x4xf32>
    %68 = vector.extract_strided_slice %53 {offsets = [0, 4], sizes = [32, 4], strides = [1, 1]} : vector<32x10xf32> to vector<32x4xf32>
    %69 = vector.broadcast %13 : vector<1x4xf32> to vector<32x4xf32>
    %70 = arith.mulf %68, %69 : vector<32x4xf32>
    %71 = vector.extract_strided_slice %53 {offsets = [0, 5], sizes = [32, 4], strides = [1, 1]} : vector<32x10xf32> to vector<32x4xf32>
    %72 = vector.extract_strided_slice %53 {offsets = [0, 6], sizes = [32, 4], strides = [1, 1]} : vector<32x10xf32> to vector<32x4xf32>
    %73 = vector.broadcast %17 : vector<1x4xf32> to vector<32x4xf32>
    %74 = arith.mulf %72, %73 : vector<32x4xf32>
    %75 = tpu.concatenate %56, %57, %60, %63, %64, %67, %70, %71, %74 in 0 : vector<32x4xf32>, vector<32x4xf32>, vector<32x4xf32>, vector<32x4xf32>, vector<32x4xf32>, vector<32x4xf32>, vector<32x4xf32>, vector<32x4xf32>, vector<32x4xf32> -> vector<288x4xf32>
    %76 = arith.truncf %75 : vector<288x4xf32> to vector<288x4xbf16>
    %cst_18 = arith.constant dense<0.000000e+00> : vector<32x4xf32>
    %77 = tpu.matmul %20, %76, %cst_18 {dimension_numbers = #tpu.dot_dimension_numbers<[1], [0], [0], [1], [0, 0, 1, 1], [], []>} : vector<32x288xbf16>, vector<288x4xbf16>, vector<32x4xf32> -> vector<32x4xf32>
    %78 = vector.broadcast %21 : vector<32x1xf32> to vector<32x4xf32>
    %79 = arith.addf %77, %78 : vector<32x4xf32>
    %cst_19 = arith.constant 0.000000e+00 : f32
    %80 = vector.broadcast %cst_19 : f32 to vector<32x4xf32>
    %81 = arith.maximumf %79, %80 : vector<32x4xf32>
    %c0_20 = arith.constant 0 : index
    %c0_21 = arith.constant 0 : index
    %82 = vector.load %arg6[%c0_20, %c0_21] : memref<4x16xbf16, #tpu.memory_space<vmem>>, vector<4x16xbf16>
    %83 = arith.truncf %81 : vector<32x4xf32> to vector<32x4xbf16>
    %cst_22 = arith.constant dense<0.000000e+00> : vector<32x16xf32>
    %84 = tpu.matmul %83, %82, %cst_22 {dimension_numbers = #tpu.dot_dimension_numbers<[1], [0], [0], [1], [0, 0, 1, 1], [], []>} : vector<32x4xbf16>, vector<4x16xbf16>, vector<32x16xf32> -> vector<32x16xf32>
    %c0_23 = arith.constant 0 : index
    %c0_24 = arith.constant 0 : index
    %c0_25 = arith.constant 0 : index
    %85 = vector.load %arg3[%c0_23, %c0_24, %c0_25] : memref<1x32x16xf32, #tpu.memory_space<vmem>>, vector<1x32x16xf32>
    %86 = vector.shape_cast %85 : vector<1x32x16xf32> to vector<32x16xf32>
    %87 = tpu.concatenate %84, %86 in 0 : vector<32x16xf32>, vector<32x16xf32> -> vector<64x16xf32>
    %88 = tpu.iota {dimensions = array<i32: 1>} : vector<1x16xi32>
    %c3_i32 = arith.constant 3 : i32
    %89 = vector.broadcast %c3_i32 : i32 to vector<1x16xi32>
    %90 = arith.andi %88, %89 : vector<1x16xi32>
    %c1_i32_26 = arith.constant 1 : i32
    %91 = vector.broadcast %c1_i32_26 : i32 to vector<1x16xi32>
    %92 = arith.cmpi sge, %90, %91 : vector<1x16xi32>
    %93 = arith.extui %92 : vector<1x16xi1> to vector<1x16xi32>
    %94 = arith.sitofp %93 : vector<1x16xi32> to vector<1x16xf32>
    %c3_i32_27 = arith.constant 3 : i32
    %95 = vector.broadcast %c3_i32_27 : i32 to vector<1x16xi32>
    %96 = arith.cmpi slt, %90, %95 : vector<1x16xi32>
    %97 = arith.extui %96 : vector<1x16xi1> to vector<1x16xi32>
    %98 = arith.sitofp %97 : vector<1x16xi32> to vector<1x16xf32>
    %c0_28 = arith.constant 0 : index
    %c0_29 = arith.constant 0 : index
    %99 = vector.load %arg14[%c0_28, %c0_29] : memref<32x576xbf16, #tpu.memory_space<vmem>>, vector<32x576xbf16>
    %c0_30 = arith.constant 0 : index
    %c0_31 = arith.constant 0 : index
    %100 = vector.load %arg15[%c0_30, %c0_31] : memref<32x1xf32, #tpu.memory_space<vmem>>, vector<32x1xf32>
    %c0_32 = arith.constant 0 : index
    %c0_33 = arith.constant 0 : index
    %101 = vector.load %arg16[%c0_32, %c0_33] : memref<32x288xbf16, #tpu.memory_space<vmem>>, vector<32x288xbf16>
    %c0_34 = arith.constant 0 : index
    %c0_35 = arith.constant 0 : index
    %102 = vector.load %arg17[%c0_34, %c0_35] : memref<32x1xf32, #tpu.memory_space<vmem>>, vector<32x1xf32>
    %cst_36 = arith.constant 0.000000e+00 : f32
    %103 = vector.broadcast %cst_36 : f32 to vector<64x5xf32>
    %104 = tpu.concatenate %103, %87, %103 in 1 : vector<64x5xf32>, vector<64x16xf32>, vector<64x5xf32> -> vector<64x26xf32>
    %105 = vector.extract_strided_slice %104 {offsets = [0, 0], sizes = [64, 16], strides = [1, 1]} : vector<64x26xf32> to vector<64x16xf32>
    %106 = vector.broadcast %94 : vector<1x16xf32> to vector<64x16xf32>
    %107 = arith.mulf %105, %106 : vector<64x16xf32>
    %108 = vector.extract_strided_slice %104 {offsets = [0, 1], sizes = [64, 16], strides = [1, 1]} : vector<64x26xf32> to vector<64x16xf32>
    %109 = vector.extract_strided_slice %104 {offsets = [0, 2], sizes = [64, 16], strides = [1, 1]} : vector<64x26xf32> to vector<64x16xf32>
    %110 = vector.broadcast %98 : vector<1x16xf32> to vector<64x16xf32>
    %111 = arith.mulf %109, %110 : vector<64x16xf32>
    %112 = vector.extract_strided_slice %104 {offsets = [0, 4], sizes = [64, 16], strides = [1, 1]} : vector<64x26xf32> to vector<64x16xf32>
    %113 = vector.broadcast %94 : vector<1x16xf32> to vector<64x16xf32>
    %114 = arith.mulf %112, %113 : vector<64x16xf32>
    %115 = vector.extract_strided_slice %104 {offsets = [0, 5], sizes = [64, 16], strides = [1, 1]} : vector<64x26xf32> to vector<64x16xf32>
    %116 = vector.extract_strided_slice %104 {offsets = [0, 6], sizes = [64, 16], strides = [1, 1]} : vector<64x26xf32> to vector<64x16xf32>
    %117 = vector.broadcast %98 : vector<1x16xf32> to vector<64x16xf32>
    %118 = arith.mulf %116, %117 : vector<64x16xf32>
    %119 = vector.extract_strided_slice %104 {offsets = [0, 8], sizes = [64, 16], strides = [1, 1]} : vector<64x26xf32> to vector<64x16xf32>
    %120 = vector.broadcast %94 : vector<1x16xf32> to vector<64x16xf32>
    %121 = arith.mulf %119, %120 : vector<64x16xf32>
    %122 = vector.extract_strided_slice %104 {offsets = [0, 9], sizes = [64, 16], strides = [1, 1]} : vector<64x26xf32> to vector<64x16xf32>
    %123 = vector.extract_strided_slice %104 {offsets = [0, 10], sizes = [64, 16], strides = [1, 1]} : vector<64x26xf32> to vector<64x16xf32>
    %124 = vector.broadcast %98 : vector<1x16xf32> to vector<64x16xf32>
    %125 = arith.mulf %123, %124 : vector<64x16xf32>
    %126 = tpu.concatenate %107, %108, %111, %114, %115, %118, %121, %122, %125 in 0 : vector<64x16xf32>, vector<64x16xf32>, vector<64x16xf32>, vector<64x16xf32>, vector<64x16xf32>, vector<64x16xf32>, vector<64x16xf32>, vector<64x16xf32>, vector<64x16xf32> -> vector<576x16xf32>
    %127 = arith.truncf %126 : vector<576x16xf32> to vector<576x16xbf16>
    %cst_37 = arith.constant dense<0.000000e+00> : vector<32x16xf32>
    %128 = tpu.matmul %99, %127, %cst_37 {dimension_numbers = #tpu.dot_dimension_numbers<[1], [0], [0], [1], [0, 0, 1, 1], [], []>} : vector<32x576xbf16>, vector<576x16xbf16>, vector<32x16xf32> -> vector<32x16xf32>
    %129 = vector.broadcast %100 : vector<32x1xf32> to vector<32x16xf32>
    %130 = arith.addf %128, %129 : vector<32x16xf32>
    %cst_38 = arith.constant 0.000000e+00 : f32
    %131 = vector.broadcast %cst_38 : f32 to vector<32x16xf32>
    %132 = arith.maximumf %130, %131 : vector<32x16xf32>
    %cst_39 = arith.constant 0.000000e+00 : f32
    %133 = vector.broadcast %cst_39 : f32 to vector<32x5xf32>
    %134 = tpu.concatenate %133, %132, %133 in 1 : vector<32x5xf32>, vector<32x16xf32>, vector<32x5xf32> -> vector<32x26xf32>
    %135 = vector.extract_strided_slice %134 {offsets = [0, 0], sizes = [32, 16], strides = [1, 1]} : vector<32x26xf32> to vector<32x16xf32>
    %136 = vector.broadcast %94 : vector<1x16xf32> to vector<32x16xf32>
    %137 = arith.mulf %135, %136 : vector<32x16xf32>
    %138 = vector.extract_strided_slice %134 {offsets = [0, 1], sizes = [32, 16], strides = [1, 1]} : vector<32x26xf32> to vector<32x16xf32>
    %139 = vector.extract_strided_slice %134 {offsets = [0, 2], sizes = [32, 16], strides = [1, 1]} : vector<32x26xf32> to vector<32x16xf32>
    %140 = vector.broadcast %98 : vector<1x16xf32> to vector<32x16xf32>
    %141 = arith.mulf %139, %140 : vector<32x16xf32>
    %142 = vector.extract_strided_slice %134 {offsets = [0, 4], sizes = [32, 16], strides = [1, 1]} : vector<32x26xf32> to vector<32x16xf32>
    %143 = vector.broadcast %94 : vector<1x16xf32> to vector<32x16xf32>
    %144 = arith.mulf %142, %143 : vector<32x16xf32>
    %145 = vector.extract_strided_slice %134 {offsets = [0, 5], sizes = [32, 16], strides = [1, 1]} : vector<32x26xf32> to vector<32x16xf32>
    %146 = vector.extract_strided_slice %134 {offsets = [0, 6], sizes = [32, 16], strides = [1, 1]} : vector<32x26xf32> to vector<32x16xf32>
    %147 = vector.broadcast %98 : vector<1x16xf32> to vector<32x16xf32>
    %148 = arith.mulf %146, %147 : vector<32x16xf32>
    %149 = vector.extract_strided_slice %134 {offsets = [0, 8], sizes = [32, 16], strides = [1, 1]} : vector<32x26xf32> to vector<32x16xf32>
    %150 = vector.broadcast %94 : vector<1x16xf32> to vector<32x16xf32>
    %151 = arith.mulf %149, %150 : vector<32x16xf32>
    %152 = vector.extract_strided_slice %134 {offsets = [0, 9], sizes = [32, 16], strides = [1, 1]} : vector<32x26xf32> to vector<32x16xf32>
    %153 = vector.extract_strided_slice %134 {offsets = [0, 10], sizes = [32, 16], strides = [1, 1]} : vector<32x26xf32> to vector<32x16xf32>
    %154 = vector.broadcast %98 : vector<1x16xf32> to vector<32x16xf32>
    %155 = arith.mulf %153, %154 : vector<32x16xf32>
    %156 = tpu.concatenate %137, %138, %141, %144, %145, %148, %151, %152, %155 in 0 : vector<32x16xf32>, vector<32x16xf32>, vector<32x16xf32>, vector<32x16xf32>, vector<32x16xf32>, vector<32x16xf32>, vector<32x16xf32>, vector<32x16xf32>, vector<32x16xf32> -> vector<288x16xf32>
    %157 = arith.truncf %156 : vector<288x16xf32> to vector<288x16xbf16>
    %cst_40 = arith.constant dense<0.000000e+00> : vector<32x16xf32>
    %158 = tpu.matmul %101, %157, %cst_40 {dimension_numbers = #tpu.dot_dimension_numbers<[1], [0], [0], [1], [0, 0, 1, 1], [], []>} : vector<32x288xbf16>, vector<288x16xbf16>, vector<32x16xf32> -> vector<32x16xf32>
    %159 = vector.broadcast %102 : vector<32x1xf32> to vector<32x16xf32>
    %160 = arith.addf %158, %159 : vector<32x16xf32>
    %cst_41 = arith.constant 0.000000e+00 : f32
    %161 = vector.broadcast %cst_41 : f32 to vector<32x16xf32>
    %162 = arith.maximumf %160, %161 : vector<32x16xf32>
    %c0_42 = arith.constant 0 : index
    %c0_43 = arith.constant 0 : index
    %163 = vector.load %arg7[%c0_42, %c0_43] : memref<16x64xbf16, #tpu.memory_space<vmem>>, vector<16x64xbf16>
    %164 = arith.truncf %162 : vector<32x16xf32> to vector<32x16xbf16>
    %cst_44 = arith.constant dense<0.000000e+00> : vector<32x64xf32>
    %165 = tpu.matmul %164, %163, %cst_44 {dimension_numbers = #tpu.dot_dimension_numbers<[1], [0], [0], [1], [0, 0, 1, 1], [], []>} : vector<32x16xbf16>, vector<16x64xbf16>, vector<32x64xf32> -> vector<32x64xf32>
    %c0_45 = arith.constant 0 : index
    %c0_46 = arith.constant 0 : index
    %c0_47 = arith.constant 0 : index
    %166 = vector.load %arg4[%c0_45, %c0_46, %c0_47] : memref<1x16x64xf32, #tpu.memory_space<vmem>>, vector<1x16x64xf32>
    %167 = vector.shape_cast %166 : vector<1x16x64xf32> to vector<16x64xf32>
    %168 = tpu.concatenate %165, %167 in 0 : vector<32x64xf32>, vector<16x64xf32> -> vector<48x64xf32>
    %169 = tpu.iota {dimensions = array<i32: 1>} : vector<1x64xi32>
    %c7_i32 = arith.constant 7 : i32
    %170 = vector.broadcast %c7_i32 : i32 to vector<1x64xi32>
    %171 = arith.andi %169, %170 : vector<1x64xi32>
    %c1_i32_48 = arith.constant 1 : i32
    %172 = vector.broadcast %c1_i32_48 : i32 to vector<1x64xi32>
    %173 = arith.cmpi sge, %171, %172 : vector<1x64xi32>
    %174 = arith.extui %173 : vector<1x64xi1> to vector<1x64xi32>
    %175 = arith.sitofp %174 : vector<1x64xi32> to vector<1x64xf32>
    %c7_i32_49 = arith.constant 7 : i32
    %176 = vector.broadcast %c7_i32_49 : i32 to vector<1x64xi32>
    %177 = arith.cmpi slt, %171, %176 : vector<1x64xi32>
    %178 = arith.extui %177 : vector<1x64xi1> to vector<1x64xi32>
    %179 = arith.sitofp %178 : vector<1x64xi32> to vector<1x64xf32>
    %c0_50 = arith.constant 0 : index
    %c0_51 = arith.constant 0 : index
    %180 = vector.load %arg18[%c0_50, %c0_51] : memref<16x432xbf16, #tpu.memory_space<vmem>>, vector<16x432xbf16>
    %c0_52 = arith.constant 0 : index
    %c0_53 = arith.constant 0 : index
    %181 = vector.load %arg19[%c0_52, %c0_53] : memref<16x1xf32, #tpu.memory_space<vmem>>, vector<16x1xf32>
    %c0_54 = arith.constant 0 : index
    %c0_55 = arith.constant 0 : index
    %182 = vector.load %arg20[%c0_54, %c0_55] : memref<16x144xbf16, #tpu.memory_space<vmem>>, vector<16x144xbf16>
    %c0_56 = arith.constant 0 : index
    %c0_57 = arith.constant 0 : index
    %183 = vector.load %arg21[%c0_56, %c0_57] : memref<16x1xf32, #tpu.memory_space<vmem>>, vector<16x1xf32>
    %cst_58 = arith.constant 0.000000e+00 : f32
    %184 = vector.broadcast %cst_58 : f32 to vector<48x9xf32>
    %185 = tpu.concatenate %184, %168, %184 in 1 : vector<48x9xf32>, vector<48x64xf32>, vector<48x9xf32> -> vector<48x82xf32>
    %186 = vector.extract_strided_slice %185 {offsets = [0, 0], sizes = [48, 64], strides = [1, 1]} : vector<48x82xf32> to vector<48x64xf32>
    %187 = vector.broadcast %175 : vector<1x64xf32> to vector<48x64xf32>
    %188 = arith.mulf %186, %187 : vector<48x64xf32>
    %189 = vector.extract_strided_slice %185 {offsets = [0, 1], sizes = [48, 64], strides = [1, 1]} : vector<48x82xf32> to vector<48x64xf32>
    %190 = vector.extract_strided_slice %185 {offsets = [0, 2], sizes = [48, 64], strides = [1, 1]} : vector<48x82xf32> to vector<48x64xf32>
    %191 = vector.broadcast %179 : vector<1x64xf32> to vector<48x64xf32>
    %192 = arith.mulf %190, %191 : vector<48x64xf32>
    %193 = vector.extract_strided_slice %185 {offsets = [0, 8], sizes = [48, 64], strides = [1, 1]} : vector<48x82xf32> to vector<48x64xf32>
    %194 = vector.broadcast %175 : vector<1x64xf32> to vector<48x64xf32>
    %195 = arith.mulf %193, %194 : vector<48x64xf32>
    %196 = vector.extract_strided_slice %185 {offsets = [0, 9], sizes = [48, 64], strides = [1, 1]} : vector<48x82xf32> to vector<48x64xf32>
    %197 = vector.extract_strided_slice %185 {offsets = [0, 10], sizes = [48, 64], strides = [1, 1]} : vector<48x82xf32> to vector<48x64xf32>
    %198 = vector.broadcast %179 : vector<1x64xf32> to vector<48x64xf32>
    %199 = arith.mulf %197, %198 : vector<48x64xf32>
    %200 = vector.extract_strided_slice %185 {offsets = [0, 16], sizes = [48, 64], strides = [1, 1]} : vector<48x82xf32> to vector<48x64xf32>
    %201 = vector.broadcast %175 : vector<1x64xf32> to vector<48x64xf32>
    %202 = arith.mulf %200, %201 : vector<48x64xf32>
    %203 = vector.extract_strided_slice %185 {offsets = [0, 17], sizes = [48, 64], strides = [1, 1]} : vector<48x82xf32> to vector<48x64xf32>
    %204 = vector.extract_strided_slice %185 {offsets = [0, 18], sizes = [48, 64], strides = [1, 1]} : vector<48x82xf32> to vector<48x64xf32>
    %205 = vector.broadcast %179 : vector<1x64xf32> to vector<48x64xf32>
    %206 = arith.mulf %204, %205 : vector<48x64xf32>
    %207 = tpu.concatenate %188, %189, %192, %195, %196, %199, %202, %203, %206 in 0 : vector<48x64xf32>, vector<48x64xf32>, vector<48x64xf32>, vector<48x64xf32>, vector<48x64xf32>, vector<48x64xf32>, vector<48x64xf32>, vector<48x64xf32>, vector<48x64xf32> -> vector<432x64xf32>
    %208 = arith.truncf %207 : vector<432x64xf32> to vector<432x64xbf16>
    %cst_59 = arith.constant dense<0.000000e+00> : vector<16x64xf32>
    %209 = tpu.matmul %180, %208, %cst_59 {dimension_numbers = #tpu.dot_dimension_numbers<[1], [0], [0], [1], [0, 0, 1, 1], [], []>} : vector<16x432xbf16>, vector<432x64xbf16>, vector<16x64xf32> -> vector<16x64xf32>
    %210 = vector.broadcast %181 : vector<16x1xf32> to vector<16x64xf32>
    %211 = arith.addf %209, %210 : vector<16x64xf32>
    %cst_60 = arith.constant 0.000000e+00 : f32
    %212 = vector.broadcast %cst_60 : f32 to vector<16x64xf32>
    %213 = arith.maximumf %211, %212 : vector<16x64xf32>
    %cst_61 = arith.constant 0.000000e+00 : f32
    %214 = vector.broadcast %cst_61 : f32 to vector<16x9xf32>
    %215 = tpu.concatenate %214, %213, %214 in 1 : vector<16x9xf32>, vector<16x64xf32>, vector<16x9xf32> -> vector<16x82xf32>
    %216 = vector.extract_strided_slice %215 {offsets = [0, 0], sizes = [16, 64], strides = [1, 1]} : vector<16x82xf32> to vector<16x64xf32>
    %217 = vector.broadcast %175 : vector<1x64xf32> to vector<16x64xf32>
    %218 = arith.mulf %216, %217 : vector<16x64xf32>
    %219 = vector.extract_strided_slice %215 {offsets = [0, 1], sizes = [16, 64], strides = [1, 1]} : vector<16x82xf32> to vector<16x64xf32>
    %220 = vector.extract_strided_slice %215 {offsets = [0, 2], sizes = [16, 64], strides = [1, 1]} : vector<16x82xf32> to vector<16x64xf32>
    %221 = vector.broadcast %179 : vector<1x64xf32> to vector<16x64xf32>
    %222 = arith.mulf %220, %221 : vector<16x64xf32>
    %223 = vector.extract_strided_slice %215 {offsets = [0, 8], sizes = [16, 64], strides = [1, 1]} : vector<16x82xf32> to vector<16x64xf32>
    %224 = vector.broadcast %175 : vector<1x64xf32> to vector<16x64xf32>
    %225 = arith.mulf %223, %224 : vector<16x64xf32>
    %226 = vector.extract_strided_slice %215 {offsets = [0, 9], sizes = [16, 64], strides = [1, 1]} : vector<16x82xf32> to vector<16x64xf32>
    %227 = vector.extract_strided_slice %215 {offsets = [0, 10], sizes = [16, 64], strides = [1, 1]} : vector<16x82xf32> to vector<16x64xf32>
    %228 = vector.broadcast %179 : vector<1x64xf32> to vector<16x64xf32>
    %229 = arith.mulf %227, %228 : vector<16x64xf32>
    %230 = vector.extract_strided_slice %215 {offsets = [0, 16], sizes = [16, 64], strides = [1, 1]} : vector<16x82xf32> to vector<16x64xf32>
    %231 = vector.broadcast %175 : vector<1x64xf32> to vector<16x64xf32>
    %232 = arith.mulf %230, %231 : vector<16x64xf32>
    %233 = vector.extract_strided_slice %215 {offsets = [0, 17], sizes = [16, 64], strides = [1, 1]} : vector<16x82xf32> to vector<16x64xf32>
    %234 = vector.extract_strided_slice %215 {offsets = [0, 18], sizes = [16, 64], strides = [1, 1]} : vector<16x82xf32> to vector<16x64xf32>
    %235 = vector.broadcast %179 : vector<1x64xf32> to vector<16x64xf32>
    %236 = arith.mulf %234, %235 : vector<16x64xf32>
    %237 = tpu.concatenate %218, %219, %222, %225, %226, %229, %232, %233, %236 in 0 : vector<16x64xf32>, vector<16x64xf32>, vector<16x64xf32>, vector<16x64xf32>, vector<16x64xf32>, vector<16x64xf32>, vector<16x64xf32>, vector<16x64xf32>, vector<16x64xf32> -> vector<144x64xf32>
    %238 = arith.truncf %237 : vector<144x64xf32> to vector<144x64xbf16>
    %cst_62 = arith.constant dense<0.000000e+00> : vector<16x64xf32>
    %239 = tpu.matmul %182, %238, %cst_62 {dimension_numbers = #tpu.dot_dimension_numbers<[1], [0], [0], [1], [0, 0, 1, 1], [], []>} : vector<16x144xbf16>, vector<144x64xbf16>, vector<16x64xf32> -> vector<16x64xf32>
    %240 = vector.broadcast %183 : vector<16x1xf32> to vector<16x64xf32>
    %241 = arith.addf %239, %240 : vector<16x64xf32>
    %cst_63 = arith.constant 0.000000e+00 : f32
    %242 = vector.broadcast %cst_63 : f32 to vector<16x64xf32>
    %243 = arith.maximumf %241, %242 : vector<16x64xf32>
    %c0_64 = arith.constant 0 : index
    %c0_65 = arith.constant 0 : index
    %244 = vector.load %arg8[%c0_64, %c0_65] : memref<64x256xbf16, #tpu.memory_space<vmem>>, vector<64x256xbf16>
    %245 = arith.truncf %243 : vector<16x64xf32> to vector<16x64xbf16>
    %cst_66 = arith.constant dense<0.000000e+00> : vector<16x256xf32>
    %246 = tpu.matmul %245, %244, %cst_66 {dimension_numbers = #tpu.dot_dimension_numbers<[1], [0], [0], [1], [0, 0, 1, 1], [], []>} : vector<16x64xbf16>, vector<64x256xbf16>, vector<16x256xf32> -> vector<16x256xf32>
    %c0_67 = arith.constant 0 : index
    %c0_68 = arith.constant 0 : index
    %c0_69 = arith.constant 0 : index
    %247 = vector.load %arg5[%c0_67, %c0_68, %c0_69] : memref<1x8x256xf32, #tpu.memory_space<vmem>>, vector<1x8x256xf32>
    %248 = vector.shape_cast %247 : vector<1x8x256xf32> to vector<8x256xf32>
    %249 = tpu.concatenate %246, %248 in 0 : vector<16x256xf32>, vector<8x256xf32> -> vector<24x256xf32>
    %250 = tpu.iota {dimensions = array<i32: 1>} : vector<1x256xi32>
    %c15_i32 = arith.constant 15 : i32
    %251 = vector.broadcast %c15_i32 : i32 to vector<1x256xi32>
    %252 = arith.andi %250, %251 : vector<1x256xi32>
    %c1_i32_70 = arith.constant 1 : i32
    %253 = vector.broadcast %c1_i32_70 : i32 to vector<1x256xi32>
    %254 = arith.cmpi sge, %252, %253 : vector<1x256xi32>
    %255 = arith.extui %254 : vector<1x256xi1> to vector<1x256xi32>
    %256 = arith.sitofp %255 : vector<1x256xi32> to vector<1x256xf32>
    %c15_i32_71 = arith.constant 15 : i32
    %257 = vector.broadcast %c15_i32_71 : i32 to vector<1x256xi32>
    %258 = arith.cmpi slt, %252, %257 : vector<1x256xi32>
    %259 = arith.extui %258 : vector<1x256xi1> to vector<1x256xi32>
    %260 = arith.sitofp %259 : vector<1x256xi32> to vector<1x256xf32>
    %c0_72 = arith.constant 0 : index
    %c0_73 = arith.constant 0 : index
    %261 = vector.load %arg22[%c0_72, %c0_73] : memref<16x216xbf16, #tpu.memory_space<vmem>>, vector<16x216xbf16>
    %c0_74 = arith.constant 0 : index
    %c0_75 = arith.constant 0 : index
    %262 = vector.load %arg23[%c0_74, %c0_75] : memref<16x1xf32, #tpu.memory_space<vmem>>, vector<16x1xf32>
    %c0_76 = arith.constant 0 : index
    %c0_77 = arith.constant 0 : index
    %263 = vector.load %arg24[%c0_76, %c0_77] : memref<16x144xbf16, #tpu.memory_space<vmem>>, vector<16x144xbf16>
    %c0_78 = arith.constant 0 : index
    %c0_79 = arith.constant 0 : index
    %264 = vector.load %arg25[%c0_78, %c0_79] : memref<16x1xf32, #tpu.memory_space<vmem>>, vector<16x1xf32>
    %cst_80 = arith.constant 0.000000e+00 : f32
    %265 = vector.broadcast %cst_80 : f32 to vector<24x17xf32>
    %266 = tpu.concatenate %265, %249, %265 in 1 : vector<24x17xf32>, vector<24x256xf32>, vector<24x17xf32> -> vector<24x290xf32>
    %267 = vector.extract_strided_slice %266 {offsets = [0, 0], sizes = [24, 256], strides = [1, 1]} : vector<24x290xf32> to vector<24x256xf32>
    %268 = vector.broadcast %256 : vector<1x256xf32> to vector<24x256xf32>
    %269 = arith.mulf %267, %268 : vector<24x256xf32>
    %270 = vector.extract_strided_slice %266 {offsets = [0, 1], sizes = [24, 256], strides = [1, 1]} : vector<24x290xf32> to vector<24x256xf32>
    %271 = vector.extract_strided_slice %266 {offsets = [0, 2], sizes = [24, 256], strides = [1, 1]} : vector<24x290xf32> to vector<24x256xf32>
    %272 = vector.broadcast %260 : vector<1x256xf32> to vector<24x256xf32>
    %273 = arith.mulf %271, %272 : vector<24x256xf32>
    %274 = vector.extract_strided_slice %266 {offsets = [0, 16], sizes = [24, 256], strides = [1, 1]} : vector<24x290xf32> to vector<24x256xf32>
    %275 = vector.broadcast %256 : vector<1x256xf32> to vector<24x256xf32>
    %276 = arith.mulf %274, %275 : vector<24x256xf32>
    %277 = vector.extract_strided_slice %266 {offsets = [0, 17], sizes = [24, 256], strides = [1, 1]} : vector<24x290xf32> to vector<24x256xf32>
    %278 = vector.extract_strided_slice %266 {offsets = [0, 18], sizes = [24, 256], strides = [1, 1]} : vector<24x290xf32> to vector<24x256xf32>
    %279 = vector.broadcast %260 : vector<1x256xf32> to vector<24x256xf32>
    %280 = arith.mulf %278, %279 : vector<24x256xf32>
    %281 = vector.extract_strided_slice %266 {offsets = [0, 32], sizes = [24, 256], strides = [1, 1]} : vector<24x290xf32> to vector<24x256xf32>
    %282 = vector.broadcast %256 : vector<1x256xf32> to vector<24x256xf32>
    %283 = arith.mulf %281, %282 : vector<24x256xf32>
    %284 = vector.extract_strided_slice %266 {offsets = [0, 33], sizes = [24, 256], strides = [1, 1]} : vector<24x290xf32> to vector<24x256xf32>
    %285 = vector.extract_strided_slice %266 {offsets = [0, 34], sizes = [24, 256], strides = [1, 1]} : vector<24x290xf32> to vector<24x256xf32>
    %286 = vector.broadcast %260 : vector<1x256xf32> to vector<24x256xf32>
    %287 = arith.mulf %285, %286 : vector<24x256xf32>
    %288 = tpu.concatenate %269, %270, %273, %276, %277, %280, %283, %284, %287 in 0 : vector<24x256xf32>, vector<24x256xf32>, vector<24x256xf32>, vector<24x256xf32>, vector<24x256xf32>, vector<24x256xf32>, vector<24x256xf32>, vector<24x256xf32>, vector<24x256xf32> -> vector<216x256xf32>
    %289 = arith.truncf %288 : vector<216x256xf32> to vector<216x256xbf16>
    %cst_81 = arith.constant dense<0.000000e+00> : vector<16x256xf32>
    %290 = tpu.matmul %261, %289, %cst_81 {dimension_numbers = #tpu.dot_dimension_numbers<[1], [0], [0], [1], [0, 0, 1, 1], [], []>} : vector<16x216xbf16>, vector<216x256xbf16>, vector<16x256xf32> -> vector<16x256xf32>
    %291 = vector.broadcast %262 : vector<16x1xf32> to vector<16x256xf32>
    %292 = arith.addf %290, %291 : vector<16x256xf32>
    %cst_82 = arith.constant 0.000000e+00 : f32
    %293 = vector.broadcast %cst_82 : f32 to vector<16x256xf32>
    %294 = arith.maximumf %292, %293 : vector<16x256xf32>
    %cst_83 = arith.constant 0.000000e+00 : f32
    %295 = vector.broadcast %cst_83 : f32 to vector<16x17xf32>
    %296 = tpu.concatenate %295, %294, %295 in 1 : vector<16x17xf32>, vector<16x256xf32>, vector<16x17xf32> -> vector<16x290xf32>
    %297 = vector.extract_strided_slice %296 {offsets = [0, 0], sizes = [16, 256], strides = [1, 1]} : vector<16x290xf32> to vector<16x256xf32>
    %298 = vector.broadcast %256 : vector<1x256xf32> to vector<16x256xf32>
    %299 = arith.mulf %297, %298 : vector<16x256xf32>
    %300 = vector.extract_strided_slice %296 {offsets = [0, 1], sizes = [16, 256], strides = [1, 1]} : vector<16x290xf32> to vector<16x256xf32>
    %301 = vector.extract_strided_slice %296 {offsets = [0, 2], sizes = [16, 256], strides = [1, 1]} : vector<16x290xf32> to vector<16x256xf32>
    %302 = vector.broadcast %260 : vector<1x256xf32> to vector<16x256xf32>
    %303 = arith.mulf %301, %302 : vector<16x256xf32>
    %304 = vector.extract_strided_slice %296 {offsets = [0, 16], sizes = [16, 256], strides = [1, 1]} : vector<16x290xf32> to vector<16x256xf32>
    %305 = vector.broadcast %256 : vector<1x256xf32> to vector<16x256xf32>
    %306 = arith.mulf %304, %305 : vector<16x256xf32>
    %307 = vector.extract_strided_slice %296 {offsets = [0, 17], sizes = [16, 256], strides = [1, 1]} : vector<16x290xf32> to vector<16x256xf32>
    %308 = vector.extract_strided_slice %296 {offsets = [0, 18], sizes = [16, 256], strides = [1, 1]} : vector<16x290xf32> to vector<16x256xf32>
    %309 = vector.broadcast %260 : vector<1x256xf32> to vector<16x256xf32>
    %310 = arith.mulf %308, %309 : vector<16x256xf32>
    %311 = vector.extract_strided_slice %296 {offsets = [0, 32], sizes = [16, 256], strides = [1, 1]} : vector<16x290xf32> to vector<16x256xf32>
    %312 = vector.broadcast %256 : vector<1x256xf32> to vector<16x256xf32>
    %313 = arith.mulf %311, %312 : vector<16x256xf32>
    %314 = vector.extract_strided_slice %296 {offsets = [0, 33], sizes = [16, 256], strides = [1, 1]} : vector<16x290xf32> to vector<16x256xf32>
    %315 = vector.extract_strided_slice %296 {offsets = [0, 34], sizes = [16, 256], strides = [1, 1]} : vector<16x290xf32> to vector<16x256xf32>
    %316 = vector.broadcast %260 : vector<1x256xf32> to vector<16x256xf32>
    %317 = arith.mulf %315, %316 : vector<16x256xf32>
    %318 = tpu.concatenate %299, %300, %303, %306, %307, %310, %313, %314, %317 in 0 : vector<16x256xf32>, vector<16x256xf32>, vector<16x256xf32>, vector<16x256xf32>, vector<16x256xf32>, vector<16x256xf32>, vector<16x256xf32>, vector<16x256xf32>, vector<16x256xf32> -> vector<144x256xf32>
    %319 = arith.truncf %318 : vector<144x256xf32> to vector<144x256xbf16>
    %cst_84 = arith.constant dense<0.000000e+00> : vector<16x256xf32>
    %320 = tpu.matmul %263, %319, %cst_84 {dimension_numbers = #tpu.dot_dimension_numbers<[1], [0], [0], [1], [0, 0, 1, 1], [], []>} : vector<16x144xbf16>, vector<144x256xbf16>, vector<16x256xf32> -> vector<16x256xf32>
    %321 = vector.broadcast %264 : vector<16x1xf32> to vector<16x256xf32>
    %322 = arith.addf %320, %321 : vector<16x256xf32>
    %cst_85 = arith.constant 0.000000e+00 : f32
    %323 = vector.broadcast %cst_85 : f32 to vector<16x256xf32>
    %324 = arith.maximumf %322, %323 : vector<16x256xf32>
    %c0_86 = arith.constant 0 : index
    %c0_87 = arith.constant 0 : index
    %325 = vector.load %arg9[%c0_86, %c0_87] : memref<256x1024xbf16, #tpu.memory_space<vmem>>, vector<256x1024xbf16>
    %326 = arith.truncf %324 : vector<16x256xf32> to vector<16x256xbf16>
    %cst_88 = arith.constant dense<0.000000e+00> : vector<16x1024xf32>
    %327 = tpu.matmul %326, %325, %cst_88 {dimension_numbers = #tpu.dot_dimension_numbers<[1], [0], [0], [1], [0, 0, 1, 1], [], []>} : vector<16x256xbf16>, vector<256x1024xbf16>, vector<16x1024xf32> -> vector<16x1024xf32>
    %328 = tpu.iota {dimensions = array<i32: 1>} : vector<1x1024xi32>
    %c31_i32 = arith.constant 31 : i32
    %329 = vector.broadcast %c31_i32 : i32 to vector<1x1024xi32>
    %330 = arith.andi %328, %329 : vector<1x1024xi32>
    %c1_i32_89 = arith.constant 1 : i32
    %331 = vector.broadcast %c1_i32_89 : i32 to vector<1x1024xi32>
    %332 = arith.cmpi sge, %330, %331 : vector<1x1024xi32>
    %333 = arith.extui %332 : vector<1x1024xi1> to vector<1x1024xi32>
    %334 = arith.sitofp %333 : vector<1x1024xi32> to vector<1x1024xf32>
    %c31_i32_90 = arith.constant 31 : i32
    %335 = vector.broadcast %c31_i32_90 : i32 to vector<1x1024xi32>
    %336 = arith.cmpi slt, %330, %335 : vector<1x1024xi32>
    %337 = arith.extui %336 : vector<1x1024xi1> to vector<1x1024xi32>
    %338 = arith.sitofp %337 : vector<1x1024xi32> to vector<1x1024xf32>
    %c0_91 = arith.constant 0 : index
    %c0_92 = arith.constant 0 : index
    %339 = vector.load %arg26[%c0_91, %c0_92] : memref<8x144xbf16, #tpu.memory_space<vmem>>, vector<8x144xbf16>
    %c0_93 = arith.constant 0 : index
    %c0_94 = arith.constant 0 : index
    %340 = vector.load %arg27[%c0_93, %c0_94] : memref<8x1xf32, #tpu.memory_space<vmem>>, vector<8x1xf32>
    %c0_95 = arith.constant 0 : index
    %c0_96 = arith.constant 0 : index
    %341 = vector.load %arg28[%c0_95, %c0_96] : memref<8x72xbf16, #tpu.memory_space<vmem>>, vector<8x72xbf16>
    %c0_97 = arith.constant 0 : index
    %c0_98 = arith.constant 0 : index
    %342 = vector.load %arg29[%c0_97, %c0_98] : memref<8x1xf32, #tpu.memory_space<vmem>>, vector<8x1xf32>
    %cst_99 = arith.constant 0.000000e+00 : f32
    %343 = vector.broadcast %cst_99 : f32 to vector<16x33xf32>
    %344 = tpu.concatenate %343, %327, %343 in 1 : vector<16x33xf32>, vector<16x1024xf32>, vector<16x33xf32> -> vector<16x1090xf32>
    %345 = vector.extract_strided_slice %344 {offsets = [0, 0], sizes = [16, 1024], strides = [1, 1]} : vector<16x1090xf32> to vector<16x1024xf32>
    %346 = vector.broadcast %334 : vector<1x1024xf32> to vector<16x1024xf32>
    %347 = arith.mulf %345, %346 : vector<16x1024xf32>
    %348 = vector.extract_strided_slice %344 {offsets = [0, 1], sizes = [16, 1024], strides = [1, 1]} : vector<16x1090xf32> to vector<16x1024xf32>
    %349 = vector.extract_strided_slice %344 {offsets = [0, 2], sizes = [16, 1024], strides = [1, 1]} : vector<16x1090xf32> to vector<16x1024xf32>
    %350 = vector.broadcast %338 : vector<1x1024xf32> to vector<16x1024xf32>
    %351 = arith.mulf %349, %350 : vector<16x1024xf32>
    %352 = vector.extract_strided_slice %344 {offsets = [0, 32], sizes = [16, 1024], strides = [1, 1]} : vector<16x1090xf32> to vector<16x1024xf32>
    %353 = vector.broadcast %334 : vector<1x1024xf32> to vector<16x1024xf32>
    %354 = arith.mulf %352, %353 : vector<16x1024xf32>
    %355 = vector.extract_strided_slice %344 {offsets = [0, 33], sizes = [16, 1024], strides = [1, 1]} : vector<16x1090xf32> to vector<16x1024xf32>
    %356 = vector.extract_strided_slice %344 {offsets = [0, 34], sizes = [16, 1024], strides = [1, 1]} : vector<16x1090xf32> to vector<16x1024xf32>
    %357 = vector.broadcast %338 : vector<1x1024xf32> to vector<16x1024xf32>
    %358 = arith.mulf %356, %357 : vector<16x1024xf32>
    %359 = vector.extract_strided_slice %344 {offsets = [0, 64], sizes = [16, 1024], strides = [1, 1]} : vector<16x1090xf32> to vector<16x1024xf32>
    %360 = vector.broadcast %334 : vector<1x1024xf32> to vector<16x1024xf32>
    %361 = arith.mulf %359, %360 : vector<16x1024xf32>
    %362 = vector.extract_strided_slice %344 {offsets = [0, 65], sizes = [16, 1024], strides = [1, 1]} : vector<16x1090xf32> to vector<16x1024xf32>
    %363 = vector.extract_strided_slice %344 {offsets = [0, 66], sizes = [16, 1024], strides = [1, 1]} : vector<16x1090xf32> to vector<16x1024xf32>
    %364 = vector.broadcast %338 : vector<1x1024xf32> to vector<16x1024xf32>
    %365 = arith.mulf %363, %364 : vector<16x1024xf32>
    %366 = tpu.concatenate %347, %348, %351, %354, %355, %358, %361, %362, %365 in 0 : vector<16x1024xf32>, vector<16x1024xf32>, vector<16x1024xf32>, vector<16x1024xf32>, vector<16x1024xf32>, vector<16x1024xf32>, vector<16x1024xf32>, vector<16x1024xf32>, vector<16x1024xf32> -> vector<144x1024xf32>
    %367 = arith.truncf %366 : vector<144x1024xf32> to vector<144x1024xbf16>
    %cst_100 = arith.constant dense<0.000000e+00> : vector<8x1024xf32>
    %368 = tpu.matmul %339, %367, %cst_100 {dimension_numbers = #tpu.dot_dimension_numbers<[1], [0], [0], [1], [0, 0, 1, 1], [], []>} : vector<8x144xbf16>, vector<144x1024xbf16>, vector<8x1024xf32> -> vector<8x1024xf32>
    %369 = vector.broadcast %340 : vector<8x1xf32> to vector<8x1024xf32>
    %370 = arith.addf %368, %369 : vector<8x1024xf32>
    %cst_101 = arith.constant 0.000000e+00 : f32
    %371 = vector.broadcast %cst_101 : f32 to vector<8x1024xf32>
    %372 = arith.maximumf %370, %371 : vector<8x1024xf32>
    %cst_102 = arith.constant 0.000000e+00 : f32
    %373 = vector.broadcast %cst_102 : f32 to vector<8x33xf32>
    %374 = tpu.concatenate %373, %372, %373 in 1 : vector<8x33xf32>, vector<8x1024xf32>, vector<8x33xf32> -> vector<8x1090xf32>
    %375 = vector.extract_strided_slice %374 {offsets = [0, 0], sizes = [8, 1024], strides = [1, 1]} : vector<8x1090xf32> to vector<8x1024xf32>
    %376 = vector.broadcast %334 : vector<1x1024xf32> to vector<8x1024xf32>
    %377 = arith.mulf %375, %376 : vector<8x1024xf32>
    %378 = vector.extract_strided_slice %374 {offsets = [0, 1], sizes = [8, 1024], strides = [1, 1]} : vector<8x1090xf32> to vector<8x1024xf32>
    %379 = vector.extract_strided_slice %374 {offsets = [0, 2], sizes = [8, 1024], strides = [1, 1]} : vector<8x1090xf32> to vector<8x1024xf32>
    %380 = vector.broadcast %338 : vector<1x1024xf32> to vector<8x1024xf32>
    %381 = arith.mulf %379, %380 : vector<8x1024xf32>
    %382 = vector.extract_strided_slice %374 {offsets = [0, 32], sizes = [8, 1024], strides = [1, 1]} : vector<8x1090xf32> to vector<8x1024xf32>
    %383 = vector.broadcast %334 : vector<1x1024xf32> to vector<8x1024xf32>
    %384 = arith.mulf %382, %383 : vector<8x1024xf32>
    %385 = vector.extract_strided_slice %374 {offsets = [0, 33], sizes = [8, 1024], strides = [1, 1]} : vector<8x1090xf32> to vector<8x1024xf32>
    %386 = vector.extract_strided_slice %374 {offsets = [0, 34], sizes = [8, 1024], strides = [1, 1]} : vector<8x1090xf32> to vector<8x1024xf32>
    %387 = vector.broadcast %338 : vector<1x1024xf32> to vector<8x1024xf32>
    %388 = arith.mulf %386, %387 : vector<8x1024xf32>
    %389 = vector.extract_strided_slice %374 {offsets = [0, 64], sizes = [8, 1024], strides = [1, 1]} : vector<8x1090xf32> to vector<8x1024xf32>
    %390 = vector.broadcast %334 : vector<1x1024xf32> to vector<8x1024xf32>
    %391 = arith.mulf %389, %390 : vector<8x1024xf32>
    %392 = vector.extract_strided_slice %374 {offsets = [0, 65], sizes = [8, 1024], strides = [1, 1]} : vector<8x1090xf32> to vector<8x1024xf32>
    %393 = vector.extract_strided_slice %374 {offsets = [0, 66], sizes = [8, 1024], strides = [1, 1]} : vector<8x1090xf32> to vector<8x1024xf32>
    %394 = vector.broadcast %338 : vector<1x1024xf32> to vector<8x1024xf32>
    %395 = arith.mulf %393, %394 : vector<8x1024xf32>
    %396 = tpu.concatenate %377, %378, %381, %384, %385, %388, %391, %392, %395 in 0 : vector<8x1024xf32>, vector<8x1024xf32>, vector<8x1024xf32>, vector<8x1024xf32>, vector<8x1024xf32>, vector<8x1024xf32>, vector<8x1024xf32>, vector<8x1024xf32>, vector<8x1024xf32> -> vector<72x1024xf32>
    %397 = arith.truncf %396 : vector<72x1024xf32> to vector<72x1024xbf16>
    %cst_103 = arith.constant dense<0.000000e+00> : vector<8x1024xf32>
    %398 = tpu.matmul %341, %397, %cst_103 {dimension_numbers = #tpu.dot_dimension_numbers<[1], [0], [0], [1], [0, 0, 1, 1], [], []>} : vector<8x72xbf16>, vector<72x1024xbf16>, vector<8x1024xf32> -> vector<8x1024xf32>
    %399 = vector.broadcast %342 : vector<8x1xf32> to vector<8x1024xf32>
    %400 = arith.addf %398, %399 : vector<8x1024xf32>
    %cst_104 = arith.constant 0.000000e+00 : f32
    %401 = vector.broadcast %cst_104 : f32 to vector<8x1024xf32>
    %402 = arith.maximumf %400, %401 : vector<8x1024xf32>
    %c0_105 = arith.constant 0 : index
    %c0_106 = arith.constant 0 : index
    %c0_107 = arith.constant 0 : index
    %403 = vector.load %arg30[%c0_105, %c0_106, %c0_107] : memref<1x8x1024xf32, #tpu.memory_space<vmem>>, vector<1x8x1024xf32>
    %404 = vector.shape_cast %403 : vector<1x8x1024xf32> to vector<8x1024xf32>
    %405 = vector.shape_cast %402 : vector<8x1024xf32> to vector<1x8x1024xf32>
    tpu.vector_store %arg30[%c0_105, %c0_106, %c0_107], %405 {strides = array<i32>} : memref<1x8x1024xf32, #tpu.memory_space<vmem>>, vector<1x8x1024xf32>,
    return
  }
  func.func @transform_0(%arg0: i32) -> (i32, i32, i32) {
    %c0_i32 = arith.constant 0 : i32
    %c0_i32_0 = arith.constant 0 : i32
    %c0_i32_1 = arith.constant 0 : i32
    return %arg0, %c0_i32, %c0_i32_0 : i32, i32, i32
  }
  func.func @transform_1(%arg0: i32) -> (i32, i32, i32) {
    %c0_i32 = arith.constant 0 : i32
    %c0_i32_0 = arith.constant 0 : i32
    %c0_i32_1 = arith.constant 0 : i32
    return %arg0, %c0_i32, %c0_i32_0 : i32, i32, i32
  }
  func.func @transform_2(%arg0: i32) -> (i32, i32, i32) {
    %c0_i32 = arith.constant 0 : i32
    %c0_i32_0 = arith.constant 0 : i32
    %c0_i32_1 = arith.constant 0 : i32
    return %arg0, %c0_i32, %c0_i32_0 : i32, i32, i32
  }
  func.func @transform_3(%arg0: i32) -> (i32, i32, i32) {
    %c0_i32 = arith.constant 0 : i32
    %c0_i32_0 = arith.constant 0 : i32
    %c0_i32_1 = arith.constant 0 : i32
    return %arg0, %c0_i32, %c0_i32_0 : i32, i32, i32
  }
  func.func @transform_4(%arg0: i32) -> (i32, i32, i32) {
    %c0_i32 = arith.constant 0 : i32
    %c0_i32_0 = arith.constant 0 : i32
    %c0_i32_1 = arith.constant 0 : i32
    return %arg0, %c0_i32, %c0_i32_0 : i32, i32, i32
  }
  func.func @transform_5(%arg0: i32) -> (i32, i32) {
    %c0_i32 = arith.constant 0 : i32
    %c0_i32_0 = arith.constant 0 : i32
    %c0_i32_1 = arith.constant 0 : i32
    return %c0_i32, %c0_i32_0 : i32, i32
  }
  func.func @transform_6(%arg0: i32) -> (i32, i32) {
    %c0_i32 = arith.constant 0 : i32
    %c0_i32_0 = arith.constant 0 : i32
    %c0_i32_1 = arith.constant 0 : i32
    return %c0_i32, %c0_i32_0 : i32, i32
  }
  func.func @transform_7(%arg0: i32) -> (i32, i32) {
    %c0_i32 = arith.constant 0 : i32
    %c0_i32_0 = arith.constant 0 : i32
    %c0_i32_1 = arith.constant 0 : i32
    return %c0_i32, %c0_i32_0 : i32, i32
  }
  func.func @transform_8(%arg0: i32) -> (i32, i32) {
    %c0_i32 = arith.constant 0 : i32
    %c0_i32_0 = arith.constant 0 : i32
    %c0_i32_1 = arith.constant 0 : i32
    return %c0_i32, %c0_i32_0 : i32, i32
  }
  func.func @transform_9(%arg0: i32) -> (i32, i32) {
    %c0_i32 = arith.constant 0 : i32
    %c0_i32_0 = arith.constant 0 : i32
    %c0_i32_1 = arith.constant 0 : i32
    return %c0_i32, %c0_i32_0 : i32, i32
  }
  func.func @transform_10(%arg0: i32) -> (i32, i32) {
    %c0_i32 = arith.constant 0 : i32
    %c0_i32_0 = arith.constant 0 : i32
    %c0_i32_1 = arith.constant 0 : i32
    return %c0_i32, %c0_i32_0 : i32, i32
  }
  func.func @transform_11(%arg0: i32) -> (i32, i32) {
    %c0_i32 = arith.constant 0 : i32
    %c0_i32_0 = arith.constant 0 : i32
    %c0_i32_1 = arith.constant 0 : i32
    return %c0_i32, %c0_i32_0 : i32, i32
  }
  func.func @transform_12(%arg0: i32) -> (i32, i32) {
    %c0_i32 = arith.constant 0 : i32
    %c0_i32_0 = arith.constant 0 : i32
    %c0_i32_1 = arith.constant 0 : i32
    return %c0_i32, %c0_i32_0 : i32, i32
  }
  func.func @transform_13(%arg0: i32) -> (i32, i32) {
    %c0_i32 = arith.constant 0 : i32
    %c0_i32_0 = arith.constant 0 : i32
    %c0_i32_1 = arith.constant 0 : i32
    return %c0_i32, %c0_i32_0 : i32, i32
  }
  func.func @transform_14(%arg0: i32) -> (i32, i32) {
    %c0_i32 = arith.constant 0 : i32
    %c0_i32_0 = arith.constant 0 : i32
    %c0_i32_1 = arith.constant 0 : i32
    return %c0_i32, %c0_i32_0 : i32, i32
  }
  func.func @transform_15(%arg0: i32) -> (i32, i32) {
    %c0_i32 = arith.constant 0 : i32
    %c0_i32_0 = arith.constant 0 : i32
    %c0_i32_1 = arith.constant 0 : i32
    return %c0_i32, %c0_i32_0 : i32, i32
  }
  func.func @transform_16(%arg0: i32) -> (i32, i32) {
    %c0_i32 = arith.constant 0 : i32
    %c0_i32_0 = arith.constant 0 : i32
    %c0_i32_1 = arith.constant 0 : i32
    return %c0_i32, %c0_i32_0 : i32, i32
  }
  func.func @transform_17(%arg0: i32) -> (i32, i32) {
    %c0_i32 = arith.constant 0 : i32
    %c0_i32_0 = arith.constant 0 : i32
    %c0_i32_1 = arith.constant 0 : i32
    return %c0_i32, %c0_i32_0 : i32, i32
  }
  func.func @transform_18(%arg0: i32) -> (i32, i32) {
    %c0_i32 = arith.constant 0 : i32
    %c0_i32_0 = arith.constant 0 : i32
    %c0_i32_1 = arith.constant 0 : i32
    return %c0_i32, %c0_i32_0 : i32, i32
  }
  func.func @transform_19(%arg0: i32) -> (i32, i32) {
    %c0_i32 = arith.constant 0 : i32
    %c0_i32_0 = arith.constant 0 : i32
    %c0_i32_1 = arith.constant 0 : i32
    return %c0_i32, %c0_i32_0 : i32, i32
  }
  func.func @transform_20(%arg0: i32) -> (i32, i32) {
    %c0_i32 = arith.constant 0 : i32
    %c0_i32_0 = arith.constant 0 : i32
    %c0_i32_1 = arith.constant 0 : i32
    return %c0_i32, %c0_i32_0 : i32, i32
  }
  func.func @transform_21(%arg0: i32) -> (i32, i32) {
    %c0_i32 = arith.constant 0 : i32
    %c0_i32_0 = arith.constant 0 : i32
    %c0_i32_1 = arith.constant 0 : i32
    return %c0_i32, %c0_i32_0 : i32, i32
  }
  func.func @transform_22(%arg0: i32) -> (i32, i32) {
    %c0_i32 = arith.constant 0 : i32
    %c0_i32_0 = arith.constant 0 : i32
    %c0_i32_1 = arith.constant 0 : i32
    return %c0_i32, %c0_i32_0 : i32, i32
  }
  func.func @transform_23(%arg0: i32) -> (i32, i32) {
    %c0_i32 = arith.constant 0 : i32
    %c0_i32_0 = arith.constant 0 : i32
    %c0_i32_1 = arith.constant 0 : i32
    return %c0_i32, %c0_i32_0 : i32, i32
  }
  func.func @transform_24(%arg0: i32) -> (i32, i32) {
    %c0_i32 = arith.constant 0 : i32
    %c0_i32_0 = arith.constant 0 : i32
    %c0_i32_1 = arith.constant 0 : i32
    return %c0_i32, %c0_i32_0 : i32, i32
  }
  func.func @transform_25(%arg0: i32) -> (i32, i32) {
    %c0_i32 = arith.constant 0 : i32
    %c0_i32_0 = arith.constant 0 : i32
    %c0_i32_1 = arith.constant 0 : i32
    return %c0_i32, %c0_i32_0 : i32, i32
  }
  func.func @transform_26(%arg0: i32) -> (i32, i32) {
    %c0_i32 = arith.constant 0 : i32
    %c0_i32_0 = arith.constant 0 : i32
    %c0_i32_1 = arith.constant 0 : i32
    return %c0_i32, %c0_i32_0 : i32, i32
  }
  func.func @transform_27(%arg0: i32) -> (i32, i32) {
    %c0_i32 = arith.constant 0 : i32
    %c0_i32_0 = arith.constant 0 : i32
    %c0_i32_1 = arith.constant 0 : i32
    return %c0_i32, %c0_i32_0 : i32, i32
  }
  func.func @transform_28(%arg0: i32) -> (i32, i32) {
    %c0_i32 = arith.constant 0 : i32
    %c0_i32_0 = arith.constant 0 : i32
    %c0_i32_1 = arith.constant 0 : i32
    return %c0_i32, %c0_i32_0 : i32, i32
  }
  func.func @transform_29(%arg0: i32) -> (i32, i32, i32) {
    %c0_i32 = arith.constant 0 : i32
    %c0_i32_0 = arith.constant 0 : i32
    %c0_i32_1 = arith.constant 0 : i32
    return %arg0, %c0_i32, %c0_i32_0 : i32, i32, i32
  }
}

</mosaic_0001>

<llo_original>
// kernel: tpu_custom_call.1
$region0: #{tpu_custom_call.1}
  #allocation0 [shape = 'u32[]', space=smem, size = 0x4, offset = 0x4, fixed_abs, tag = 'smem constant byte address 0x4 - core index']
  #allocation1 [shape = 'u32[144,128]{1,0:T(1,128)}', space=vmem, size = 0x12000, scoped, tag = 'internal scratch']
  %s0 = inlined_call_operand.smem [shape: u32[30], index: -1, kind: input, shape index: {}]
  %s1 = sld [smem:[%s0]]
  %s2 = scalar_lea.smem %s0, 1
  %s3 = sld [smem:[%s2]]
  %s4 = scalar_lea.smem %s0, 2
  %s5 = sld [smem:[%s4]]
  %s6 = scalar_lea.smem %s0, 3
  %s7 = sld [smem:[%s6]]
  %s8 = scalar_lea.smem %s0, 4
  %s9 = sld [smem:[%s8]]
  %s10 = scalar_lea.smem %s0, 5
  %s11 = sld [smem:[%s10]]
  %s12 = scalar_lea.smem %s0, 6
  %s13 = sld [smem:[%s12]]
  %s14 = scalar_lea.smem %s0, 7
  %s15 = sld [smem:[%s14]]
  %s16 = scalar_lea.smem %s0, 8
  %s17 = sld [smem:[%s16]]
  %s18 = scalar_lea.smem %s0, 9
  %s19 = sld [smem:[%s18]]
  %s20 = scalar_lea.smem %s0, 10
  %s21 = sld [smem:[%s20]]
  %s22 = scalar_lea.smem %s0, 11
  %s23 = sld [smem:[%s22]]
  %s24 = scalar_lea.smem %s0, 12
  %s25 = sld [smem:[%s24]]
  %s26 = scalar_lea.smem %s0, 13
  %s27 = sld [smem:[%s26]]
  %s28 = scalar_lea.smem %s0, 14
  %s29 = sld [smem:[%s28]]
  %s30 = scalar_lea.smem %s0, 15
  %s31 = sld [smem:[%s30]]
  %s32 = scalar_lea.smem %s0, 16
  %s33 = sld [smem:[%s32]]
  %s34 = scalar_lea.smem %s0, 17
  %s35 = sld [smem:[%s34]]
  %s36 = scalar_lea.smem %s0, 18
  %s37 = sld [smem:[%s36]]
  %s38 = scalar_lea.smem %s0, 19
  %s39 = sld [smem:[%s38]]
  %s40 = scalar_lea.smem %s0, 20
  %s41 = sld [smem:[%s40]]
  %s42 = scalar_lea.smem %s0, 21
  %s43 = sld [smem:[%s42]]
  %s44 = scalar_lea.smem %s0, 22
  %s45 = sld [smem:[%s44]]
  %s46 = scalar_lea.smem %s0, 23
  %s47 = sld [smem:[%s46]]
  %s48 = scalar_lea.smem %s0, 24
  %s49 = sld [smem:[%s48]]
  %s50 = scalar_lea.smem %s0, 25
  %s51 = sld [smem:[%s50]]
  %s52 = scalar_lea.smem %s0, 26
  %s53 = sld [smem:[%s52]]
  %s54 = scalar_lea.smem %s0, 27
  %s55 = sld [smem:[%s54]]
  %s56 = scalar_lea.smem %s0, 28
  %s57 = sld [smem:[%s56]]
  %s58 = scalar_lea.smem %s0, 29
  %s59 = sld [smem:[%s58]]
  %s60 = sld [smem:[#allocation0]]
  $region157: #{tpu_custom_call.1} parent=0
    _
  %s62 = ssub.s32 1, %s60
  %s63 = scalar_select 0, %s62, %s60
  $region1: #{tpu_custom_call.1} parent=0
    #allocation2 [shape = 'u8[1024]{0}', space=vmem, size = 0x400, scoped, tag = 'input window, operand 5, single buffered']
    #allocation3 [shape = 's32[2]{0}', space=sflag, size = 0x8, scoped, tag = 'scoped memory for tpu_custom_call.1']
    #allocation4 [shape = 's32[2]{0}', space=sflag, size = 0x8, scoped, tag = 'scoped memory for tpu_custom_call.1']
    #allocation5 [shape = 'u8[524288]{0}', space=vmem, size = 0x80000, scoped, tag = 'input window, operand 8, single buffered']
    #allocation6 [shape = 's32[1]{0}', space=sflag, size = 0x4, scoped, tag = 'scoped memory for tpu_custom_call.1']
    #allocation7 [shape = 'u8[65536]{0}', space=vmem, size = 0x10000, scoped, tag = 'output window, operand 0']
    %64 = vsyncpa [#allocation3], 0
    %65 = vsyncpa [#allocation6], 0
    %66 = vsyncpa [#allocation4], 0
    %s67 = scalar_lea.sflag [#allocation4], 1
    %68 = vsyncpa %s67, 0
    loop: start=0, step=1, limit=4
    $region2: #{tpu_custom_call.1} parent=1 // loop_pre_header
      _
    $region3: #{tpu_custom_call.1} parent=1 // loop_header
      %s70 = sphi 0, %s74
      %p71 = scmp.ge.s32.totalorder %s70, 4
      %s80 = sphi 0, %s82
      %s83 = sphi 0, %s80
      %s84 = sphi 0, %s83
      %s100 = sphi 0, %s84
      %s106 = sphi 0, %s108
      %s109 = sphi 0, %s106
      %s110 = sphi 0, %s109
      %s126 = sphi 0, %s110
      %s132 = sphi 0, %s134
      %s135 = sphi 0, %s132
      %s136 = sphi 0, %s135
      %s152 = sphi 0, %s136
      %s158 = sphi 0, %s160
      %s161 = sphi 0, %s158
      %s162 = sphi 0, %s161
      %s178 = sphi 0, %s162
      %s184 = sphi 0, %s186
      %s187 = sphi 0, %s184
      %s188 = sphi 0, %s187
      %s204 = sphi 0, %s188
      %s208 = sphi 0, %s208
      %s210 = sphi 0, %s208
      %s211 = sphi 0, %s210
      %s225 = sphi 0, %s211
      %s229 = sphi 0, %s229
      %s231 = sphi 0, %s229
      %s232 = sphi 0, %s231
      %s246 = sphi 0, %s232
      %s250 = sphi 0, %s250
      %s252 = sphi 0, %s250
      %s253 = sphi 0, %s252
      %s267 = sphi 0, %s253
      %s271 = sphi 0, %s271
      %s273 = sphi 0, %s271
      %s274 = sphi 0, %s273
      %s288 = sphi 0, %s274
      %s292 = sphi 0, %s292
      %s294 = sphi 0, %s292
      %s295 = sphi 0, %s294
      %s309 = sphi 0, %s295
      %s313 = sphi 0, %s313
      %s315 = sphi 0, %s313
      %s316 = sphi 0, %s315
      %s330 = sphi 0, %s316
      %s334 = sphi 0, %s334
      %s336 = sphi 0, %s334
      %s337 = sphi 0, %s336
      %s351 = sphi 0, %s337
      %s355 = sphi 0, %s355
      %s357 = sphi 0, %s355
      %s358 = sphi 0, %s357
      %s372 = sphi 0, %s358
      %s376 = sphi 0, %s376
      %s378 = sphi 0, %s376
      %s379 = sphi 0, %s378
      %s393 = sphi 0, %s379
      %s397 = sphi 0, %s397
      %s399 = sphi 0, %s397
      %s400 = sphi 0, %s399
      %s414 = sphi 0, %s400
      %s418 = sphi 0, %s418
      %s420 = sphi 0, %s418
      %s421 = sphi 0, %s420
      %s435 = sphi 0, %s421
      %s439 = sphi 0, %s439
      %s441 = sphi 0, %s439
      %s442 = sphi 0, %s441
      %s456 = sphi 0, %s442
      %s460 = sphi 0, %s460
      %s462 = sphi 0, %s460
      %s463 = sphi 0, %s462
      %s477 = sphi 0, %s463
      %s481 = sphi 0, %s481
      %s483 = sphi 0, %s481
      %s484 = sphi 0, %s483
      %s498 = sphi 0, %s484
      %s502 = sphi 0, %s502
      %s504 = sphi 0, %s502
      %s505 = sphi 0, %s504
      %s519 = sphi 0, %s505
      %s523 = sphi 0, %s523
      %s525 = sphi 0, %s523
      %s526 = sphi 0, %s525
      %s540 = sphi 0, %s526
      %s544 = sphi 0, %s544
      %s546 = sphi 0, %s544
      %s547 = sphi 0, %s546
      %s561 = sphi 0, %s547
      %s565 = sphi 0, %s565
      %s567 = sphi 0, %s565
      %s568 = sphi 0, %s567
      %s582 = sphi 0, %s568
      %s586 = sphi 0, %s586
      %s588 = sphi 0, %s586
      %s589 = sphi 0, %s588
      %s603 = sphi 0, %s589
      %s607 = sphi 0, %s607
      %s609 = sphi 0, %s607
      %s610 = sphi 0, %s609
      %s624 = sphi 0, %s610
      %s628 = sphi 0, %s628
      %s630 = sphi 0, %s628
      %s631 = sphi 0, %s630
      %s645 = sphi 0, %s631
      %s649 = sphi 0, %s649
      %s651 = sphi 0, %s649
      %s652 = sphi 0, %s651
      %s666 = sphi 0, %s652
      %s670 = sphi 0, %s670
      %s672 = sphi 0, %s670
      %s673 = sphi 0, %s672
      %s687 = sphi 0, %s673
      %s691 = sphi 0, %s691
      %s693 = sphi 0, %s691
      %s694 = sphi 0, %s693
      %s708 = sphi 0, %s694
      %s714 = sphi 0, %s716
      %s717 = sphi 0, %s714
      %s718 = sphi 0, %s717
      %s734 = sphi 0, %s718
    $region4: #{tpu_custom_call.1} parent=1 // loop_header_branch
      %73 = sbr.rel (%p71) target = $region8
    $region5: #{tpu_custom_call.1} parent=1 // loop_body
      %s75 = ssub.s32 %s70, 1
      %s76 = ssub.s32 %s70, 2
      %s77 = sadd.s32 %s70, 1
      %s78 = ssub.s32 %s70, %s77
      %p79 = scmp.eq.s32.totalorder %s78, 0
      %s81 = sadd.s32 %s80, 1
      %s82 = scalar_select %p79, %s80, %s81
      %p85 = pneg %p79
      %p86 = scmp.eq.s32.totalorder %s70, 1
      %p87 = por %p85, %p86
      %p88 = scmp.ne.s32.totalorder %s80, %s83
      %p89 = scmp.eq.s32.totalorder %s70, 0
      %p90 = por %p88, %p89
      %p91 = scmp.ne.s32.totalorder %s80, %s83
      %p92 = scmp.eq.s32.totalorder %s75, 1
      %p93 = por %p91, %p92
      %p94 = scmp.ne.s32.totalorder %s83, %s84
      %p95 = scmp.eq.s32.totalorder %s75, 0
      %p96 = por %p94, %p95
      %p97 = scmp.ne.s32.totalorder %s83, %s84
      %p98 = scmp.eq.s32.totalorder %s76, 1
      %p99 = por %p97, %p98
      %p101 = scmp.ne.s32.totalorder %s84, %s100
      %p102 = scmp.eq.s32.totalorder %s76, 0
      %p103 = por %p101, %p102
      %s104 = ssub.s32 %s70, %s77
      %p105 = scmp.eq.s32.totalorder %s104, 0
      %s107 = sadd.s32 %s106, 1
      %s108 = scalar_select %p105, %s106, %s107
      %p111 = pneg %p105
      %p112 = scmp.eq.s32.totalorder %s70, 1
      %p113 = por %p111, %p112
      %p114 = scmp.ne.s32.totalorder %s106, %s109
      %p115 = scmp.eq.s32.totalorder %s70, 0
      %p116 = por %p114, %p115
      %p117 = scmp.ne.s32.totalorder %s106, %s109
      %p118 = scmp.eq.s32.totalorder %s75, 1
      %p119 = por %p117, %p118
      %p120 = scmp.ne.s32.totalorder %s109, %s110
      %p121 = scmp.eq.s32.totalorder %s75, 0
      %p122 = por %p120, %p121
      %p123 = scmp.ne.s32.totalorder %s109, %s110
      %p124 = scmp.eq.s32.totalorder %s76, 1
      %p125 = por %p123, %p124
      %p127 = scmp.ne.s32.totalorder %s110, %s126
      %p128 = scmp.eq.s32.totalorder %s76, 0
      %p129 = por %p127, %p128
      %s130 = ssub.s32 %s70, %s77
      %p131 = scmp.eq.s32.totalorder %s130, 0
      %s133 = sadd.s32 %s132, 1
      %s134 = scalar_select %p131, %s132, %s133
      %p137 = pneg %p131
      %p138 = scmp.eq.s32.totalorder %s70, 1
      %p139 = por %p137, %p138
      %p140 = scmp.ne.s32.totalorder %s132, %s135
      %p141 = scmp.eq.s32.totalorder %s70, 0
      %p142 = por %p140, %p141
      %p143 = scmp.ne.s32.totalorder %s132, %s135
      %p144 = scmp.eq.s32.totalorder %s75, 1
      %p145 = por %p143, %p144
      %p146 = scmp.ne.s32.totalorder %s135, %s136
      %p147 = scmp.eq.s32.totalorder %s75, 0
      %p148 = por %p146, %p147
      %p149 = scmp.ne.s32.totalorder %s135, %s136
      %p150 = scmp.eq.s32.totalorder %s76, 1
      %p151 = por %p149, %p150
      %p153 = scmp.ne.s32.totalorder %s136, %s152
      %p154 = scmp.eq.s32.totalorder %s76, 0
      %p155 = por %p153, %p154
      %s156 = ssub.s32 %s70, %s77
      %p157 = scmp.eq.s32.totalorder %s156, 0
      %s159 = sadd.s32 %s158, 1
      %s160 = scalar_select %p157, %s158, %s159
      %p163 = pneg %p157
      %p164 = scmp.eq.s32.totalorder %s70, 1
      %p165 = por %p163, %p164
      %p166 = scmp.ne.s32.totalorder %s158, %s161
      %p167 = scmp.eq.s32.totalorder %s70, 0
      %p168 = por %p166, %p167
      %p169 = scmp.ne.s32.totalorder %s158, %s161
      %p170 = scmp.eq.s32.totalorder %s75, 1
      %p171 = por %p169, %p170
      %p172 = scmp.ne.s32.totalorder %s161, %s162
      %p173 = scmp.eq.s32.totalorder %s75, 0
      %p174 = por %p172, %p173
      %p175 = scmp.ne.s32.totalorder %s161, %s162
      %p176 = scmp.eq.s32.totalorder %s76, 1
      %p177 = por %p175, %p176
      %p179 = scmp.ne.s32.totalorder %s162, %s178
      %p180 = scmp.eq.s32.totalorder %s76, 0
      %p181 = por %p179, %p180
      %s182 = ssub.s32 %s70, %s77
      %p183 = scmp.eq.s32.totalorder %s182, 0
      %s185 = sadd.s32 %s184, 1
      %s186 = scalar_select %p183, %s184, %s185
      %p189 = pneg %p183
      %p190 = scmp.eq.s32.totalorder %s70, 1
      %p191 = por %p189, %p190
      %p192 = scmp.ne.s32.totalorder %s184, %s187
      %p193 = scmp.eq.s32.totalorder %s70, 0
      %p194 = por %p192, %p193
      %p195 = scmp.ne.s32.totalorder %s184, %s187
      %p196 = scmp.eq.s32.totalorder %s75, 1
      %p197 = por %p195, %p196
      %p198 = scmp.ne.s32.totalorder %s187, %s188
      %p199 = scmp.eq.s32.totalorder %s75, 0
      %p200 = por %p198, %p199
      %p201 = scmp.ne.s32.totalorder %s187, %s188
      %p202 = scmp.eq.s32.totalorder %s76, 1
      %p203 = por %p201, %p202
      %p205 = scmp.ne.s32.totalorder %s188, %s204
      %p206 = scmp.eq.s32.totalorder %s76, 0
      %p207 = por %p205, %p206
      %s209 = sadd.s32 %s208, 1
      %p212 = scmp.eq.s32.totalorder %s70, 1
      %p213 = scmp.ne.s32.totalorder %s208, %s210
      %p214 = scmp.eq.s32.totalorder %s70, 0
      %p215 = por %p213, %p214
      %p216 = scmp.ne.s32.totalorder %s208, %s210
      %p217 = scmp.eq.s32.totalorder %s75, 1
      %p218 = por %p216, %p217
      %p219 = scmp.ne.s32.totalorder %s210, %s211
      %p220 = scmp.eq.s32.totalorder %s75, 0
      %p221 = por %p219, %p220
      %p222 = scmp.ne.s32.totalorder %s210, %s211
      %p223 = scmp.eq.s32.totalorder %s76, 1
      %p224 = por %p222, %p223
      %p226 = scmp.ne.s32.totalorder %s211, %s225
      %p227 = scmp.eq.s32.totalorder %s76, 0
      %p228 = por %p226, %p227
      %s230 = sadd.s32 %s229, 1
      %p233 = scmp.eq.s32.totalorder %s70, 1
      %p234 = scmp.ne.s32.totalorder %s229, %s231
      %p235 = scmp.eq.s32.totalorder %s70, 0
      %p236 = por %p234, %p235
      %p237 = scmp.ne.s32.totalorder %s229, %s231
      %p238 = scmp.eq.s32.totalorder %s75, 1
      %p239 = por %p237, %p238
      %p240 = scmp.ne.s32.totalorder %s231, %s232
      %p241 = scmp.eq.s32.totalorder %s75, 0
      %p242 = por %p240, %p241
      %p243 = scmp.ne.s32.totalorder %s231, %s232
      %p244 = scmp.eq.s32.totalorder %s76, 1
      %p245 = por %p243, %p244
      %p247 = scmp.ne.s32.totalorder %s232, %s246
      %p248 = scmp.eq.s32.totalorder %s76, 0
      %p249 = por %p247, %p248
      %s251 = sadd.s32 %s250, 1
      %p254 = scmp.eq.s32.totalorder %s70, 1
      %p255 = scmp.ne.s32.totalorder %s250, %s252
      %p256 = scmp.eq.s32.totalorder %s70, 0
      %p257 = por %p255, %p256
      %p258 = scmp.ne.s32.totalorder %s250, %s252
      %p259 = scmp.eq.s32.totalorder %s75, 1
      %p260 = por %p258, %p259
      %p261 = scmp.ne.s32.totalorder %s252, %s253
      %p262 = scmp.eq.s32.totalorder %s75, 0
      %p263 = por %p261, %p262
      %p264 = scmp.ne.s32.totalorder %s252, %s253
      %p265 = scmp.eq.s32.totalorder %s76, 1
      %p266 = por %p264, %p265
      %p268 = scmp.ne.s32.totalorder %s253, %s267
      %p269 = scmp.eq.s32.totalorder %s76, 0
      %p270 = por %p268, %p269
      %s272 = sadd.s32 %s271, 1
      %p275 = scmp.eq.s32.totalorder %s70, 1
      %p276 = scmp.ne.s32.totalorder %s271, %s273
      %p277 = scmp.eq.s32.totalorder %s70, 0
      %p278 = por %p276, %p277
      %p279 = scmp.ne.s32.totalorder %s271, %s273
      %p280 = scmp.eq.s32.totalorder %s75, 1
      %p281 = por %p279, %p280
      %p282 = scmp.ne.s32.totalorder %s273, %s274
      %p283 = scmp.eq.s32.totalorder %s75, 0
      %p284 = por %p282, %p283
      %p285 = scmp.ne.s32.totalorder %s273, %s274
      %p286 = scmp.eq.s32.totalorder %s76, 1
      %p287 = por %p285, %p286
      %p289 = scmp.ne.s32.totalorder %s274, %s288
      %p290 = scmp.eq.s32.totalorder %s76, 0
      %p291 = por %p289, %p290
      %s293 = sadd.s32 %s292, 1
      %p296 = scmp.eq.s32.totalorder %s70, 1
      %p297 = scmp.ne.s32.totalorder %s292, %s294
      %p298 = scmp.eq.s32.totalorder %s70, 0
      %p299 = por %p297, %p298
      %p300 = scmp.ne.s32.totalorder %s292, %s294
      %p301 = scmp.eq.s32.totalorder %s75, 1
      %p302 = por %p300, %p301
      %p303 = scmp.ne.s32.totalorder %s294, %s295
      %p304 = scmp.eq.s32.totalorder %s75, 0
      %p305 = por %p303, %p304
      %p306 = scmp.ne.s32.totalorder %s294, %s295
      %p307 = scmp.eq.s32.totalorder %s76, 1
      %p308 = por %p306, %p307
      %p310 = scmp.ne.s32.totalorder %s295, %s309
      %p311 = scmp.eq.s32.totalorder %s76, 0
      %p312 = por %p310, %p311
      %s314 = sadd.s32 %s313, 1
      %p317 = scmp.eq.s32.totalorder %s70, 1
      %p318 = scmp.ne.s32.totalorder %s313, %s315
      %p319 = scmp.eq.s32.totalorder %s70, 0
      %p320 = por %p318, %p319
      %p321 = scmp.ne.s32.totalorder %s313, %s315
      %p322 = scmp.eq.s32.totalorder %s75, 1
      %p323 = por %p321, %p322
      %p324 = scmp.ne.s32.totalorder %s315, %s316
      %p325 = scmp.eq.s32.totalorder %s75, 0
      %p326 = por %p324, %p325
      %p327 = scmp.ne.s32.totalorder %s315, %s316
      %p328 = scmp.eq.s32.totalorder %s76, 1
      %p329 = por %p327, %p328
      %p331 = scmp.ne.s32.totalorder %s316, %s330
      %p332 = scmp.eq.s32.totalorder %s76, 0
      %p333 = por %p331, %p332
      %s335 = sadd.s32 %s334, 1
      %p338 = scmp.eq.s32.totalorder %s70, 1
      %p339 = scmp.ne.s32.totalorder %s334, %s336
      %p340 = scmp.eq.s32.totalorder %s70, 0
      %p341 = por %p339, %p340
      %p342 = scmp.ne.s32.totalorder %s334, %s336
      %p343 = scmp.eq.s32.totalorder %s75, 1
      %p344 = por %p342, %p343
      %p345 = scmp.ne.s32.totalorder %s336, %s337
      %p346 = scmp.eq.s32.totalorder %s75, 0
      %p347 = por %p345, %p346
      %p348 = scmp.ne.s32.totalorder %s336, %s337
      %p349 = scmp.eq.s32.totalorder %s76, 1
      %p350 = por %p348, %p349
      %p352 = scmp.ne.s32.totalorder %s337, %s351
      %p353 = scmp.eq.s32.totalorder %s76, 0
      %p354 = por %p352, %p353
      %s356 = sadd.s32 %s355, 1
      %p359 = scmp.eq.s32.totalorder %s70, 1
      %p360 = scmp.ne.s32.totalorder %s355, %s357
      %p361 = scmp.eq.s32.totalorder %s70, 0
      %p362 = por %p360, %p361
      %p363 = scmp.ne.s32.totalorder %s355, %s357
      %p364 = scmp.eq.s32.totalorder %s75, 1
      %p365 = por %p363, %p364
      %p366 = scmp.ne.s32.totalorder %s357, %s358
      %p367 = scmp.eq.s32.totalorder %s75, 0
      %p368 = por %p366, %p367
      %p369 = scmp.ne.s32.totalorder %s357, %s358
      %p370 = scmp.eq.s32.totalorder %s76, 1
      %p371 = por %p369, %p370
      %p373 = scmp.ne.s32.totalorder %s358, %s372
      %p374 = scmp.eq.s32.totalorder %s76, 0
      %p375 = por %p373, %p374
      %s377 = sadd.s32 %s376, 1
      %p380 = scmp.eq.s32.totalorder %s70, 1
      %p381 = scmp.ne.s32.totalorder %s376, %s378
      %p382 = scmp.eq.s32.totalorder %s70, 0
      %p383 = por %p381, %p382
      %p384 = scmp.ne.s32.totalorder %s376, %s378
      %p385 = scmp.eq.s32.totalorder %s75, 1
      %p386 = por %p384, %p385
      %p387 = scmp.ne.s32.totalorder %s378, %s379
      %p388 = scmp.eq.s32.totalorder %s75, 0
      %p389 = por %p387, %p388
      %p390 = scmp.ne.s32.totalorder %s378, %s379
      %p391 = scmp.eq.s32.totalorder %s76, 1
      %p392 = por %p390, %p391
      %p394 = scmp.ne.s32.totalorder %s379, %s393
      %p395 = scmp.eq.s32.totalorder %s76, 0
      %p396 = por %p394, %p395
      %s398 = sadd.s32 %s397, 1
      %p401 = scmp.eq.s32.totalorder %s70, 1
      %p402 = scmp.ne.s32.totalorder %s397, %s399
      %p403 = scmp.eq.s32.totalorder %s70, 0
      %p404 = por %p402, %p403
      %p405 = scmp.ne.s32.totalorder %s397, %s399
      %p406 = scmp.eq.s32.totalorder %s75, 1
      %p407 = por %p405, %p406
      %p408 = scmp.ne.s32.totalorder %s399, %s400
      %p409 = scmp.eq.s32.totalorder %s75, 0
      %p410 = por %p408, %p409
      %p411 = scmp.ne.s32.totalorder %s399, %s400
      %p412 = scmp.eq.s32.totalorder %s76, 1
      %p413 = por %p411, %p412
      %p415 = scmp.ne.s32.totalorder %s400, %s414
      %p416 = scmp.eq.s32.totalorder %s76, 0
      %p417 = por %p415, %p416
      %s419 = sadd.s32 %s418, 1
      %p422 = scmp.eq.s32.totalorder %s70, 1
      %p423 = scmp.ne.s32.totalorder %s418, %s420
      %p424 = scmp.eq.s32.totalorder %s70, 0
      %p425 = por %p423, %p424
      %p426 = scmp.ne.s32.totalorder %s418, %s420
      %p427 = scmp.eq.s32.totalorder %s75, 1
      %p428 = por %p426, %p427
      %p429 = scmp.ne.s32.totalorder %s420, %s421
      %p430 = scmp.eq.s32.totalorder %s75, 0
      %p431 = por %p429, %p430
      %p432 = scmp.ne.s32.totalorder %s420, %s421
      %p433 = scmp.eq.s32.totalorder %s76, 1
      %p434 = por %p432, %p433
      %p436 = scmp.ne.s32.totalorder %s421, %s435
      %p437 = scmp.eq.s32.totalorder %s76, 0
      %p438 = por %p436, %p437
      %s440 = sadd.s32 %s439, 1
      %p443 = scmp.eq.s32.totalorder %s70, 1
      %p444 = scmp.ne.s32.totalorder %s439, %s441
      %p445 = scmp.eq.s32.totalorder %s70, 0
      %p446 = por %p444, %p445
      %p447 = scmp.ne.s32.totalorder %s439, %s441
      %p448 = scmp.eq.s32.totalorder %s75, 1
      %p449 = por %p447, %p448
      %p450 = scmp.ne.s32.totalorder %s441, %s442
      %p451 = scmp.eq.s32.totalorder %s75, 0
      %p452 = por %p450, %p451
      %p453 = scmp.ne.s32.totalorder %s441, %s442
      %p454 = scmp.eq.s32.totalorder %s76, 1
      %p455 = por %p453, %p454
      %p457 = scmp.ne.s32.totalorder %s442, %s456
      %p458 = scmp.eq.s32.totalorder %s76, 0
      %p459 = por %p457, %p458
      %s461 = sadd.s32 %s460, 1
      %p464 = scmp.eq.s32.totalorder %s70, 1
      %p465 = scmp.ne.s32.totalorder %s460, %s462
      %p466 = scmp.eq.s32.totalorder %s70, 0
      %p467 = por %p465, %p466
      %p468 = scmp.ne.s32.totalorder %s460, %s462
      %p469 = scmp.eq.s32.totalorder %s75, 1
      %p470 = por %p468, %p469
      %p471 = scmp.ne.s32.totalorder %s462, %s463
      %p472 = scmp.eq.s32.totalorder %s75, 0
      %p473 = por %p471, %p472
      %p474 = scmp.ne.s32.totalorder %s462, %s463
      %p475 = scmp.eq.s32.totalorder %s76, 1
      %p476 = por %p474, %p475
      %p478 = scmp.ne.s32.totalorder %s463, %s477
      %p479 = scmp.eq.s32.totalorder %s76, 0
      %p480 = por %p478, %p479
      %s482 = sadd.s32 %s481, 1
      %p485 = scmp.eq.s32.totalorder %s70, 1
      %p486 = scmp.ne.s32.totalorder %s481, %s483
      %p487 = scmp.eq.s32.totalorder %s70, 0
      %p488 = por %p486, %p487
      %p489 = scmp.ne.s32.totalorder %s481, %s483
      %p490 = scmp.eq.s32.totalorder %s75, 1
      %p491 = por %p489, %p490
      %p492 = scmp.ne.s32.totalorder %s483, %s484
      %p493 = scmp.eq.s32.totalorder %s75, 0
      %p494 = por %p492, %p493
      %p495 = scmp.ne.s32.totalorder %s483, %s484
      %p496 = scmp.eq.s32.totalorder %s76, 1
      %p497 = por %p495, %p496
      %p499 = scmp.ne.s32.totalorder %s484, %s498
      %p500 = scmp.eq.s32.totalorder %s76, 0
      %p501 = por %p499, %p500
      %s503 = sadd.s32 %s502, 1
      %p506 = scmp.eq.s32.totalorder %s70, 1
      %p507 = scmp.ne.s32.totalorder %s502, %s504
      %p508 = scmp.eq.s32.totalorder %s70, 0
      %p509 = por %p507, %p508
      %p510 = scmp.ne.s32.totalorder %s502, %s504
      %p511 = scmp.eq.s32.totalorder %s75, 1
      %p512 = por %p510, %p511
      %p513 = scmp.ne.s32.totalorder %s504, %s505
      %p514 = scmp.eq.s32.totalorder %s75, 0
      %p515 = por %p513, %p514
      %p516 = scmp.ne.s32.totalorder %s504, %s505
      %p517 = scmp.eq.s32.totalorder %s76, 1
      %p518 = por %p516, %p517
      %p520 = scmp.ne.s32.totalorder %s505, %s519
      %p521 = scmp.eq.s32.totalorder %s76, 0
      %p522 = por %p520, %p521
      %s524 = sadd.s32 %s523, 1
      %p527 = scmp.eq.s32.totalorder %s70, 1
      %p528 = scmp.ne.s32.totalorder %s523, %s525
      %p529 = scmp.eq.s32.totalorder %s70, 0
      %p530 = por %p528, %p529
      %p531 = scmp.ne.s32.totalorder %s523, %s525
      %p532 = scmp.eq.s32.totalorder %s75, 1
      %p533 = por %p531, %p532
      %p534 = scmp.ne.s32.totalorder %s525, %s526
      %p535 = scmp.eq.s32.totalorder %s75, 0
      %p536 = por %p534, %p535
      %p537 = scmp.ne.s32.totalorder %s525, %s526
      %p538 = scmp.eq.s32.totalorder %s76, 1
      %p539 = por %p537, %p538
      %p541 = scmp.ne.s32.totalorder %s526, %s540
      %p542 = scmp.eq.s32.totalorder %s76, 0
      %p543 = por %p541, %p542
      %s545 = sadd.s32 %s544, 1
      %p548 = scmp.eq.s32.totalorder %s70, 1
      %p549 = scmp.ne.s32.totalorder %s544, %s546
      %p550 = scmp.eq.s32.totalorder %s70, 0
      %p551 = por %p549, %p550
      %p552 = scmp.ne.s32.totalorder %s544, %s546
      %p553 = scmp.eq.s32.totalorder %s75, 1
      %p554 = por %p552, %p553
      %p555 = scmp.ne.s32.totalorder %s546, %s547
      %p556 = scmp.eq.s32.totalorder %s75, 0
      %p557 = por %p555, %p556
      %p558 = scmp.ne.s32.totalorder %s546, %s547
      %p559 = scmp.eq.s32.totalorder %s76, 1
      %p560 = por %p558, %p559
      %p562 = scmp.ne.s32.totalorder %s547, %s561
      %p563 = scmp.eq.s32.totalorder %s76, 0
      %p564 = por %p562, %p563
      %s566 = sadd.s32 %s565, 1
      %p569 = scmp.eq.s32.totalorder %s70, 1
      %p570 = scmp.ne.s32.totalorder %s565, %s567
      %p571 = scmp.eq.s32.totalorder %s70, 0
      %p572 = por %p570, %p571
      %p573 = scmp.ne.s32.totalorder %s565, %s567
      %p574 = scmp.eq.s32.totalorder %s75, 1
      %p575 = por %p573, %p574
      %p576 = scmp.ne.s32.totalorder %s567, %s568
      %p577 = scmp.eq.s32.totalorder %s75, 0
      %p578 = por %p576, %p577
      %p579 = scmp.ne.s32.totalorder %s567, %s568
      %p580 = scmp.eq.s32.totalorder %s76, 1
      %p581 = por %p579, %p580
      %p583 = scmp.ne.s32.totalorder %s568, %s582
      %p584 = scmp.eq.s32.totalorder %s76, 0
      %p585 = por %p583, %p584
      %s587 = sadd.s32 %s586, 1
      %p590 = scmp.eq.s32.totalorder %s70, 1
      %p591 = scmp.ne.s32.totalorder %s586, %s588
      %p592 = scmp.eq.s32.totalorder %s70, 0
      %p593 = por %p591, %p592
      %p594 = scmp.ne.s32.totalorder %s586, %s588
      %p595 = scmp.eq.s32.totalorder %s75, 1
      %p596 = por %p594, %p595
      %p597 = scmp.ne.s32.totalorder %s588, %s589
      %p598 = scmp.eq.s32.totalorder %s75, 0
      %p599 = por %p597, %p598
      %p600 = scmp.ne.s32.totalorder %s588, %s589
      %p601 = scmp.eq.s32.totalorder %s76, 1
      %p602 = por %p600, %p601
      %p604 = scmp.ne.s32.totalorder %s589, %s603
      %p605 = scmp.eq.s32.totalorder %s76, 0
      %p606 = por %p604, %p605
      %s608 = sadd.s32 %s607, 1
      %p611 = scmp.eq.s32.totalorder %s70, 1
      %p612 = scmp.ne.s32.totalorder %s607, %s609
      %p613 = scmp.eq.s32.totalorder %s70, 0
      %p614 = por %p612, %p613
      %p615 = scmp.ne.s32.totalorder %s607, %s609
      %p616 = scmp.eq.s32.totalorder %s75, 1
      %p617 = por %p615, %p616
      %p618 = scmp.ne.s32.totalorder %s609, %s610
      %p619 = scmp.eq.s32.totalorder %s75, 0
      %p620 = por %p618, %p619
      %p621 = scmp.ne.s32.totalorder %s609, %s610
      %p622 = scmp.eq.s32.totalorder %s76, 1
      %p623 = por %p621, %p622
      %p625 = scmp.ne.s32.totalorder %s610, %s624
      %p626 = scmp.eq.s32.totalorder %s76, 0
      %p627 = por %p625, %p626
      %s629 = sadd.s32 %s628, 1
      %p632 = scmp.eq.s32.totalorder %s70, 1
      %p633 = scmp.ne.s32.totalorder %s628, %s630
      %p634 = scmp.eq.s32.totalorder %s70, 0
      %p635 = por %p633, %p634
      %p636 = scmp.ne.s32.totalorder %s628, %s630
      %p637 = scmp.eq.s32.totalorder %s75, 1
      %p638 = por %p636, %p637
      %p639 = scmp.ne.s32.totalorder %s630, %s631
      %p640 = scmp.eq.s32.totalorder %s75, 0
      %p641 = por %p639, %p640
      %p642 = scmp.ne.s32.totalorder %s630, %s631
      %p643 = scmp.eq.s32.totalorder %s76, 1
      %p644 = por %p642, %p643
      %p646 = scmp.ne.s32.totalorder %s631, %s645
      %p647 = scmp.eq.s32.totalorder %s76, 0
      %p648 = por %p646, %p647
      %s650 = sadd.s32 %s649, 1
      %p653 = scmp.eq.s32.totalorder %s70, 1
      %p654 = scmp.ne.s32.totalorder %s649, %s651
      %p655 = scmp.eq.s32.totalorder %s70, 0
      %p656 = por %p654, %p655
      %p657 = scmp.ne.s32.totalorder %s649, %s651
      %p658 = scmp.eq.s32.totalorder %s75, 1
      %p659 = por %p657, %p658
      %p660 = scmp.ne.s32.totalorder %s651, %s652
      %p661 = scmp.eq.s32.totalorder %s75, 0
      %p662 = por %p660, %p661
      %p663 = scmp.ne.s32.totalorder %s651, %s652
      %p664 = scmp.eq.s32.totalorder %s76, 1
      %p665 = por %p663, %p664
      %p667 = scmp.ne.s32.totalorder %s652, %s666
      %p668 = scmp.eq.s32.totalorder %s76, 0
      %p669 = por %p667, %p668
      %s671 = sadd.s32 %s670, 1
      %p674 = scmp.eq.s32.totalorder %s70, 1
      %p675 = scmp.ne.s32.totalorder %s670, %s672
      %p676 = scmp.eq.s32.totalorder %s70, 0
      %p677 = por %p675, %p676
      %p678 = scmp.ne.s32.totalorder %s670, %s672
      %p679 = scmp.eq.s32.totalorder %s75, 1
      %p680 = por %p678, %p679
      %p681 = scmp.ne.s32.totalorder %s672, %s673
      %p682 = scmp.eq.s32.totalorder %s75, 0
      %p683 = por %p681, %p682
      %p684 = scmp.ne.s32.totalorder %s672, %s673
      %p685 = scmp.eq.s32.totalorder %s76, 1
      %p686 = por %p684, %p685
      %p688 = scmp.ne.s32.totalorder %s673, %s687
      %p689 = scmp.eq.s32.totalorder %s76, 0
      %p690 = por %p688, %p689
      %s692 = sadd.s32 %s691, 1
      %p695 = scmp.eq.s32.totalorder %s70, 1
      %p696 = scmp.ne.s32.totalorder %s691, %s693
      %p697 = scmp.eq.s32.totalorder %s70, 0
      %p698 = por %p696, %p697
      %p699 = scmp.ne.s32.totalorder %s691, %s693
      %p700 = scmp.eq.s32.totalorder %s75, 1
      %p701 = por %p699, %p700
      %p702 = scmp.ne.s32.totalorder %s693, %s694
      %p703 = scmp.eq.s32.totalorder %s75, 0
      %p704 = por %p702, %p703
      %p705 = scmp.ne.s32.totalorder %s693, %s694
      %p706 = scmp.eq.s32.totalorder %s76, 1
      %p707 = por %p705, %p706
      %p709 = scmp.ne.s32.totalorder %s694, %s708
      %p710 = scmp.eq.s32.totalorder %s76, 0
      %p711 = por %p709, %p710
      %s712 = ssub.s32 %s70, %s77
      %p713 = scmp.eq.s32.totalorder %s712, 0
      %s715 = sadd.s32 %s714, 1
      %s716 = scalar_select %p713, %s714, %s715
      %p719 = pneg %p713
      %p720 = scmp.eq.s32.totalorder %s70, 1
      %p721 = por %p719, %p720
      %p722 = scmp.ne.s32.totalorder %s714, %s717
      %p723 = scmp.eq.s32.totalorder %s70, 0
      %p724 = por %p722, %p723
      %p725 = scmp.ne.s32.totalorder %s714, %s717
      %p726 = scmp.eq.s32.totalorder %s75, 1
      %p727 = por %p725, %p726
      %p728 = scmp.ne.s32.totalorder %s717, %s718
      %p729 = scmp.eq.s32.totalorder %s75, 0
      %p730 = por %p728, %p729
      %p731 = scmp.ne.s32.totalorder %s717, %s718
      %p732 = scmp.eq.s32.totalorder %s76, 1
      %p733 = por %p731, %p732
      %p735 = scmp.ne.s32.totalorder %s718, %s734
      %p736 = scmp.eq.s32.totalorder %s76, 0
      %p737 = por %p735, %p736
      %p738 = scmp.le.s32.totalorder 1, %s70
      %p739 = scmp.lt.s32.totalorder %s70, 3
      %p740 = pnand %p738, %p739
      %p741 = pneg %p740
      // Predicated region
      $region9: #{tpu_custom_call.1} parent=5 // pred_check
        _
      $region10: #{tpu_custom_call.1} parent=5 // pred_check_branch
        %743 = sbr.rel (%p740) target = $region12
      $region11: #{tpu_custom_call.1} parent=5 // pred_region
        %s744 = ssub.s32 %s70, 1
        // Predicated region
        $region13: #{tpu_custom_call.1} parent=11 // pred_check
          %p745 = pneg %p221
        $region14: #{tpu_custom_call.1} parent=11 // pred_check_branch
          %747 = sbr.rel (%p745) target = $region16
        $region15: #{tpu_custom_call.1} parent=11 // pred_region
          %s749 = ssub.s32 32, 32
          %750 = vsyncadd [#allocation3], %s749
          %s752 = sshll.u32 [#allocation2], 4
          %s753 = int_to_ptr.vmem [resolvable:$true] %s752
          %755 = dma.hbm_to_vmem [thread:$0]  %s11, 32, %s753, [#allocation3]
        $region16: #{tpu_custom_call.1} parent=11 // pred_fallthru
          _
        // Predicated region
        $region17: #{tpu_custom_call.1} parent=11 // pred_check
          %p756 = pneg %p242
        $region18: #{tpu_custom_call.1} parent=11 // pred_check_branch
          %758 = sbr.rel (%p756) target = $region20
        $region19: #{tpu_custom_call.1} parent=11 // pred_region
          _
        $region20: #{tpu_custom_call.1} parent=11 // pred_fallthru
          _
        // Predicated region
        $region21: #{tpu_custom_call.1} parent=11 // pred_check
          %p759 = pneg %p263
        $region22: #{tpu_custom_call.1} parent=11 // pred_check_branch
          %761 = sbr.rel (%p759) target = $region24
        $region23: #{tpu_custom_call.1} parent=11 // pred_region
          _
        $region24: #{tpu_custom_call.1} parent=11 // pred_fallthru
          _
        // Predicated region
        $region25: #{tpu_custom_call.1} parent=11 // pred_check
          %p762 = pneg %p284
        $region26: #{tpu_custom_call.1} parent=11 // pred_check_branch
          %764 = sbr.rel (%p762) target = $region28
        $region27: #{tpu_custom_call.1} parent=11 // pred_region
          %s766 = ssub.s32 16384, 16384
          %767 = vsyncadd [#allocation6], %s766
          %s768 = sshll.u32 [#allocation5], 4
          %s769 = int_to_ptr.vmem [resolvable:$true] %s768
          %774 = dma.hbm_to_vmem [thread:$0]  %s17, 16384, %s769, [#allocation6], 512, 512, 32
        $region28: #{tpu_custom_call.1} parent=11 // pred_fallthru
          _
        // Predicated region
        $region29: #{tpu_custom_call.1} parent=11 // pred_check
          %p775 = pneg %p305
        $region30: #{tpu_custom_call.1} parent=11 // pred_check_branch
          %777 = sbr.rel (%p775) target = $region32
        $region31: #{tpu_custom_call.1} parent=11 // pred_region
          _
        $region32: #{tpu_custom_call.1} parent=11 // pred_fallthru
          _
        // Predicated region
        $region33: #{tpu_custom_call.1} parent=11 // pred_check
          %p778 = pneg %p326
        $region34: #{tpu_custom_call.1} parent=11 // pred_check_branch
          %780 = sbr.rel (%p778) target = $region36
        $region35: #{tpu_custom_call.1} parent=11 // pred_region
          _
        $region36: #{tpu_custom_call.1} parent=11 // pred_fallthru
          _
        // Predicated region
        $region37: #{tpu_custom_call.1} parent=11 // pred_check
          %p781 = pneg %p347
        $region38: #{tpu_custom_call.1} parent=11 // pred_check_branch
          %783 = sbr.rel (%p781) target = $region40
        $region39: #{tpu_custom_call.1} parent=11 // pred_region
          _
        $region40: #{tpu_custom_call.1} parent=11 // pred_fallthru
          _
        // Predicated region
        $region41: #{tpu_custom_call.1} parent=11 // pred_check
          %p784 = pneg %p368
        $region42: #{tpu_custom_call.1} parent=11 // pred_check_branch
          %786 = sbr.rel (%p784) target = $region44
        $region43: #{tpu_custom_call.1} parent=11 // pred_region
          _
        $region44: #{tpu_custom_call.1} parent=11 // pred_fallthru
          _
        // Predicated region
        $region45: #{tpu_custom_call.1} parent=11 // pred_check
          %p787 = pneg %p389
        $region46: #{tpu_custom_call.1} parent=11 // pred_check_branch
          %789 = sbr.rel (%p787) target = $region48
        $region47: #{tpu_custom_call.1} parent=11 // pred_region
          _
        $region48: #{tpu_custom_call.1} parent=11 // pred_fallthru
          _
        // Predicated region
        $region49: #{tpu_custom_call.1} parent=11 // pred_check
          %p790 = pneg %p410
        $region50: #{tpu_custom_call.1} parent=11 // pred_check_branch
          %792 = sbr.rel (%p790) target = $region52
        $region51: #{tpu_custom_call.1} parent=11 // pred_region
          _
        $region52: #{tpu_custom_call.1} parent=11 // pred_fallthru
          _
        // Predicated region
        $region53: #{tpu_custom_call.1} parent=11 // pred_check
          %p793 = pneg %p431
        $region54: #{tpu_custom_call.1} parent=11 // pred_check_branch
          %795 = sbr.rel (%p793) target = $region56
        $region55: #{tpu_custom_call.1} parent=11 // pred_region
          _
        $region56: #{tpu_custom_call.1} parent=11 // pred_fallthru
          _
        // Predicated region
        $region57: #{tpu_custom_call.1} parent=11 // pred_check
          %p796 = pneg %p452
        $region58: #{tpu_custom_call.1} parent=11 // pred_check_branch
          %798 = sbr.rel (%p796) target = $region60
        $region59: #{tpu_custom_call.1} parent=11 // pred_region
          _
        $region60: #{tpu_custom_call.1} parent=11 // pred_fallthru
          _
        // Predicated region
        $region61: #{tpu_custom_call.1} parent=11 // pred_check
          %p799 = pneg %p473
        $region62: #{tpu_custom_call.1} parent=11 // pred_check_branch
          %801 = sbr.rel (%p799) target = $region64
        $region63: #{tpu_custom_call.1} parent=11 // pred_region
          _
        $region64: #{tpu_custom_call.1} parent=11 // pred_fallthru
          _
        // Predicated region
        $region65: #{tpu_custom_call.1} parent=11 // pred_check
          %p802 = pneg %p494
        $region66: #{tpu_custom_call.1} parent=11 // pred_check_branch
          %804 = sbr.rel (%p802) target = $region68
        $region67: #{tpu_custom_call.1} parent=11 // pred_region
          _
        $region68: #{tpu_custom_call.1} parent=11 // pred_fallthru
          _
        // Predicated region
        $region69: #{tpu_custom_call.1} parent=11 // pred_check
          %p805 = pneg %p515
        $region70: #{tpu_custom_call.1} parent=11 // pred_check_branch
          %807 = sbr.rel (%p805) target = $region72
        $region71: #{tpu_custom_call.1} parent=11 // pred_region
          _
        $region72: #{tpu_custom_call.1} parent=11 // pred_fallthru
          _
        // Predicated region
        $region73: #{tpu_custom_call.1} parent=11 // pred_check
          %p808 = pneg %p536
        $region74: #{tpu_custom_call.1} parent=11 // pred_check_branch
          %810 = sbr.rel (%p808) target = $region76
        $region75: #{tpu_custom_call.1} parent=11 // pred_region
          _
        $region76: #{tpu_custom_call.1} parent=11 // pred_fallthru
          _
        // Predicated region
        $region77: #{tpu_custom_call.1} parent=11 // pred_check
          %p811 = pneg %p557
        $region78: #{tpu_custom_call.1} parent=11 // pred_check_branch
          %813 = sbr.rel (%p811) target = $region80
        $region79: #{tpu_custom_call.1} parent=11 // pred_region
          _
        $region80: #{tpu_custom_call.1} parent=11 // pred_fallthru
          _
        // Predicated region
        $region81: #{tpu_custom_call.1} parent=11 // pred_check
          %p814 = pneg %p578
        $region82: #{tpu_custom_call.1} parent=11 // pred_check_branch
          %816 = sbr.rel (%p814) target = $region84
        $region83: #{tpu_custom_call.1} parent=11 // pred_region
          _
        $region84: #{tpu_custom_call.1} parent=11 // pred_fallthru
          _
        // Predicated region
        $region85: #{tpu_custom_call.1} parent=11 // pred_check
          %p817 = pneg %p599
        $region86: #{tpu_custom_call.1} parent=11 // pred_check_branch
          %819 = sbr.rel (%p817) target = $region88
        $region87: #{tpu_custom_call.1} parent=11 // pred_region
          _
        $region88: #{tpu_custom_call.1} parent=11 // pred_fallthru
          _
        // Predicated region
        $region89: #{tpu_custom_call.1} parent=11 // pred_check
          %p820 = pneg %p620
        $region90: #{tpu_custom_call.1} parent=11 // pred_check_branch
          %822 = sbr.rel (%p820) target = $region92
        $region91: #{tpu_custom_call.1} parent=11 // pred_region
          _
        $region92: #{tpu_custom_call.1} parent=11 // pred_fallthru
          _
        // Predicated region
        $region93: #{tpu_custom_call.1} parent=11 // pred_check
          %p823 = pneg %p641
        $region94: #{tpu_custom_call.1} parent=11 // pred_check_branch
          %825 = sbr.rel (%p823) target = $region96
        $region95: #{tpu_custom_call.1} parent=11 // pred_region
          _
        $region96: #{tpu_custom_call.1} parent=11 // pred_fallthru
          _
        // Predicated region
        $region97: #{tpu_custom_call.1} parent=11 // pred_check
          %p826 = pneg %p662
        $region98: #{tpu_custom_call.1} parent=11 // pred_check_branch
          %828 = sbr.rel (%p826) target = $region100
        $region99: #{tpu_custom_call.1} parent=11 // pred_region
          _
        $region100: #{tpu_custom_call.1} parent=11 // pred_fallthru
          _
        // Predicated region
        $region101: #{tpu_custom_call.1} parent=11 // pred_check
          %p829 = pneg %p683
        $region102: #{tpu_custom_call.1} parent=11 // pred_check_branch
          %831 = sbr.rel (%p829) target = $region104
        $region103: #{tpu_custom_call.1} parent=11 // pred_region
          _
        $region104: #{tpu_custom_call.1} parent=11 // pred_fallthru
          _
        // Predicated region
        $region105: #{tpu_custom_call.1} parent=11 // pred_check
          %p832 = pneg %p704
        $region106: #{tpu_custom_call.1} parent=11 // pred_check_branch
          %834 = sbr.rel (%p832) target = $region108
        $region107: #{tpu_custom_call.1} parent=11 // pred_region
          _
        $region108: #{tpu_custom_call.1} parent=11 // pred_fallthru
          _
      $region12: #{tpu_custom_call.1} parent=5 // pred_fallthru
        _
      %p835 = scmp.lt.s32.totalorder %s70, 2
      // Predicated region
      $region109: #{tpu_custom_call.1} parent=5 // pred_check
        %p836 = pneg %p835
      $region110: #{tpu_custom_call.1} parent=5 // pred_check_branch
        %838 = sbr.rel (%p836) target = $region112
      $region111: #{tpu_custom_call.1} parent=5 // pred_region
        // Predicated region
        $region113: #{tpu_custom_call.1} parent=111 // pred_check
          %p839 = pneg %p90
        $region114: #{tpu_custom_call.1} parent=111 // pred_check_branch
          %841 = sbr.rel (%p839) target = $region116
        $region115: #{tpu_custom_call.1} parent=111 // pred_region
          %p842 = scmp.lt.s32.totalorder %s70, 1
          %s843 = scalar_select %p842, %s70, 1
          %s844 = smul.addr %s843, 8
          %s845 = smul.addr %s844, 8
          %s846 = scalar_lea.vmem %s1, %s845
        $region116: #{tpu_custom_call.1} parent=111 // pred_fallthru
          _
        // Predicated region
        $region117: #{tpu_custom_call.1} parent=111 // pred_check
          %p847 = pneg %p116
        $region118: #{tpu_custom_call.1} parent=111 // pred_check_branch
          %849 = sbr.rel (%p847) target = $region120
        $region119: #{tpu_custom_call.1} parent=111 // pred_region
          %p850 = scmp.lt.s32.totalorder %s70, 1
          %s851 = scalar_select %p850, %s70, 1
          %s852 = smul.addr %s851, 8
          %s853 = smul.addr %s852, 8
          %s854 = scalar_lea.vmem %s3, %s853
        $region120: #{tpu_custom_call.1} parent=111 // pred_fallthru
          _
        // Predicated region
        $region121: #{tpu_custom_call.1} parent=111 // pred_check
          %p855 = pneg %p142
        $region122: #{tpu_custom_call.1} parent=111 // pred_check_branch
          %857 = sbr.rel (%p855) target = $region124
        $region123: #{tpu_custom_call.1} parent=111 // pred_region
          %p858 = scmp.lt.s32.totalorder %s70, 1
          %s859 = scalar_select %p858, %s70, 1
          %s860 = smul.addr %s859, 4
          %s861 = smul.addr %s860, 8
          %s862 = scalar_lea.vmem %s5, %s861
        $region124: #{tpu_custom_call.1} parent=111 // pred_fallthru
          _
        // Predicated region
        $region125: #{tpu_custom_call.1} parent=111 // pred_check
          %p863 = pneg %p168
        $region126: #{tpu_custom_call.1} parent=111 // pred_check_branch
          %865 = sbr.rel (%p863) target = $region128
        $region127: #{tpu_custom_call.1} parent=111 // pred_region
          %p866 = scmp.lt.s32.totalorder %s70, 1
          %s867 = scalar_select %p866, %s70, 1
          %s868 = smul.addr %s867, 2
          %s869 = smul.addr %s868, 8
          %s870 = scalar_lea.vmem %s7, %s869
        $region128: #{tpu_custom_call.1} parent=111 // pred_fallthru
          _
        // Predicated region
        $region129: #{tpu_custom_call.1} parent=111 // pred_check
          %p871 = pneg %p194
        $region130: #{tpu_custom_call.1} parent=111 // pred_check_branch
          %873 = sbr.rel (%p871) target = $region132
        $region131: #{tpu_custom_call.1} parent=111 // pred_region
          %p874 = scmp.lt.s32.totalorder %s70, 1
          %s875 = scalar_select %p874, %s70, 1
          %s876 = smul.addr %s875, 2
          %s877 = smul.addr %s876, 8
          %s878 = scalar_lea.vmem %s9, %s877
        $region132: #{tpu_custom_call.1} parent=111 // pred_fallthru
          _
      $region112: #{tpu_custom_call.1} parent=5 // pred_fallthru
        _
      %p879 = scmp.le.s32.totalorder 1, %s70
      %p880 = scmp.lt.s32.totalorder %s70, 3
      %p881 = pnand %p879, %p880
      %p882 = pneg %p881
      // Predicated region
      $region133: #{tpu_custom_call.1} parent=5 // pred_check
        _
      $region134: #{tpu_custom_call.1} parent=5 // pred_check_branch
        %884 = sbr.rel (%p881) target = $region136
      $region135: #{tpu_custom_call.1} parent=5 // pred_region
        %s885 = ssub.s32 %s70, 1
        // Predicated region
        $region137: #{tpu_custom_call.1} parent=135 // pred_check
          %p886 = pneg %p221
        $region138: #{tpu_custom_call.1} parent=135 // pred_check_branch
          %888 = sbr.rel (%p886) target = $region140
        $region139: #{tpu_custom_call.1} parent=135 // pred_region
          %889 = dma.done [#allocation3], 32
        $region140: #{tpu_custom_call.1} parent=135 // pred_fallthru
          _
        // Predicated region
        $region141: #{tpu_custom_call.1} parent=135 // pred_check
          %p890 = pneg %p284
        $region142: #{tpu_custom_call.1} parent=135 // pred_check_branch
          %892 = sbr.rel (%p890) target = $region144
        $region143: #{tpu_custom_call.1} parent=135 // pred_region
          %893 = dma.done [#allocation6], 16384
        $region144: #{tpu_custom_call.1} parent=135 // pred_fallthru
          _
        %p894 = scmp.lt.s32.totalorder %s75, 1
        %s895 = scalar_select %p894, %s75, 1
        %s896 = smul.addr %s895, 8
        %s897 = smul.addr %s896, 8
        %s898 = scalar_lea.vmem %s1, %s897
        %p899 = pneg %p96
        %p900 = pneg %p93
        %p901 = scmp.lt.s32.totalorder %s75, 1
        %s902 = scalar_select %p901, %s75, 1
        %s903 = smul.addr %s902, 8
        %s904 = smul.addr %s903, 8
        %s905 = scalar_lea.vmem %s3, %s904
        %p906 = pneg %p122
        %p907 = pneg %p119
        %p908 = scmp.lt.s32.totalorder %s75, 1
        %s909 = scalar_select %p908, %s75, 1
        %s910 = smul.addr %s909, 4
        %s911 = smul.addr %s910, 8
        %s912 = scalar_lea.vmem %s5, %s911
        %p913 = pneg %p148
        %p914 = pneg %p145
        %p915 = scmp.lt.s32.totalorder %s75, 1
        %s916 = scalar_select %p915, %s75, 1
        %s917 = smul.addr %s916, 2
        %s918 = smul.addr %s917, 8
        %s919 = scalar_lea.vmem %s7, %s918
        %p920 = pneg %p174
        %p921 = pneg %p171
        %p922 = scmp.lt.s32.totalorder %s75, 1
        %s923 = scalar_select %p922, %s75, 1
        %s924 = smul.addr %s923, 2
        %s925 = smul.addr %s924, 8
        %s926 = scalar_lea.vmem %s9, %s925
        %p927 = pneg %p200
        %p928 = pneg %p197
        %p929 = pneg %p221
        %p930 = pneg %p218
        %p931 = pneg %p242
        %p932 = pneg %p239
        %p933 = pneg %p263
        %p934 = pneg %p260
        %p935 = pneg %p284
        %p936 = pneg %p281
        %p937 = pneg %p305
        %p938 = pneg %p302
        %p939 = pneg %p326
        %p940 = pneg %p323
        %p941 = pneg %p347
        %p942 = pneg %p344
        %p943 = pneg %p368
        %p944 = pneg %p365
        %p945 = pneg %p389
        %p946 = pneg %p386
        %p947 = pneg %p410
        %p948 = pneg %p407
        %p949 = pneg %p431
        %p950 = pneg %p428
        %p951 = pneg %p452
        %p952 = pneg %p449
        %p953 = pneg %p473
        %p954 = pneg %p470
        %p955 = pneg %p494
        %p956 = pneg %p491
        %p957 = pneg %p515
        %p958 = pneg %p512
        %p959 = pneg %p536
        %p960 = pneg %p533
        %p961 = pneg %p557
        %p962 = pneg %p554
        %p963 = pneg %p578
        %p964 = pneg %p575
        %p965 = pneg %p599
        %p966 = pneg %p596
        %p967 = pneg %p620
        %p968 = pneg %p617
        %p969 = pneg %p641
        %p970 = pneg %p638
        %p971 = pneg %p662
        %p972 = pneg %p659
        %p973 = pneg %p683
        %p974 = pneg %p680
        %p975 = pneg %p704
        %p976 = pneg %p701
        %p977 = pneg %p730
        %p978 = pneg %p727
        %s979 = sand.u32 %s717, 1
        %s980 = scalar_lea.sflag [#allocation4], %s979
        %s981 = sand.u32 %s717, 1
        %s982 = smul.addr %s981, 64
        %s983 = scalar_lea.vmem [#allocation7], %s982
        %p984 = scmp.lt.s32.totalorder %s75, 1
        %s985 = scalar_select %p984, %s75, 1
        %s986 = smul.addr %s985, 8
        %s987 = smul.addr %s986, 8
        %s988 = scalar_lea.vmem %s1, %s987
        %p989 = scmp.lt.s32.totalorder %s75, 1
        %s990 = scalar_select %p989, %s75, 1
        %s991 = smul.addr %s990, 8
        %s992 = smul.addr %s991, 8
        %s993 = scalar_lea.vmem %s3, %s992
        %p994 = scmp.lt.s32.totalorder %s75, 1
        %s995 = scalar_select %p994, %s75, 1
        %s996 = smul.addr %s995, 4
        %s997 = smul.addr %s996, 8
        %s998 = scalar_lea.vmem %s5, %s997
        %p999 = scmp.lt.s32.totalorder %s75, 1
        %s1000 = scalar_select %p999, %s75, 1
        %s1001 = smul.addr %s1000, 2
        %s1002 = smul.addr %s1001, 8
        %s1003 = scalar_lea.vmem %s7, %s1002
        %p1004 = scmp.lt.s32.totalorder %s75, 1
        %s1005 = scalar_select %p1004, %s75, 1
        %s1006 = smul.addr %s1005, 2
        %s1007 = smul.addr %s1006, 8
        %s1008 = scalar_lea.vmem %s9, %s1007
        %v1010 = vld [vmem:[%s988] sm:$0xff]
        %v1011 = vld [vmem:[%s988 + $0x8] sm:$0xff]
        %v1012 = vld [vmem:[%s988 + $0x10] sm:$0xff]
        %v1013 = vld [vmem:[%s988 + $0x18] sm:$0xff]
        %v1014 = vld [vmem:[%s988 + $0x20] sm:$0xff]
        %v1015 = vld [vmem:[%s988 + $0x28] sm:$0xff]
        %v1016 = vld [vmem:[%s988 + $0x30] sm:$0xff]
        %v1017 = vld [vmem:[%s988 + $0x38] sm:$0xff]
        %1019 = vset.pattern.permute.xlu0 0
        %1020 = vperm.xlu0 %1019, %v1010
        %v1021 = vpop.permute.xlu0 %1020
        %1023 = vset.pattern.permute.xlu0 0
        %1024 = vperm.xlu0 %1023, %v1011
        %v1025 = vpop.permute.xlu0 %1024
        %1027 = vset.pattern.permute.xlu0 0
        %1028 = vperm.xlu0 %1027, %v1012
        %v1029 = vpop.permute.xlu0 %1028
        %1031 = vset.pattern.permute.xlu0 0
        %1032 = vperm.xlu0 %1031, %v1013
        %v1033 = vpop.permute.xlu0 %1032
        %1035 = vset.pattern.permute.xlu0 0
        %1036 = vperm.xlu0 %1035, %v1014
        %v1037 = vpop.permute.xlu0 %1036
        %1039 = vset.pattern.permute.xlu0 0
        %1040 = vperm.xlu0 %1039, %v1015
        %v1041 = vpop.permute.xlu0 %1040
        %1043 = vset.pattern.permute.xlu0 0
        %1044 = vperm.xlu0 %1043, %v1016
        %v1045 = vpop.permute.xlu0 %1044
        %1047 = vset.pattern.permute.xlu0 0
        %1048 = vperm.xlu0 %1047, %v1017
        %v1049 = vpop.permute.xlu0 %1048
        %v1050 = vld [vmem:[%s993] sm:$0xff]
        %v1051 = vld [vmem:[%s993 + $0x8] sm:$0xff]
        %v1052 = vld [vmem:[%s993 + $0x10] sm:$0xff]
        %v1053 = vld [vmem:[%s993 + $0x18] sm:$0xff]
        %v1054 = vld [vmem:[%s993 + $0x20] sm:$0xff]
        %v1055 = vld [vmem:[%s993 + $0x28] sm:$0xff]
        %v1056 = vld [vmem:[%s993 + $0x30] sm:$0xff]
        %v1057 = vld [vmem:[%s993 + $0x38] sm:$0xff]
        %v1058 = vlaneseq
        %v1059 = vand.u32 %v1058, 127
        %v1060 = vand.u32 %v1059, 1
        %vm1061 = vcmp.ge.s32.totalorder %v1060, 1
        %v1062 = vsel %vm1061, 1, 0
        %v1063 = vcvt.s32.f32 %v1062
        %vm1064 = vcmp.lt.s32.totalorder %v1060, 1
        %v1065 = vsel %vm1064, 1, 0
        %v1066 = vcvt.s32.f32 %v1065
        %v1067 = vld [vmem:[%s19] sm:$0xff]
        %v1068 = vld [vmem:[%s19 + $0x8] sm:$0xff]
        %v1069 = vld [vmem:[%s19 + $0x10] sm:$0xff]
        %v1070 = vld [vmem:[%s19 + $0x18] sm:$0xff]
        %v1071 = vld [vmem:[%s19 + $0x20] sm:$0xf]
        %v1072 = vld [vmem:[%s19 + $0x24] sm:$0xff]
        %v1073 = vld [vmem:[%s19 + $0x2c] sm:$0xff]
        %v1074 = vld [vmem:[%s19 + $0x34] sm:$0xff]
        %v1075 = vld [vmem:[%s19 + $0x3c] sm:$0xff]
        %v1076 = vld [vmem:[%s19 + $0x44] sm:$0xf]
        %v1077 = vld [vmem:[%s19 + $0x48] sm:$0xff]
        %v1078 = vld [vmem:[%s19 + $0x50] sm:$0xff]
        %v1079 = vld [vmem:[%s19 + $0x58] sm:$0xff]
        %v1080 = vld [vmem:[%s19 + $0x60] sm:$0xff]
        %v1081 = vld [vmem:[%s19 + $0x68] sm:$0xf]
        %v1082 = vld [vmem:[%s19 + $0x6c] sm:$0xff]
        %v1083 = vld [vmem:[%s19 + $0x74] sm:$0xff]
        %v1084 = vld [vmem:[%s19 + $0x7c] sm:$0xff]
        %v1085 = vld [vmem:[%s19 + $0x84] sm:$0xff]
        %v1086 = vld [vmem:[%s19 + $0x8c] sm:$0xf]
        %v1087 = vld [vmem:[%s21] sm:$0xff]
        %v1088 = vld [vmem:[%s21 + $0x8] sm:$0xff]
        %v1089 = vld [vmem:[%s21 + $0x10] sm:$0xff]
        %v1090 = vld [vmem:[%s21 + $0x18] sm:$0xff]
        %v1091 = vld [vmem:[%s23] sm:$0xff]
        %v1092 = vld [vmem:[%s23 + $0x8] sm:$0xf]
        %v1093 = vld [vmem:[%s23 + $0xc] sm:$0xff]
        %v1094 = vld [vmem:[%s23 + $0x14] sm:$0xf]
        %v1095 = vld [vmem:[%s23 + $0x18] sm:$0xff]
        %v1096 = vld [vmem:[%s23 + $0x20] sm:$0xf]
        %v1097 = vld [vmem:[%s23 + $0x24] sm:$0xff]
        %v1098 = vld [vmem:[%s23 + $0x2c] sm:$0xf]
        %v1099 = vld [vmem:[%s25] sm:$0xff]
        %v1100 = vld [vmem:[%s25 + $0x8] sm:$0xff]
        %v1101 = vld [vmem:[%s25 + $0x10] sm:$0xff]
        %v1102 = vld [vmem:[%s25 + $0x18] sm:$0xff]
        %1111 = vrot.lane.b32.xlu0 %v1021, 3
        %v1112 = vpop.permute.xlu0 %1111
        %1113 = vrot.lane.b32.xlu0 %v1025, 3
        %v1114 = vpop.permute.xlu0 %1113
        %1115 = vrot.lane.b32.xlu0 %v1029, 3
        %v1116 = vpop.permute.xlu0 %1115
        %1117 = vrot.lane.b32.xlu0 %v1033, 3
        %v1118 = vpop.permute.xlu0 %1117
        %1119 = vrot.lane.b32.xlu0 %v1037, 3
        %v1120 = vpop.permute.xlu0 %1119
        %1121 = vrot.lane.b32.xlu0 %v1041, 3
        %v1122 = vpop.permute.xlu0 %1121
        %1123 = vrot.lane.b32.xlu0 %v1045, 3
        %v1124 = vpop.permute.xlu0 %1123
        %1125 = vrot.lane.b32.xlu0 %v1049, 3
        %v1126 = vpop.permute.xlu0 %1125
        %1127 = vrot.lane.b32.xlu0 %v1050, 3
        %v1128 = vpop.permute.xlu0 %1127
        %1129 = vrot.lane.b32.xlu0 %v1051, 3
        %v1130 = vpop.permute.xlu0 %1129
        %1131 = vrot.lane.b32.xlu0 %v1052, 3
        %v1132 = vpop.permute.xlu0 %1131
        %1133 = vrot.lane.b32.xlu0 %v1053, 3
        %v1134 = vpop.permute.xlu0 %1133
        %1135 = vrot.lane.b32.xlu0 %v1054, 3
        %v1136 = vpop.permute.xlu0 %1135
        %1137 = vrot.lane.b32.xlu0 %v1055, 3
        %v1138 = vpop.permute.xlu0 %1137
        %1139 = vrot.lane.b32.xlu0 %v1056, 3
        %v1140 = vpop.permute.xlu0 %1139
        %1141 = vrot.lane.b32.xlu0 %v1057, 3
        %v1142 = vpop.permute.xlu0 %1141
        %vm1159 = vcmask 23552
        %v1160 = vsel %vm1159, 0.0, %v1112
        %v1161 = vsel %vm1159, 0.0, %v1114
        %v1162 = vsel %vm1159, 0.0, %v1116
        %v1163 = vsel %vm1159, 0.0, %v1118
        %v1164 = vsel %vm1159, 0.0, %v1120
        %v1165 = vsel %vm1159, 0.0, %v1122
        %v1166 = vsel %vm1159, 0.0, %v1124
        %v1167 = vsel %vm1159, 0.0, %v1126
        %v1168 = vsel %vm1159, 0.0, %v1128
        %v1169 = vsel %vm1159, 0.0, %v1130
        %v1170 = vsel %vm1159, 0.0, %v1132
        %v1171 = vsel %vm1159, 0.0, %v1134
        %v1172 = vsel %vm1159, 0.0, %v1136
        %v1173 = vsel %vm1159, 0.0, %v1138
        %v1174 = vsel %vm1159, 0.0, %v1140
        %v1175 = vsel %vm1159, 0.0, %v1142
        %vm1176 = vcmask 56320
        %v1177 = vsel %vm1176, %v1160, 0.0
        %v1178 = vsel %vm1176, %v1161, 0.0
        %v1179 = vsel %vm1176, %v1162, 0.0
        %v1180 = vsel %vm1176, %v1163, 0.0
        %v1181 = vsel %vm1176, %v1164, 0.0
        %v1182 = vsel %vm1176, %v1165, 0.0
        %v1183 = vsel %vm1176, %v1166, 0.0
        %v1184 = vsel %vm1176, %v1167, 0.0
        %v1185 = vsel %vm1176, %v1168, 0.0
        %v1186 = vsel %vm1176, %v1169, 0.0
        %v1187 = vsel %vm1176, %v1170, 0.0
        %v1188 = vsel %vm1176, %v1171, 0.0
        %v1189 = vsel %vm1176, %v1172, 0.0
        %v1190 = vsel %vm1176, %v1173, 0.0
        %v1191 = vsel %vm1176, %v1174, 0.0
        %v1192 = vsel %vm1176, %v1175, 0.0
        %v1193 = vmul.f32 %v1177, %v1063
        %v1194 = vmul.f32 %v1178, %v1063
        %v1195 = vmul.f32 %v1179, %v1063
        %v1196 = vmul.f32 %v1180, %v1063
        %v1197 = vmul.f32 %v1181, %v1063
        %v1198 = vmul.f32 %v1182, %v1063
        %v1199 = vmul.f32 %v1183, %v1063
        %v1200 = vmul.f32 %v1184, %v1063
        %v1201 = vmul.f32 %v1185, %v1063
        %v1202 = vmul.f32 %v1186, %v1063
        %v1203 = vmul.f32 %v1187, %v1063
        %v1204 = vmul.f32 %v1188, %v1063
        %v1205 = vmul.f32 %v1189, %v1063
        %v1206 = vmul.f32 %v1190, %v1063
        %v1207 = vmul.f32 %v1191, %v1063
        %v1208 = vmul.f32 %v1192, %v1063
        %1210 = vrot.lane.b32.xlu0 %v1066, 2
        %v1211 = vpop.permute.xlu0 %1210
        %v1213 = vmul.f32 %v1177, %v1211
        %v1214 = vmul.f32 %v1178, %v1211
        %v1215 = vmul.f32 %v1179, %v1211
        %v1216 = vmul.f32 %v1180, %v1211
        %v1217 = vmul.f32 %v1181, %v1211
        %v1218 = vmul.f32 %v1182, %v1211
        %v1219 = vmul.f32 %v1183, %v1211
        %v1220 = vmul.f32 %v1184, %v1211
        %v1221 = vmul.f32 %v1185, %v1211
        %v1222 = vmul.f32 %v1186, %v1211
        %v1223 = vmul.f32 %v1187, %v1211
        %v1224 = vmul.f32 %v1188, %v1211
        %v1225 = vmul.f32 %v1189, %v1211
        %v1226 = vmul.f32 %v1190, %v1211
        %v1227 = vmul.f32 %v1191, %v1211
        %v1228 = vmul.f32 %v1192, %v1211
        %1230 = vrot.lane.b32.xlu0 %v1063, 2
        %v1231 = vpop.permute.xlu0 %1230
        %v1233 = vmul.f32 %v1177, %v1231
        %v1234 = vmul.f32 %v1178, %v1231
        %v1235 = vmul.f32 %v1179, %v1231
        %v1236 = vmul.f32 %v1180, %v1231
        %v1237 = vmul.f32 %v1181, %v1231
        %v1238 = vmul.f32 %v1182, %v1231
        %v1239 = vmul.f32 %v1183, %v1231
        %v1240 = vmul.f32 %v1184, %v1231
        %v1241 = vmul.f32 %v1185, %v1231
        %v1242 = vmul.f32 %v1186, %v1231
        %v1243 = vmul.f32 %v1187, %v1231
        %v1244 = vmul.f32 %v1188, %v1231
        %v1245 = vmul.f32 %v1189, %v1231
        %v1246 = vmul.f32 %v1190, %v1231
        %v1247 = vmul.f32 %v1191, %v1231
        %v1248 = vmul.f32 %v1192, %v1231
        %1249 = vrot.lane.b32.xlu0 %v1066, 4
        %v1250 = vpop.permute.xlu0 %1249
        %v1252 = vmul.f32 %v1177, %v1250
        %v1253 = vmul.f32 %v1178, %v1250
        %v1254 = vmul.f32 %v1179, %v1250
        %v1255 = vmul.f32 %v1180, %v1250
        %v1256 = vmul.f32 %v1181, %v1250
        %v1257 = vmul.f32 %v1182, %v1250
        %v1258 = vmul.f32 %v1183, %v1250
        %v1259 = vmul.f32 %v1184, %v1250
        %v1260 = vmul.f32 %v1185, %v1250
        %v1261 = vmul.f32 %v1186, %v1250
        %v1262 = vmul.f32 %v1187, %v1250
        %v1263 = vmul.f32 %v1188, %v1250
        %v1264 = vmul.f32 %v1189, %v1250
        %v1265 = vmul.f32 %v1190, %v1250
        %v1266 = vmul.f32 %v1191, %v1250
        %v1267 = vmul.f32 %v1192, %v1250
        %1268 = vrot.lane.b32.xlu0 %v1063, 4
        %v1269 = vpop.permute.xlu0 %1268
        %v1271 = vmul.f32 %v1177, %v1269
        %v1272 = vmul.f32 %v1178, %v1269
        %v1273 = vmul.f32 %v1179, %v1269
        %v1274 = vmul.f32 %v1180, %v1269
        %v1275 = vmul.f32 %v1181, %v1269
        %v1276 = vmul.f32 %v1182, %v1269
        %v1277 = vmul.f32 %v1183, %v1269
        %v1278 = vmul.f32 %v1184, %v1269
        %v1279 = vmul.f32 %v1185, %v1269
        %v1280 = vmul.f32 %v1186, %v1269
        %v1281 = vmul.f32 %v1187, %v1269
        %v1282 = vmul.f32 %v1188, %v1269
        %v1283 = vmul.f32 %v1189, %v1269
        %v1284 = vmul.f32 %v1190, %v1269
        %v1285 = vmul.f32 %v1191, %v1269
        %v1286 = vmul.f32 %v1192, %v1269
        %1287 = vrot.lane.b32.xlu0 %v1066, 6
        %v1288 = vpop.permute.xlu0 %1287
        %v1290 = vmul.f32 %v1177, %v1288
        %v1291 = vmul.f32 %v1178, %v1288
        %v1292 = vmul.f32 %v1179, %v1288
        %v1293 = vmul.f32 %v1180, %v1288
        %v1294 = vmul.f32 %v1181, %v1288
        %v1295 = vmul.f32 %v1182, %v1288
        %v1296 = vmul.f32 %v1183, %v1288
        %v1297 = vmul.f32 %v1184, %v1288
        %v1298 = vmul.f32 %v1185, %v1288
        %v1299 = vmul.f32 %v1186, %v1288
        %v1300 = vmul.f32 %v1187, %v1288
        %v1301 = vmul.f32 %v1188, %v1288
        %v1302 = vmul.f32 %v1189, %v1288
        %v1303 = vmul.f32 %v1190, %v1288
        %v1304 = vmul.f32 %v1191, %v1288
        %v1305 = vmul.f32 %v1192, %v1288
        %1322 = vrot.lane.b32.xlu0 %v1177, 127
        %v1323 = vpop.permute.xlu0 %1322
        %1324 = vrot.lane.b32.xlu0 %v1178, 127
        %v1325 = vpop.permute.xlu0 %1324
        %1326 = vrot.lane.b32.xlu0 %v1179, 127
        %v1327 = vpop.permute.xlu0 %1326
        %1328 = vrot.lane.b32.xlu0 %v1180, 127
        %v1329 = vpop.permute.xlu0 %1328
        %1330 = vrot.lane.b32.xlu0 %v1181, 127
        %v1331 = vpop.permute.xlu0 %1330
        %1332 = vrot.lane.b32.xlu0 %v1182, 127
        %v1333 = vpop.permute.xlu0 %1332
        %1334 = vrot.lane.b32.xlu0 %v1183, 127
        %v1335 = vpop.permute.xlu0 %1334
        %1336 = vrot.lane.b32.xlu0 %v1184, 127
        %v1337 = vpop.permute.xlu0 %1336
        %1338 = vrot.lane.b32.xlu0 %v1185, 127
        %v1339 = vpop.permute.xlu0 %1338
        %1340 = vrot.lane.b32.xlu0 %v1186, 127
        %v1341 = vpop.permute.xlu0 %1340
        %1342 = vrot.lane.b32.xlu0 %v1187, 127
        %v1343 = vpop.permute.xlu0 %1342
        %1344 = vrot.lane.b32.xlu0 %v1188, 127
        %v1345 = vpop.permute.xlu0 %1344
        %1346 = vrot.lane.b32.xlu0 %v1189, 127
        %v1347 = vpop.permute.xlu0 %1346
        %1348 = vrot.lane.b32.xlu0 %v1190, 127
        %v1349 = vpop.permute.xlu0 %1348
        %1350 = vrot.lane.b32.xlu0 %v1191, 127
        %v1351 = vpop.permute.xlu0 %1350
        %1352 = vrot.lane.b32.xlu0 %v1192, 127
        %v1353 = vpop.permute.xlu0 %1352
        %1386 = vrot.lane.b32.xlu0 %v1213, 126
        %v1387 = vpop.permute.xlu0 %1386
        %1388 = vrot.lane.b32.xlu0 %v1214, 126
        %v1389 = vpop.permute.xlu0 %1388
        %1390 = vrot.lane.b32.xlu0 %v1215, 126
        %v1391 = vpop.permute.xlu0 %1390
        %1392 = vrot.lane.b32.xlu0 %v1216, 126
        %v1393 = vpop.permute.xlu0 %1392
        %1394 = vrot.lane.b32.xlu0 %v1217, 126
        %v1395 = vpop.permute.xlu0 %1394
        %1396 = vrot.lane.b32.xlu0 %v1218, 126
        %v1397 = vpop.permute.xlu0 %1396
        %1398 = vrot.lane.b32.xlu0 %v1219, 126
        %v1399 = vpop.permute.xlu0 %1398
        %1400 = vrot.lane.b32.xlu0 %v1220, 126
        %v1401 = vpop.permute.xlu0 %1400
        %1402 = vrot.lane.b32.xlu0 %v1221, 126
        %v1403 = vpop.permute.xlu0 %1402
        %1404 = vrot.lane.b32.xlu0 %v1222, 126
        %v1405 = vpop.permute.xlu0 %1404
        %1406 = vrot.lane.b32.xlu0 %v1223, 126
        %v1407 = vpop.permute.xlu0 %1406
        %1408 = vrot.lane.b32.xlu0 %v1224, 126
        %v1409 = vpop.permute.xlu0 %1408
        %1410 = vrot.lane.b32.xlu0 %v1225, 126
        %v1411 = vpop.permute.xlu0 %1410
        %1412 = vrot.lane.b32.xlu0 %v1226, 126
        %v1413 = vpop.permute.xlu0 %1412
        %1414 = vrot.lane.b32.xlu0 %v1227, 126
        %v1415 = vpop.permute.xlu0 %1414
        %1416 = vrot.lane.b32.xlu0 %v1228, 126
        %v1417 = vpop.permute.xlu0 %1416
        %1450 = vrot.lane.b32.xlu0 %v1233, 126
        %v1451 = vpop.permute.xlu0 %1450
        %1452 = vrot.lane.b32.xlu0 %v1234, 126
        %v1453 = vpop.permute.xlu0 %1452
        %1454 = vrot.lane.b32.xlu0 %v1235, 126
        %v1455 = vpop.permute.xlu0 %1454
        %1456 = vrot.lane.b32.xlu0 %v1236, 126
        %v1457 = vpop.permute.xlu0 %1456
        %1458 = vrot.lane.b32.xlu0 %v1237, 126
        %v1459 = vpop.permute.xlu0 %1458
        %1460 = vrot.lane.b32.xlu0 %v1238, 126
        %v1461 = vpop.permute.xlu0 %1460
        %1462 = vrot.lane.b32.xlu0 %v1239, 126
        %v1463 = vpop.permute.xlu0 %1462
        %1464 = vrot.lane.b32.xlu0 %v1240, 126
        %v1465 = vpop.permute.xlu0 %1464
        %1466 = vrot.lane.b32.xlu0 %v1241, 126
        %v1467 = vpop.permute.xlu0 %1466
        %1468 = vrot.lane.b32.xlu0 %v1242, 126
        %v1469 = vpop.permute.xlu0 %1468
        %1470 = vrot.lane.b32.xlu0 %v1243, 126
        %v1471 = vpop.permute.xlu0 %1470
        %1472 = vrot.lane.b32.xlu0 %v1244, 126
        %v1473 = vpop.permute.xlu0 %1472
        %1474 = vrot.lane.b32.xlu0 %v1245, 126
        %v1475 = vpop.permute.xlu0 %1474
        %1476 = vrot.lane.b32.xlu0 %v1246, 126
        %v1477 = vpop.permute.xlu0 %1476
        %1478 = vrot.lane.b32.xlu0 %v1247, 126
        %v1479 = vpop.permute.xlu0 %1478
        %1480 = vrot.lane.b32.xlu0 %v1248, 126
        %v1481 = vpop.permute.xlu0 %1480
        %1498 = vrot.lane.b32.xlu0 %v1177, 125
        %v1499 = vpop.permute.xlu0 %1498
        %1500 = vrot.lane.b32.xlu0 %v1178, 125
        %v1501 = vpop.permute.xlu0 %1500
        %1502 = vrot.lane.b32.xlu0 %v1179, 125
        %v1503 = vpop.permute.xlu0 %1502
        %1504 = vrot.lane.b32.xlu0 %v1180, 125
        %v1505 = vpop.permute.xlu0 %1504
        %1506 = vrot.lane.b32.xlu0 %v1181, 125
        %v1507 = vpop.permute.xlu0 %1506
        %1508 = vrot.lane.b32.xlu0 %v1182, 125
        %v1509 = vpop.permute.xlu0 %1508
        %1510 = vrot.lane.b32.xlu0 %v1183, 125
        %v1511 = vpop.permute.xlu0 %1510
        %1512 = vrot.lane.b32.xlu0 %v1184, 125
        %v1513 = vpop.permute.xlu0 %1512
        %1514 = vrot.lane.b32.xlu0 %v1185, 125
        %v1515 = vpop.permute.xlu0 %1514
        %1516 = vrot.lane.b32.xlu0 %v1186, 125
        %v1517 = vpop.permute.xlu0 %1516
        %1518 = vrot.lane.b32.xlu0 %v1187, 125
        %v1519 = vpop.permute.xlu0 %1518
        %1520 = vrot.lane.b32.xlu0 %v1188, 125
        %v1521 = vpop.permute.xlu0 %1520
        %1522 = vrot.lane.b32.xlu0 %v1189, 125
        %v1523 = vpop.permute.xlu0 %1522
        %1524 = vrot.lane.b32.xlu0 %v1190, 125
        %v1525 = vpop.permute.xlu0 %1524
        %1526 = vrot.lane.b32.xlu0 %v1191, 125
        %v1527 = vpop.permute.xlu0 %1526
        %1528 = vrot.lane.b32.xlu0 %v1192, 125
        %v1529 = vpop.permute.xlu0 %1528
        %1562 = vrot.lane.b32.xlu0 %v1252, 124
        %v1563 = vpop.permute.xlu0 %1562
        %1564 = vrot.lane.b32.xlu0 %v1253, 124
        %v1565 = vpop.permute.xlu0 %1564
        %1566 = vrot.lane.b32.xlu0 %v1254, 124
        %v1567 = vpop.permute.xlu0 %1566
        %1568 = vrot.lane.b32.xlu0 %v1255, 124
        %v1569 = vpop.permute.xlu0 %1568
        %1570 = vrot.lane.b32.xlu0 %v1256, 124
        %v1571 = vpop.permute.xlu0 %1570
        %1572 = vrot.lane.b32.xlu0 %v1257, 124
        %v1573 = vpop.permute.xlu0 %1572
        %1574 = vrot.lane.b32.xlu0 %v1258, 124
        %v1575 = vpop.permute.xlu0 %1574
        %1576 = vrot.lane.b32.xlu0 %v1259, 124
        %v1577 = vpop.permute.xlu0 %1576
        %1578 = vrot.lane.b32.xlu0 %v1260, 124
        %v1579 = vpop.permute.xlu0 %1578
        %1580 = vrot.lane.b32.xlu0 %v1261, 124
        %v1581 = vpop.permute.xlu0 %1580
        %1582 = vrot.lane.b32.xlu0 %v1262, 124
        %v1583 = vpop.permute.xlu0 %1582
        %1584 = vrot.lane.b32.xlu0 %v1263, 124
        %v1585 = vpop.permute.xlu0 %1584
        %1586 = vrot.lane.b32.xlu0 %v1264, 124
        %v1587 = vpop.permute.xlu0 %1586
        %1588 = vrot.lane.b32.xlu0 %v1265, 124
        %v1589 = vpop.permute.xlu0 %1588
        %1590 = vrot.lane.b32.xlu0 %v1266, 124
        %v1591 = vpop.permute.xlu0 %1590
        %1592 = vrot.lane.b32.xlu0 %v1267, 124
        %v1593 = vpop.permute.xlu0 %1592
        %1626 = vrot.lane.b32.xlu0 %v1271, 124
        %v1627 = vpop.permute.xlu0 %1626
        %1628 = vrot.lane.b32.xlu0 %v1272, 124
        %v1629 = vpop.permute.xlu0 %1628
        %1630 = vrot.lane.b32.xlu0 %v1273, 124
        %v1631 = vpop.permute.xlu0 %1630
        %1632 = vrot.lane.b32.xlu0 %v1274, 124
        %v1633 = vpop.permute.xlu0 %1632
        %1634 = vrot.lane.b32.xlu0 %v1275, 124
        %v1635 = vpop.permute.xlu0 %1634
        %1636 = vrot.lane.b32.xlu0 %v1276, 124
        %v1637 = vpop.permute.xlu0 %1636
        %1638 = vrot.lane.b32.xlu0 %v1277, 124
        %v1639 = vpop.permute.xlu0 %1638
        %1640 = vrot.lane.b32.xlu0 %v1278, 124
        %v1641 = vpop.permute.xlu0 %1640
        %1642 = vrot.lane.b32.xlu0 %v1279, 124
        %v1643 = vpop.permute.xlu0 %1642
        %1644 = vrot.lane.b32.xlu0 %v1280, 124
        %v1645 = vpop.permute.xlu0 %1644
        %1646 = vrot.lane.b32.xlu0 %v1281, 124
        %v1647 = vpop.permute.xlu0 %1646
        %1648 = vrot.lane.b32.xlu0 %v1282, 124
        %v1649 = vpop.permute.xlu0 %1648
        %1650 = vrot.lane.b32.xlu0 %v1283, 124
        %v1651 = vpop.permute.xlu0 %1650
        %1652 = vrot.lane.b32.xlu0 %v1284, 124
        %v1653 = vpop.permute.xlu0 %1652
        %1654 = vrot.lane.b32.xlu0 %v1285, 124
        %v1655 = vpop.permute.xlu0 %1654
        %1656 = vrot.lane.b32.xlu0 %v1286, 124
        %v1657 = vpop.permute.xlu0 %1656
        %1674 = vrot.lane.b32.xlu0 %v1177, 123
        %v1675 = vpop.permute.xlu0 %1674
        %1676 = vrot.lane.b32.xlu0 %v1178, 123
        %v1677 = vpop.permute.xlu0 %1676
        %1678 = vrot.lane.b32.xlu0 %v1179, 123
        %v1679 = vpop.permute.xlu0 %1678
        %1680 = vrot.lane.b32.xlu0 %v1180, 123
        %v1681 = vpop.permute.xlu0 %1680
        %1682 = vrot.lane.b32.xlu0 %v1181, 123
        %v1683 = vpop.permute.xlu0 %1682
        %1684 = vrot.lane.b32.xlu0 %v1182, 123
        %v1685 = vpop.permute.xlu0 %1684
        %1686 = vrot.lane.b32.xlu0 %v1183, 123
        %v1687 = vpop.permute.xlu0 %1686
        %1688 = vrot.lane.b32.xlu0 %v1184, 123
        %v1689 = vpop.permute.xlu0 %1688
        %1690 = vrot.lane.b32.xlu0 %v1185, 123
        %v1691 = vpop.permute.xlu0 %1690
        %1692 = vrot.lane.b32.xlu0 %v1186, 123
        %v1693 = vpop.permute.xlu0 %1692
        %1694 = vrot.lane.b32.xlu0 %v1187, 123
        %v1695 = vpop.permute.xlu0 %1694
        %1696 = vrot.lane.b32.xlu0 %v1188, 123
        %v1697 = vpop.permute.xlu0 %1696
        %1698 = vrot.lane.b32.xlu0 %v1189, 123
        %v1699 = vpop.permute.xlu0 %1698
        %1700 = vrot.lane.b32.xlu0 %v1190, 123
        %v1701 = vpop.permute.xlu0 %1700
        %1702 = vrot.lane.b32.xlu0 %v1191, 123
        %v1703 = vpop.permute.xlu0 %1702
        %1704 = vrot.lane.b32.xlu0 %v1192, 123
        %v1705 = vpop.permute.xlu0 %1704
        %1738 = vrot.lane.b32.xlu0 %v1290, 122
        %v1739 = vpop.permute.xlu0 %1738
        %1740 = vrot.lane.b32.xlu0 %v1291, 122
        %v1741 = vpop.permute.xlu0 %1740
        %1742 = vrot.lane.b32.xlu0 %v1292, 122
        %v1743 = vpop.permute.xlu0 %1742
        %1744 = vrot.lane.b32.xlu0 %v1293, 122
        %v1745 = vpop.permute.xlu0 %1744
        %1746 = vrot.lane.b32.xlu0 %v1294, 122
        %v1747 = vpop.permute.xlu0 %1746
        %1748 = vrot.lane.b32.xlu0 %v1295, 122
        %v1749 = vpop.permute.xlu0 %1748
        %1750 = vrot.lane.b32.xlu0 %v1296, 122
        %v1751 = vpop.permute.xlu0 %1750
        %1752 = vrot.lane.b32.xlu0 %v1297, 122
        %v1753 = vpop.permute.xlu0 %1752
        %1754 = vrot.lane.b32.xlu0 %v1298, 122
        %v1755 = vpop.permute.xlu0 %1754
        %1756 = vrot.lane.b32.xlu0 %v1299, 122
        %v1757 = vpop.permute.xlu0 %1756
        %1758 = vrot.lane.b32.xlu0 %v1300, 122
        %v1759 = vpop.permute.xlu0 %1758
        %1760 = vrot.lane.b32.xlu0 %v1301, 122
        %v1761 = vpop.permute.xlu0 %1760
        %1762 = vrot.lane.b32.xlu0 %v1302, 122
        %v1763 = vpop.permute.xlu0 %1762
        %1764 = vrot.lane.b32.xlu0 %v1303, 122
        %v1765 = vpop.permute.xlu0 %1764
        %1766 = vrot.lane.b32.xlu0 %v1304, 122
        %v1767 = vpop.permute.xlu0 %1766
        %1768 = vrot.lane.b32.xlu0 %v1305, 122
        %v1769 = vpop.permute.xlu0 %1768
        %v1786 = vpack.c.bf16 %v1194, %v1193
        %v1787 = vpack.c.bf16 %v1196, %v1195
        %v1788 = vpack.c.bf16 %v1198, %v1197
        %v1789 = vpack.c.bf16 %v1200, %v1199
        %v1790 = vpack.c.bf16 %v1202, %v1201
        %v1791 = vpack.c.bf16 %v1204, %v1203
        %v1792 = vpack.c.bf16 %v1206, %v1205
        %v1793 = vpack.c.bf16 %v1208, %v1207
        %v1794 = vpack.c.bf16 %v1325, %v1323
        %v1795 = vpack.c.bf16 %v1329, %v1327
        %v1796 = vpack.c.bf16 %v1333, %v1331
        %v1797 = vpack.c.bf16 %v1337, %v1335
        %v1798 = vpack.c.bf16 %v1341, %v1339
        %v1799 = vpack.c.bf16 %v1345, %v1343
        %v1800 = vpack.c.bf16 %v1349, %v1347
        %v1801 = vpack.c.bf16 %v1353, %v1351
        %v1802 = vpack.c.bf16 %v1389, %v1387
        %v1803 = vpack.c.bf16 %v1393, %v1391
        %v1804 = vpack.c.bf16 %v1397, %v1395
        %v1805 = vpack.c.bf16 %v1401, %v1399
        %v1806 = vpack.c.bf16 %v1405, %v1403
        %v1807 = vpack.c.bf16 %v1409, %v1407
        %v1808 = vpack.c.bf16 %v1413, %v1411
        %v1809 = vpack.c.bf16 %v1417, %v1415
        %v1810 = vpack.c.bf16 %v1453, %v1451
        %v1811 = vpack.c.bf16 %v1457, %v1455
        %v1812 = vpack.c.bf16 %v1461, %v1459
        %v1813 = vpack.c.bf16 %v1465, %v1463
        %v1814 = vpack.c.bf16 %v1469, %v1467
        %v1815 = vpack.c.bf16 %v1473, %v1471
        %v1816 = vpack.c.bf16 %v1477, %v1475
        %v1817 = vpack.c.bf16 %v1481, %v1479
        %v1818 = vpack.c.bf16 %v1501, %v1499
        %v1819 = vpack.c.bf16 %v1505, %v1503
        %v1820 = vpack.c.bf16 %v1509, %v1507
        %v1821 = vpack.c.bf16 %v1513, %v1511
        %v1822 = vpack.c.bf16 %v1517, %v1515
        %v1823 = vpack.c.bf16 %v1521, %v1519
        %v1824 = vpack.c.bf16 %v1525, %v1523
        %v1825 = vpack.c.bf16 %v1529, %v1527
        %v1826 = vpack.c.bf16 %v1565, %v1563
        %v1827 = vpack.c.bf16 %v1569, %v1567
        %v1828 = vpack.c.bf16 %v1573, %v1571
        %v1829 = vpack.c.bf16 %v1577, %v1575
        %v1830 = vpack.c.bf16 %v1581, %v1579
        %v1831 = vpack.c.bf16 %v1585, %v1583
        %v1832 = vpack.c.bf16 %v1589, %v1587
        %v1833 = vpack.c.bf16 %v1593, %v1591
        %v1834 = vpack.c.bf16 %v1629, %v1627
        %v1835 = vpack.c.bf16 %v1633, %v1631
        %v1836 = vpack.c.bf16 %v1637, %v1635
        %v1837 = vpack.c.bf16 %v1641, %v1639
        %v1838 = vpack.c.bf16 %v1645, %v1643
        %v1839 = vpack.c.bf16 %v1649, %v1647
        %v1840 = vpack.c.bf16 %v1653, %v1651
        %v1841 = vpack.c.bf16 %v1657, %v1655
        %v1842 = vpack.c.bf16 %v1677, %v1675
        %v1843 = vpack.c.bf16 %v1681, %v1679
        %v1844 = vpack.c.bf16 %v1685, %v1683
        %v1845 = vpack.c.bf16 %v1689, %v1687
        %v1846 = vpack.c.bf16 %v1693, %v1691
        %v1847 = vpack.c.bf16 %v1697, %v1695
        %v1848 = vpack.c.bf16 %v1701, %v1699
        %v1849 = vpack.c.bf16 %v1705, %v1703
        %v1850 = vpack.c.bf16 %v1741, %v1739
        %v1851 = vpack.c.bf16 %v1745, %v1743
        %v1852 = vpack.c.bf16 %v1749, %v1747
        %v1853 = vpack.c.bf16 %v1753, %v1751
        %v1854 = vpack.c.bf16 %v1757, %v1755
        %v1855 = vpack.c.bf16 %v1761, %v1759
        %v1856 = vpack.c.bf16 %v1765, %v1763
        %v1857 = vpack.c.bf16 %v1769, %v1767
        %1859 = vset.pattern.permute.xlu0 0
        %1860 = vperm.xlu0 %1859, %v1087
        %v1861 = vpop.permute.xlu0 %1860
        %1864 = vset.pattern.permute.xlu0 0
        %1865 = vperm.xlu0 %1864, %v1088
        %v1866 = vpop.permute.xlu0 %1865
        %1869 = vset.pattern.permute.xlu0 0
        %1870 = vperm.xlu0 %1869, %v1089
        %v1871 = vpop.permute.xlu0 %1870
        %1874 = vset.pattern.permute.xlu0 0
        %1875 = vperm.xlu0 %1874, %v1090
        %v1876 = vpop.permute.xlu0 %1875
        %v1898 = vunpack.c.l.b16 %v1067
        %v1899 = vunpack.c.h.b16 %v1067
        %v1900 = vunpack.c.l.b16 %v1068
        %v1901 = vunpack.c.h.b16 %v1068
        %v1902 = vunpack.c.l.b16 %v1069
        %v1903 = vunpack.c.h.b16 %v1069
        %v1904 = vunpack.c.l.b16 %v1070
        %v1905 = vunpack.c.h.b16 %v1070
        %v1906 = vunpack.c.l.b16 %v1071
        %v1907 = vunpack.c.l.b16 %v1072
        %v1908 = vunpack.c.h.b16 %v1072
        %v1909 = vunpack.c.l.b16 %v1073
        %v1910 = vunpack.c.h.b16 %v1073
        %v1911 = vunpack.c.l.b16 %v1074
        %v1912 = vunpack.c.h.b16 %v1074
        %v1913 = vunpack.c.l.b16 %v1075
        %v1914 = vunpack.c.h.b16 %v1075
        %v1915 = vunpack.c.l.b16 %v1076
        %v1916 = vunpack.c.l.b16 %v1077
        %v1917 = vunpack.c.h.b16 %v1077
        %v1918 = vunpack.c.l.b16 %v1078
        %v1919 = vunpack.c.h.b16 %v1078
        %v1920 = vunpack.c.l.b16 %v1079
        %v1921 = vunpack.c.h.b16 %v1079
        %v1922 = vunpack.c.l.b16 %v1080
        %v1923 = vunpack.c.h.b16 %v1080
        %v1924 = vunpack.c.l.b16 %v1081
        %v1925 = vunpack.c.l.b16 %v1082
        %v1926 = vunpack.c.h.b16 %v1082
        %v1927 = vunpack.c.l.b16 %v1083
        %v1928 = vunpack.c.h.b16 %v1083
        %v1929 = vunpack.c.l.b16 %v1084
        %v1930 = vunpack.c.h.b16 %v1084
        %v1931 = vunpack.c.l.b16 %v1085
        %v1932 = vunpack.c.h.b16 %v1085
        %v1933 = vunpack.c.l.b16 %v1086
        %v1934 = vpack.c.b16 %v1907, %v1898
        %v1935 = vpack.c.b16 %v1908, %v1899
        %v1936 = vpack.c.b16 %v1909, %v1900
        %v1937 = vpack.c.b16 %v1910, %v1901
        %v1938 = vpack.c.b16 %v1911, %v1902
        %v1939 = vpack.c.b16 %v1912, %v1903
        %v1940 = vpack.c.b16 %v1913, %v1904
        %v1941 = vpack.c.b16 %v1914, %v1905
        %v1942 = vpack.c.b16 %v1915, %v1906
        %v1943 = vpack.c.b16 %v1925, %v1916
        %v1944 = vpack.c.b16 %v1926, %v1917
        %v1945 = vpack.c.b16 %v1927, %v1918
        %v1946 = vpack.c.b16 %v1928, %v1919
        %v1947 = vpack.c.b16 %v1929, %v1920
        %v1948 = vpack.c.b16 %v1930, %v1921
        %v1949 = vpack.c.b16 %v1931, %v1922
        %v1950 = vpack.c.b16 %v1932, %v1923
        %v1951 = vpack.c.b16 %v1933, %v1924
        %1970 = vmatprep.subr.bf16.mxu0 0
        %1971 = vmatpush1.bf16.msra.mxu0 %v1793
        %1972 = vmatprep.subr.bf16.mxu0 0
        %1973 = vmatpush1.bf16.msra.mxu0 %v1792
        %1974 = vmatprep.subr.bf16.mxu0 0
        %1975 = vmatpush1.bf16.msra.mxu0 %v1791
        %1976 = vmatprep.subr.bf16.mxu0 0
        %1977 = vmatpush1.bf16.msra.mxu0 %v1790
        %1978 = vmatprep.subr.bf16.mxu0 0
        %1979 = vmatpush1.bf16.msra.mxu0 %v1789
        %1980 = vmatprep.subr.bf16.mxu0 0
        %1981 = vmatpush1.bf16.msra.mxu0 %v1788
        %1982 = vmatprep.subr.bf16.mxu0 0
        %1983 = vmatpush1.bf16.msra.mxu0 %v1787
        %1984 = vmatprep.subr.bf16.mxu0 0
        %1985 = vmatpush1.bf16.msra.mxu0 %v1786
        %1986 = vmatprep.subr.bf16.mxu0 0
        %1987 = vmatpush2.bf16.msra.mxu0 %v1801
        %1988 = vmatprep.subr.bf16.mxu0 0
        %1989 = vmatpush2.bf16.msra.mxu0 %v1800
        %1990 = vmatprep.subr.bf16.mxu0 0
        %1991 = vmatpush2.bf16.msra.mxu0 %v1799
        %1992 = vmatprep.subr.bf16.mxu0 0
        %1993 = vmatpush2.bf16.msra.mxu0 %v1798
        %1994 = vmatprep.subr.bf16.mxu0 0
        %1995 = vmatpush2.bf16.msra.mxu0 %v1797
        %1996 = vmatprep.subr.bf16.mxu0 0
        %1997 = vmatpush2.bf16.msra.mxu0 %v1796
        %1998 = vmatprep.subr.bf16.mxu0 0
        %1999 = vmatpush2.bf16.msra.mxu0 %v1795
        %2000 = vmatprep.subr.bf16.mxu0 0
        %2001 = vmatpush2.bf16.msra.mxu0 %v1794
        %2002 = vmatprep.mubr.bf16.mxu0 %v1935
        %2003 = vmatmul.mubr.bf16.gmra.mxu0 %v1934
        %v2004 = vpop.f32.mrf.mxu0
        %v2005 = vadd.f32 %v1861, %v2004
        %v2006 = vpop.f32.mrf.mxu0
        %v2007 = vpop.f32.mrf.mxu0
        %v2008 = vadd.f32 %v1866, %v2007
        %v2009 = vpop.f32.mrf.mxu0
        %2010 = vmatprep.mubr.bf16.mxu0 %v1944
        %2011 = vmatmul.mubr.bf16.gmra.mxu0 %v1943
        %v2012 = vpop.f32.mrf.mxu0
        %v2013 = vadd.f32 %v1871, %v2012
        %v2014 = vpop.f32.mrf.mxu0
        %v2015 = vpop.f32.mrf.mxu0
        %v2016 = vadd.f32 %v1876, %v2015
        %v2017 = vpop.f32.mrf.mxu0
        %2018 = vdwg.mxu0
        %2019 = vmatprep.subr.bf16.mxu0 0
        %2020 = vmatpush1.bf16.msra.mxu0 %v1809
        %2021 = vmatprep.subr.bf16.mxu0 0
        %2022 = vmatpush1.bf16.msra.mxu0 %v1808
        %2023 = vmatprep.subr.bf16.mxu0 0
        %2024 = vmatpush1.bf16.msra.mxu0 %v1807
        %2025 = vmatprep.subr.bf16.mxu0 0
        %2026 = vmatpush1.bf16.msra.mxu0 %v1806
        %2027 = vmatprep.subr.bf16.mxu0 0
        %2028 = vmatpush1.bf16.msra.mxu0 %v1805
        %2029 = vmatprep.subr.bf16.mxu0 0
        %2030 = vmatpush1.bf16.msra.mxu0 %v1804
        %2031 = vmatprep.subr.bf16.mxu0 0
        %2032 = vmatpush1.bf16.msra.mxu0 %v1803
        %2033 = vmatprep.subr.bf16.mxu0 0
        %2034 = vmatpush1.bf16.msra.mxu0 %v1802
        %2035 = vmatprep.subr.bf16.mxu0 0
        %2036 = vmatpush2.bf16.msra.mxu0 %v1817
        %2037 = vmatprep.subr.bf16.mxu0 0
        %2038 = vmatpush2.bf16.msra.mxu0 %v1816
        %2039 = vmatprep.subr.bf16.mxu0 0
        %2040 = vmatpush2.bf16.msra.mxu0 %v1815
        %2041 = vmatprep.subr.bf16.mxu0 0
        %2042 = vmatpush2.bf16.msra.mxu0 %v1814
        %2043 = vmatprep.subr.bf16.mxu0 0
        %2044 = vmatpush2.bf16.msra.mxu0 %v1813
        %2045 = vmatprep.subr.bf16.mxu0 0
        %2046 = vmatpush2.bf16.msra.mxu0 %v1812
        %2047 = vmatprep.subr.bf16.mxu0 0
        %2048 = vmatpush2.bf16.msra.mxu0 %v1811
        %2049 = vmatprep.subr.bf16.mxu0 0
        %2050 = vmatpush2.bf16.msra.mxu0 %v1810
        %2051 = vmatprep.mubr.bf16.mxu0 %v1937
        %2052 = vmatmul.mubr.bf16.gmra.mxu0 %v1936
        %v2053 = vpop.f32.mrf.mxu0
        %v2054 = vadd.f32 %v2005, %v2053
        %v2055 = vpop.f32.mrf.mxu0
        %v2056 = vpop.f32.mrf.mxu0
        %v2057 = vadd.f32 %v2008, %v2056
        %v2058 = vpop.f32.mrf.mxu0
        %2059 = vmatprep.mubr.bf16.mxu0 %v1946
        %2060 = vmatmul.mubr.bf16.gmra.mxu0 %v1945
        %v2061 = vpop.f32.mrf.mxu0
        %v2062 = vadd.f32 %v2013, %v2061
        %v2063 = vpop.f32.mrf.mxu0
        %v2064 = vpop.f32.mrf.mxu0
        %v2065 = vadd.f32 %v2016, %v2064
        %v2066 = vpop.f32.mrf.mxu0
        %2067 = vdwg.mxu0
        %2068 = vmatprep.subr.bf16.mxu0 0
        %2069 = vmatpush1.bf16.msra.mxu0 %v1825
        %2070 = vmatprep.subr.bf16.mxu0 0
        %2071 = vmatpush1.bf16.msra.mxu0 %v1824
        %2072 = vmatprep.subr.bf16.mxu0 0
        %2073 = vmatpush1.bf16.msra.mxu0 %v1823
        %2074 = vmatprep.subr.bf16.mxu0 0
        %2075 = vmatpush1.bf16.msra.mxu0 %v1822
        %2076 = vmatprep.subr.bf16.mxu0 0
        %2077 = vmatpush1.bf16.msra.mxu0 %v1821
        %2078 = vmatprep.subr.bf16.mxu0 0
        %2079 = vmatpush1.bf16.msra.mxu0 %v1820
        %2080 = vmatprep.subr.bf16.mxu0 0
        %2081 = vmatpush1.bf16.msra.mxu0 %v1819
        %2082 = vmatprep.subr.bf16.mxu0 0
        %2083 = vmatpush1.bf16.msra.mxu0 %v1818
        %2084 = vmatprep.subr.bf16.mxu0 0
        %2085 = vmatpush2.bf16.msra.mxu0 %v1833
        %2086 = vmatprep.subr.bf16.mxu0 0
        %2087 = vmatpush2.bf16.msra.mxu0 %v1832
        %2088 = vmatprep.subr.bf16.mxu0 0
        %2089 = vmatpush2.bf16.msra.mxu0 %v1831
        %2090 = vmatprep.subr.bf16.mxu0 0
        %2091 = vmatpush2.bf16.msra.mxu0 %v1830
        %2092 = vmatprep.subr.bf16.mxu0 0
        %2093 = vmatpush2.bf16.msra.mxu0 %v1829
        %2094 = vmatprep.subr.bf16.mxu0 0
        %2095 = vmatpush2.bf16.msra.mxu0 %v1828
        %2096 = vmatprep.subr.bf16.mxu0 0
        %2097 = vmatpush2.bf16.msra.mxu0 %v1827
        %2098 = vmatprep.subr.bf16.mxu0 0
        %2099 = vmatpush2.bf16.msra.mxu0 %v1826
        %2100 = vmatprep.mubr.bf16.mxu0 %v1939
        %2101 = vmatmul.mubr.bf16.gmra.mxu0 %v1938
        %v2102 = vpop.f32.mrf.mxu0
        %v2103 = vadd.f32 %v2054, %v2102
        %v2104 = vpop.f32.mrf.mxu0
        %v2105 = vpop.f32.mrf.mxu0
        %v2106 = vadd.f32 %v2057, %v2105
        %v2107 = vpop.f32.mrf.mxu0
        %2108 = vmatprep.mubr.bf16.mxu0 %v1948
        %2109 = vmatmul.mubr.bf16.gmra.mxu0 %v1947
        %v2110 = vpop.f32.mrf.mxu0
        %v2111 = vadd.f32 %v2062, %v2110
        %v2112 = vpop.f32.mrf.mxu0
        %v2113 = vpop.f32.mrf.mxu0
        %v2114 = vadd.f32 %v2065, %v2113
        %v2115 = vpop.f32.mrf.mxu0
        %2116 = vdwg.mxu0
        %2117 = vmatprep.subr.bf16.mxu0 0
        %2118 = vmatpush1.bf16.msra.mxu0 %v1841
        %2119 = vmatprep.subr.bf16.mxu0 0
        %2120 = vmatpush1.bf16.msra.mxu0 %v1840
        %2121 = vmatprep.subr.bf16.mxu0 0
        %2122 = vmatpush1.bf16.msra.mxu0 %v1839
        %2123 = vmatprep.subr.bf16.mxu0 0
        %2124 = vmatpush1.bf16.msra.mxu0 %v1838
        %2125 = vmatprep.subr.bf16.mxu0 0
        %2126 = vmatpush1.bf16.msra.mxu0 %v1837
        %2127 = vmatprep.subr.bf16.mxu0 0
        %2128 = vmatpush1.bf16.msra.mxu0 %v1836
        %2129 = vmatprep.subr.bf16.mxu0 0
        %2130 = vmatpush1.bf16.msra.mxu0 %v1835
        %2131 = vmatprep.subr.bf16.mxu0 0
        %2132 = vmatpush1.bf16.msra.mxu0 %v1834
        %2133 = vmatprep.subr.bf16.mxu0 0
        %2134 = vmatpush2.bf16.msra.mxu0 %v1849
        %2135 = vmatprep.subr.bf16.mxu0 0
        %2136 = vmatpush2.bf16.msra.mxu0 %v1848
        %2137 = vmatprep.subr.bf16.mxu0 0
        %2138 = vmatpush2.bf16.msra.mxu0 %v1847
        %2139 = vmatprep.subr.bf16.mxu0 0
        %2140 = vmatpush2.bf16.msra.mxu0 %v1846
        %2141 = vmatprep.subr.bf16.mxu0 0
        %2142 = vmatpush2.bf16.msra.mxu0 %v1845
        %2143 = vmatprep.subr.bf16.mxu0 0
        %2144 = vmatpush2.bf16.msra.mxu0 %v1844
        %2145 = vmatprep.subr.bf16.mxu0 0
        %2146 = vmatpush2.bf16.msra.mxu0 %v1843
        %2147 = vmatprep.subr.bf16.mxu0 0
        %2148 = vmatpush2.bf16.msra.mxu0 %v1842
        %2149 = vmatprep.mubr.bf16.mxu0 %v1941
        %2150 = vmatmul.mubr.bf16.gmra.mxu0 %v1940
        %v2151 = vpop.f32.mrf.mxu0
        %v2152 = vadd.f32 %v2103, %v2151
        %v2153 = vpop.f32.mrf.mxu0
        %v2154 = vpop.f32.mrf.mxu0
        %v2155 = vadd.f32 %v2106, %v2154
        %v2156 = vpop.f32.mrf.mxu0
        %2157 = vmatprep.mubr.bf16.mxu0 %v1950
        %2158 = vmatmul.mubr.bf16.gmra.mxu0 %v1949
        %v2159 = vpop.f32.mrf.mxu0
        %v2160 = vadd.f32 %v2111, %v2159
        %v2161 = vpop.f32.mrf.mxu0
        %v2162 = vpop.f32.mrf.mxu0
        %v2163 = vadd.f32 %v2114, %v2162
        %v2164 = vpop.f32.mrf.mxu0
        %2165 = vdwg.mxu0
        %2166 = vmatprep.subr.bf16.mxu0 0
        %2167 = vmatpush1.bf16.msra.mxu0 %v1857
        %2168 = vmatprep.subr.bf16.mxu0 0
        %2169 = vmatpush1.bf16.msra.mxu0 %v1856
        %2170 = vmatprep.subr.bf16.mxu0 0
        %2171 = vmatpush1.bf16.msra.mxu0 %v1855
        %2172 = vmatprep.subr.bf16.mxu0 0
        %2173 = vmatpush1.bf16.msra.mxu0 %v1854
        %2174 = vmatprep.subr.bf16.mxu0 0
        %2175 = vmatpush1.bf16.msra.mxu0 %v1853
        %2176 = vmatprep.subr.bf16.mxu0 0
        %2177 = vmatpush1.bf16.msra.mxu0 %v1852
        %2178 = vmatprep.subr.bf16.mxu0 0
        %2179 = vmatpush1.bf16.msra.mxu0 %v1851
        %2180 = vmatprep.subr.bf16.mxu0 0
        %2181 = vmatpush1.bf16.msra.mxu0 %v1850
        %2182 = vmatprep.subr.bf16.mxu0 0
        %2183 = vmatpush2.bf16.msra.mxu0 0
        %2184 = vmatprep.subr.bf16.mxu0 0
        %2185 = vmatpush2.bf16.msra.mxu0 0
        %2186 = vmatprep.subr.bf16.mxu0 0
        %2187 = vmatpush2.bf16.msra.mxu0 0
        %2188 = vmatprep.subr.bf16.mxu0 0
        %2189 = vmatpush2.bf16.msra.mxu0 0
        %2190 = vmatprep.subr.bf16.mxu0 0
        %2191 = vmatpush2.bf16.msra.mxu0 0
        %2192 = vmatprep.subr.bf16.mxu0 0
        %2193 = vmatpush2.bf16.msra.mxu0 0
        %2194 = vmatprep.subr.bf16.mxu0 0
        %2195 = vmatpush2.bf16.msra.mxu0 0
        %2196 = vmatprep.subr.bf16.mxu0 0
        %2197 = vmatpush2.bf16.msra.mxu0 0
        %2198 = vmatprep.mubr.bf16.mxu0 0
        %2199 = vmatmul.mubr.bf16.gmra.mxu0 %v1942
        %v2200 = vpop.f32.mrf.mxu0
        %v2201 = vadd.f32 %v2152, %v2200
        %v2202 = vpop.f32.mrf.mxu0
        %v2203 = vpop.f32.mrf.mxu0
        %v2204 = vadd.f32 %v2155, %v2203
        %v2205 = vpop.f32.mrf.mxu0
        %2206 = vmatprep.mubr.bf16.mxu0 0
        %2207 = vmatmul.mubr.bf16.gmra.mxu0 %v1951
        %v2208 = vpop.f32.mrf.mxu0
        %v2209 = vadd.f32 %v2160, %v2208
        %v2210 = vpop.f32.mrf.mxu0
        %v2211 = vpop.f32.mrf.mxu0
        %v2212 = vadd.f32 %v2163, %v2211
        %v2213 = vpop.f32.mrf.mxu0
        %2214 = vdwg.mxu0
        %v2215 = vmax.f32 %v2201, 0.0
        %v2216 = vmax.f32 %v2204, 0.0
        %v2217 = vmax.f32 %v2209, 0.0
        %v2218 = vmax.f32 %v2212, 0.0
        %2223 = vrot.lane.b32.xlu0 %v2215, 3
        %v2224 = vpop.permute.xlu0 %2223
        %2225 = vrot.lane.b32.xlu0 %v2216, 3
        %v2226 = vpop.permute.xlu0 %2225
        %2227 = vrot.lane.b32.xlu0 %v2217, 3
        %v2228 = vpop.permute.xlu0 %2227
        %2229 = vrot.lane.b32.xlu0 %v2218, 3
        %v2230 = vpop.permute.xlu0 %2229
        %v2235 = vsel %vm1159, 0.0, %v2224
        %v2236 = vsel %vm1159, 0.0, %v2226
        %v2237 = vsel %vm1159, 0.0, %v2228
        %v2238 = vsel %vm1159, 0.0, %v2230
        %v2239 = vsel %vm1176, %v2235, 0.0
        %v2240 = vsel %vm1176, %v2236, 0.0
        %v2241 = vsel %vm1176, %v2237, 0.0
        %v2242 = vsel %vm1176, %v2238, 0.0
        %v2243 = vmul.f32 %v2239, %v1063
        %v2244 = vmul.f32 %v2240, %v1063
        %v2245 = vmul.f32 %v2241, %v1063
        %v2246 = vmul.f32 %v2242, %v1063
        %v2247 = vmul.f32 %v2239, %v1211
        %v2248 = vmul.f32 %v2240, %v1211
        %v2249 = vmul.f32 %v2241, %v1211
        %v2250 = vmul.f32 %v2242, %v1211
        %v2251 = vmul.f32 %v2239, %v1231
        %v2252 = vmul.f32 %v2240, %v1231
        %v2253 = vmul.f32 %v2241, %v1231
        %v2254 = vmul.f32 %v2242, %v1231
        %v2255 = vmul.f32 %v2239, %v1250
        %v2256 = vmul.f32 %v2240, %v1250
        %v2257 = vmul.f32 %v2241, %v1250
        %v2258 = vmul.f32 %v2242, %v1250
        %v2259 = vmul.f32 %v2239, %v1269
        %v2260 = vmul.f32 %v2240, %v1269
        %v2261 = vmul.f32 %v2241, %v1269
        %v2262 = vmul.f32 %v2242, %v1269
        %v2263 = vmul.f32 %v2239, %v1288
        %v2264 = vmul.f32 %v2240, %v1288
        %v2265 = vmul.f32 %v2241, %v1288
        %v2266 = vmul.f32 %v2242, %v1288
        %2271 = vrot.lane.b32.xlu0 %v2239, 127
        %v2272 = vpop.permute.xlu0 %2271
        %2273 = vrot.lane.b32.xlu0 %v2240, 127
        %v2274 = vpop.permute.xlu0 %2273
        %2275 = vrot.lane.b32.xlu0 %v2241, 127
        %v2276 = vpop.permute.xlu0 %2275
        %2277 = vrot.lane.b32.xlu0 %v2242, 127
        %v2278 = vpop.permute.xlu0 %2277
        %2287 = vrot.lane.b32.xlu0 %v2247, 126
        %v2288 = vpop.permute.xlu0 %2287
        %2289 = vrot.lane.b32.xlu0 %v2248, 126
        %v2290 = vpop.permute.xlu0 %2289
        %2291 = vrot.lane.b32.xlu0 %v2249, 126
        %v2292 = vpop.permute.xlu0 %2291
        %2293 = vrot.lane.b32.xlu0 %v2250, 126
        %v2294 = vpop.permute.xlu0 %2293
        %2303 = vrot.lane.b32.xlu0 %v2251, 126
        %v2304 = vpop.permute.xlu0 %2303
        %2305 = vrot.lane.b32.xlu0 %v2252, 126
        %v2306 = vpop.permute.xlu0 %2305
        %2307 = vrot.lane.b32.xlu0 %v2253, 126
        %v2308 = vpop.permute.xlu0 %2307
        %2309 = vrot.lane.b32.xlu0 %v2254, 126
        %v2310 = vpop.permute.xlu0 %2309
        %2315 = vrot.lane.b32.xlu0 %v2239, 125
        %v2316 = vpop.permute.xlu0 %2315
        %2317 = vrot.lane.b32.xlu0 %v2240, 125
        %v2318 = vpop.permute.xlu0 %2317
        %2319 = vrot.lane.b32.xlu0 %v2241, 125
        %v2320 = vpop.permute.xlu0 %2319
        %2321 = vrot.lane.b32.xlu0 %v2242, 125
        %v2322 = vpop.permute.xlu0 %2321
        %2331 = vrot.lane.b32.xlu0 %v2255, 124
        %v2332 = vpop.permute.xlu0 %2331
        %2333 = vrot.lane.b32.xlu0 %v2256, 124
        %v2334 = vpop.permute.xlu0 %2333
        %2335 = vrot.lane.b32.xlu0 %v2257, 124
        %v2336 = vpop.permute.xlu0 %2335
        %2337 = vrot.lane.b32.xlu0 %v2258, 124
        %v2338 = vpop.permute.xlu0 %2337
        %2347 = vrot.lane.b32.xlu0 %v2259, 124
        %v2348 = vpop.permute.xlu0 %2347
        %2349 = vrot.lane.b32.xlu0 %v2260, 124
        %v2350 = vpop.permute.xlu0 %2349
        %2351 = vrot.lane.b32.xlu0 %v2261, 124
        %v2352 = vpop.permute.xlu0 %2351
        %2353 = vrot.lane.b32.xlu0 %v2262, 124
        %v2354 = vpop.permute.xlu0 %2353
        %2359 = vrot.lane.b32.xlu0 %v2239, 123
        %v2360 = vpop.permute.xlu0 %2359
        %2361 = vrot.lane.b32.xlu0 %v2240, 123
        %v2362 = vpop.permute.xlu0 %2361
        %2363 = vrot.lane.b32.xlu0 %v2241, 123
        %v2364 = vpop.permute.xlu0 %2363
        %2365 = vrot.lane.b32.xlu0 %v2242, 123
        %v2366 = vpop.permute.xlu0 %2365
        %2375 = vrot.lane.b32.xlu0 %v2263, 122
        %v2376 = vpop.permute.xlu0 %2375
        %2377 = vrot.lane.b32.xlu0 %v2264, 122
        %v2378 = vpop.permute.xlu0 %2377
        %2379 = vrot.lane.b32.xlu0 %v2265, 122
        %v2380 = vpop.permute.xlu0 %2379
        %2381 = vrot.lane.b32.xlu0 %v2266, 122
        %v2382 = vpop.permute.xlu0 %2381
        %v2387 = vpack.c.bf16 %v2244, %v2243
        %v2388 = vpack.c.bf16 %v2246, %v2245
        %v2389 = vpack.c.bf16 %v2274, %v2272
        %v2390 = vpack.c.bf16 %v2278, %v2276
        %v2391 = vpack.c.bf16 %v2290, %v2288
        %v2392 = vpack.c.bf16 %v2294, %v2292
        %v2393 = vpack.c.bf16 %v2306, %v2304
        %v2394 = vpack.c.bf16 %v2310, %v2308
        %v2395 = vpack.c.bf16 %v2318, %v2316
        %v2396 = vpack.c.bf16 %v2322, %v2320
        %v2397 = vpack.c.bf16 %v2334, %v2332
        %v2398 = vpack.c.bf16 %v2338, %v2336
        %v2399 = vpack.c.bf16 %v2350, %v2348
        %v2400 = vpack.c.bf16 %v2354, %v2352
        %v2401 = vpack.c.bf16 %v2362, %v2360
        %v2402 = vpack.c.bf16 %v2366, %v2364
        %v2403 = vpack.c.bf16 %v2378, %v2376
        %v2404 = vpack.c.bf16 %v2382, %v2380
        %2406 = vset.pattern.permute.xlu0 0
        %2407 = vperm.xlu0 %2406, %v1099
        %v2408 = vpop.permute.xlu0 %2407
        %2411 = vset.pattern.permute.xlu0 0
        %2412 = vperm.xlu0 %2411, %v1100
        %v2413 = vpop.permute.xlu0 %2412
        %2416 = vset.pattern.permute.xlu0 0
        %2417 = vperm.xlu0 %2416, %v1101
        %v2418 = vpop.permute.xlu0 %2417
        %2421 = vset.pattern.permute.xlu0 0
        %2422 = vperm.xlu0 %2421, %v1102
        %v2423 = vpop.permute.xlu0 %2422
        %v2433 = vunpack.c.l.b16 %v1091
        %v2434 = vunpack.c.h.b16 %v1091
        %v2435 = vunpack.c.l.b16 %v1092
        %v2436 = vunpack.c.l.b16 %v1093
        %v2437 = vunpack.c.h.b16 %v1093
        %v2438 = vunpack.c.l.b16 %v1094
        %v2439 = vunpack.c.l.b16 %v1095
        %v2440 = vunpack.c.h.b16 %v1095
        %v2441 = vunpack.c.l.b16 %v1096
        %v2442 = vunpack.c.l.b16 %v1097
        %v2443 = vunpack.c.h.b16 %v1097
        %v2444 = vunpack.c.l.b16 %v1098
        %v2445 = vpack.c.b16 %v2436, %v2433
        %v2446 = vpack.c.b16 %v2437, %v2434
        %v2447 = vpack.c.b16 %v2438, %v2435
        %v2448 = vpack.c.b16 %v2442, %v2439
        %v2449 = vpack.c.b16 %v2443, %v2440
        %v2450 = vpack.c.b16 %v2444, %v2441
        %vm2455 = vcmask 261120
        %v2457 = vsel %vm2455, %v2447, 0
        %v2460 = vsel %vm2455, %v2450, 0
        %2462 = vmatprep.subr.bf16.mxu0 0
        %2463 = vmatpush1.bf16.msra.mxu0 %v2394
        %2464 = vmatprep.subr.bf16.mxu0 0
        %2465 = vmatpush1.bf16.msra.mxu0 %v2393
        %2466 = vmatprep.subr.bf16.mxu0 0
        %2467 = vmatpush1.bf16.msra.mxu0 %v2392
        %2468 = vmatprep.subr.bf16.mxu0 0
        %2469 = vmatpush1.bf16.msra.mxu0 %v2391
        %2470 = vmatprep.subr.bf16.mxu0 0
        %2471 = vmatpush1.bf16.msra.mxu0 %v2390
        %2472 = vmatprep.subr.bf16.mxu0 0
        %2473 = vmatpush1.bf16.msra.mxu0 %v2389
        %2474 = vmatprep.subr.bf16.mxu0 0
        %2475 = vmatpush1.bf16.msra.mxu0 %v2388
        %2476 = vmatprep.subr.bf16.mxu0 0
        %2477 = vmatpush1.bf16.msra.mxu0 %v2387
        %2478 = vmatprep.subr.bf16.mxu0 0
        %2479 = vmatpush2.bf16.msra.mxu0 %v2402
        %2480 = vmatprep.subr.bf16.mxu0 0
        %2481 = vmatpush2.bf16.msra.mxu0 %v2401
        %2482 = vmatprep.subr.bf16.mxu0 0
        %2483 = vmatpush2.bf16.msra.mxu0 %v2400
        %2484 = vmatprep.subr.bf16.mxu0 0
        %2485 = vmatpush2.bf16.msra.mxu0 %v2399
        %2486 = vmatprep.subr.bf16.mxu0 0
        %2487 = vmatpush2.bf16.msra.mxu0 %v2398
        %2488 = vmatprep.subr.bf16.mxu0 0
        %2489 = vmatpush2.bf16.msra.mxu0 %v2397
        %2490 = vmatprep.subr.bf16.mxu0 0
        %2491 = vmatpush2.bf16.msra.mxu0 %v2396
        %2492 = vmatprep.subr.bf16.mxu0 0
        %2493 = vmatpush2.bf16.msra.mxu0 %v2395
        %2494 = vmatprep.mubr.bf16.mxu0 %v2446
        %2495 = vmatmul.mubr.bf16.gmra.mxu0 %v2445
        %v2496 = vpop.f32.mrf.mxu0
        %v2497 = vadd.f32 %v2408, %v2496
        %v2498 = vpop.f32.mrf.mxu0
        %v2499 = vpop.f32.mrf.mxu0
        %v2500 = vadd.f32 %v2413, %v2499
        %v2501 = vpop.f32.mrf.mxu0
        %2502 = vmatprep.mubr.bf16.mxu0 %v2449
        %2503 = vmatmul.mubr.bf16.gmra.mxu0 %v2448
        %v2504 = vpop.f32.mrf.mxu0
        %v2505 = vadd.f32 %v2418, %v2504
        %v2506 = vpop.f32.mrf.mxu0
        %v2507 = vpop.f32.mrf.mxu0
        %v2508 = vadd.f32 %v2423, %v2507
        %v2509 = vpop.f32.mrf.mxu0
        %2510 = vdwg.mxu0
        %2511 = vmatprep.subr.bf16.mxu0 0
        %2512 = vmatpush1.bf16.msra.mxu0 0
        %2513 = vmatprep.subr.bf16.mxu0 0
        %2514 = vmatpush1.bf16.msra.mxu0 0
        %2515 = vmatprep.subr.bf16.mxu0 0
        %2516 = vmatpush1.bf16.msra.mxu0 0
        %2517 = vmatprep.subr.bf16.mxu0 0
        %2518 = vmatpush1.bf16.msra.mxu0 0
        %2519 = vmatprep.subr.bf16.mxu0 0
        %2520 = vmatpush1.bf16.msra.mxu0 0
        %2521 = vmatprep.subr.bf16.mxu0 0
        %2522 = vmatpush1.bf16.msra.mxu0 0
        %2523 = vmatprep.subr.bf16.mxu0 0
        %2524 = vmatpush1.bf16.msra.mxu0 %v2404
        %2525 = vmatprep.subr.bf16.mxu0 0
        %2526 = vmatpush1.bf16.msra.mxu0 %v2403
        %2527 = vmatprep.subr.bf16.mxu0 0
        %2528 = vmatpush2.bf16.msra.mxu0 0
        %2529 = vmatprep.subr.bf16.mxu0 0
        %2530 = vmatpush2.bf16.msra.mxu0 0
        %2531 = vmatprep.subr.bf16.mxu0 0
        %2532 = vmatpush2.bf16.msra.mxu0 0
        %2533 = vmatprep.subr.bf16.mxu0 0
        %2534 = vmatpush2.bf16.msra.mxu0 0
        %2535 = vmatprep.subr.bf16.mxu0 0
        %2536 = vmatpush2.bf16.msra.mxu0 0
        %2537 = vmatprep.subr.bf16.mxu0 0
        %2538 = vmatpush2.bf16.msra.mxu0 0
        %2539 = vmatprep.subr.bf16.mxu0 0
        %2540 = vmatpush2.bf16.msra.mxu0 0
        %2541 = vmatprep.subr.bf16.mxu0 0
        %2542 = vmatpush2.bf16.msra.mxu0 0
        %2543 = vmatprep.mubr.bf16.mxu0 0
        %2544 = vmatmul.mubr.bf16.gmra.mxu0 %v2457
        %v2545 = vpop.f32.mrf.mxu0
        %v2546 = vadd.f32 %v2497, %v2545
        %v2547 = vpop.f32.mrf.mxu0
        %v2548 = vpop.f32.mrf.mxu0
        %v2549 = vadd.f32 %v2500, %v2548
        %v2550 = vpop.f32.mrf.mxu0
        %2551 = vmatprep.mubr.bf16.mxu0 0
        %2552 = vmatmul.mubr.bf16.gmra.mxu0 %v2460
        %v2553 = vpop.f32.mrf.mxu0
        %v2554 = vadd.f32 %v2505, %v2553
        %v2555 = vpop.f32.mrf.mxu0
        %v2556 = vpop.f32.mrf.mxu0
        %v2557 = vadd.f32 %v2508, %v2556
        %v2558 = vpop.f32.mrf.mxu0
        %2559 = vdwg.mxu0
        %v2560 = vmax.f32 %v2546, 0.0
        %v2561 = vmax.f32 %v2549, 0.0
        %v2562 = vmax.f32 %v2554, 0.0
        %v2563 = vmax.f32 %v2557, 0.0
        %v2564 = vld [vmem:[#allocation2] sm:$0x3]
        %v2565 = vpack.c.bf16 %v2561, %v2560
        %v2566 = vpack.c.bf16 %v2563, %v2562
        %vm2567 = vcmask 31744
        %v2569 = vsel %vm2567, %v2565, 0
        %v2572 = vsel %vm2567, %v2566, 0
        %vm2574 = vcmask 1041408
        %v2576 = vsel %vm2574, %v2564, 0
        %2578 = vmatprep.subr.bf16.mxu0 0
        %2579 = vmatpush1.bf16.msra.mxu0 0
        %2580 = vmatprep.subr.bf16.mxu0 0
        %2581 = vmatpush1.bf16.msra.mxu0 0
        %2582 = vmatprep.subr.bf16.mxu0 0
        %2583 = vmatpush1.bf16.msra.mxu0 0
        %2584 = vmatprep.subr.bf16.mxu0 0
        %2585 = vmatpush1.bf16.msra.mxu0 0
        %2586 = vmatprep.subr.bf16.mxu0 0
        %2587 = vmatpush1.bf16.msra.mxu0 0
        %2588 = vmatprep.subr.bf16.mxu0 0
        %2589 = vmatpush1.bf16.msra.mxu0 0
        %2590 = vmatprep.subr.bf16.mxu0 0
        %2591 = vmatpush1.bf16.msra.mxu0 0
        %2592 = vmatprep.subr.bf16.mxu0 0
        %2593 = vmatpush1.bf16.msra.mxu0 %v2576
        %2594 = vmatprep.subr.bf16.mxu0 0
        %2595 = vmatpush2.bf16.msra.mxu0 0
        %2596 = vmatprep.subr.bf16.mxu0 0
        %2597 = vmatpush2.bf16.msra.mxu0 0
        %2598 = vmatprep.subr.bf16.mxu0 0
        %2599 = vmatpush2.bf16.msra.mxu0 0
        %2600 = vmatprep.subr.bf16.mxu0 0
        %2601 = vmatpush2.bf16.msra.mxu0 0
        %2602 = vmatprep.subr.bf16.mxu0 0
        %2603 = vmatpush2.bf16.msra.mxu0 0
        %2604 = vmatprep.subr.bf16.mxu0 0
        %2605 = vmatpush2.bf16.msra.mxu0 0
        %2606 = vmatprep.subr.bf16.mxu0 0
        %2607 = vmatpush2.bf16.msra.mxu0 0
        %2608 = vmatprep.subr.bf16.mxu0 0
        %2609 = vmatpush2.bf16.msra.mxu0 0
        %2610 = vmatprep.mubr.bf16.mxu0 0
        %2611 = vmatmul.mubr.bf16.gmra.mxu0 %v2569
        %v2612 = vpop.f32.mrf.mxu0
        %v2613 = vadd.f32 0.0, %v2612
        %v2614 = vpop.f32.mrf.mxu0
        %v2615 = vpop.f32.mrf.mxu0
        %v2616 = vadd.f32 0.0, %v2615
        %v2617 = vpop.f32.mrf.mxu0
        %2618 = vmatprep.mubr.bf16.mxu0 0
        %2619 = vmatmul.mubr.bf16.gmra.mxu0 %v2572
        %v2620 = vpop.f32.mrf.mxu0
        %v2621 = vadd.f32 0.0, %v2620
        %v2622 = vpop.f32.mrf.mxu0
        %v2623 = vpop.f32.mrf.mxu0
        %v2624 = vadd.f32 0.0, %v2623
        %v2625 = vpop.f32.mrf.mxu0
        %2626 = vdwg.mxu0
        %v2627 = vld [vmem:[%s998] sm:$0xff]
        %v2628 = vld [vmem:[%s998 + $0x8] sm:$0xff]
        %v2629 = vld [vmem:[%s998 + $0x10] sm:$0xff]
        %v2630 = vld [vmem:[%s998 + $0x18] sm:$0xff]
        %v2631 = vand.u32 %v1059, 3
        %vm2632 = vcmp.ge.s32.totalorder %v2631, 1
        %v2633 = vsel %vm2632, 1, 0
        %v2634 = vcvt.s32.f32 %v2633
        %vm2635 = vcmp.lt.s32.totalorder %v2631, 3
        %v2636 = vsel %vm2635, 1, 0
        %v2637 = vcvt.s32.f32 %v2636
        %v2638 = vld [vmem:[%s27] sm:$0xff]
        %v2639 = vld [vmem:[%s27 + $0x8] sm:$0xff]
        %v2640 = vld [vmem:[%s27 + $0x10] sm:$0xf]
        %v2641 = vld [vmem:[%s27 + $0x14] sm:$0xff]
        %v2642 = vld [vmem:[%s27 + $0x1c] sm:$0xff]
        %v2643 = vld [vmem:[%s27 + $0x24] sm:$0xf]
        %v2644 = vld [vmem:[%s27 + $0x28] sm:$0xff]
        %v2645 = vld [vmem:[%s27 + $0x30] sm:$0xff]
        %v2646 = vld [vmem:[%s27 + $0x38] sm:$0xf]
        %v2647 = vld [vmem:[%s27 + $0x3c] sm:$0xff]
        %v2648 = vld [vmem:[%s27 + $0x44] sm:$0xff]
        %v2649 = vld [vmem:[%s27 + $0x4c] sm:$0xf]
        %v2650 = vld [vmem:[%s29] sm:$0xff]
        %v2651 = vld [vmem:[%s29 + $0x8] sm:$0xff]
        %v2652 = vld [vmem:[%s29 + $0x10] sm:$0xff]
        %v2653 = vld [vmem:[%s29 + $0x18] sm:$0xff]
        %v2654 = vld [vmem:[%s31] sm:$0xff]
        %v2655 = vld [vmem:[%s31 + $0x8] sm:$0xf]
        %v2656 = vld [vmem:[%s31 + $0xc] sm:$0xff]
        %v2657 = vld [vmem:[%s31 + $0x14] sm:$0xf]
        %v2658 = vld [vmem:[%s31 + $0x18] sm:$0xff]
        %v2659 = vld [vmem:[%s31 + $0x20] sm:$0xf]
        %v2660 = vld [vmem:[%s31 + $0x24] sm:$0xff]
        %v2661 = vld [vmem:[%s31 + $0x2c] sm:$0xf]
        %v2662 = vld [vmem:[%s33] sm:$0xff]
        %v2663 = vld [vmem:[%s33 + $0x8] sm:$0xff]
        %v2664 = vld [vmem:[%s33 + $0x10] sm:$0xff]
        %v2665 = vld [vmem:[%s33 + $0x18] sm:$0xff]
        %2674 = vrot.lane.b32.xlu0 %v2613, 5
        %v2675 = vpop.permute.xlu0 %2674
        %2676 = vrot.lane.b32.xlu0 %v2616, 5
        %v2677 = vpop.permute.xlu0 %2676
        %2678 = vrot.lane.b32.xlu0 %v2621, 5
        %v2679 = vpop.permute.xlu0 %2678
        %2680 = vrot.lane.b32.xlu0 %v2624, 5
        %v2681 = vpop.permute.xlu0 %2680
        %2682 = vrot.lane.b32.xlu0 %v2627, 5
        %v2683 = vpop.permute.xlu0 %2682
        %2684 = vrot.lane.b32.xlu0 %v2628, 5
        %v2685 = vpop.permute.xlu0 %2684
        %2686 = vrot.lane.b32.xlu0 %v2629, 5
        %v2687 = vpop.permute.xlu0 %2686
        %2688 = vrot.lane.b32.xlu0 %v2630, 5
        %v2689 = vpop.permute.xlu0 %2688
        %vm2698 = vcmask 39936
        %v2699 = vsel %vm2698, 0.0, %v2675
        %v2700 = vsel %vm2698, 0.0, %v2677
        %v2701 = vsel %vm2698, 0.0, %v2679
        %v2702 = vsel %vm2698, 0.0, %v2681
        %v2703 = vsel %vm2698, 0.0, %v2683
        %v2704 = vsel %vm2698, 0.0, %v2685
        %v2705 = vsel %vm2698, 0.0, %v2687
        %v2706 = vsel %vm2698, 0.0, %v2689
        %vm2707 = vcmask 171008
        %v2708 = vsel %vm2707, %v2699, 0.0
        %v2709 = vsel %vm2707, %v2700, 0.0
        %v2710 = vsel %vm2707, %v2701, 0.0
        %v2711 = vsel %vm2707, %v2702, 0.0
        %v2712 = vsel %vm2707, %v2703, 0.0
        %v2713 = vsel %vm2707, %v2704, 0.0
        %v2714 = vsel %vm2707, %v2705, 0.0
        %v2715 = vsel %vm2707, %v2706, 0.0
        %v2716 = vmul.f32 %v2708, %v2634
        %v2717 = vmul.f32 %v2709, %v2634
        %v2718 = vmul.f32 %v2710, %v2634
        %v2719 = vmul.f32 %v2711, %v2634
        %v2720 = vmul.f32 %v2712, %v2634
        %v2721 = vmul.f32 %v2713, %v2634
        %v2722 = vmul.f32 %v2714, %v2634
        %v2723 = vmul.f32 %v2715, %v2634
        %2725 = vrot.lane.b32.xlu0 %v2637, 2
        %v2726 = vpop.permute.xlu0 %2725
        %v2728 = vmul.f32 %v2708, %v2726
        %v2729 = vmul.f32 %v2709, %v2726
        %v2730 = vmul.f32 %v2710, %v2726
        %v2731 = vmul.f32 %v2711, %v2726
        %v2732 = vmul.f32 %v2712, %v2726
        %v2733 = vmul.f32 %v2713, %v2726
        %v2734 = vmul.f32 %v2714, %v2726
        %v2735 = vmul.f32 %v2715, %v2726
        %2737 = vrot.lane.b32.xlu0 %v2634, 4
        %v2738 = vpop.permute.xlu0 %2737
        %v2740 = vmul.f32 %v2708, %v2738
        %v2741 = vmul.f32 %v2709, %v2738
        %v2742 = vmul.f32 %v2710, %v2738
        %v2743 = vmul.f32 %v2711, %v2738
        %v2744 = vmul.f32 %v2712, %v2738
        %v2745 = vmul.f32 %v2713, %v2738
        %v2746 = vmul.f32 %v2714, %v2738
        %v2747 = vmul.f32 %v2715, %v2738
        %2748 = vrot.lane.b32.xlu0 %v2637, 6
        %v2749 = vpop.permute.xlu0 %2748
        %v2751 = vmul.f32 %v2708, %v2749
        %v2752 = vmul.f32 %v2709, %v2749
        %v2753 = vmul.f32 %v2710, %v2749
        %v2754 = vmul.f32 %v2711, %v2749
        %v2755 = vmul.f32 %v2712, %v2749
        %v2756 = vmul.f32 %v2713, %v2749
        %v2757 = vmul.f32 %v2714, %v2749
        %v2758 = vmul.f32 %v2715, %v2749
        %2759 = vrot.lane.b32.xlu0 %v2634, 8
        %v2760 = vpop.permute.xlu0 %2759
        %v2762 = vmul.f32 %v2708, %v2760
        %v2763 = vmul.f32 %v2709, %v2760
        %v2764 = vmul.f32 %v2710, %v2760
        %v2765 = vmul.f32 %v2711, %v2760
        %v2766 = vmul.f32 %v2712, %v2760
        %v2767 = vmul.f32 %v2713, %v2760
        %v2768 = vmul.f32 %v2714, %v2760
        %v2769 = vmul.f32 %v2715, %v2760
        %2770 = vrot.lane.b32.xlu0 %v2637, 10
        %v2771 = vpop.permute.xlu0 %2770
        %v2773 = vmul.f32 %v2708, %v2771
        %v2774 = vmul.f32 %v2709, %v2771
        %v2775 = vmul.f32 %v2710, %v2771
        %v2776 = vmul.f32 %v2711, %v2771
        %v2777 = vmul.f32 %v2712, %v2771
        %v2778 = vmul.f32 %v2713, %v2771
        %v2779 = vmul.f32 %v2714, %v2771
        %v2780 = vmul.f32 %v2715, %v2771
        %2789 = vrot.lane.b32.xlu0 %v2708, 127
        %v2790 = vpop.permute.xlu0 %2789
        %2791 = vrot.lane.b32.xlu0 %v2709, 127
        %v2792 = vpop.permute.xlu0 %2791
        %2793 = vrot.lane.b32.xlu0 %v2710, 127
        %v2794 = vpop.permute.xlu0 %2793
        %2795 = vrot.lane.b32.xlu0 %v2711, 127
        %v2796 = vpop.permute.xlu0 %2795
        %2797 = vrot.lane.b32.xlu0 %v2712, 127
        %v2798 = vpop.permute.xlu0 %2797
        %2799 = vrot.lane.b32.xlu0 %v2713, 127
        %v2800 = vpop.permute.xlu0 %2799
        %2801 = vrot.lane.b32.xlu0 %v2714, 127
        %v2802 = vpop.permute.xlu0 %2801
        %2803 = vrot.lane.b32.xlu0 %v2715, 127
        %v2804 = vpop.permute.xlu0 %2803
        %2821 = vrot.lane.b32.xlu0 %v2728, 126
        %v2822 = vpop.permute.xlu0 %2821
        %2823 = vrot.lane.b32.xlu0 %v2729, 126
        %v2824 = vpop.permute.xlu0 %2823
        %2825 = vrot.lane.b32.xlu0 %v2730, 126
        %v2826 = vpop.permute.xlu0 %2825
        %2827 = vrot.lane.b32.xlu0 %v2731, 126
        %v2828 = vpop.permute.xlu0 %2827
        %2829 = vrot.lane.b32.xlu0 %v2732, 126
        %v2830 = vpop.permute.xlu0 %2829
        %2831 = vrot.lane.b32.xlu0 %v2733, 126
        %v2832 = vpop.permute.xlu0 %2831
        %2833 = vrot.lane.b32.xlu0 %v2734, 126
        %v2834 = vpop.permute.xlu0 %2833
        %2835 = vrot.lane.b32.xlu0 %v2735, 126
        %v2836 = vpop.permute.xlu0 %2835
        %2853 = vrot.lane.b32.xlu0 %v2740, 124
        %v2854 = vpop.permute.xlu0 %2853
        %2855 = vrot.lane.b32.xlu0 %v2741, 124
        %v2856 = vpop.permute.xlu0 %2855
        %2857 = vrot.lane.b32.xlu0 %v2742, 124
        %v2858 = vpop.permute.xlu0 %2857
        %2859 = vrot.lane.b32.xlu0 %v2743, 124
        %v2860 = vpop.permute.xlu0 %2859
        %2861 = vrot.lane.b32.xlu0 %v2744, 124
        %v2862 = vpop.permute.xlu0 %2861
        %2863 = vrot.lane.b32.xlu0 %v2745, 124
        %v2864 = vpop.permute.xlu0 %2863
        %2865 = vrot.lane.b32.xlu0 %v2746, 124
        %v2866 = vpop.permute.xlu0 %2865
        %2867 = vrot.lane.b32.xlu0 %v2747, 124
        %v2868 = vpop.permute.xlu0 %2867
        %2877 = vrot.lane.b32.xlu0 %v2708, 123
        %v2878 = vpop.permute.xlu0 %2877
        %2879 = vrot.lane.b32.xlu0 %v2709, 123
        %v2880 = vpop.permute.xlu0 %2879
        %2881 = vrot.lane.b32.xlu0 %v2710, 123
        %v2882 = vpop.permute.xlu0 %2881
        %2883 = vrot.lane.b32.xlu0 %v2711, 123
        %v2884 = vpop.permute.xlu0 %2883
        %2885 = vrot.lane.b32.xlu0 %v2712, 123
        %v2886 = vpop.permute.xlu0 %2885
        %2887 = vrot.lane.b32.xlu0 %v2713, 123
        %v2888 = vpop.permute.xlu0 %2887
        %2889 = vrot.lane.b32.xlu0 %v2714, 123
        %v2890 = vpop.permute.xlu0 %2889
        %2891 = vrot.lane.b32.xlu0 %v2715, 123
        %v2892 = vpop.permute.xlu0 %2891
        %2909 = vrot.lane.b32.xlu0 %v2751, 122
        %v2910 = vpop.permute.xlu0 %2909
        %2911 = vrot.lane.b32.xlu0 %v2752, 122
        %v2912 = vpop.permute.xlu0 %2911
        %2913 = vrot.lane.b32.xlu0 %v2753, 122
        %v2914 = vpop.permute.xlu0 %2913
        %2915 = vrot.lane.b32.xlu0 %v2754, 122
        %v2916 = vpop.permute.xlu0 %2915
        %2917 = vrot.lane.b32.xlu0 %v2755, 122
        %v2918 = vpop.permute.xlu0 %2917
        %2919 = vrot.lane.b32.xlu0 %v2756, 122
        %v2920 = vpop.permute.xlu0 %2919
        %2921 = vrot.lane.b32.xlu0 %v2757, 122
        %v2922 = vpop.permute.xlu0 %2921
        %2923 = vrot.lane.b32.xlu0 %v2758, 122
        %v2924 = vpop.permute.xlu0 %2923
        %2941 = vrot.lane.b32.xlu0 %v2762, 120
        %v2942 = vpop.permute.xlu0 %2941
        %2943 = vrot.lane.b32.xlu0 %v2763, 120
        %v2944 = vpop.permute.xlu0 %2943
        %2945 = vrot.lane.b32.xlu0 %v2764, 120
        %v2946 = vpop.permute.xlu0 %2945
        %2947 = vrot.lane.b32.xlu0 %v2765, 120
        %v2948 = vpop.permute.xlu0 %2947
        %2949 = vrot.lane.b32.xlu0 %v2766, 120
        %v2950 = vpop.permute.xlu0 %2949
        %2951 = vrot.lane.b32.xlu0 %v2767, 120
        %v2952 = vpop.permute.xlu0 %2951
        %2953 = vrot.lane.b32.xlu0 %v2768, 120
        %v2954 = vpop.permute.xlu0 %2953
        %2955 = vrot.lane.b32.xlu0 %v2769, 120
        %v2956 = vpop.permute.xlu0 %2955
        %2965 = vrot.lane.b32.xlu0 %v2708, 119
        %v2966 = vpop.permute.xlu0 %2965
        %2967 = vrot.lane.b32.xlu0 %v2709, 119
        %v2968 = vpop.permute.xlu0 %2967
        %2969 = vrot.lane.b32.xlu0 %v2710, 119
        %v2970 = vpop.permute.xlu0 %2969
        %2971 = vrot.lane.b32.xlu0 %v2711, 119
        %v2972 = vpop.permute.xlu0 %2971
        %2973 = vrot.lane.b32.xlu0 %v2712, 119
        %v2974 = vpop.permute.xlu0 %2973
        %2975 = vrot.lane.b32.xlu0 %v2713, 119
        %v2976 = vpop.permute.xlu0 %2975
        %2977 = vrot.lane.b32.xlu0 %v2714, 119
        %v2978 = vpop.permute.xlu0 %2977
        %2979 = vrot.lane.b32.xlu0 %v2715, 119
        %v2980 = vpop.permute.xlu0 %2979
        %2997 = vrot.lane.b32.xlu0 %v2773, 118
        %v2998 = vpop.permute.xlu0 %2997
        %2999 = vrot.lane.b32.xlu0 %v2774, 118
        %v3000 = vpop.permute.xlu0 %2999
        %3001 = vrot.lane.b32.xlu0 %v2775, 118
        %v3002 = vpop.permute.xlu0 %3001
        %3003 = vrot.lane.b32.xlu0 %v2776, 118
        %v3004 = vpop.permute.xlu0 %3003
        %3005 = vrot.lane.b32.xlu0 %v2777, 118
        %v3006 = vpop.permute.xlu0 %3005
        %3007 = vrot.lane.b32.xlu0 %v2778, 118
        %v3008 = vpop.permute.xlu0 %3007
        %3009 = vrot.lane.b32.xlu0 %v2779, 118
        %v3010 = vpop.permute.xlu0 %3009
        %3011 = vrot.lane.b32.xlu0 %v2780, 118
        %v3012 = vpop.permute.xlu0 %3011
        %v3021 = vpack.c.bf16 %v2717, %v2716
        %v3022 = vpack.c.bf16 %v2719, %v2718
        %v3023 = vpack.c.bf16 %v2721, %v2720
        %v3024 = vpack.c.bf16 %v2723, %v2722
        %v3025 = vpack.c.bf16 %v2792, %v2790
        %v3026 = vpack.c.bf16 %v2796, %v2794
        %v3027 = vpack.c.bf16 %v2800, %v2798
        %v3028 = vpack.c.bf16 %v2804, %v2802
        %v3029 = vpack.c.bf16 %v2824, %v2822
        %v3030 = vpack.c.bf16 %v2828, %v2826
        %v3031 = vpack.c.bf16 %v2832, %v2830
        %v3032 = vpack.c.bf16 %v2836, %v2834
        %v3033 = vpack.c.bf16 %v2856, %v2854
        %v3034 = vpack.c.bf16 %v2860, %v2858
        %v3035 = vpack.c.bf16 %v2864, %v2862
        %v3036 = vpack.c.bf16 %v2868, %v2866
        %v3037 = vpack.c.bf16 %v2880, %v2878
        %v3038 = vpack.c.bf16 %v2884, %v2882
        %v3039 = vpack.c.bf16 %v2888, %v2886
        %v3040 = vpack.c.bf16 %v2892, %v2890
        %v3041 = vpack.c.bf16 %v2912, %v2910
        %v3042 = vpack.c.bf16 %v2916, %v2914
        %v3043 = vpack.c.bf16 %v2920, %v2918
        %v3044 = vpack.c.bf16 %v2924, %v2922
        %v3045 = vpack.c.bf16 %v2944, %v2942
        %v3046 = vpack.c.bf16 %v2948, %v2946
        %v3047 = vpack.c.bf16 %v2952, %v2950
        %v3048 = vpack.c.bf16 %v2956, %v2954
        %v3049 = vpack.c.bf16 %v2968, %v2966
        %v3050 = vpack.c.bf16 %v2972, %v2970
        %v3051 = vpack.c.bf16 %v2976, %v2974
        %v3052 = vpack.c.bf16 %v2980, %v2978
        %v3053 = vpack.c.bf16 %v3000, %v2998
        %v3054 = vpack.c.bf16 %v3004, %v3002
        %v3055 = vpack.c.bf16 %v3008, %v3006
        %v3056 = vpack.c.bf16 %v3012, %v3010
        %3058 = vset.pattern.permute.xlu0 0
        %3059 = vperm.xlu0 %3058, %v2650
        %v3060 = vpop.permute.xlu0 %3059
        %3063 = vset.pattern.permute.xlu0 0
        %3064 = vperm.xlu0 %3063, %v2651
        %v3065 = vpop.permute.xlu0 %3064
        %3068 = vset.pattern.permute.xlu0 0
        %3069 = vperm.xlu0 %3068, %v2652
        %v3070 = vpop.permute.xlu0 %3069
        %3073 = vset.pattern.permute.xlu0 0
        %3074 = vperm.xlu0 %3073, %v2653
        %v3075 = vpop.permute.xlu0 %3074
        %v3089 = vunpack.c.l.b16 %v2638
        %v3090 = vunpack.c.h.b16 %v2638
        %v3091 = vunpack.c.l.b16 %v2639
        %v3092 = vunpack.c.h.b16 %v2639
        %v3093 = vunpack.c.l.b16 %v2640
        %v3094 = vunpack.c.l.b16 %v2641
        %v3095 = vunpack.c.h.b16 %v2641
        %v3096 = vunpack.c.l.b16 %v2642
        %v3097 = vunpack.c.h.b16 %v2642
        %v3098 = vunpack.c.l.b16 %v2643
        %v3099 = vunpack.c.l.b16 %v2644
        %v3100 = vunpack.c.h.b16 %v2644
        %v3101 = vunpack.c.l.b16 %v2645
        %v3102 = vunpack.c.h.b16 %v2645
        %v3103 = vunpack.c.l.b16 %v2646
        %v3104 = vunpack.c.l.b16 %v2647
        %v3105 = vunpack.c.h.b16 %v2647
        %v3106 = vunpack.c.l.b16 %v2648
        %v3107 = vunpack.c.h.b16 %v2648
        %v3108 = vunpack.c.l.b16 %v2649
        %v3109 = vpack.c.b16 %v3094, %v3089
        %v3110 = vpack.c.b16 %v3095, %v3090
        %v3111 = vpack.c.b16 %v3096, %v3091
        %v3112 = vpack.c.b16 %v3097, %v3092
        %v3113 = vpack.c.b16 %v3098, %v3093
        %v3114 = vpack.c.b16 %v3104, %v3099
        %v3115 = vpack.c.b16 %v3105, %v3100
        %v3116 = vpack.c.b16 %v3106, %v3101
        %v3117 = vpack.c.b16 %v3107, %v3102
        %v3118 = vpack.c.b16 %v3108, %v3103
        %vm3127 = vcmask 523264
        %v3129 = vsel %vm3127, %v3113, 0
        %v3132 = vsel %vm3127, %v3118, 0
        %3134 = vmatprep.subr.bf16.mxu0 0
        %3135 = vmatpush1.bf16.msra.mxu0 %v3028
        %3136 = vmatprep.subr.bf16.mxu0 0
        %3137 = vmatpush1.bf16.msra.mxu0 %v3027
        %3138 = vmatprep.subr.bf16.mxu0 0
        %3139 = vmatpush1.bf16.msra.mxu0 %v3026
        %3140 = vmatprep.subr.bf16.mxu0 0
        %3141 = vmatpush1.bf16.msra.mxu0 %v3025
        %3142 = vmatprep.subr.bf16.mxu0 0
        %3143 = vmatpush1.bf16.msra.mxu0 %v3024
        %3144 = vmatprep.subr.bf16.mxu0 0
        %3145 = vmatpush1.bf16.msra.mxu0 %v3023
        %3146 = vmatprep.subr.bf16.mxu0 0
        %3147 = vmatpush1.bf16.msra.mxu0 %v3022
        %3148 = vmatprep.subr.bf16.mxu0 0
        %3149 = vmatpush1.bf16.msra.mxu0 %v3021
        %3150 = vmatprep.subr.bf16.mxu0 0
        %3151 = vmatpush2.bf16.msra.mxu0 %v3036
        %3152 = vmatprep.subr.bf16.mxu0 0
        %3153 = vmatpush2.bf16.msra.mxu0 %v3035
        %3154 = vmatprep.subr.bf16.mxu0 0
        %3155 = vmatpush2.bf16.msra.mxu0 %v3034
        %3156 = vmatprep.subr.bf16.mxu0 0
        %3157 = vmatpush2.bf16.msra.mxu0 %v3033
        %3158 = vmatprep.subr.bf16.mxu0 0
        %3159 = vmatpush2.bf16.msra.mxu0 %v3032
        %3160 = vmatprep.subr.bf16.mxu0 0
        %3161 = vmatpush2.bf16.msra.mxu0 %v3031
        %3162 = vmatprep.subr.bf16.mxu0 0
        %3163 = vmatpush2.bf16.msra.mxu0 %v3030
        %3164 = vmatprep.subr.bf16.mxu0 0
        %3165 = vmatpush2.bf16.msra.mxu0 %v3029
        %3166 = vmatprep.mubr.bf16.mxu0 %v3110
        %3167 = vmatmul.mubr.bf16.gmra.mxu0 %v3109
        %v3168 = vpop.f32.mrf.mxu0
        %v3169 = vadd.f32 %v3060, %v3168
        %v3170 = vpop.f32.mrf.mxu0
        %v3171 = vpop.f32.mrf.mxu0
        %v3172 = vadd.f32 %v3065, %v3171
        %v3173 = vpop.f32.mrf.mxu0
        %3174 = vmatprep.mubr.bf16.mxu0 %v3115
        %3175 = vmatmul.mubr.bf16.gmra.mxu0 %v3114
        %v3176 = vpop.f32.mrf.mxu0
        %v3177 = vadd.f32 %v3070, %v3176
        %v3178 = vpop.f32.mrf.mxu0
        %v3179 = vpop.f32.mrf.mxu0
        %v3180 = vadd.f32 %v3075, %v3179
        %v3181 = vpop.f32.mrf.mxu0
        %3182 = vdwg.mxu0
        %3183 = vmatprep.subr.bf16.mxu0 0
        %3184 = vmatpush1.bf16.msra.mxu0 %v3044
        %3185 = vmatprep.subr.bf16.mxu0 0
        %3186 = vmatpush1.bf16.msra.mxu0 %v3043
        %3187 = vmatprep.subr.bf16.mxu0 0
        %3188 = vmatpush1.bf16.msra.mxu0 %v3042
        %3189 = vmatprep.subr.bf16.mxu0 0
        %3190 = vmatpush1.bf16.msra.mxu0 %v3041
        %3191 = vmatprep.subr.bf16.mxu0 0
        %3192 = vmatpush1.bf16.msra.mxu0 %v3040
        %3193 = vmatprep.subr.bf16.mxu0 0
        %3194 = vmatpush1.bf16.msra.mxu0 %v3039
        %3195 = vmatprep.subr.bf16.mxu0 0
        %3196 = vmatpush1.bf16.msra.mxu0 %v3038
        %3197 = vmatprep.subr.bf16.mxu0 0
        %3198 = vmatpush1.bf16.msra.mxu0 %v3037
        %3199 = vmatprep.subr.bf16.mxu0 0
        %3200 = vmatpush2.bf16.msra.mxu0 %v3052
        %3201 = vmatprep.subr.bf16.mxu0 0
        %3202 = vmatpush2.bf16.msra.mxu0 %v3051
        %3203 = vmatprep.subr.bf16.mxu0 0
        %3204 = vmatpush2.bf16.msra.mxu0 %v3050
        %3205 = vmatprep.subr.bf16.mxu0 0
        %3206 = vmatpush2.bf16.msra.mxu0 %v3049
        %3207 = vmatprep.subr.bf16.mxu0 0
        %3208 = vmatpush2.bf16.msra.mxu0 %v3048
        %3209 = vmatprep.subr.bf16.mxu0 0
        %3210 = vmatpush2.bf16.msra.mxu0 %v3047
        %3211 = vmatprep.subr.bf16.mxu0 0
        %3212 = vmatpush2.bf16.msra.mxu0 %v3046
        %3213 = vmatprep.subr.bf16.mxu0 0
        %3214 = vmatpush2.bf16.msra.mxu0 %v3045
        %3215 = vmatprep.mubr.bf16.mxu0 %v3112
        %3216 = vmatmul.mubr.bf16.gmra.mxu0 %v3111
        %v3217 = vpop.f32.mrf.mxu0
        %v3218 = vadd.f32 %v3169, %v3217
        %v3219 = vpop.f32.mrf.mxu0
        %v3220 = vpop.f32.mrf.mxu0
        %v3221 = vadd.f32 %v3172, %v3220
        %v3222 = vpop.f32.mrf.mxu0
        %3223 = vmatprep.mubr.bf16.mxu0 %v3117
        %3224 = vmatmul.mubr.bf16.gmra.mxu0 %v3116
        %v3225 = vpop.f32.mrf.mxu0
        %v3226 = vadd.f32 %v3177, %v3225
        %v3227 = vpop.f32.mrf.mxu0
        %v3228 = vpop.f32.mrf.mxu0
        %v3229 = vadd.f32 %v3180, %v3228
        %v3230 = vpop.f32.mrf.mxu0
        %3231 = vdwg.mxu0
        %3232 = vmatprep.subr.bf16.mxu0 0
        %3233 = vmatpush1.bf16.msra.mxu0 0
        %3234 = vmatprep.subr.bf16.mxu0 0
        %3235 = vmatpush1.bf16.msra.mxu0 0
        %3236 = vmatprep.subr.bf16.mxu0 0
        %3237 = vmatpush1.bf16.msra.mxu0 0
        %3238 = vmatprep.subr.bf16.mxu0 0
        %3239 = vmatpush1.bf16.msra.mxu0 0
        %3240 = vmatprep.subr.bf16.mxu0 0
        %3241 = vmatpush1.bf16.msra.mxu0 %v3056
        %3242 = vmatprep.subr.bf16.mxu0 0
        %3243 = vmatpush1.bf16.msra.mxu0 %v3055
        %3244 = vmatprep.subr.bf16.mxu0 0
        %3245 = vmatpush1.bf16.msra.mxu0 %v3054
        %3246 = vmatprep.subr.bf16.mxu0 0
        %3247 = vmatpush1.bf16.msra.mxu0 %v3053
        %3248 = vmatprep.subr.bf16.mxu0 0
        %3249 = vmatpush2.bf16.msra.mxu0 0
        %3250 = vmatprep.subr.bf16.mxu0 0
        %3251 = vmatpush2.bf16.msra.mxu0 0
        %3252 = vmatprep.subr.bf16.mxu0 0
        %3253 = vmatpush2.bf16.msra.mxu0 0
        %3254 = vmatprep.subr.bf16.mxu0 0
        %3255 = vmatpush2.bf16.msra.mxu0 0
        %3256 = vmatprep.subr.bf16.mxu0 0
        %3257 = vmatpush2.bf16.msra.mxu0 0
        %3258 = vmatprep.subr.bf16.mxu0 0
        %3259 = vmatpush2.bf16.msra.mxu0 0
        %3260 = vmatprep.subr.bf16.mxu0 0
        %3261 = vmatpush2.bf16.msra.mxu0 0
        %3262 = vmatprep.subr.bf16.mxu0 0
        %3263 = vmatpush2.bf16.msra.mxu0 0
        %3264 = vmatprep.mubr.bf16.mxu0 0
        %3265 = vmatmul.mubr.bf16.gmra.mxu0 %v3129
        %v3266 = vpop.f32.mrf.mxu0
        %v3267 = vadd.f32 %v3218, %v3266
        %v3268 = vpop.f32.mrf.mxu0
        %v3269 = vpop.f32.mrf.mxu0
        %v3270 = vadd.f32 %v3221, %v3269
        %v3271 = vpop.f32.mrf.mxu0
        %3272 = vmatprep.mubr.bf16.mxu0 0
        %3273 = vmatmul.mubr.bf16.gmra.mxu0 %v3132
        %v3274 = vpop.f32.mrf.mxu0
        %v3275 = vadd.f32 %v3226, %v3274
        %v3276 = vpop.f32.mrf.mxu0
        %v3277 = vpop.f32.mrf.mxu0
        %v3278 = vadd.f32 %v3229, %v3277
        %v3279 = vpop.f32.mrf.mxu0
        %3280 = vdwg.mxu0
        %v3281 = vmax.f32 %v3267, 0.0
        %v3282 = vmax.f32 %v3270, 0.0
        %v3283 = vmax.f32 %v3275, 0.0
        %v3284 = vmax.f32 %v3278, 0.0
        %3289 = vrot.lane.b32.xlu0 %v3281, 5
        %v3290 = vpop.permute.xlu0 %3289
        %3291 = vrot.lane.b32.xlu0 %v3282, 5
        %v3292 = vpop.permute.xlu0 %3291
        %3293 = vrot.lane.b32.xlu0 %v3283, 5
        %v3294 = vpop.permute.xlu0 %3293
        %3295 = vrot.lane.b32.xlu0 %v3284, 5
        %v3296 = vpop.permute.xlu0 %3295
        %v3301 = vsel %vm2698, 0.0, %v3290
        %v3302 = vsel %vm2698, 0.0, %v3292
        %v3303 = vsel %vm2698, 0.0, %v3294
        %v3304 = vsel %vm2698, 0.0, %v3296
        %v3305 = vsel %vm2707, %v3301, 0.0
        %v3306 = vsel %vm2707, %v3302, 0.0
        %v3307 = vsel %vm2707, %v3303, 0.0
        %v3308 = vsel %vm2707, %v3304, 0.0
        %v3309 = vmul.f32 %v3305, %v2634
        %v3310 = vmul.f32 %v3306, %v2634
        %v3311 = vmul.f32 %v3307, %v2634
        %v3312 = vmul.f32 %v3308, %v2634
        %v3313 = vmul.f32 %v3305, %v2726
        %v3314 = vmul.f32 %v3306, %v2726
        %v3315 = vmul.f32 %v3307, %v2726
        %v3316 = vmul.f32 %v3308, %v2726
        %v3317 = vmul.f32 %v3305, %v2738
        %v3318 = vmul.f32 %v3306, %v2738
        %v3319 = vmul.f32 %v3307, %v2738
        %v3320 = vmul.f32 %v3308, %v2738
        %v3321 = vmul.f32 %v3305, %v2749
        %v3322 = vmul.f32 %v3306, %v2749
        %v3323 = vmul.f32 %v3307, %v2749
        %v3324 = vmul.f32 %v3308, %v2749
        %v3325 = vmul.f32 %v3305, %v2760
        %v3326 = vmul.f32 %v3306, %v2760
        %v3327 = vmul.f32 %v3307, %v2760
        %v3328 = vmul.f32 %v3308, %v2760
        %v3329 = vmul.f32 %v3305, %v2771
        %v3330 = vmul.f32 %v3306, %v2771
        %v3331 = vmul.f32 %v3307, %v2771
        %v3332 = vmul.f32 %v3308, %v2771
        %3337 = vrot.lane.b32.xlu0 %v3305, 127
        %v3338 = vpop.permute.xlu0 %3337
        %3339 = vrot.lane.b32.xlu0 %v3306, 127
        %v3340 = vpop.permute.xlu0 %3339
        %3341 = vrot.lane.b32.xlu0 %v3307, 127
        %v3342 = vpop.permute.xlu0 %3341
        %3343 = vrot.lane.b32.xlu0 %v3308, 127
        %v3344 = vpop.permute.xlu0 %3343
        %3353 = vrot.lane.b32.xlu0 %v3313, 126
        %v3354 = vpop.permute.xlu0 %3353
        %3355 = vrot.lane.b32.xlu0 %v3314, 126
        %v3356 = vpop.permute.xlu0 %3355
        %3357 = vrot.lane.b32.xlu0 %v3315, 126
        %v3358 = vpop.permute.xlu0 %3357
        %3359 = vrot.lane.b32.xlu0 %v3316, 126
        %v3360 = vpop.permute.xlu0 %3359
        %3369 = vrot.lane.b32.xlu0 %v3317, 124
        %v3370 = vpop.permute.xlu0 %3369
        %3371 = vrot.lane.b32.xlu0 %v3318, 124
        %v3372 = vpop.permute.xlu0 %3371
        %3373 = vrot.lane.b32.xlu0 %v3319, 124
        %v3374 = vpop.permute.xlu0 %3373
        %3375 = vrot.lane.b32.xlu0 %v3320, 124
        %v3376 = vpop.permute.xlu0 %3375
        %3381 = vrot.lane.b32.xlu0 %v3305, 123
        %v3382 = vpop.permute.xlu0 %3381
        %3383 = vrot.lane.b32.xlu0 %v3306, 123
        %v3384 = vpop.permute.xlu0 %3383
        %3385 = vrot.lane.b32.xlu0 %v3307, 123
        %v3386 = vpop.permute.xlu0 %3385
        %3387 = vrot.lane.b32.xlu0 %v3308, 123
        %v3388 = vpop.permute.xlu0 %3387
        %3397 = vrot.lane.b32.xlu0 %v3321, 122
        %v3398 = vpop.permute.xlu0 %3397
        %3399 = vrot.lane.b32.xlu0 %v3322, 122
        %v3400 = vpop.permute.xlu0 %3399
        %3401 = vrot.lane.b32.xlu0 %v3323, 122
        %v3402 = vpop.permute.xlu0 %3401
        %3403 = vrot.lane.b32.xlu0 %v3324, 122
        %v3404 = vpop.permute.xlu0 %3403
        %3413 = vrot.lane.b32.xlu0 %v3325, 120
        %v3414 = vpop.permute.xlu0 %3413
        %3415 = vrot.lane.b32.xlu0 %v3326, 120
        %v3416 = vpop.permute.xlu0 %3415
        %3417 = vrot.lane.b32.xlu0 %v3327, 120
        %v3418 = vpop.permute.xlu0 %3417
        %3419 = vrot.lane.b32.xlu0 %v3328, 120
        %v3420 = vpop.permute.xlu0 %3419
        %3425 = vrot.lane.b32.xlu0 %v3305, 119
        %v3426 = vpop.permute.xlu0 %3425
        %3427 = vrot.lane.b32.xlu0 %v3306, 119
        %v3428 = vpop.permute.xlu0 %3427
        %3429 = vrot.lane.b32.xlu0 %v3307, 119
        %v3430 = vpop.permute.xlu0 %3429
        %3431 = vrot.lane.b32.xlu0 %v3308, 119
        %v3432 = vpop.permute.xlu0 %3431
        %3441 = vrot.lane.b32.xlu0 %v3329, 118
        %v3442 = vpop.permute.xlu0 %3441
        %3443 = vrot.lane.b32.xlu0 %v3330, 118
        %v3444 = vpop.permute.xlu0 %3443
        %3445 = vrot.lane.b32.xlu0 %v3331, 118
        %v3446 = vpop.permute.xlu0 %3445
        %3447 = vrot.lane.b32.xlu0 %v3332, 118
        %v3448 = vpop.permute.xlu0 %3447
        %v3453 = vpack.c.bf16 %v3310, %v3309
        %v3454 = vpack.c.bf16 %v3312, %v3311
        %v3455 = vpack.c.bf16 %v3340, %v3338
        %v3456 = vpack.c.bf16 %v3344, %v3342
        %v3457 = vpack.c.bf16 %v3356, %v3354
        %v3458 = vpack.c.bf16 %v3360, %v3358
        %v3459 = vpack.c.bf16 %v3372, %v3370
        %v3460 = vpack.c.bf16 %v3376, %v3374
        %v3461 = vpack.c.bf16 %v3384, %v3382
        %v3462 = vpack.c.bf16 %v3388, %v3386
        %v3463 = vpack.c.bf16 %v3400, %v3398
        %v3464 = vpack.c.bf16 %v3404, %v3402
        %v3465 = vpack.c.bf16 %v3416, %v3414
        %v3466 = vpack.c.bf16 %v3420, %v3418
        %v3467 = vpack.c.bf16 %v3428, %v3426
        %v3468 = vpack.c.bf16 %v3432, %v3430
        %v3469 = vpack.c.bf16 %v3444, %v3442
        %v3470 = vpack.c.bf16 %v3448, %v3446
        %3472 = vset.pattern.permute.xlu0 0
        %3473 = vperm.xlu0 %3472, %v2662
        %v3474 = vpop.permute.xlu0 %3473
        %3477 = vset.pattern.permute.xlu0 0
        %3478 = vperm.xlu0 %3477, %v2663
        %v3479 = vpop.permute.xlu0 %3478
        %3482 = vset.pattern.permute.xlu0 0
        %3483 = vperm.xlu0 %3482, %v2664
        %v3484 = vpop.permute.xlu0 %3483
        %3487 = vset.pattern.permute.xlu0 0
        %3488 = vperm.xlu0 %3487, %v2665
        %v3489 = vpop.permute.xlu0 %3488
        %v3499 = vunpack.c.l.b16 %v2654
        %v3500 = vunpack.c.h.b16 %v2654
        %v3501 = vunpack.c.l.b16 %v2655
        %v3502 = vunpack.c.l.b16 %v2656
        %v3503 = vunpack.c.h.b16 %v2656
        %v3504 = vunpack.c.l.b16 %v2657
        %v3505 = vunpack.c.l.b16 %v2658
        %v3506 = vunpack.c.h.b16 %v2658
        %v3507 = vunpack.c.l.b16 %v2659
        %v3508 = vunpack.c.l.b16 %v2660
        %v3509 = vunpack.c.h.b16 %v2660
        %v3510 = vunpack.c.l.b16 %v2661
        %v3511 = vpack.c.b16 %v3502, %v3499
        %v3512 = vpack.c.b16 %v3503, %v3500
        %v3513 = vpack.c.b16 %v3504, %v3501
        %v3514 = vpack.c.b16 %v3508, %v3505
        %v3515 = vpack.c.b16 %v3509, %v3506
        %v3516 = vpack.c.b16 %v3510, %v3507
        %v3522 = vsel %vm2455, %v3513, 0
        %v3525 = vsel %vm2455, %v3516, 0
        %3527 = vmatprep.subr.bf16.mxu0 0
        %3528 = vmatpush1.bf16.msra.mxu0 %v3460
        %3529 = vmatprep.subr.bf16.mxu0 0
        %3530 = vmatpush1.bf16.msra.mxu0 %v3459
        %3531 = vmatprep.subr.bf16.mxu0 0
        %3532 = vmatpush1.bf16.msra.mxu0 %v3458
        %3533 = vmatprep.subr.bf16.mxu0 0
        %3534 = vmatpush1.bf16.msra.mxu0 %v3457
        %3535 = vmatprep.subr.bf16.mxu0 0
        %3536 = vmatpush1.bf16.msra.mxu0 %v3456
        %3537 = vmatprep.subr.bf16.mxu0 0
        %3538 = vmatpush1.bf16.msra.mxu0 %v3455
        %3539 = vmatprep.subr.bf16.mxu0 0
        %3540 = vmatpush1.bf16.msra.mxu0 %v3454
        %3541 = vmatprep.subr.bf16.mxu0 0
        %3542 = vmatpush1.bf16.msra.mxu0 %v3453
        %3543 = vmatprep.subr.bf16.mxu0 0
        %3544 = vmatpush2.bf16.msra.mxu0 %v3468
        %3545 = vmatprep.subr.bf16.mxu0 0
        %3546 = vmatpush2.bf16.msra.mxu0 %v3467
        %3547 = vmatprep.subr.bf16.mxu0 0
        %3548 = vmatpush2.bf16.msra.mxu0 %v3466
        %3549 = vmatprep.subr.bf16.mxu0 0
        %3550 = vmatpush2.bf16.msra.mxu0 %v3465
        %3551 = vmatprep.subr.bf16.mxu0 0
        %3552 = vmatpush2.bf16.msra.mxu0 %v3464
        %3553 = vmatprep.subr.bf16.mxu0 0
        %3554 = vmatpush2.bf16.msra.mxu0 %v3463
        %3555 = vmatprep.subr.bf16.mxu0 0
        %3556 = vmatpush2.bf16.msra.mxu0 %v3462
        %3557 = vmatprep.subr.bf16.mxu0 0
        %3558 = vmatpush2.bf16.msra.mxu0 %v3461
        %3559 = vmatprep.mubr.bf16.mxu0 %v3512
        %3560 = vmatmul.mubr.bf16.gmra.mxu0 %v3511
        %v3561 = vpop.f32.mrf.mxu0
        %v3562 = vadd.f32 %v3474, %v3561
        %v3563 = vpop.f32.mrf.mxu0
        %v3564 = vpop.f32.mrf.mxu0
        %v3565 = vadd.f32 %v3479, %v3564
        %v3566 = vpop.f32.mrf.mxu0
        %3567 = vmatprep.mubr.bf16.mxu0 %v3515
        %3568 = vmatmul.mubr.bf16.gmra.mxu0 %v3514
        %v3569 = vpop.f32.mrf.mxu0
        %v3570 = vadd.f32 %v3484, %v3569
        %v3571 = vpop.f32.mrf.mxu0
        %v3572 = vpop.f32.mrf.mxu0
        %v3573 = vadd.f32 %v3489, %v3572
        %v3574 = vpop.f32.mrf.mxu0
        %3575 = vdwg.mxu0
        %3576 = vmatprep.subr.bf16.mxu0 0
        %3577 = vmatpush1.bf16.msra.mxu0 0
        %3578 = vmatprep.subr.bf16.mxu0 0
        %3579 = vmatpush1.bf16.msra.mxu0 0
        %3580 = vmatprep.subr.bf16.mxu0 0
        %3581 = vmatpush1.bf16.msra.mxu0 0
        %3582 = vmatprep.subr.bf16.mxu0 0
        %3583 = vmatpush1.bf16.msra.mxu0 0
        %3584 = vmatprep.subr.bf16.mxu0 0
        %3585 = vmatpush1.bf16.msra.mxu0 0
        %3586 = vmatprep.subr.bf16.mxu0 0
        %3587 = vmatpush1.bf16.msra.mxu0 0
        %3588 = vmatprep.subr.bf16.mxu0 0
        %3589 = vmatpush1.bf16.msra.mxu0 %v3470
        %3590 = vmatprep.subr.bf16.mxu0 0
        %3591 = vmatpush1.bf16.msra.mxu0 %v3469
        %3592 = vmatprep.subr.bf16.mxu0 0
        %3593 = vmatpush2.bf16.msra.mxu0 0
        %3594 = vmatprep.subr.bf16.mxu0 0
        %3595 = vmatpush2.bf16.msra.mxu0 0
        %3596 = vmatprep.subr.bf16.mxu0 0
        %3597 = vmatpush2.bf16.msra.mxu0 0
        %3598 = vmatprep.subr.bf16.mxu0 0
        %3599 = vmatpush2.bf16.msra.mxu0 0
        %3600 = vmatprep.subr.bf16.mxu0 0
        %3601 = vmatpush2.bf16.msra.mxu0 0
        %3602 = vmatprep.subr.bf16.mxu0 0
        %3603 = vmatpush2.bf16.msra.mxu0 0
        %3604 = vmatprep.subr.bf16.mxu0 0
        %3605 = vmatpush2.bf16.msra.mxu0 0
        %3606 = vmatprep.subr.bf16.mxu0 0
        %3607 = vmatpush2.bf16.msra.mxu0 0
        %3608 = vmatprep.mubr.bf16.mxu0 0
        %3609 = vmatmul.mubr.bf16.gmra.mxu0 %v3522
        %v3610 = vpop.f32.mrf.mxu0
        %v3611 = vadd.f32 %v3562, %v3610
        %v3612 = vpop.f32.mrf.mxu0
        %v3613 = vpop.f32.mrf.mxu0
        %v3614 = vadd.f32 %v3565, %v3613
        %v3615 = vpop.f32.mrf.mxu0
        %3616 = vmatprep.mubr.bf16.mxu0 0
        %3617 = vmatmul.mubr.bf16.gmra.mxu0 %v3525
        %v3618 = vpop.f32.mrf.mxu0
        %v3619 = vadd.f32 %v3570, %v3618
        %v3620 = vpop.f32.mrf.mxu0
        %v3621 = vpop.f32.mrf.mxu0
        %v3622 = vadd.f32 %v3573, %v3621
        %v3623 = vpop.f32.mrf.mxu0
        %3624 = vdwg.mxu0
        %v3625 = vmax.f32 %v3611, 0.0
        %v3626 = vmax.f32 %v3614, 0.0
        %v3627 = vmax.f32 %v3619, 0.0
        %v3628 = vmax.f32 %v3622, 0.0
        %v3629 = vld [vmem:[%s13] sm:$0xf]
        %v3630 = vld [vmem:[%s13 + $0x4] sm:$0xf]
        %v3631 = vpack.c.bf16 %v3626, %v3625
        %v3632 = vpack.c.bf16 %v3628, %v3627
        %v3635 = vunpack.c.l.b16 %v3629
        %v3636 = vunpack.c.l.b16 %v3630
        %v3637 = vpack.c.b16 %v3636, %v3635
        %vm3639 = vcmask 130048
        %v3641 = vsel %vm3639, %v3631, 0
        %v3644 = vsel %vm3639, %v3632, 0
        %3646 = vmatprep.subr.bf16.mxu0 0
        %3647 = vmatpush1.bf16.msra.mxu0 0
        %3648 = vmatprep.subr.bf16.mxu0 0
        %3649 = vmatpush1.bf16.msra.mxu0 0
        %3650 = vmatprep.subr.bf16.mxu0 0
        %3651 = vmatpush1.bf16.msra.mxu0 0
        %3652 = vmatprep.subr.bf16.mxu0 0
        %3653 = vmatpush1.bf16.msra.mxu0 0
        %3654 = vmatprep.subr.bf16.mxu0 0
        %3655 = vmatpush1.bf16.msra.mxu0 0
        %3656 = vmatprep.subr.bf16.mxu0 0
        %3657 = vmatpush1.bf16.msra.mxu0 0
        %3658 = vmatprep.subr.bf16.mxu0 0
        %3659 = vmatpush1.bf16.msra.mxu0 0
        %3660 = vmatprep.subr.bf16.mxu0 0
        %3661 = vmatpush1.bf16.msra.mxu0 %v3637
        %3662 = vmatprep.subr.bf16.mxu0 0
        %3663 = vmatpush2.bf16.msra.mxu0 0
        %3664 = vmatprep.subr.bf16.mxu0 0
        %3665 = vmatpush2.bf16.msra.mxu0 0
        %3666 = vmatprep.subr.bf16.mxu0 0
        %3667 = vmatpush2.bf16.msra.mxu0 0
        %3668 = vmatprep.subr.bf16.mxu0 0
        %3669 = vmatpush2.bf16.msra.mxu0 0
        %3670 = vmatprep.subr.bf16.mxu0 0
        %3671 = vmatpush2.bf16.msra.mxu0 0
        %3672 = vmatprep.subr.bf16.mxu0 0
        %3673 = vmatpush2.bf16.msra.mxu0 0
        %3674 = vmatprep.subr.bf16.mxu0 0
        %3675 = vmatpush2.bf16.msra.mxu0 0
        %3676 = vmatprep.subr.bf16.mxu0 0
        %3677 = vmatpush2.bf16.msra.mxu0 0
        %3678 = vmatprep.mubr.bf16.mxu0 0
        %3679 = vmatmul.mubr.bf16.gmra.mxu0 %v3641
        %v3680 = vpop.f32.mrf.mxu0
        %v3681 = vadd.f32 0.0, %v3680
        %v3682 = vpop.f32.mrf.mxu0
        %v3683 = vpop.f32.mrf.mxu0
        %v3684 = vadd.f32 0.0, %v3683
        %v3685 = vpop.f32.mrf.mxu0
        %3686 = vmatprep.mubr.bf16.mxu0 0
        %3687 = vmatmul.mubr.bf16.gmra.mxu0 %v3644
        %v3688 = vpop.f32.mrf.mxu0
        %v3689 = vadd.f32 0.0, %v3688
        %v3690 = vpop.f32.mrf.mxu0
        %v3691 = vpop.f32.mrf.mxu0
        %v3692 = vadd.f32 0.0, %v3691
        %v3693 = vpop.f32.mrf.mxu0
        %3694 = vdwg.mxu0
        %v3695 = vld [vmem:[%s1003] sm:$0xff]
        %v3696 = vld [vmem:[%s1003 + $0x8] sm:$0xff]
        %v3697 = vand.u32 %v1059, 7
        %vm3698 = vcmp.ge.s32.totalorder %v3697, 1
        %v3699 = vsel %vm3698, 1, 0
        %v3700 = vcvt.s32.f32 %v3699
        %vm3701 = vcmp.lt.s32.totalorder %v3697, 7
        %v3702 = vsel %vm3701, 1, 0
        %v3703 = vcvt.s32.f32 %v3702
        %v3704 = vld [vmem:[%s35] sm:$0xff]
        %v3705 = vld [vmem:[%s35 + $0x8] sm:$0xff]
        %v3706 = vld [vmem:[%s35 + $0x10] sm:$0xff]
        %v3707 = vld [vmem:[%s35 + $0x18] sm:$0xff]
        %v3708 = vld [vmem:[%s37] sm:$0xff]
        %v3709 = vld [vmem:[%s37 + $0x8] sm:$0xff]
        %v3710 = vld [vmem:[%s39] sm:$0xff]
        %v3711 = vld [vmem:[%s39 + $0x8] sm:$0xff]
        %v3712 = vld [vmem:[%s41] sm:$0xff]
        %v3713 = vld [vmem:[%s41 + $0x8] sm:$0xff]
        %3720 = vrot.lane.b32.xlu0 %v3681, 9
        %v3721 = vpop.permute.xlu0 %3720
        %3722 = vrot.lane.b32.xlu0 %v3684, 9
        %v3723 = vpop.permute.xlu0 %3722
        %3724 = vrot.lane.b32.xlu0 %v3689, 9
        %v3725 = vpop.permute.xlu0 %3724
        %3726 = vrot.lane.b32.xlu0 %v3692, 9
        %v3727 = vpop.permute.xlu0 %3726
        %3728 = vrot.lane.b32.xlu0 %v3695, 9
        %v3729 = vpop.permute.xlu0 %3728
        %3730 = vrot.lane.b32.xlu0 %v3696, 9
        %v3731 = vpop.permute.xlu0 %3730
        %vm3738 = vcmask 72704
        %v3739 = vsel %vm3738, 0.0, %v3721
        %v3740 = vsel %vm3738, 0.0, %v3723
        %v3741 = vsel %vm3738, 0.0, %v3725
        %v3742 = vsel %vm3738, 0.0, %v3727
        %v3743 = vsel %vm3738, 0.0, %v3729
        %v3744 = vsel %vm3738, 0.0, %v3731
        %vm3745 = vcmask 596992
        %v3746 = vsel %vm3745, %v3739, 0.0
        %v3747 = vsel %vm3745, %v3740, 0.0
        %v3748 = vsel %vm3745, %v3741, 0.0
        %v3749 = vsel %vm3745, %v3742, 0.0
        %v3750 = vsel %vm3745, %v3743, 0.0
        %v3751 = vsel %vm3745, %v3744, 0.0
        %v3752 = vmul.f32 %v3746, %v3700
        %v3753 = vmul.f32 %v3747, %v3700
        %v3754 = vmul.f32 %v3748, %v3700
        %v3755 = vmul.f32 %v3749, %v3700
        %v3756 = vmul.f32 %v3750, %v3700
        %v3757 = vmul.f32 %v3751, %v3700
        %3759 = vrot.lane.b32.xlu0 %v3703, 2
        %v3760 = vpop.permute.xlu0 %3759
        %v3762 = vmul.f32 %v3746, %v3760
        %v3763 = vmul.f32 %v3747, %v3760
        %v3764 = vmul.f32 %v3748, %v3760
        %v3765 = vmul.f32 %v3749, %v3760
        %v3766 = vmul.f32 %v3750, %v3760
        %v3767 = vmul.f32 %v3751, %v3760
        %3769 = vrot.lane.b32.xlu0 %v3700, 8
        %v3770 = vpop.permute.xlu0 %3769
        %v3772 = vmul.f32 %v3746, %v3770
        %v3773 = vmul.f32 %v3747, %v3770
        %v3774 = vmul.f32 %v3748, %v3770
        %v3775 = vmul.f32 %v3749, %v3770
        %v3776 = vmul.f32 %v3750, %v3770
        %v3777 = vmul.f32 %v3751, %v3770
        %3778 = vrot.lane.b32.xlu0 %v3703, 10
        %v3779 = vpop.permute.xlu0 %3778
        %v3781 = vmul.f32 %v3746, %v3779
        %v3782 = vmul.f32 %v3747, %v3779
        %v3783 = vmul.f32 %v3748, %v3779
        %v3784 = vmul.f32 %v3749, %v3779
        %v3785 = vmul.f32 %v3750, %v3779
        %v3786 = vmul.f32 %v3751, %v3779
        %3787 = vrot.lane.b32.xlu0 %v3700, 16
        %v3788 = vpop.permute.xlu0 %3787
        %v3790 = vmul.f32 %v3746, %v3788
        %v3791 = vmul.f32 %v3747, %v3788
        %v3792 = vmul.f32 %v3748, %v3788
        %v3793 = vmul.f32 %v3749, %v3788
        %v3794 = vmul.f32 %v3750, %v3788
        %v3795 = vmul.f32 %v3751, %v3788
        %3796 = vrot.lane.b32.xlu0 %v3703, 18
        %v3797 = vpop.permute.xlu0 %3796
        %v3799 = vmul.f32 %v3746, %v3797
        %v3800 = vmul.f32 %v3747, %v3797
        %v3801 = vmul.f32 %v3748, %v3797
        %v3802 = vmul.f32 %v3749, %v3797
        %v3803 = vmul.f32 %v3750, %v3797
        %v3804 = vmul.f32 %v3751, %v3797
        %3811 = vrot.lane.b32.xlu0 %v3746, 127
        %v3812 = vpop.permute.xlu0 %3811
        %3813 = vrot.lane.b32.xlu0 %v3747, 127
        %v3814 = vpop.permute.xlu0 %3813
        %3815 = vrot.lane.b32.xlu0 %v3748, 127
        %v3816 = vpop.permute.xlu0 %3815
        %3817 = vrot.lane.b32.xlu0 %v3749, 127
        %v3818 = vpop.permute.xlu0 %3817
        %3819 = vrot.lane.b32.xlu0 %v3750, 127
        %v3820 = vpop.permute.xlu0 %3819
        %3821 = vrot.lane.b32.xlu0 %v3751, 127
        %v3822 = vpop.permute.xlu0 %3821
        %3835 = vrot.lane.b32.xlu0 %v3762, 126
        %v3836 = vpop.permute.xlu0 %3835
        %3837 = vrot.lane.b32.xlu0 %v3763, 126
        %v3838 = vpop.permute.xlu0 %3837
        %3839 = vrot.lane.b32.xlu0 %v3764, 126
        %v3840 = vpop.permute.xlu0 %3839
        %3841 = vrot.lane.b32.xlu0 %v3765, 126
        %v3842 = vpop.permute.xlu0 %3841
        %3843 = vrot.lane.b32.xlu0 %v3766, 126
        %v3844 = vpop.permute.xlu0 %3843
        %3845 = vrot.lane.b32.xlu0 %v3767, 126
        %v3846 = vpop.permute.xlu0 %3845
        %3859 = vrot.lane.b32.xlu0 %v3772, 120
        %v3860 = vpop.permute.xlu0 %3859
        %3861 = vrot.lane.b32.xlu0 %v3773, 120
        %v3862 = vpop.permute.xlu0 %3861
        %3863 = vrot.lane.b32.xlu0 %v3774, 120
        %v3864 = vpop.permute.xlu0 %3863
        %3865 = vrot.lane.b32.xlu0 %v3775, 120
        %v3866 = vpop.permute.xlu0 %3865
        %3867 = vrot.lane.b32.xlu0 %v3776, 120
        %v3868 = vpop.permute.xlu0 %3867
        %3869 = vrot.lane.b32.xlu0 %v3777, 120
        %v3870 = vpop.permute.xlu0 %3869
        %3877 = vrot.lane.b32.xlu0 %v3746, 119
        %v3878 = vpop.permute.xlu0 %3877
        %3879 = vrot.lane.b32.xlu0 %v3747, 119
        %v3880 = vpop.permute.xlu0 %3879
        %3881 = vrot.lane.b32.xlu0 %v3748, 119
        %v3882 = vpop.permute.xlu0 %3881
        %3883 = vrot.lane.b32.xlu0 %v3749, 119
        %v3884 = vpop.permute.xlu0 %3883
        %3885 = vrot.lane.b32.xlu0 %v3750, 119
        %v3886 = vpop.permute.xlu0 %3885
        %3887 = vrot.lane.b32.xlu0 %v3751, 119
        %v3888 = vpop.permute.xlu0 %3887
        %3901 = vrot.lane.b32.xlu0 %v3781, 118
        %v3902 = vpop.permute.xlu0 %3901
        %3903 = vrot.lane.b32.xlu0 %v3782, 118
        %v3904 = vpop.permute.xlu0 %3903
        %3905 = vrot.lane.b32.xlu0 %v3783, 118
        %v3906 = vpop.permute.xlu0 %3905
        %3907 = vrot.lane.b32.xlu0 %v3784, 118
        %v3908 = vpop.permute.xlu0 %3907
        %3909 = vrot.lane.b32.xlu0 %v3785, 118
        %v3910 = vpop.permute.xlu0 %3909
        %3911 = vrot.lane.b32.xlu0 %v3786, 118
        %v3912 = vpop.permute.xlu0 %3911
        %3925 = vrot.lane.b32.xlu0 %v3790, 112
        %v3926 = vpop.permute.xlu0 %3925
        %3927 = vrot.lane.b32.xlu0 %v3791, 112
        %v3928 = vpop.permute.xlu0 %3927
        %3929 = vrot.lane.b32.xlu0 %v3792, 112
        %v3930 = vpop.permute.xlu0 %3929
        %3931 = vrot.lane.b32.xlu0 %v3793, 112
        %v3932 = vpop.permute.xlu0 %3931
        %3933 = vrot.lane.b32.xlu0 %v3794, 112
        %v3934 = vpop.permute.xlu0 %3933
        %3935 = vrot.lane.b32.xlu0 %v3795, 112
        %v3936 = vpop.permute.xlu0 %3935
        %3943 = vrot.lane.b32.xlu0 %v3746, 111
        %v3944 = vpop.permute.xlu0 %3943
        %3945 = vrot.lane.b32.xlu0 %v3747, 111
        %v3946 = vpop.permute.xlu0 %3945
        %3947 = vrot.lane.b32.xlu0 %v3748, 111
        %v3948 = vpop.permute.xlu0 %3947
        %3949 = vrot.lane.b32.xlu0 %v3749, 111
        %v3950 = vpop.permute.xlu0 %3949
        %3951 = vrot.lane.b32.xlu0 %v3750, 111
        %v3952 = vpop.permute.xlu0 %3951
        %3953 = vrot.lane.b32.xlu0 %v3751, 111
        %v3954 = vpop.permute.xlu0 %3953
        %3967 = vrot.lane.b32.xlu0 %v3799, 110
        %v3968 = vpop.permute.xlu0 %3967
        %3969 = vrot.lane.b32.xlu0 %v3800, 110
        %v3970 = vpop.permute.xlu0 %3969
        %3971 = vrot.lane.b32.xlu0 %v3801, 110
        %v3972 = vpop.permute.xlu0 %3971
        %3973 = vrot.lane.b32.xlu0 %v3802, 110
        %v3974 = vpop.permute.xlu0 %3973
        %3975 = vrot.lane.b32.xlu0 %v3803, 110
        %v3976 = vpop.permute.xlu0 %3975
        %3977 = vrot.lane.b32.xlu0 %v3804, 110
        %v3978 = vpop.permute.xlu0 %3977
        %v3985 = vpack.c.bf16 %v3753, %v3752
        %v3986 = vpack.c.bf16 %v3755, %v3754
        %v3987 = vpack.c.bf16 %v3757, %v3756
        %v3988 = vpack.c.bf16 %v3814, %v3812
        %v3989 = vpack.c.bf16 %v3818, %v3816
        %v3990 = vpack.c.bf16 %v3822, %v3820
        %v3991 = vpack.c.bf16 %v3838, %v3836
        %v3992 = vpack.c.bf16 %v3842, %v3840
        %v3993 = vpack.c.bf16 %v3846, %v3844
        %v3994 = vpack.c.bf16 %v3862, %v3860
        %v3995 = vpack.c.bf16 %v3866, %v3864
        %v3996 = vpack.c.bf16 %v3870, %v3868
        %v3997 = vpack.c.bf16 %v3880, %v3878
        %v3998 = vpack.c.bf16 %v3884, %v3882
        %v3999 = vpack.c.bf16 %v3888, %v3886
        %v4000 = vpack.c.bf16 %v3904, %v3902
        %v4001 = vpack.c.bf16 %v3908, %v3906
        %v4002 = vpack.c.bf16 %v3912, %v3910
        %v4003 = vpack.c.bf16 %v3928, %v3926
        %v4004 = vpack.c.bf16 %v3932, %v3930
        %v4005 = vpack.c.bf16 %v3936, %v3934
        %v4006 = vpack.c.bf16 %v3946, %v3944
        %v4007 = vpack.c.bf16 %v3950, %v3948
        %v4008 = vpack.c.bf16 %v3954, %v3952
        %v4009 = vpack.c.bf16 %v3970, %v3968
        %v4010 = vpack.c.bf16 %v3974, %v3972
        %v4011 = vpack.c.bf16 %v3978, %v3976
        %4013 = vset.pattern.permute.xlu0 0
        %4014 = vperm.xlu0 %4013, %v3708
        %v4015 = vpop.permute.xlu0 %4014
        %4018 = vset.pattern.permute.xlu0 0
        %4019 = vperm.xlu0 %4018, %v3709
        %v4020 = vpop.permute.xlu0 %4019
        %v4026 = vunpack.c.l.b16 %v3704
        %v4027 = vunpack.c.h.b16 %v3704
        %v4028 = vunpack.c.l.b16 %v3705
        %v4029 = vunpack.c.h.b16 %v3705
        %v4030 = vunpack.c.l.b16 %v3706
        %v4031 = vunpack.c.h.b16 %v3706
        %v4032 = vunpack.c.l.b16 %v3707
        %v4033 = vunpack.c.h.b16 %v3707
        %v4034 = vpack.c.b16 %v4030, %v4026
        %v4035 = vpack.c.b16 %v4031, %v4027
        %v4036 = vpack.c.b16 %v4032, %v4028
        %v4037 = vpack.c.b16 %v4033, %v4029
        %vm4041 = vcmask 392192
        %v4043 = vsel %vm4041, %v4037, 0
        %4045 = vmatprep.subr.bf16.mxu0 0
        %4046 = vmatpush1.bf16.msra.mxu0 %v3992
        %4047 = vmatprep.subr.bf16.mxu0 0
        %4048 = vmatpush1.bf16.msra.mxu0 %v3991
        %4049 = vmatprep.subr.bf16.mxu0 0
        %4050 = vmatpush1.bf16.msra.mxu0 %v3990
        %4051 = vmatprep.subr.bf16.mxu0 0
        %4052 = vmatpush1.bf16.msra.mxu0 %v3989
        %4053 = vmatprep.subr.bf16.mxu0 0
        %4054 = vmatpush1.bf16.msra.mxu0 %v3988
        %4055 = vmatprep.subr.bf16.mxu0 0
        %4056 = vmatpush1.bf16.msra.mxu0 %v3987
        %4057 = vmatprep.subr.bf16.mxu0 0
        %4058 = vmatpush1.bf16.msra.mxu0 %v3986
        %4059 = vmatprep.subr.bf16.mxu0 0
        %4060 = vmatpush1.bf16.msra.mxu0 %v3985
        %4061 = vmatprep.subr.bf16.mxu0 0
        %4062 = vmatpush2.bf16.msra.mxu0 %v4000
        %4063 = vmatprep.subr.bf16.mxu0 0
        %4064 = vmatpush2.bf16.msra.mxu0 %v3999
        %4065 = vmatprep.subr.bf16.mxu0 0
        %4066 = vmatpush2.bf16.msra.mxu0 %v3998
        %4067 = vmatprep.subr.bf16.mxu0 0
        %4068 = vmatpush2.bf16.msra.mxu0 %v3997
        %4069 = vmatprep.subr.bf16.mxu0 0
        %4070 = vmatpush2.bf16.msra.mxu0 %v3996
        %4071 = vmatprep.subr.bf16.mxu0 0
        %4072 = vmatpush2.bf16.msra.mxu0 %v3995
        %4073 = vmatprep.subr.bf16.mxu0 0
        %4074 = vmatpush2.bf16.msra.mxu0 %v3994
        %4075 = vmatprep.subr.bf16.mxu0 0
        %4076 = vmatpush2.bf16.msra.mxu0 %v3993
        %4077 = vmatprep.mubr.bf16.mxu0 %v4035
        %4078 = vmatmul.mubr.bf16.gmra.mxu0 %v4034
        %v4079 = vpop.f32.mrf.mxu0
        %v4080 = vadd.f32 %v4015, %v4079
        %v4081 = vpop.f32.mrf.mxu0
        %v4082 = vpop.f32.mrf.mxu0
        %v4083 = vadd.f32 %v4020, %v4082
        %v4084 = vpop.f32.mrf.mxu0
        %4085 = vdwg.mxu0
        %4086 = vmatprep.subr.bf16.mxu0 0
        %4087 = vmatpush1.bf16.msra.mxu0 %v4008
        %4088 = vmatprep.subr.bf16.mxu0 0
        %4089 = vmatpush1.bf16.msra.mxu0 %v4007
        %4090 = vmatprep.subr.bf16.mxu0 0
        %4091 = vmatpush1.bf16.msra.mxu0 %v4006
        %4092 = vmatprep.subr.bf16.mxu0 0
        %4093 = vmatpush1.bf16.msra.mxu0 %v4005
        %4094 = vmatprep.subr.bf16.mxu0 0
        %4095 = vmatpush1.bf16.msra.mxu0 %v4004
        %4096 = vmatprep.subr.bf16.mxu0 0
        %4097 = vmatpush1.bf16.msra.mxu0 %v4003
        %4098 = vmatprep.subr.bf16.mxu0 0
        %4099 = vmatpush1.bf16.msra.mxu0 %v4002
        %4100 = vmatprep.subr.bf16.mxu0 0
        %4101 = vmatpush1.bf16.msra.mxu0 %v4001
        %4102 = vmatprep.subr.bf16.mxu0 0
        %4103 = vmatpush2.bf16.msra.mxu0 0
        %4104 = vmatprep.subr.bf16.mxu0 0
        %4105 = vmatpush2.bf16.msra.mxu0 0
        %4106 = vmatprep.subr.bf16.mxu0 0
        %4107 = vmatpush2.bf16.msra.mxu0 0
        %4108 = vmatprep.subr.bf16.mxu0 0
        %4109 = vmatpush2.bf16.msra.mxu0 0
        %4110 = vmatprep.subr.bf16.mxu0 0
        %4111 = vmatpush2.bf16.msra.mxu0 0
        %4112 = vmatprep.subr.bf16.mxu0 0
        %4113 = vmatpush2.bf16.msra.mxu0 %v4011
        %4114 = vmatprep.subr.bf16.mxu0 0
        %4115 = vmatpush2.bf16.msra.mxu0 %v4010
        %4116 = vmatprep.subr.bf16.mxu0 0
        %4117 = vmatpush2.bf16.msra.mxu0 %v4009
        %4118 = vmatprep.mubr.bf16.mxu0 %v4043
        %4119 = vmatmul.mubr.bf16.gmra.mxu0 %v4036
        %v4120 = vpop.f32.mrf.mxu0
        %v4121 = vadd.f32 %v4080, %v4120
        %v4122 = vpop.f32.mrf.mxu0
        %v4123 = vpop.f32.mrf.mxu0
        %v4124 = vadd.f32 %v4083, %v4123
        %v4125 = vpop.f32.mrf.mxu0
        %4126 = vdwg.mxu0
        %v4127 = vmax.f32 %v4121, 0.0
        %v4128 = vmax.f32 %v4124, 0.0
        %4131 = vrot.lane.b32.xlu0 %v4127, 9
        %v4132 = vpop.permute.xlu0 %4131
        %4133 = vrot.lane.b32.xlu0 %v4128, 9
        %v4134 = vpop.permute.xlu0 %4133
        %v4137 = vsel %vm3738, 0.0, %v4132
        %v4138 = vsel %vm3738, 0.0, %v4134
        %v4139 = vsel %vm3745, %v4137, 0.0
        %v4140 = vsel %vm3745, %v4138, 0.0
        %v4141 = vmul.f32 %v4139, %v3700
        %v4142 = vmul.f32 %v4140, %v3700
        %v4143 = vmul.f32 %v4139, %v3760
        %v4144 = vmul.f32 %v4140, %v3760
        %v4145 = vmul.f32 %v4139, %v3770
        %v4146 = vmul.f32 %v4140, %v3770
        %v4147 = vmul.f32 %v4139, %v3779
        %v4148 = vmul.f32 %v4140, %v3779
        %v4149 = vmul.f32 %v4139, %v3788
        %v4150 = vmul.f32 %v4140, %v3788
        %v4151 = vmul.f32 %v4139, %v3797
        %v4152 = vmul.f32 %v4140, %v3797
        %4155 = vrot.lane.b32.xlu0 %v4139, 127
        %v4156 = vpop.permute.xlu0 %4155
        %4157 = vrot.lane.b32.xlu0 %v4140, 127
        %v4158 = vpop.permute.xlu0 %4157
        %4163 = vrot.lane.b32.xlu0 %v4143, 126
        %v4164 = vpop.permute.xlu0 %4163
        %4165 = vrot.lane.b32.xlu0 %v4144, 126
        %v4166 = vpop.permute.xlu0 %4165
        %4171 = vrot.lane.b32.xlu0 %v4145, 120
        %v4172 = vpop.permute.xlu0 %4171
        %4173 = vrot.lane.b32.xlu0 %v4146, 120
        %v4174 = vpop.permute.xlu0 %4173
        %4177 = vrot.lane.b32.xlu0 %v4139, 119
        %v4178 = vpop.permute.xlu0 %4177
        %4179 = vrot.lane.b32.xlu0 %v4140, 119
        %v4180 = vpop.permute.xlu0 %4179
        %4185 = vrot.lane.b32.xlu0 %v4147, 118
        %v4186 = vpop.permute.xlu0 %4185
        %4187 = vrot.lane.b32.xlu0 %v4148, 118
        %v4188 = vpop.permute.xlu0 %4187
        %4193 = vrot.lane.b32.xlu0 %v4149, 112
        %v4194 = vpop.permute.xlu0 %4193
        %4195 = vrot.lane.b32.xlu0 %v4150, 112
        %v4196 = vpop.permute.xlu0 %4195
        %4199 = vrot.lane.b32.xlu0 %v4139, 111
        %v4200 = vpop.permute.xlu0 %4199
        %4201 = vrot.lane.b32.xlu0 %v4140, 111
        %v4202 = vpop.permute.xlu0 %4201
        %4207 = vrot.lane.b32.xlu0 %v4151, 110
        %v4208 = vpop.permute.xlu0 %4207
        %4209 = vrot.lane.b32.xlu0 %v4152, 110
        %v4210 = vpop.permute.xlu0 %4209
        %v4213 = vpack.c.bf16 %v4142, %v4141
        %v4214 = vpack.c.bf16 %v4158, %v4156
        %v4215 = vpack.c.bf16 %v4166, %v4164
        %v4216 = vpack.c.bf16 %v4174, %v4172
        %v4217 = vpack.c.bf16 %v4180, %v4178
        %v4218 = vpack.c.bf16 %v4188, %v4186
        %v4219 = vpack.c.bf16 %v4196, %v4194
        %v4220 = vpack.c.bf16 %v4202, %v4200
        %v4221 = vpack.c.bf16 %v4210, %v4208
        %4223 = vset.pattern.permute.xlu0 0
        %4224 = vperm.xlu0 %4223, %v3712
        %v4225 = vpop.permute.xlu0 %4224
        %4228 = vset.pattern.permute.xlu0 0
        %4229 = vperm.xlu0 %4228, %v3713
        %v4230 = vpop.permute.xlu0 %4229
        %v4234 = vunpack.c.l.b16 %v3710
        %v4235 = vunpack.c.h.b16 %v3710
        %v4236 = vunpack.c.l.b16 %v3711
        %v4237 = vunpack.c.h.b16 %v3711
        %v4238 = vpack.c.b16 %v4236, %v4234
        %v4239 = vpack.c.b16 %v4237, %v4235
        %v4242 = vsel %vm3639, %v4239, 0
        %4244 = vmatprep.subr.bf16.mxu0 0
        %4245 = vmatpush1.bf16.msra.mxu0 %v4220
        %4246 = vmatprep.subr.bf16.mxu0 0
        %4247 = vmatpush1.bf16.msra.mxu0 %v4219
        %4248 = vmatprep.subr.bf16.mxu0 0
        %4249 = vmatpush1.bf16.msra.mxu0 %v4218
        %4250 = vmatprep.subr.bf16.mxu0 0
        %4251 = vmatpush1.bf16.msra.mxu0 %v4217
        %4252 = vmatprep.subr.bf16.mxu0 0
        %4253 = vmatpush1.bf16.msra.mxu0 %v4216
        %4254 = vmatprep.subr.bf16.mxu0 0
        %4255 = vmatpush1.bf16.msra.mxu0 %v4215
        %4256 = vmatprep.subr.bf16.mxu0 0
        %4257 = vmatpush1.bf16.msra.mxu0 %v4214
        %4258 = vmatprep.subr.bf16.mxu0 0
        %4259 = vmatpush1.bf16.msra.mxu0 %v4213
        %4260 = vmatprep.subr.bf16.mxu0 0
        %4261 = vmatpush2.bf16.msra.mxu0 0
        %4262 = vmatprep.subr.bf16.mxu0 0
        %4263 = vmatpush2.bf16.msra.mxu0 0
        %4264 = vmatprep.subr.bf16.mxu0 0
        %4265 = vmatpush2.bf16.msra.mxu0 0
        %4266 = vmatprep.subr.bf16.mxu0 0
        %4267 = vmatpush2.bf16.msra.mxu0 0
        %4268 = vmatprep.subr.bf16.mxu0 0
        %4269 = vmatpush2.bf16.msra.mxu0 0
        %4270 = vmatprep.subr.bf16.mxu0 0
        %4271 = vmatpush2.bf16.msra.mxu0 0
        %4272 = vmatprep.subr.bf16.mxu0 0
        %4273 = vmatpush2.bf16.msra.mxu0 0
        %4274 = vmatprep.subr.bf16.mxu0 0
        %4275 = vmatpush2.bf16.msra.mxu0 %v4221
        %4276 = vmatprep.mubr.bf16.mxu0 %v4242
        %4277 = vmatmul.mubr.bf16.gmra.mxu0 %v4238
        %v4278 = vpop.f32.mrf.mxu0
        %v4279 = vadd.f32 %v4225, %v4278
        %v4280 = vpop.f32.mrf.mxu0
        %v4281 = vpop.f32.mrf.mxu0
        %v4282 = vadd.f32 %v4230, %v4281
        %v4283 = vpop.f32.mrf.mxu0
        %4284 = vdwg.mxu0
        %v4285 = vmax.f32 %v4279, 0.0
        %v4286 = vmax.f32 %v4282, 0.0
        %v4287 = vld [vmem:[%s15] sm:$0xff]
        %v4288 = vld [vmem:[%s15 + $0x8] sm:$0xff]
        %v4289 = vld [vmem:[%s15 + $0x10] sm:$0xff]
        %v4290 = vld [vmem:[%s15 + $0x18] sm:$0xff]
        %v4291 = vld [vmem:[%s15 + $0x20] sm:$0xff]
        %v4292 = vld [vmem:[%s15 + $0x28] sm:$0xff]
        %v4293 = vld [vmem:[%s15 + $0x30] sm:$0xff]
        %v4294 = vld [vmem:[%s15 + $0x38] sm:$0xff]
        %v4295 = vpack.c.bf16 %v4286, %v4285
        %v4304 = vunpack.c.l.b16 %v4287
        %v4305 = vunpack.c.h.b16 %v4287
        %v4306 = vunpack.c.l.b16 %v4288
        %v4307 = vunpack.c.h.b16 %v4288
        %v4308 = vunpack.c.l.b16 %v4289
        %v4309 = vunpack.c.h.b16 %v4289
        %v4310 = vunpack.c.l.b16 %v4290
        %v4311 = vunpack.c.h.b16 %v4290
        %v4312 = vunpack.c.l.b16 %v4291
        %v4313 = vunpack.c.h.b16 %v4291
        %v4314 = vunpack.c.l.b16 %v4292
        %v4315 = vunpack.c.h.b16 %v4292
        %v4316 = vunpack.c.l.b16 %v4293
        %v4317 = vunpack.c.h.b16 %v4293
        %v4318 = vunpack.c.l.b16 %v4294
        %v4319 = vunpack.c.h.b16 %v4294
        %v4320 = vpack.c.b16 %v4306, %v4304
        %v4321 = vpack.c.b16 %v4307, %v4305
        %v4322 = vpack.c.b16 %v4310, %v4308
        %v4323 = vpack.c.b16 %v4311, %v4309
        %v4324 = vpack.c.b16 %v4314, %v4312
        %v4325 = vpack.c.b16 %v4315, %v4313
        %v4326 = vpack.c.b16 %v4318, %v4316
        %v4327 = vpack.c.b16 %v4319, %v4317
        %v4337 = vsel %vm3127, %v4295, 0
        %4339 = vmatprep.subr.bf16.mxu0 0
        %4340 = vmatpush1.bf16.msra.mxu0 0
        %4341 = vmatprep.subr.bf16.mxu0 0
        %4342 = vmatpush1.bf16.msra.mxu0 0
        %4343 = vmatprep.subr.bf16.mxu0 0
        %4344 = vmatpush1.bf16.msra.mxu0 0
        %4345 = vmatprep.subr.bf16.mxu0 0
        %4346 = vmatpush1.bf16.msra.mxu0 0
        %4347 = vmatprep.subr.bf16.mxu0 %v4327
        %4348 = vmatpush1.bf16.msra.mxu0 %v4326
        %4349 = vmatprep.subr.bf16.mxu0 %v4325
        %4350 = vmatpush1.bf16.msra.mxu0 %v4324
        %4351 = vmatprep.subr.bf16.mxu0 %v4323
        %4352 = vmatpush1.bf16.msra.mxu0 %v4322
        %4353 = vmatprep.subr.bf16.mxu0 %v4321
        %4354 = vmatpush1.bf16.msra.mxu0 %v4320
        %4355 = vmatprep.subr.bf16.mxu0 0
        %4356 = vmatpush2.bf16.msra.mxu0 0
        %4357 = vmatprep.subr.bf16.mxu0 0
        %4358 = vmatpush2.bf16.msra.mxu0 0
        %4359 = vmatprep.subr.bf16.mxu0 0
        %4360 = vmatpush2.bf16.msra.mxu0 0
        %4361 = vmatprep.subr.bf16.mxu0 0
        %4362 = vmatpush2.bf16.msra.mxu0 0
        %4363 = vmatprep.subr.bf16.mxu0 0
        %4364 = vmatpush2.bf16.msra.mxu0 0
        %4365 = vmatprep.subr.bf16.mxu0 0
        %4366 = vmatpush2.bf16.msra.mxu0 0
        %4367 = vmatprep.subr.bf16.mxu0 0
        %4368 = vmatpush2.bf16.msra.mxu0 0
        %4369 = vmatprep.subr.bf16.mxu0 0
        %4370 = vmatpush2.bf16.msra.mxu0 0
        %4371 = vmatprep.mubr.bf16.mxu0 0
        %4372 = vmatmul.mubr.bf16.gmra.mxu0 %v4337
        %v4373 = vpop.f32.mrf.mxu0
        %v4374 = vadd.f32 0.0, %v4373
        %v4375 = vpop.f32.mrf.mxu0
        %v4376 = vadd.f32 0.0, %v4375
        %v4377 = vpop.f32.mrf.mxu0
        %v4378 = vadd.f32 0.0, %v4377
        %v4379 = vpop.f32.mrf.mxu0
        %v4380 = vadd.f32 0.0, %v4379
        %4381 = vdwg.mxu0
        %v4382 = vld [vmem:[%s1008] sm:$0xff]
        %v4383 = vld [vmem:[%s1008 + $0x8] sm:$0xff]
        %v4384 = vadd.s32 %v1059, 128
        %v4385 = vand.u32 %v1059, 15
        %v4386 = vand.u32 %v4384, 15
        %vm4387 = vcmp.ge.s32.totalorder %v4385, 1
        %vm4388 = vcmp.ge.s32.totalorder %v4386, 1
        %v4389 = vsel %vm4387, 1, 0
        %v4390 = vsel %vm4388, 1, 0
        %v4391 = vcvt.s32.f32 %v4389
        %v4392 = vcvt.s32.f32 %v4390
        %vm4393 = vcmp.lt.s32.totalorder %v4385, 15
        %vm4394 = vcmp.lt.s32.totalorder %v4386, 15
        %v4395 = vsel %vm4393, 1, 0
        %v4396 = vsel %vm4394, 1, 0
        %v4397 = vcvt.s32.f32 %v4395
        %v4398 = vcvt.s32.f32 %v4396
        %v4399 = vld [vmem:[%s43] sm:$0xff]
        %v4400 = vld [vmem:[%s43 + $0x8] sm:$0xff]
        %v4401 = vld [vmem:[%s45] sm:$0xff]
        %v4402 = vld [vmem:[%s45 + $0x8] sm:$0xff]
        %v4403 = vld [vmem:[%s47] sm:$0xff]
        %v4404 = vld [vmem:[%s47 + $0x8] sm:$0xff]
        %v4405 = vld [vmem:[%s49] sm:$0xff]
        %v4406 = vld [vmem:[%s49 + $0x8] sm:$0xff]
        %4413 = vrot.lane.b32.xlu0 %v4374, 17
        %v4414 = vpop.permute.xlu0 %4413
        %4415 = vrot.lane.b32.xlu0 %v4376, 17
        %v4416 = vpop.permute.xlu0 %4415
        %4417 = vrot.lane.b32.xlu0 %v4378, 17
        %v4418 = vpop.permute.xlu0 %4417
        %4419 = vrot.lane.b32.xlu0 %v4380, 17
        %v4420 = vpop.permute.xlu0 %4419
        %4421 = vrot.lane.b32.xlu0 %v4382, 17
        %v4422 = vpop.permute.xlu0 %4421
        %4423 = vrot.lane.b32.xlu0 %v4383, 17
        %v4424 = vpop.permute.xlu0 %4423
        %vm4425 = vcmask 138240
        %v4426 = vsel %vm4425, %v4414, %v4416
        %v4427 = vsel %vm4425, %v4418, %v4420
        %v4428 = vsel %vm4425, %v4422, %v4424
        %v4438 = vsel %vm4425, 0.0, %v4414
        %v4439 = vsel %vm4425, 0.0, %v4418
        %v4440 = vsel %vm4425, 0.0, %v4422
        %v4441 = vsel %vm4425, %v4416, 0.0
        %v4442 = vsel %vm4425, %v4420, 0.0
        %v4443 = vsel %vm4425, %v4424, 0.0
        %v4444 = vmul.f32 %v4438, %v4391
        %v4445 = vmul.f32 %v4426, %v4392
        %v4446 = vmul.f32 %v4439, %v4391
        %v4447 = vmul.f32 %v4427, %v4392
        %v4448 = vmul.f32 %v4440, %v4391
        %v4449 = vmul.f32 %v4428, %v4392
        %4452 = vrot.lane.b32.xlu0 %v4397, 2
        %v4453 = vpop.permute.xlu0 %4452
        %4454 = vrot.lane.b32.xlu0 %v4398, 2
        %v4455 = vpop.permute.xlu0 %4454
        %vm4456 = vcmask 15360
        %v4457 = vsel %vm4456, %v4453, %v4455
        %v4461 = vmul.f32 %v4438, %v4453
        %v4462 = vmul.f32 %v4426, %v4457
        %v4463 = vmul.f32 %v4441, %v4455
        %v4464 = vmul.f32 %v4439, %v4453
        %v4465 = vmul.f32 %v4427, %v4457
        %v4466 = vmul.f32 %v4442, %v4455
        %v4467 = vmul.f32 %v4440, %v4453
        %v4468 = vmul.f32 %v4428, %v4457
        %v4469 = vmul.f32 %v4443, %v4455
        %4472 = vrot.lane.b32.xlu0 %v4391, 16
        %v4473 = vpop.permute.xlu0 %4472
        %4474 = vrot.lane.b32.xlu0 %v4392, 16
        %v4475 = vpop.permute.xlu0 %4474
        %v4476 = vsel %vm3639, %v4473, %v4475
        %v4480 = vmul.f32 %v4438, %v4473
        %v4481 = vmul.f32 %v4426, %v4476
        %v4482 = vmul.f32 %v4441, %v4475
        %v4483 = vmul.f32 %v4439, %v4473
        %v4484 = vmul.f32 %v4427, %v4476
        %v4485 = vmul.f32 %v4442, %v4475
        %v4486 = vmul.f32 %v4440, %v4473
        %v4487 = vmul.f32 %v4428, %v4476
        %v4488 = vmul.f32 %v4443, %v4475
        %4489 = vrot.lane.b32.xlu0 %v4397, 18
        %v4490 = vpop.permute.xlu0 %4489
        %4491 = vrot.lane.b32.xlu0 %v4398, 18
        %v4492 = vpop.permute.xlu0 %4491
        %vm4493 = vcmask 146432
        %v4494 = vsel %vm4493, %v4490, %v4492
        %v4498 = vmul.f32 %v4438, %v4490
        %v4499 = vmul.f32 %v4426, %v4494
        %v4500 = vmul.f32 %v4441, %v4492
        %v4501 = vmul.f32 %v4439, %v4490
        %v4502 = vmul.f32 %v4427, %v4494
        %v4503 = vmul.f32 %v4442, %v4492
        %v4504 = vmul.f32 %v4440, %v4490
        %v4505 = vmul.f32 %v4428, %v4494
        %v4506 = vmul.f32 %v4443, %v4492
        %4507 = vrot.lane.b32.xlu0 %v4391, 32
        %v4508 = vpop.permute.xlu0 %4507
        %4509 = vrot.lane.b32.xlu0 %v4392, 32
        %v4510 = vpop.permute.xlu0 %4509
        %v4511 = vsel %vm2455, %v4508, %v4510
        %v4515 = vmul.f32 %v4438, %v4508
        %v4516 = vmul.f32 %v4426, %v4511
        %v4517 = vmul.f32 %v4441, %v4510
        %v4518 = vmul.f32 %v4439, %v4508
        %v4519 = vmul.f32 %v4427, %v4511
        %v4520 = vmul.f32 %v4442, %v4510
        %v4521 = vmul.f32 %v4440, %v4508
        %v4522 = vmul.f32 %v4428, %v4511
        %v4523 = vmul.f32 %v4443, %v4510
        %4524 = vrot.lane.b32.xlu0 %v4397, 34
        %v4525 = vpop.permute.xlu0 %4524
        %4526 = vrot.lane.b32.xlu0 %v4398, 34
        %v4527 = vpop.permute.xlu0 %4526
        %vm4528 = vcmask 277504
        %v4529 = vsel %vm4528, %v4525, %v4527
        %v4533 = vmul.f32 %v4438, %v4525
        %v4534 = vmul.f32 %v4426, %v4529
        %v4535 = vmul.f32 %v4441, %v4527
        %v4536 = vmul.f32 %v4439, %v4525
        %v4537 = vmul.f32 %v4427, %v4529
        %v4538 = vmul.f32 %v4442, %v4527
        %v4539 = vmul.f32 %v4440, %v4525
        %v4540 = vmul.f32 %v4428, %v4529
        %v4541 = vmul.f32 %v4443, %v4527
        %4548 = vrot.lane.b32.xlu0 %v4438, 127
        %v4549 = vpop.permute.xlu0 %4548
        %4550 = vrot.lane.b32.xlu0 %v4426, 127
        %v4551 = vpop.permute.xlu0 %4550
        %4552 = vrot.lane.b32.xlu0 %v4441, 127
        %v4553 = vpop.permute.xlu0 %4552
        %4554 = vrot.lane.b32.xlu0 %v4439, 127
        %v4555 = vpop.permute.xlu0 %4554
        %4556 = vrot.lane.b32.xlu0 %v4427, 127
        %v4557 = vpop.permute.xlu0 %4556
        %4558 = vrot.lane.b32.xlu0 %v4442, 127
        %v4559 = vpop.permute.xlu0 %4558
        %4560 = vrot.lane.b32.xlu0 %v4440, 127
        %v4561 = vpop.permute.xlu0 %4560
        %4562 = vrot.lane.b32.xlu0 %v4428, 127
        %v4563 = vpop.permute.xlu0 %4562
        %4564 = vrot.lane.b32.xlu0 %v4443, 127
        %v4565 = vpop.permute.xlu0 %4564
        %vm4566 = vcmask 1039360
        %v4567 = vsel %vm4566, %v4549, %v4551
        %v4568 = vsel %vm4566, %v4551, %v4553
        %v4569 = vsel %vm4566, %v4555, %v4557
        %v4570 = vsel %vm4566, %v4557, %v4559
        %v4571 = vsel %vm4566, %v4561, %v4563
        %v4572 = vsel %vm4566, %v4563, %v4565
        %4588 = vrot.lane.b32.xlu0 %v4461, 126
        %v4589 = vpop.permute.xlu0 %4588
        %4590 = vrot.lane.b32.xlu0 %v4462, 126
        %v4591 = vpop.permute.xlu0 %4590
        %4592 = vrot.lane.b32.xlu0 %v4463, 126
        %v4593 = vpop.permute.xlu0 %4592
        %4594 = vrot.lane.b32.xlu0 %v4464, 126
        %v4595 = vpop.permute.xlu0 %4594
        %4596 = vrot.lane.b32.xlu0 %v4465, 126
        %v4597 = vpop.permute.xlu0 %4596
        %4598 = vrot.lane.b32.xlu0 %v4466, 126
        %v4599 = vpop.permute.xlu0 %4598
        %4600 = vrot.lane.b32.xlu0 %v4467, 126
        %v4601 = vpop.permute.xlu0 %4600
        %4602 = vrot.lane.b32.xlu0 %v4468, 126
        %v4603 = vpop.permute.xlu0 %4602
        %4604 = vrot.lane.b32.xlu0 %v4469, 126
        %v4605 = vpop.permute.xlu0 %4604
        %vm4606 = vcmask 1031168
        %v4607 = vsel %vm4606, %v4589, %v4591
        %v4608 = vsel %vm4606, %v4591, %v4593
        %v4609 = vsel %vm4606, %v4595, %v4597
        %v4610 = vsel %vm4606, %v4597, %v4599
        %v4611 = vsel %vm4606, %v4601, %v4603
        %v4612 = vsel %vm4606, %v4603, %v4605
        %4628 = vrot.lane.b32.xlu0 %v4480, 112
        %v4629 = vpop.permute.xlu0 %4628
        %4630 = vrot.lane.b32.xlu0 %v4481, 112
        %v4631 = vpop.permute.xlu0 %4630
        %4632 = vrot.lane.b32.xlu0 %v4482, 112
        %v4633 = vpop.permute.xlu0 %4632
        %4634 = vrot.lane.b32.xlu0 %v4483, 112
        %v4635 = vpop.permute.xlu0 %4634
        %4636 = vrot.lane.b32.xlu0 %v4484, 112
        %v4637 = vpop.permute.xlu0 %4636
        %4638 = vrot.lane.b32.xlu0 %v4485, 112
        %v4639 = vpop.permute.xlu0 %4638
        %4640 = vrot.lane.b32.xlu0 %v4486, 112
        %v4641 = vpop.permute.xlu0 %4640
        %4642 = vrot.lane.b32.xlu0 %v4487, 112
        %v4643 = vpop.permute.xlu0 %4642
        %4644 = vrot.lane.b32.xlu0 %v4488, 112
        %v4645 = vpop.permute.xlu0 %4644
        %vm4646 = vcmask 916480
        %v4647 = vsel %vm4646, %v4629, %v4631
        %v4648 = vsel %vm4646, %v4631, %v4633
        %v4649 = vsel %vm4646, %v4635, %v4637
        %v4650 = vsel %vm4646, %v4637, %v4639
        %v4651 = vsel %vm4646, %v4641, %v4643
        %v4652 = vsel %vm4646, %v4643, %v4645
        %4659 = vrot.lane.b32.xlu0 %v4438, 111
        %v4660 = vpop.permute.xlu0 %4659
        %4661 = vrot.lane.b32.xlu0 %v4426, 111
        %v4662 = vpop.permute.xlu0 %4661
        %4663 = vrot.lane.b32.xlu0 %v4441, 111
        %v4664 = vpop.permute.xlu0 %4663
        %4665 = vrot.lane.b32.xlu0 %v4439, 111
        %v4666 = vpop.permute.xlu0 %4665
        %4667 = vrot.lane.b32.xlu0 %v4427, 111
        %v4668 = vpop.permute.xlu0 %4667
        %4669 = vrot.lane.b32.xlu0 %v4442, 111
        %v4670 = vpop.permute.xlu0 %4669
        %4671 = vrot.lane.b32.xlu0 %v4440, 111
        %v4672 = vpop.permute.xlu0 %4671
        %4673 = vrot.lane.b32.xlu0 %v4428, 111
        %v4674 = vpop.permute.xlu0 %4673
        %4675 = vrot.lane.b32.xlu0 %v4443, 111
        %v4676 = vpop.permute.xlu0 %4675
        %vm4677 = vcmask 908288
        %v4678 = vsel %vm4677, %v4660, %v4662
        %v4679 = vsel %vm4677, %v4662, %v4664
        %v4680 = vsel %vm4677, %v4666, %v4668
        %v4681 = vsel %vm4677, %v4668, %v4670
        %v4682 = vsel %vm4677, %v4672, %v4674
        %v4683 = vsel %vm4677, %v4674, %v4676
        %4699 = vrot.lane.b32.xlu0 %v4498, 110
        %v4700 = vpop.permute.xlu0 %4699
        %4701 = vrot.lane.b32.xlu0 %v4499, 110
        %v4702 = vpop.permute.xlu0 %4701
        %4703 = vrot.lane.b32.xlu0 %v4500, 110
        %v4704 = vpop.permute.xlu0 %4703
        %4705 = vrot.lane.b32.xlu0 %v4501, 110
        %v4706 = vpop.permute.xlu0 %4705
        %4707 = vrot.lane.b32.xlu0 %v4502, 110
        %v4708 = vpop.permute.xlu0 %4707
        %4709 = vrot.lane.b32.xlu0 %v4503, 110
        %v4710 = vpop.permute.xlu0 %4709
        %4711 = vrot.lane.b32.xlu0 %v4504, 110
        %v4712 = vpop.permute.xlu0 %4711
        %4713 = vrot.lane.b32.xlu0 %v4505, 110
        %v4714 = vpop.permute.xlu0 %4713
        %4715 = vrot.lane.b32.xlu0 %v4506, 110
        %v4716 = vpop.permute.xlu0 %4715
        %vm4717 = vcmask 900096
        %v4718 = vsel %vm4717, %v4700, %v4702
        %v4719 = vsel %vm4717, %v4702, %v4704
        %v4720 = vsel %vm4717, %v4706, %v4708
        %v4721 = vsel %vm4717, %v4708, %v4710
        %v4722 = vsel %vm4717, %v4712, %v4714
        %v4723 = vsel %vm4717, %v4714, %v4716
        %4739 = vrot.lane.b32.xlu0 %v4515, 96
        %v4740 = vpop.permute.xlu0 %4739
        %4741 = vrot.lane.b32.xlu0 %v4516, 96
        %v4742 = vpop.permute.xlu0 %4741
        %4743 = vrot.lane.b32.xlu0 %v4517, 96
        %v4744 = vpop.permute.xlu0 %4743
        %4745 = vrot.lane.b32.xlu0 %v4518, 96
        %v4746 = vpop.permute.xlu0 %4745
        %4747 = vrot.lane.b32.xlu0 %v4519, 96
        %v4748 = vpop.permute.xlu0 %4747
        %4749 = vrot.lane.b32.xlu0 %v4520, 96
        %v4750 = vpop.permute.xlu0 %4749
        %4751 = vrot.lane.b32.xlu0 %v4521, 96
        %v4752 = vpop.permute.xlu0 %4751
        %4753 = vrot.lane.b32.xlu0 %v4522, 96
        %v4754 = vpop.permute.xlu0 %4753
        %4755 = vrot.lane.b32.xlu0 %v4523, 96
        %v4756 = vpop.permute.xlu0 %4755
        %vm4757 = vcmask 785408
        %v4758 = vsel %vm4757, %v4740, %v4742
        %v4759 = vsel %vm4757, %v4742, %v4744
        %v4760 = vsel %vm4757, %v4746, %v4748
        %v4761 = vsel %vm4757, %v4748, %v4750
        %v4762 = vsel %vm4757, %v4752, %v4754
        %v4763 = vsel %vm4757, %v4754, %v4756
        %4770 = vrot.lane.b32.xlu0 %v4438, 95
        %v4771 = vpop.permute.xlu0 %4770
        %4772 = vrot.lane.b32.xlu0 %v4426, 95
        %v4773 = vpop.permute.xlu0 %4772
        %4774 = vrot.lane.b32.xlu0 %v4441, 95
        %v4775 = vpop.permute.xlu0 %4774
        %4776 = vrot.lane.b32.xlu0 %v4439, 95
        %v4777 = vpop.permute.xlu0 %4776
        %4778 = vrot.lane.b32.xlu0 %v4427, 95
        %v4779 = vpop.permute.xlu0 %4778
        %4780 = vrot.lane.b32.xlu0 %v4442, 95
        %v4781 = vpop.permute.xlu0 %4780
        %4782 = vrot.lane.b32.xlu0 %v4440, 95
        %v4783 = vpop.permute.xlu0 %4782
        %4784 = vrot.lane.b32.xlu0 %v4428, 95
        %v4785 = vpop.permute.xlu0 %4784
        %4786 = vrot.lane.b32.xlu0 %v4443, 95
        %v4787 = vpop.permute.xlu0 %4786
        %vm4788 = vcmask 777216
        %v4789 = vsel %vm4788, %v4771, %v4773
        %v4790 = vsel %vm4788, %v4773, %v4775
        %v4791 = vsel %vm4788, %v4777, %v4779
        %v4792 = vsel %vm4788, %v4779, %v4781
        %v4793 = vsel %vm4788, %v4783, %v4785
        %v4794 = vsel %vm4788, %v4785, %v4787
        %4810 = vrot.lane.b32.xlu0 %v4533, 94
        %v4811 = vpop.permute.xlu0 %4810
        %4812 = vrot.lane.b32.xlu0 %v4534, 94
        %v4813 = vpop.permute.xlu0 %4812
        %4814 = vrot.lane.b32.xlu0 %v4535, 94
        %v4815 = vpop.permute.xlu0 %4814
        %4816 = vrot.lane.b32.xlu0 %v4536, 94
        %v4817 = vpop.permute.xlu0 %4816
        %4818 = vrot.lane.b32.xlu0 %v4537, 94
        %v4819 = vpop.permute.xlu0 %4818
        %4820 = vrot.lane.b32.xlu0 %v4538, 94
        %v4821 = vpop.permute.xlu0 %4820
        %4822 = vrot.lane.b32.xlu0 %v4539, 94
        %v4823 = vpop.permute.xlu0 %4822
        %4824 = vrot.lane.b32.xlu0 %v4540, 94
        %v4825 = vpop.permute.xlu0 %4824
        %4826 = vrot.lane.b32.xlu0 %v4541, 94
        %v4827 = vpop.permute.xlu0 %4826
        %vm4828 = vcmask 769024
        %v4829 = vsel %vm4828, %v4811, %v4813
        %v4830 = vsel %vm4828, %v4813, %v4815
        %v4831 = vsel %vm4828, %v4817, %v4819
        %v4832 = vsel %vm4828, %v4819, %v4821
        %v4833 = vsel %vm4828, %v4823, %v4825
        %v4834 = vsel %vm4828, %v4825, %v4827
        %v4841 = vpack.c.bf16 %v4446, %v4444
        %v4842 = vpack.c.bf16 %v4447, %v4445
        %v4843 = vpack.c.bf16 %v4567, %v4448
        %v4844 = vpack.c.bf16 %v4568, %v4449
        %v4845 = vpack.c.bf16 %v4571, %v4569
        %v4846 = vpack.c.bf16 %v4572, %v4570
        %v4847 = vpack.c.bf16 %v4609, %v4607
        %v4848 = vpack.c.bf16 %v4610, %v4608
        %v4849 = vpack.c.bf16 %v4647, %v4611
        %v4850 = vpack.c.bf16 %v4648, %v4612
        %v4851 = vpack.c.bf16 %v4651, %v4649
        %v4852 = vpack.c.bf16 %v4652, %v4650
        %v4853 = vpack.c.bf16 %v4680, %v4678
        %v4854 = vpack.c.bf16 %v4681, %v4679
        %v4855 = vpack.c.bf16 %v4718, %v4682
        %v4856 = vpack.c.bf16 %v4719, %v4683
        %v4857 = vpack.c.bf16 %v4722, %v4720
        %v4858 = vpack.c.bf16 %v4723, %v4721
        %v4859 = vpack.c.bf16 %v4760, %v4758
        %v4860 = vpack.c.bf16 %v4761, %v4759
        %v4861 = vpack.c.bf16 %v4789, %v4762
        %v4862 = vpack.c.bf16 %v4790, %v4763
        %v4863 = vpack.c.bf16 %v4793, %v4791
        %v4864 = vpack.c.bf16 %v4794, %v4792
        %v4865 = vpack.c.bf16 %v4831, %v4829
        %v4866 = vpack.c.bf16 %v4832, %v4830
        %v4867 = vpack.c.bf16 %v4833, %v4833
        %v4868 = vpack.c.bf16 %v4834, %v4834
        %4870 = vset.pattern.permute.xlu0 0
        %4871 = vperm.xlu0 %4870, %v4401
        %v4872 = vpop.permute.xlu0 %4871
        %4875 = vset.pattern.permute.xlu0 0
        %4876 = vperm.xlu0 %4875, %v4402
        %v4877 = vpop.permute.xlu0 %4876
        %v4881 = vunpack.c.l.b16 %v4399
        %v4882 = vunpack.c.h.b16 %v4399
        %v4883 = vunpack.c.l.b16 %v4400
        %v4884 = vunpack.c.h.b16 %v4400
        %v4885 = vpack.c.b16 %v4883, %v4881
        %v4886 = vpack.c.b16 %v4884, %v4882
        %vm4888 = vcmask 719872
        %v4890 = vsel %vm4888, %v4886, 0
        %vm4892 = vcmask 1043456
        %v4894 = vsel %vm4892, %v4867, 0
        %v4897 = vsel %vm4892, %v4868, 0
        %4899 = vmatprep.subr.bf16.mxu0 %v4856
        %4900 = vmatpush1.bf16.msra.mxu0 %v4855
        %4901 = vmatprep.subr.bf16.mxu0 %v4854
        %4902 = vmatpush1.bf16.msra.mxu0 %v4853
        %4903 = vmatprep.subr.bf16.mxu0 %v4852
        %4904 = vmatpush1.bf16.msra.mxu0 %v4851
        %4905 = vmatprep.subr.bf16.mxu0 %v4850
        %4906 = vmatpush1.bf16.msra.mxu0 %v4849
        %4907 = vmatprep.subr.bf16.mxu0 %v4848
        %4908 = vmatpush1.bf16.msra.mxu0 %v4847
        %4909 = vmatprep.subr.bf16.mxu0 %v4846
        %4910 = vmatpush1.bf16.msra.mxu0 %v4845
        %4911 = vmatprep.subr.bf16.mxu0 %v4844
        %4912 = vmatpush1.bf16.msra.mxu0 %v4843
        %4913 = vmatprep.subr.bf16.mxu0 %v4842
        %4914 = vmatpush1.bf16.msra.mxu0 %v4841
        %4915 = vmatprep.subr.bf16.mxu0 0
        %4916 = vmatpush2.bf16.msra.mxu0 0
        %4917 = vmatprep.subr.bf16.mxu0 0
        %4918 = vmatpush2.bf16.msra.mxu0 0
        %4919 = vmatprep.subr.bf16.mxu0 %v4897
        %4920 = vmatpush2.bf16.msra.mxu0 %v4894
        %4921 = vmatprep.subr.bf16.mxu0 %v4866
        %4922 = vmatpush2.bf16.msra.mxu0 %v4865
        %4923 = vmatprep.subr.bf16.mxu0 %v4864
        %4924 = vmatpush2.bf16.msra.mxu0 %v4863
        %4925 = vmatprep.subr.bf16.mxu0 %v4862
        %4926 = vmatpush2.bf16.msra.mxu0 %v4861
        %4927 = vmatprep.subr.bf16.mxu0 %v4860
        %4928 = vmatpush2.bf16.msra.mxu0 %v4859
        %4929 = vmatprep.subr.bf16.mxu0 %v4858
        %4930 = vmatpush2.bf16.msra.mxu0 %v4857
        %4931 = vmatprep.mubr.bf16.mxu0 %v4890
        %4932 = vmatmul.mubr.bf16.gmra.mxu0 %v4885
        %v4933 = vpop.f32.mrf.mxu0
        %v4934 = vadd.f32 %v4872, %v4933
        %v4935 = vpop.f32.mrf.mxu0
        %v4936 = vadd.f32 %v4872, %v4935
        %v4937 = vpop.f32.mrf.mxu0
        %v4938 = vadd.f32 %v4877, %v4937
        %v4939 = vpop.f32.mrf.mxu0
        %v4940 = vadd.f32 %v4877, %v4939
        %4941 = vdwg.mxu0
        %v4942 = vmax.f32 %v4934, 0.0
        %v4943 = vmax.f32 %v4936, 0.0
        %v4944 = vmax.f32 %v4938, 0.0
        %v4945 = vmax.f32 %v4940, 0.0
        %4950 = vrot.lane.b32.xlu0 %v4942, 17
        %v4951 = vpop.permute.xlu0 %4950
        %4952 = vrot.lane.b32.xlu0 %v4943, 17
        %v4953 = vpop.permute.xlu0 %4952
        %4954 = vrot.lane.b32.xlu0 %v4944, 17
        %v4955 = vpop.permute.xlu0 %4954
        %4956 = vrot.lane.b32.xlu0 %v4945, 17
        %v4957 = vpop.permute.xlu0 %4956
        %v4958 = vsel %vm4425, %v4951, %v4953
        %v4959 = vsel %vm4425, %v4955, %v4957
        %v4966 = vsel %vm4425, 0.0, %v4951
        %v4967 = vsel %vm4425, 0.0, %v4955
        %v4968 = vsel %vm4425, %v4953, 0.0
        %v4969 = vsel %vm4425, %v4957, 0.0
        %v4970 = vmul.f32 %v4966, %v4391
        %v4971 = vmul.f32 %v4958, %v4392
        %v4972 = vmul.f32 %v4967, %v4391
        %v4973 = vmul.f32 %v4959, %v4392
        %v4974 = vmul.f32 %v4966, %v4453
        %v4975 = vmul.f32 %v4958, %v4457
        %v4976 = vmul.f32 %v4968, %v4455
        %v4977 = vmul.f32 %v4967, %v4453
        %v4978 = vmul.f32 %v4959, %v4457
        %v4979 = vmul.f32 %v4969, %v4455
        %v4980 = vmul.f32 %v4966, %v4473
        %v4981 = vmul.f32 %v4958, %v4476
        %v4982 = vmul.f32 %v4968, %v4475
        %v4983 = vmul.f32 %v4967, %v4473
        %v4984 = vmul.f32 %v4959, %v4476
        %v4985 = vmul.f32 %v4969, %v4475
        %v4986 = vmul.f32 %v4966, %v4490
        %v4987 = vmul.f32 %v4958, %v4494
        %v4988 = vmul.f32 %v4968, %v4492
        %v4989 = vmul.f32 %v4967, %v4490
        %v4990 = vmul.f32 %v4959, %v4494
        %v4991 = vmul.f32 %v4969, %v4492
        %v4992 = vmul.f32 %v4966, %v4508
        %v4993 = vmul.f32 %v4958, %v4511
        %v4994 = vmul.f32 %v4968, %v4510
        %v4995 = vmul.f32 %v4967, %v4508
        %v4996 = vmul.f32 %v4959, %v4511
        %v4997 = vmul.f32 %v4969, %v4510
        %v4998 = vmul.f32 %v4966, %v4525
        %v4999 = vmul.f32 %v4958, %v4529
        %v5000 = vmul.f32 %v4968, %v4527
        %v5001 = vmul.f32 %v4967, %v4525
        %v5002 = vmul.f32 %v4959, %v4529
        %v5003 = vmul.f32 %v4969, %v4527
        %5008 = vrot.lane.b32.xlu0 %v4966, 127
        %v5009 = vpop.permute.xlu0 %5008
        %5010 = vrot.lane.b32.xlu0 %v4958, 127
        %v5011 = vpop.permute.xlu0 %5010
        %5012 = vrot.lane.b32.xlu0 %v4968, 127
        %v5013 = vpop.permute.xlu0 %5012
        %5014 = vrot.lane.b32.xlu0 %v4967, 127
        %v5015 = vpop.permute.xlu0 %5014
        %5016 = vrot.lane.b32.xlu0 %v4959, 127
        %v5017 = vpop.permute.xlu0 %5016
        %5018 = vrot.lane.b32.xlu0 %v4969, 127
        %v5019 = vpop.permute.xlu0 %5018
        %v5020 = vsel %vm4566, %v5009, %v5011
        %v5021 = vsel %vm4566, %v5011, %v5013
        %v5022 = vsel %vm4566, %v5015, %v5017
        %v5023 = vsel %vm4566, %v5017, %v5019
        %5034 = vrot.lane.b32.xlu0 %v4974, 126
        %v5035 = vpop.permute.xlu0 %5034
        %5036 = vrot.lane.b32.xlu0 %v4975, 126
        %v5037 = vpop.permute.xlu0 %5036
        %5038 = vrot.lane.b32.xlu0 %v4976, 126
        %v5039 = vpop.permute.xlu0 %5038
        %5040 = vrot.lane.b32.xlu0 %v4977, 126
        %v5041 = vpop.permute.xlu0 %5040
        %5042 = vrot.lane.b32.xlu0 %v4978, 126
        %v5043 = vpop.permute.xlu0 %5042
        %5044 = vrot.lane.b32.xlu0 %v4979, 126
        %v5045 = vpop.permute.xlu0 %5044
        %v5046 = vsel %vm4606, %v5035, %v5037
        %v5047 = vsel %vm4606, %v5037, %v5039
        %v5048 = vsel %vm4606, %v5041, %v5043
        %v5049 = vsel %vm4606, %v5043, %v5045
        %5060 = vrot.lane.b32.xlu0 %v4980, 112
        %v5061 = vpop.permute.xlu0 %5060
        %5062 = vrot.lane.b32.xlu0 %v4981, 112
        %v5063 = vpop.permute.xlu0 %5062
        %5064 = vrot.lane.b32.xlu0 %v4982, 112
        %v5065 = vpop.permute.xlu0 %5064
        %5066 = vrot.lane.b32.xlu0 %v4983, 112
        %v5067 = vpop.permute.xlu0 %5066
        %5068 = vrot.lane.b32.xlu0 %v4984, 112
        %v5069 = vpop.permute.xlu0 %5068
        %5070 = vrot.lane.b32.xlu0 %v4985, 112
        %v5071 = vpop.permute.xlu0 %5070
        %v5072 = vsel %vm4646, %v5061, %v5063
        %v5073 = vsel %vm4646, %v5063, %v5065
        %v5074 = vsel %vm4646, %v5067, %v5069
        %v5075 = vsel %vm4646, %v5069, %v5071
        %5080 = vrot.lane.b32.xlu0 %v4966, 111
        %v5081 = vpop.permute.xlu0 %5080
        %5082 = vrot.lane.b32.xlu0 %v4958, 111
        %v5083 = vpop.permute.xlu0 %5082
        %5084 = vrot.lane.b32.xlu0 %v4968, 111
        %v5085 = vpop.permute.xlu0 %5084
        %5086 = vrot.lane.b32.xlu0 %v4967, 111
        %v5087 = vpop.permute.xlu0 %5086
        %5088 = vrot.lane.b32.xlu0 %v4959, 111
        %v5089 = vpop.permute.xlu0 %5088
        %5090 = vrot.lane.b32.xlu0 %v4969, 111
        %v5091 = vpop.permute.xlu0 %5090
        %v5092 = vsel %vm4677, %v5081, %v5083
        %v5093 = vsel %vm4677, %v5083, %v5085
        %v5094 = vsel %vm4677, %v5087, %v5089
        %v5095 = vsel %vm4677, %v5089, %v5091
        %5106 = vrot.lane.b32.xlu0 %v4986, 110
        %v5107 = vpop.permute.xlu0 %5106
        %5108 = vrot.lane.b32.xlu0 %v4987, 110
        %v5109 = vpop.permute.xlu0 %5108
        %5110 = vrot.lane.b32.xlu0 %v4988, 110
        %v5111 = vpop.permute.xlu0 %5110
        %5112 = vrot.lane.b32.xlu0 %v4989, 110
        %v5113 = vpop.permute.xlu0 %5112
        %5114 = vrot.lane.b32.xlu0 %v4990, 110
        %v5115 = vpop.permute.xlu0 %5114
        %5116 = vrot.lane.b32.xlu0 %v4991, 110
        %v5117 = vpop.permute.xlu0 %5116
        %v5118 = vsel %vm4717, %v5107, %v5109
        %v5119 = vsel %vm4717, %v5109, %v5111
        %v5120 = vsel %vm4717, %v5113, %v5115
        %v5121 = vsel %vm4717, %v5115, %v5117
        %5132 = vrot.lane.b32.xlu0 %v4992, 96
        %v5133 = vpop.permute.xlu0 %5132
        %5134 = vrot.lane.b32.xlu0 %v4993, 96
        %v5135 = vpop.permute.xlu0 %5134
        %5136 = vrot.lane.b32.xlu0 %v4994, 96
        %v5137 = vpop.permute.xlu0 %5136
        %5138 = vrot.lane.b32.xlu0 %v4995, 96
        %v5139 = vpop.permute.xlu0 %5138
        %5140 = vrot.lane.b32.xlu0 %v4996, 96
        %v5141 = vpop.permute.xlu0 %5140
        %5142 = vrot.lane.b32.xlu0 %v4997, 96
        %v5143 = vpop.permute.xlu0 %5142
        %v5144 = vsel %vm4757, %v5133, %v5135
        %v5145 = vsel %vm4757, %v5135, %v5137
        %v5146 = vsel %vm4757, %v5139, %v5141
        %v5147 = vsel %vm4757, %v5141, %v5143
        %5152 = vrot.lane.b32.xlu0 %v4966, 95
        %v5153 = vpop.permute.xlu0 %5152
        %5154 = vrot.lane.b32.xlu0 %v4958, 95
        %v5155 = vpop.permute.xlu0 %5154
        %5156 = vrot.lane.b32.xlu0 %v4968, 95
        %v5157 = vpop.permute.xlu0 %5156
        %5158 = vrot.lane.b32.xlu0 %v4967, 95
        %v5159 = vpop.permute.xlu0 %5158
        %5160 = vrot.lane.b32.xlu0 %v4959, 95
        %v5161 = vpop.permute.xlu0 %5160
        %5162 = vrot.lane.b32.xlu0 %v4969, 95
        %v5163 = vpop.permute.xlu0 %5162
        %v5164 = vsel %vm4788, %v5153, %v5155
        %v5165 = vsel %vm4788, %v5155, %v5157
        %v5166 = vsel %vm4788, %v5159, %v5161
        %v5167 = vsel %vm4788, %v5161, %v5163
        %5178 = vrot.lane.b32.xlu0 %v4998, 94
        %v5179 = vpop.permute.xlu0 %5178
        %5180 = vrot.lane.b32.xlu0 %v4999, 94
        %v5181 = vpop.permute.xlu0 %5180
        %5182 = vrot.lane.b32.xlu0 %v5000, 94
        %v5183 = vpop.permute.xlu0 %5182
        %5184 = vrot.lane.b32.xlu0 %v5001, 94
        %v5185 = vpop.permute.xlu0 %5184
        %5186 = vrot.lane.b32.xlu0 %v5002, 94
        %v5187 = vpop.permute.xlu0 %5186
        %5188 = vrot.lane.b32.xlu0 %v5003, 94
        %v5189 = vpop.permute.xlu0 %5188
        %v5190 = vsel %vm4828, %v5179, %v5181
        %v5191 = vsel %vm4828, %v5181, %v5183
        %v5192 = vsel %vm4828, %v5185, %v5187
        %v5193 = vsel %vm4828, %v5187, %v5189
        %v5198 = vpack.c.bf16 %v4972, %v4970
        %v5199 = vpack.c.bf16 %v4973, %v4971
        %v5200 = vpack.c.bf16 %v5022, %v5020
        %v5201 = vpack.c.bf16 %v5023, %v5021
        %v5202 = vpack.c.bf16 %v5048, %v5046
        %v5203 = vpack.c.bf16 %v5049, %v5047
        %v5204 = vpack.c.bf16 %v5074, %v5072
        %v5205 = vpack.c.bf16 %v5075, %v5073
        %v5206 = vpack.c.bf16 %v5094, %v5092
        %v5207 = vpack.c.bf16 %v5095, %v5093
        %v5208 = vpack.c.bf16 %v5120, %v5118
        %v5209 = vpack.c.bf16 %v5121, %v5119
        %v5210 = vpack.c.bf16 %v5146, %v5144
        %v5211 = vpack.c.bf16 %v5147, %v5145
        %v5212 = vpack.c.bf16 %v5166, %v5164
        %v5213 = vpack.c.bf16 %v5167, %v5165
        %v5214 = vpack.c.bf16 %v5192, %v5190
        %v5215 = vpack.c.bf16 %v5193, %v5191
        %5217 = vset.pattern.permute.xlu0 0
        %5218 = vperm.xlu0 %5217, %v4405
        %v5219 = vpop.permute.xlu0 %5218
        %5222 = vset.pattern.permute.xlu0 0
        %5223 = vperm.xlu0 %5222, %v4406
        %v5224 = vpop.permute.xlu0 %5223
        %v5228 = vunpack.c.l.b16 %v4403
        %v5229 = vunpack.c.h.b16 %v4403
        %v5230 = vunpack.c.l.b16 %v4404
        %v5231 = vunpack.c.h.b16 %v4404
        %v5232 = vpack.c.b16 %v5230, %v5228
        %v5233 = vpack.c.b16 %v5231, %v5229
        %v5236 = vsel %vm3639, %v5233, 0
        %5238 = vmatprep.subr.bf16.mxu0 %v5213
        %5239 = vmatpush1.bf16.msra.mxu0 %v5212
        %5240 = vmatprep.subr.bf16.mxu0 %v5211
        %5241 = vmatpush1.bf16.msra.mxu0 %v5210
        %5242 = vmatprep.subr.bf16.mxu0 %v5209
        %5243 = vmatpush1.bf16.msra.mxu0 %v5208
        %5244 = vmatprep.subr.bf16.mxu0 %v5207
        %5245 = vmatpush1.bf16.msra.mxu0 %v5206
        %5246 = vmatprep.subr.bf16.mxu0 %v5205
        %5247 = vmatpush1.bf16.msra.mxu0 %v5204
        %5248 = vmatprep.subr.bf16.mxu0 %v5203
        %5249 = vmatpush1.bf16.msra.mxu0 %v5202
        %5250 = vmatprep.subr.bf16.mxu0 %v5201
        %5251 = vmatpush1.bf16.msra.mxu0 %v5200
        %5252 = vmatprep.subr.bf16.mxu0 %v5199
        %5253 = vmatpush1.bf16.msra.mxu0 %v5198
        %5254 = vmatprep.subr.bf16.mxu0 0
        %5255 = vmatpush2.bf16.msra.mxu0 0
        %5256 = vmatprep.subr.bf16.mxu0 0
        %5257 = vmatpush2.bf16.msra.mxu0 0
        %5258 = vmatprep.subr.bf16.mxu0 0
        %5259 = vmatpush2.bf16.msra.mxu0 0
        %5260 = vmatprep.subr.bf16.mxu0 0
        %5261 = vmatpush2.bf16.msra.mxu0 0
        %5262 = vmatprep.subr.bf16.mxu0 0
        %5263 = vmatpush2.bf16.msra.mxu0 0
        %5264 = vmatprep.subr.bf16.mxu0 0
        %5265 = vmatpush2.bf16.msra.mxu0 0
        %5266 = vmatprep.subr.bf16.mxu0 0
        %5267 = vmatpush2.bf16.msra.mxu0 0
        %5268 = vmatprep.subr.bf16.mxu0 %v5215
        %5269 = vmatpush2.bf16.msra.mxu0 %v5214
        %5270 = vmatprep.mubr.bf16.mxu0 %v5236
        %5271 = vmatmul.mubr.bf16.gmra.mxu0 %v5232
        %v5272 = vpop.f32.mrf.mxu0
        %v5273 = vadd.f32 %v5219, %v5272
        %v5274 = vpop.f32.mrf.mxu0
        %v5275 = vadd.f32 %v5219, %v5274
        %v5276 = vpop.f32.mrf.mxu0
        %v5277 = vadd.f32 %v5224, %v5276
        %v5278 = vpop.f32.mrf.mxu0
        %v5279 = vadd.f32 %v5224, %v5278
        %5280 = vdwg.mxu0
        %v5281 = vmax.f32 %v5273, 0.0
        %v5282 = vmax.f32 %v5275, 0.0
        %v5283 = vmax.f32 %v5277, 0.0
        %v5284 = vmax.f32 %v5279, 0.0
        %v5285 = vld [vmem:[#allocation5] sm:$0xff]
        %v5286 = vld [vmem:[#allocation5 + $0x8] sm:$0xff]
        %v5287 = vld [vmem:[#allocation5 + $0x10] sm:$0xff]
        %v5288 = vld [vmem:[#allocation5 + $0x18] sm:$0xff]
        %v5289 = vld [vmem:[#allocation5 + $0x20] sm:$0xff]
        %v5290 = vld [vmem:[#allocation5 + $0x28] sm:$0xff]
        %v5291 = vld [vmem:[#allocation5 + $0x30] sm:$0xff]
        %v5292 = vld [vmem:[#allocation5 + $0x38] sm:$0xff]
        %v5293 = vld [vmem:[#allocation5 + $0x40] sm:$0xff]
        %v5294 = vld [vmem:[#allocation5 + $0x48] sm:$0xff]
        %v5295 = vld [vmem:[#allocation5 + $0x50] sm:$0xff]
        %v5296 = vld [vmem:[#allocation5 + $0x58] sm:$0xff]
        %v5297 = vld [vmem:[#allocation5 + $0x60] sm:$0xff]
        %v5298 = vld [vmem:[#allocation5 + $0x68] sm:$0xff]
        %v5299 = vld [vmem:[#allocation5 + $0x70] sm:$0xff]
        %v5300 = vld [vmem:[#allocation5 + $0x78] sm:$0xff]
        %v5301 = vld [vmem:[#allocation5 + $0x80] sm:$0xff]
        %v5302 = vld [vmem:[#allocation5 + $0x88] sm:$0xff]
        %v5303 = vld [vmem:[#allocation5 + $0x90] sm:$0xff]
        %v5304 = vld [vmem:[#allocation5 + $0x98] sm:$0xff]
        %v5305 = vld [vmem:[#allocation5 + $0xa0] sm:$0xff]
        %v5306 = vld [vmem:[#allocation5 + $0xa8] sm:$0xff]
        %v5307 = vld [vmem:[#allocation5 + $0xb0] sm:$0xff]
        %v5308 = vld [vmem:[#allocation5 + $0xb8] sm:$0xff]
        %v5309 = vld [vmem:[#allocation5 + $0xc0] sm:$0xff]
        %v5310 = vld [vmem:[#allocation5 + $0xc8] sm:$0xff]
        %v5311 = vld [vmem:[#allocation5 + $0xd0] sm:$0xff]
        %v5312 = vld [vmem:[#allocation5 + $0xd8] sm:$0xff]
        %v5313 = vld [vmem:[#allocation5 + $0xe0] sm:$0xff]
        %v5314 = vld [vmem:[#allocation5 + $0xe8] sm:$0xff]
        %v5315 = vld [vmem:[#allocation5 + $0xf0] sm:$0xff]
        %v5316 = vld [vmem:[#allocation5 + $0xf8] sm:$0xff]
        %v5317 = vld [vmem:[#allocation5 + $0x100] sm:$0xff]
        %v5318 = vld [vmem:[#allocation5 + $0x108] sm:$0xff]
        %v5319 = vld [vmem:[#allocation5 + $0x110] sm:$0xff]
        %v5320 = vld [vmem:[#allocation5 + $0x118] sm:$0xff]
        %v5321 = vld [vmem:[#allocation5 + $0x120] sm:$0xff]
        %v5322 = vld [vmem:[#allocation5 + $0x128] sm:$0xff]
        %v5323 = vld [vmem:[#allocation5 + $0x130] sm:$0xff]
        %v5324 = vld [vmem:[#allocation5 + $0x138] sm:$0xff]
        %v5325 = vld [vmem:[#allocation5 + $0x140] sm:$0xff]
        %v5326 = vld [vmem:[#allocation5 + $0x148] sm:$0xff]
        %v5327 = vld [vmem:[#allocation5 + $0x150] sm:$0xff]
        %v5328 = vld [vmem:[#allocation5 + $0x158] sm:$0xff]
        %v5329 = vld [vmem:[#allocation5 + $0x160] sm:$0xff]
        %v5330 = vld [vmem:[#allocation5 + $0x168] sm:$0xff]
        %v5331 = vld [vmem:[#allocation5 + $0x170] sm:$0xff]
        %v5332 = vld [vmem:[#allocation5 + $0x178] sm:$0xff]
        %v5333 = vld [vmem:[#allocation5 + $0x180] sm:$0xff]
        %v5334 = vld [vmem:[#allocation5 + $0x188] sm:$0xff]
        %v5335 = vld [vmem:[#allocation5 + $0x190] sm:$0xff]
        %v5336 = vld [vmem:[#allocation5 + $0x198] sm:$0xff]
        %v5337 = vld [vmem:[#allocation5 + $0x1a0] sm:$0xff]
        %v5338 = vld [vmem:[#allocation5 + $0x1a8] sm:$0xff]
        %v5339 = vld [vmem:[#allocation5 + $0x1b0] sm:$0xff]
        %v5340 = vld [vmem:[#allocation5 + $0x1b8] sm:$0xff]
        %v5341 = vld [vmem:[#allocation5 + $0x1c0] sm:$0xff]
        %v5342 = vld [vmem:[#allocation5 + $0x1c8] sm:$0xff]
        %v5343 = vld [vmem:[#allocation5 + $0x1d0] sm:$0xff]
        %v5344 = vld [vmem:[#allocation5 + $0x1d8] sm:$0xff]
        %v5345 = vld [vmem:[#allocation5 + $0x1e0] sm:$0xff]
        %v5346 = vld [vmem:[#allocation5 + $0x1e8] sm:$0xff]
        %v5347 = vld [vmem:[#allocation5 + $0x1f0] sm:$0xff]
        %v5348 = vld [vmem:[#allocation5 + $0x1f8] sm:$0xff]
        %v5349 = vld [vmem:[#allocation5 + $0x200] sm:$0xff]
        %v5350 = vld [vmem:[#allocation5 + $0x208] sm:$0xff]
        %v5351 = vld [vmem:[#allocation5 + $0x210] sm:$0xff]
        %v5352 = vld [vmem:[#allocation5 + $0x218] sm:$0xff]
        %v5353 = vld [vmem:[#allocation5 + $0x220] sm:$0xff]
        %v5354 = vld [vmem:[#allocation5 + $0x228] sm:$0xff]
        %v5355 = vld [vmem:[#allocation5 + $0x230] sm:$0xff]
        %v5356 = vld [vmem:[#allocation5 + $0x238] sm:$0xff]
        %v5357 = vld [vmem:[#allocation5 + $0x240] sm:$0xff]
        %v5358 = vld [vmem:[#allocation5 + $0x248] sm:$0xff]
        %v5359 = vld [vmem:[#allocation5 + $0x250] sm:$0xff]
        %v5360 = vld [vmem:[#allocation5 + $0x258] sm:$0xff]
        %v5361 = vld [vmem:[#allocation5 + $0x260] sm:$0xff]
        %v5362 = vld [vmem:[#allocation5 + $0x268] sm:$0xff]
        %v5363 = vld [vmem:[#allocation5 + $0x270] sm:$0xff]
        %v5364 = vld [vmem:[#allocation5 + $0x278] sm:$0xff]
        %v5365 = vld [vmem:[#allocation5 + $0x280] sm:$0xff]
        %v5366 = vld [vmem:[#allocation5 + $0x288] sm:$0xff]
        %v5367 = vld [vmem:[#allocation5 + $0x290] sm:$0xff]
        %v5368 = vld [vmem:[#allocation5 + $0x298] sm:$0xff]
        %v5369 = vld [vmem:[#allocation5 + $0x2a0] sm:$0xff]
        %v5370 = vld [vmem:[#allocation5 + $0x2a8] sm:$0xff]
        %v5371 = vld [vmem:[#allocation5 + $0x2b0] sm:$0xff]
        %v5372 = vld [vmem:[#allocation5 + $0x2b8] sm:$0xff]
        %v5373 = vld [vmem:[#allocation5 + $0x2c0] sm:$0xff]
        %v5374 = vld [vmem:[#allocation5 + $0x2c8] sm:$0xff]
        %v5375 = vld [vmem:[#allocation5 + $0x2d0] sm:$0xff]
        %v5376 = vld [vmem:[#allocation5 + $0x2d8] sm:$0xff]
        %v5377 = vld [vmem:[#allocation5 + $0x2e0] sm:$0xff]
        %v5378 = vld [vmem:[#allocation5 + $0x2e8] sm:$0xff]
        %v5379 = vld [vmem:[#allocation5 + $0x2f0] sm:$0xff]
        %v5380 = vld [vmem:[#allocation5 + $0x2f8] sm:$0xff]
        %v5381 = vld [vmem:[#allocation5 + $0x300] sm:$0xff]
        %v5382 = vld [vmem:[#allocation5 + $0x308] sm:$0xff]
        %v5383 = vld [vmem:[#allocation5 + $0x310] sm:$0xff]
        %v5384 = vld [vmem:[#allocation5 + $0x318] sm:$0xff]
        %v5385 = vld [vmem:[#allocation5 + $0x320] sm:$0xff]
        %v5386 = vld [vmem:[#allocation5 + $0x328] sm:$0xff]
        %v5387 = vld [vmem:[#allocation5 + $0x330] sm:$0xff]
        %v5388 = vld [vmem:[#allocation5 + $0x338] sm:$0xff]
        %v5389 = vld [vmem:[#allocation5 + $0x340] sm:$0xff]
        %v5390 = vld [vmem:[#allocation5 + $0x348] sm:$0xff]
        %v5391 = vld [vmem:[#allocation5 + $0x350] sm:$0xff]
        %v5392 = vld [vmem:[#allocation5 + $0x358] sm:$0xff]
        %v5393 = vld [vmem:[#allocation5 + $0x360] sm:$0xff]
        %v5394 = vld [vmem:[#allocation5 + $0x368] sm:$0xff]
        %v5395 = vld [vmem:[#allocation5 + $0x370] sm:$0xff]
        %v5396 = vld [vmem:[#allocation5 + $0x378] sm:$0xff]
        %v5397 = vld [vmem:[#allocation5 + $0x380] sm:$0xff]
        %v5398 = vld [vmem:[#allocation5 + $0x388] sm:$0xff]
        %v5399 = vld [vmem:[#allocation5 + $0x390] sm:$0xff]
        %v5400 = vld [vmem:[#allocation5 + $0x398] sm:$0xff]
        %v5401 = vld [vmem:[#allocation5 + $0x3a0] sm:$0xff]
        %v5402 = vld [vmem:[#allocation5 + $0x3a8] sm:$0xff]
        %v5403 = vld [vmem:[#allocation5 + $0x3b0] sm:$0xff]
        %v5404 = vld [vmem:[#allocation5 + $0x3b8] sm:$0xff]
        %v5405 = vld [vmem:[#allocation5 + $0x3c0] sm:$0xff]
        %v5406 = vld [vmem:[#allocation5 + $0x3c8] sm:$0xff]
        %v5407 = vld [vmem:[#allocation5 + $0x3d0] sm:$0xff]
        %v5408 = vld [vmem:[#allocation5 + $0x3d8] sm:$0xff]
        %v5409 = vld [vmem:[#allocation5 + $0x3e0] sm:$0xff]
        %v5410 = vld [vmem:[#allocation5 + $0x3e8] sm:$0xff]
        %v5411 = vld [vmem:[#allocation5 + $0x3f0] sm:$0xff]
        %v5412 = vld [vmem:[#allocation5 + $0x3f8] sm:$0xff]
        %v5413 = vpack.c.bf16 %v5283, %v5281
        %v5414 = vpack.c.bf16 %v5284, %v5282
        %v5543 = vunpack.c.l.b16 %v5285
        %v5544 = vunpack.c.h.b16 %v5285
        %v5545 = vunpack.c.l.b16 %v5286
        %v5546 = vunpack.c.h.b16 %v5286
        %v5547 = vunpack.c.l.b16 %v5287
        %v5548 = vunpack.c.h.b16 %v5287
        %v5549 = vunpack.c.l.b16 %v5288
        %v5550 = vunpack.c.h.b16 %v5288
        %v5551 = vunpack.c.l.b16 %v5289
        %v5552 = vunpack.c.h.b16 %v5289
        %v5553 = vunpack.c.l.b16 %v5290
        %v5554 = vunpack.c.h.b16 %v5290
        %v5555 = vunpack.c.l.b16 %v5291
        %v5556 = vunpack.c.h.b16 %v5291
        %v5557 = vunpack.c.l.b16 %v5292
        %v5558 = vunpack.c.h.b16 %v5292
        %v5559 = vunpack.c.l.b16 %v5293
        %v5560 = vunpack.c.h.b16 %v5293
        %v5561 = vunpack.c.l.b16 %v5294
        %v5562 = vunpack.c.h.b16 %v5294
        %v5563 = vunpack.c.l.b16 %v5295
        %v5564 = vunpack.c.h.b16 %v5295
        %v5565 = vunpack.c.l.b16 %v5296
        %v5566 = vunpack.c.h.b16 %v5296
        %v5567 = vunpack.c.l.b16 %v5297
        %v5568 = vunpack.c.h.b16 %v5297
        %v5569 = vunpack.c.l.b16 %v5298
        %v5570 = vunpack.c.h.b16 %v5298
        %v5571 = vunpack.c.l.b16 %v5299
        %v5572 = vunpack.c.h.b16 %v5299
        %v5573 = vunpack.c.l.b16 %v5300
        %v5574 = vunpack.c.h.b16 %v5300
        %v5575 = vunpack.c.l.b16 %v5301
        %v5576 = vunpack.c.h.b16 %v5301
        %v5577 = vunpack.c.l.b16 %v5302
        %v5578 = vunpack.c.h.b16 %v5302
        %v5579 = vunpack.c.l.b16 %v5303
        %v5580 = vunpack.c.h.b16 %v5303
        %v5581 = vunpack.c.l.b16 %v5304
        %v5582 = vunpack.c.h.b16 %v5304
        %v5583 = vunpack.c.l.b16 %v5305
        %v5584 = vunpack.c.h.b16 %v5305
        %v5585 = vunpack.c.l.b16 %v5306
        %v5586 = vunpack.c.h.b16 %v5306
        %v5587 = vunpack.c.l.b16 %v5307
        %v5588 = vunpack.c.h.b16 %v5307
        %v5589 = vunpack.c.l.b16 %v5308
        %v5590 = vunpack.c.h.b16 %v5308
        %v5591 = vunpack.c.l.b16 %v5309
        %v5592 = vunpack.c.h.b16 %v5309
        %v5593 = vunpack.c.l.b16 %v5310
        %v5594 = vunpack.c.h.b16 %v5310
        %v5595 = vunpack.c.l.b16 %v5311
        %v5596 = vunpack.c.h.b16 %v5311
        %v5597 = vunpack.c.l.b16 %v5312
        %v5598 = vunpack.c.h.b16 %v5312
        %v5599 = vunpack.c.l.b16 %v5313
        %v5600 = vunpack.c.h.b16 %v5313
        %v5601 = vunpack.c.l.b16 %v5314
        %v5602 = vunpack.c.h.b16 %v5314
        %v5603 = vunpack.c.l.b16 %v5315
        %v5604 = vunpack.c.h.b16 %v5315
        %v5605 = vunpack.c.l.b16 %v5316
        %v5606 = vunpack.c.h.b16 %v5316
        %v5607 = vunpack.c.l.b16 %v5317
        %v5608 = vunpack.c.h.b16 %v5317
        %v5609 = vunpack.c.l.b16 %v5318
        %v5610 = vunpack.c.h.b16 %v5318
        %v5611 = vunpack.c.l.b16 %v5319
        %v5612 = vunpack.c.h.b16 %v5319
        %v5613 = vunpack.c.l.b16 %v5320
        %v5614 = vunpack.c.h.b16 %v5320
        %v5615 = vunpack.c.l.b16 %v5321
        %v5616 = vunpack.c.h.b16 %v5321
        %v5617 = vunpack.c.l.b16 %v5322
        %v5618 = vunpack.c.h.b16 %v5322
        %v5619 = vunpack.c.l.b16 %v5323
        %v5620 = vunpack.c.h.b16 %v5323
        %v5621 = vunpack.c.l.b16 %v5324
        %v5622 = vunpack.c.h.b16 %v5324
        %v5623 = vunpack.c.l.b16 %v5325
        %v5624 = vunpack.c.h.b16 %v5325
        %v5625 = vunpack.c.l.b16 %v5326
        %v5626 = vunpack.c.h.b16 %v5326
        %v5627 = vunpack.c.l.b16 %v5327
        %v5628 = vunpack.c.h.b16 %v5327
        %v5629 = vunpack.c.l.b16 %v5328
        %v5630 = vunpack.c.h.b16 %v5328
        %v5631 = vunpack.c.l.b16 %v5329
        %v5632 = vunpack.c.h.b16 %v5329
        %v5633 = vunpack.c.l.b16 %v5330
        %v5634 = vunpack.c.h.b16 %v5330
        %v5635 = vunpack.c.l.b16 %v5331
        %v5636 = vunpack.c.h.b16 %v5331
        %v5637 = vunpack.c.l.b16 %v5332
        %v5638 = vunpack.c.h.b16 %v5332
        %v5639 = vunpack.c.l.b16 %v5333
        %v5640 = vunpack.c.h.b16 %v5333
        %v5641 = vunpack.c.l.b16 %v5334
        %v5642 = vunpack.c.h.b16 %v5334
        %v5643 = vunpack.c.l.b16 %v5335
        %v5644 = vunpack.c.h.b16 %v5335
        %v5645 = vunpack.c.l.b16 %v5336
        %v5646 = vunpack.c.h.b16 %v5336
        %v5647 = vunpack.c.l.b16 %v5337
        %v5648 = vunpack.c.h.b16 %v5337
        %v5649 = vunpack.c.l.b16 %v5338
        %v5650 = vunpack.c.h.b16 %v5338
        %v5651 = vunpack.c.l.b16 %v5339
        %v5652 = vunpack.c.h.b16 %v5339
        %v5653 = vunpack.c.l.b16 %v5340
        %v5654 = vunpack.c.h.b16 %v5340
        %v5655 = vunpack.c.l.b16 %v5341
        %v5656 = vunpack.c.h.b16 %v5341
        %v5657 = vunpack.c.l.b16 %v5342
        %v5658 = vunpack.c.h.b16 %v5342
        %v5659 = vunpack.c.l.b16 %v5343
        %v5660 = vunpack.c.h.b16 %v5343
        %v5661 = vunpack.c.l.b16 %v5344
        %v5662 = vunpack.c.h.b16 %v5344
        %v5663 = vunpack.c.l.b16 %v5345
        %v5664 = vunpack.c.h.b16 %v5345
        %v5665 = vunpack.c.l.b16 %v5346
        %v5666 = vunpack.c.h.b16 %v5346
        %v5667 = vunpack.c.l.b16 %v5347
        %v5668 = vunpack.c.h.b16 %v5347
        %v5669 = vunpack.c.l.b16 %v5348
        %v5670 = vunpack.c.h.b16 %v5348
        %v5671 = vunpack.c.l.b16 %v5349
        %v5672 = vunpack.c.h.b16 %v5349
        %v5673 = vunpack.c.l.b16 %v5350
        %v5674 = vunpack.c.h.b16 %v5350
        %v5675 = vunpack.c.l.b16 %v5351
        %v5676 = vunpack.c.h.b16 %v5351
        %v5677 = vunpack.c.l.b16 %v5352
        %v5678 = vunpack.c.h.b16 %v5352
        %v5679 = vunpack.c.l.b16 %v5353
        %v5680 = vunpack.c.h.b16 %v5353
        %v5681 = vunpack.c.l.b16 %v5354
        %v5682 = vunpack.c.h.b16 %v5354
        %v5683 = vunpack.c.l.b16 %v5355
        %v5684 = vunpack.c.h.b16 %v5355
        %v5685 = vunpack.c.l.b16 %v5356
        %v5686 = vunpack.c.h.b16 %v5356
        %v5687 = vunpack.c.l.b16 %v5357
        %v5688 = vunpack.c.h.b16 %v5357
        %v5689 = vunpack.c.l.b16 %v5358
        %v5690 = vunpack.c.h.b16 %v5358
        %v5691 = vunpack.c.l.b16 %v5359
        %v5692 = vunpack.c.h.b16 %v5359
        %v5693 = vunpack.c.l.b16 %v5360
        %v5694 = vunpack.c.h.b16 %v5360
        %v5695 = vunpack.c.l.b16 %v5361
        %v5696 = vunpack.c.h.b16 %v5361
        %v5697 = vunpack.c.l.b16 %v5362
        %v5698 = vunpack.c.h.b16 %v5362
        %v5699 = vunpack.c.l.b16 %v5363
        %v5700 = vunpack.c.h.b16 %v5363
        %v5701 = vunpack.c.l.b16 %v5364
        %v5702 = vunpack.c.h.b16 %v5364
        %v5703 = vunpack.c.l.b16 %v5365
        %v5704 = vunpack.c.h.b16 %v5365
        %v5705 = vunpack.c.l.b16 %v5366
        %v5706 = vunpack.c.h.b16 %v5366
        %v5707 = vunpack.c.l.b16 %v5367
        %v5708 = vunpack.c.h.b16 %v5367
        %v5709 = vunpack.c.l.b16 %v5368
        %v5710 = vunpack.c.h.b16 %v5368
        %v5711 = vunpack.c.l.b16 %v5369
        %v5712 = vunpack.c.h.b16 %v5369
        %v5713 = vunpack.c.l.b16 %v5370
        %v5714 = vunpack.c.h.b16 %v5370
        %v5715 = vunpack.c.l.b16 %v5371
        %v5716 = vunpack.c.h.b16 %v5371
        %v5717 = vunpack.c.l.b16 %v5372
        %v5718 = vunpack.c.h.b16 %v5372
        %v5719 = vunpack.c.l.b16 %v5373
        %v5720 = vunpack.c.h.b16 %v5373
        %v5721 = vunpack.c.l.b16 %v5374
        %v5722 = vunpack.c.h.b16 %v5374
        %v5723 = vunpack.c.l.b16 %v5375
        %v5724 = vunpack.c.h.b16 %v5375
        %v5725 = vunpack.c.l.b16 %v5376
        %v5726 = vunpack.c.h.b16 %v5376
        %v5727 = vunpack.c.l.b16 %v5377
        %v5728 = vunpack.c.h.b16 %v5377
        %v5729 = vunpack.c.l.b16 %v5378
        %v5730 = vunpack.c.h.b16 %v5378
        %v5731 = vunpack.c.l.b16 %v5379
        %v5732 = vunpack.c.h.b16 %v5379
        %v5733 = vunpack.c.l.b16 %v5380
        %v5734 = vunpack.c.h.b16 %v5380
        %v5735 = vunpack.c.l.b16 %v5381
        %v5736 = vunpack.c.h.b16 %v5381
        %v5737 = vunpack.c.l.b16 %v5382
        %v5738 = vunpack.c.h.b16 %v5382
        %v5739 = vunpack.c.l.b16 %v5383
        %v5740 = vunpack.c.h.b16 %v5383
        %v5741 = vunpack.c.l.b16 %v5384
        %v5742 = vunpack.c.h.b16 %v5384
        %v5743 = vunpack.c.l.b16 %v5385
        %v5744 = vunpack.c.h.b16 %v5385
        %v5745 = vunpack.c.l.b16 %v5386
        %v5746 = vunpack.c.h.b16 %v5386
        %v5747 = vunpack.c.l.b16 %v5387
        %v5748 = vunpack.c.h.b16 %v5387
        %v5749 = vunpack.c.l.b16 %v5388
        %v5750 = vunpack.c.h.b16 %v5388
        %v5751 = vunpack.c.l.b16 %v5389
        %v5752 = vunpack.c.h.b16 %v5389
        %v5753 = vunpack.c.l.b16 %v5390
        %v5754 = vunpack.c.h.b16 %v5390
        %v5755 = vunpack.c.l.b16 %v5391
        %v5756 = vunpack.c.h.b16 %v5391
        %v5757 = vunpack.c.l.b16 %v5392
        %v5758 = vunpack.c.h.b16 %v5392
        %v5759 = vunpack.c.l.b16 %v5393
        %v5760 = vunpack.c.h.b16 %v5393
        %v5761 = vunpack.c.l.b16 %v5394
        %v5762 = vunpack.c.h.b16 %v5394
        %v5763 = vunpack.c.l.b16 %v5395
        %v5764 = vunpack.c.h.b16 %v5395
        %v5765 = vunpack.c.l.b16 %v5396
        %v5766 = vunpack.c.h.b16 %v5396
        %v5767 = vunpack.c.l.b16 %v5397
        %v5768 = vunpack.c.h.b16 %v5397
        %v5769 = vunpack.c.l.b16 %v5398
        %v5770 = vunpack.c.h.b16 %v5398
        %v5771 = vunpack.c.l.b16 %v5399
        %v5772 = vunpack.c.h.b16 %v5399
        %v5773 = vunpack.c.l.b16 %v5400
        %v5774 = vunpack.c.h.b16 %v5400
        %v5775 = vunpack.c.l.b16 %v5401
        %v5776 = vunpack.c.h.b16 %v5401
        %v5777 = vunpack.c.l.b16 %v5402
        %v5778 = vunpack.c.h.b16 %v5402
        %v5779 = vunpack.c.l.b16 %v5403
        %v5780 = vunpack.c.h.b16 %v5403
        %v5781 = vunpack.c.l.b16 %v5404
        %v5782 = vunpack.c.h.b16 %v5404
        %v5783 = vunpack.c.l.b16 %v5405
        %v5784 = vunpack.c.h.b16 %v5405
        %v5785 = vunpack.c.l.b16 %v5406
        %v5786 = vunpack.c.h.b16 %v5406
        %v5787 = vunpack.c.l.b16 %v5407
        %v5788 = vunpack.c.h.b16 %v5407
        %v5789 = vunpack.c.l.b16 %v5408
        %v5790 = vunpack.c.h.b16 %v5408
        %v5791 = vunpack.c.l.b16 %v5409
        %v5792 = vunpack.c.h.b16 %v5409
        %v5793 = vunpack.c.l.b16 %v5410
        %v5794 = vunpack.c.h.b16 %v5410
        %v5795 = vunpack.c.l.b16 %v5411
        %v5796 = vunpack.c.h.b16 %v5411
        %v5797 = vunpack.c.l.b16 %v5412
        %v5798 = vunpack.c.h.b16 %v5412
        %v5799 = vpack.c.b16 %v5551, %v5543
        %v5800 = vpack.c.b16 %v5552, %v5544
        %v5801 = vpack.c.b16 %v5553, %v5545
        %v5802 = vpack.c.b16 %v5554, %v5546
        %v5803 = vpack.c.b16 %v5555, %v5547
        %v5804 = vpack.c.b16 %v5556, %v5548
        %v5805 = vpack.c.b16 %v5557, %v5549
        %v5806 = vpack.c.b16 %v5558, %v5550
        %v5807 = vpack.c.b16 %v5567, %v5559
        %v5808 = vpack.c.b16 %v5568, %v5560
        %v5809 = vpack.c.b16 %v5569, %v5561
        %v5810 = vpack.c.b16 %v5570, %v5562
        %v5811 = vpack.c.b16 %v5571, %v5563
        %v5812 = vpack.c.b16 %v5572, %v5564
        %v5813 = vpack.c.b16 %v5573, %v5565
        %v5814 = vpack.c.b16 %v5574, %v5566
        %v5815 = vpack.c.b16 %v5583, %v5575
        %v5816 = vpack.c.b16 %v5584, %v5576
        %v5817 = vpack.c.b16 %v5585, %v5577
        %v5818 = vpack.c.b16 %v5586, %v5578
        %v5819 = vpack.c.b16 %v5587, %v5579
        %v5820 = vpack.c.b16 %v5588, %v5580
        %v5821 = vpack.c.b16 %v5589, %v5581
        %v5822 = vpack.c.b16 %v5590, %v5582
        %v5823 = vpack.c.b16 %v5599, %v5591
        %v5824 = vpack.c.b16 %v5600, %v5592
        %v5825 = vpack.c.b16 %v5601, %v5593
        %v5826 = vpack.c.b16 %v5602, %v5594
        %v5827 = vpack.c.b16 %v5603, %v5595
        %v5828 = vpack.c.b16 %v5604, %v5596
        %v5829 = vpack.c.b16 %v5605, %v5597
        %v5830 = vpack.c.b16 %v5606, %v5598
        %v5831 = vpack.c.b16 %v5615, %v5607
        %v5832 = vpack.c.b16 %v5616, %v5608
        %v5833 = vpack.c.b16 %v5617, %v5609
        %v5834 = vpack.c.b16 %v5618, %v5610
        %v5835 = vpack.c.b16 %v5619, %v5611
        %v5836 = vpack.c.b16 %v5620, %v5612
        %v5837 = vpack.c.b16 %v5621, %v5613
        %v5838 = vpack.c.b16 %v5622, %v5614
        %v5839 = vpack.c.b16 %v5631, %v5623
        %v5840 = vpack.c.b16 %v5632, %v5624
        %v5841 = vpack.c.b16 %v5633, %v5625
        %v5842 = vpack.c.b16 %v5634, %v5626
        %v5843 = vpack.c.b16 %v5635, %v5627
        %v5844 = vpack.c.b16 %v5636, %v5628
        %v5845 = vpack.c.b16 %v5637, %v5629
        %v5846 = vpack.c.b16 %v5638, %v5630
        %v5847 = vpack.c.b16 %v5647, %v5639
        %v5848 = vpack.c.b16 %v5648, %v5640
        %v5849 = vpack.c.b16 %v5649, %v5641
        %v5850 = vpack.c.b16 %v5650, %v5642
        %v5851 = vpack.c.b16 %v5651, %v5643
        %v5852 = vpack.c.b16 %v5652, %v5644
        %v5853 = vpack.c.b16 %v5653, %v5645
        %v5854 = vpack.c.b16 %v5654, %v5646
        %v5855 = vpack.c.b16 %v5663, %v5655
        %v5856 = vpack.c.b16 %v5664, %v5656
        %v5857 = vpack.c.b16 %v5665, %v5657
        %v5858 = vpack.c.b16 %v5666, %v5658
        %v5859 = vpack.c.b16 %v5667, %v5659
        %v5860 = vpack.c.b16 %v5668, %v5660
        %v5861 = vpack.c.b16 %v5669, %v5661
        %v5862 = vpack.c.b16 %v5670, %v5662
        %v5863 = vpack.c.b16 %v5679, %v5671
        %v5864 = vpack.c.b16 %v5680, %v5672
        %v5865 = vpack.c.b16 %v5681, %v5673
        %v5866 = vpack.c.b16 %v5682, %v5674
        %v5867 = vpack.c.b16 %v5683, %v5675
        %v5868 = vpack.c.b16 %v5684, %v5676
        %v5869 = vpack.c.b16 %v5685, %v5677
        %v5870 = vpack.c.b16 %v5686, %v5678
        %v5871 = vpack.c.b16 %v5695, %v5687
        %v5872 = vpack.c.b16 %v5696, %v5688
        %v5873 = vpack.c.b16 %v5697, %v5689
        %v5874 = vpack.c.b16 %v5698, %v5690
        %v5875 = vpack.c.b16 %v5699, %v5691
        %v5876 = vpack.c.b16 %v5700, %v5692
        %v5877 = vpack.c.b16 %v5701, %v5693
        %v5878 = vpack.c.b16 %v5702, %v5694
        %v5879 = vpack.c.b16 %v5711, %v5703
        %v5880 = vpack.c.b16 %v5712, %v5704
        %v5881 = vpack.c.b16 %v5713, %v5705
        %v5882 = vpack.c.b16 %v5714, %v5706
        %v5883 = vpack.c.b16 %v5715, %v5707
        %v5884 = vpack.c.b16 %v5716, %v5708
        %v5885 = vpack.c.b16 %v5717, %v5709
        %v5886 = vpack.c.b16 %v5718, %v5710
        %v5887 = vpack.c.b16 %v5727, %v5719
        %v5888 = vpack.c.b16 %v5728, %v5720
        %v5889 = vpack.c.b16 %v5729, %v5721
        %v5890 = vpack.c.b16 %v5730, %v5722
        %v5891 = vpack.c.b16 %v5731, %v5723
        %v5892 = vpack.c.b16 %v5732, %v5724
        %v5893 = vpack.c.b16 %v5733, %v5725
        %v5894 = vpack.c.b16 %v5734, %v5726
        %v5895 = vpack.c.b16 %v5743, %v5735
        %v5896 = vpack.c.b16 %v5744, %v5736
        %v5897 = vpack.c.b16 %v5745, %v5737
        %v5898 = vpack.c.b16 %v5746, %v5738
        %v5899 = vpack.c.b16 %v5747, %v5739
        %v5900 = vpack.c.b16 %v5748, %v5740
        %v5901 = vpack.c.b16 %v5749, %v5741
        %v5902 = vpack.c.b16 %v5750, %v5742
        %v5903 = vpack.c.b16 %v5759, %v5751
        %v5904 = vpack.c.b16 %v5760, %v5752
        %v5905 = vpack.c.b16 %v5761, %v5753
        %v5906 = vpack.c.b16 %v5762, %v5754
        %v5907 = vpack.c.b16 %v5763, %v5755
        %v5908 = vpack.c.b16 %v5764, %v5756
        %v5909 = vpack.c.b16 %v5765, %v5757
        %v5910 = vpack.c.b16 %v5766, %v5758
        %v5911 = vpack.c.b16 %v5775, %v5767
        %v5912 = vpack.c.b16 %v5776, %v5768
        %v5913 = vpack.c.b16 %v5777, %v5769
        %v5914 = vpack.c.b16 %v5778, %v5770
        %v5915 = vpack.c.b16 %v5779, %v5771
        %v5916 = vpack.c.b16 %v5780, %v5772
        %v5917 = vpack.c.b16 %v5781, %v5773
        %v5918 = vpack.c.b16 %v5782, %v5774
        %v5919 = vpack.c.b16 %v5791, %v5783
        %v5920 = vpack.c.b16 %v5792, %v5784
        %v5921 = vpack.c.b16 %v5793, %v5785
        %v5922 = vpack.c.b16 %v5794, %v5786
        %v5923 = vpack.c.b16 %v5795, %v5787
        %v5924 = vpack.c.b16 %v5796, %v5788
        %v5925 = vpack.c.b16 %v5797, %v5789
        %v5926 = vpack.c.b16 %v5798, %v5790
        %6055 = vmatprep.subr.bf16.mxu0 %v5856
        %6056 = vmatpush1.bf16.msra.mxu0 %v5855
        %6057 = vmatprep.subr.bf16.mxu0 %v5848
        %6058 = vmatpush1.bf16.msra.mxu0 %v5847
        %6059 = vmatprep.subr.bf16.mxu0 %v5840
        %6060 = vmatpush1.bf16.msra.mxu0 %v5839
        %6061 = vmatprep.subr.bf16.mxu0 %v5832
        %6062 = vmatpush1.bf16.msra.mxu0 %v5831
        %6063 = vmatprep.subr.bf16.mxu0 %v5824
        %6064 = vmatpush1.bf16.msra.mxu0 %v5823
        %6065 = vmatprep.subr.bf16.mxu0 %v5816
        %6066 = vmatpush1.bf16.msra.mxu0 %v5815
        %6067 = vmatprep.subr.bf16.mxu0 %v5808
        %6068 = vmatpush1.bf16.msra.mxu0 %v5807
        %6069 = vmatprep.subr.bf16.mxu0 %v5800
        %6070 = vmatpush1.bf16.msra.mxu0 %v5799
        %6071 = vmatprep.subr.bf16.mxu0 %v5920
        %6072 = vmatpush2.bf16.msra.mxu0 %v5919
        %6073 = vmatprep.subr.bf16.mxu0 %v5912
        %6074 = vmatpush2.bf16.msra.mxu0 %v5911
        %6075 = vmatprep.subr.bf16.mxu0 %v5904
        %6076 = vmatpush2.bf16.msra.mxu0 %v5903
        %6077 = vmatprep.subr.bf16.mxu0 %v5896
        %6078 = vmatpush2.bf16.msra.mxu0 %v5895
        %6079 = vmatprep.subr.bf16.mxu0 %v5888
        %6080 = vmatpush2.bf16.msra.mxu0 %v5887
        %6081 = vmatprep.subr.bf16.mxu0 %v5880
        %6082 = vmatpush2.bf16.msra.mxu0 %v5879
        %6083 = vmatprep.subr.bf16.mxu0 %v5872
        %6084 = vmatpush2.bf16.msra.mxu0 %v5871
        %6085 = vmatprep.subr.bf16.mxu0 %v5864
        %6086 = vmatpush2.bf16.msra.mxu0 %v5863
        %6087 = vmatprep.mubr.bf16.mxu0 %v5414
        %6088 = vmatmul.mubr.bf16.gmra.mxu0 %v5413
        %v6089 = vpop.f32.mrf.mxu0
        %v6090 = vadd.f32 0.0, %v6089
        %v6091 = vpop.f32.mrf.mxu0
        %v6092 = vadd.f32 0.0, %v6091
        %v6093 = vpop.f32.mrf.mxu0
        %v6094 = vadd.f32 0.0, %v6093
        %v6095 = vpop.f32.mrf.mxu0
        %v6096 = vadd.f32 0.0, %v6095
        %6097 = vdwg.mxu0
        %6098 = vmatprep.subr.bf16.mxu0 %v5858
        %6099 = vmatpush1.bf16.msra.mxu0 %v5857
        %6100 = vmatprep.subr.bf16.mxu0 %v5850
        %6101 = vmatpush1.bf16.msra.mxu0 %v5849
        %6102 = vmatprep.subr.bf16.mxu0 %v5842
        %6103 = vmatpush1.bf16.msra.mxu0 %v5841
        %6104 = vmatprep.subr.bf16.mxu0 %v5834
        %6105 = vmatpush1.bf16.msra.mxu0 %v5833
        %6106 = vmatprep.subr.bf16.mxu0 %v5826
        %6107 = vmatpush1.bf16.msra.mxu0 %v5825
        %6108 = vmatprep.subr.bf16.mxu0 %v5818
        %6109 = vmatpush1.bf16.msra.mxu0 %v5817
        %6110 = vmatprep.subr.bf16.mxu0 %v5810
        %6111 = vmatpush1.bf16.msra.mxu0 %v5809
        %6112 = vmatprep.subr.bf16.mxu0 %v5802
        %6113 = vmatpush1.bf16.msra.mxu0 %v5801
        %6114 = vmatprep.subr.bf16.mxu0 %v5922
        %6115 = vmatpush2.bf16.msra.mxu0 %v5921
        %6116 = vmatprep.subr.bf16.mxu0 %v5914
        %6117 = vmatpush2.bf16.msra.mxu0 %v5913
        %6118 = vmatprep.subr.bf16.mxu0 %v5906
        %6119 = vmatpush2.bf16.msra.mxu0 %v5905
        %6120 = vmatprep.subr.bf16.mxu0 %v5898
        %6121 = vmatpush2.bf16.msra.mxu0 %v5897
        %6122 = vmatprep.subr.bf16.mxu0 %v5890
        %6123 = vmatpush2.bf16.msra.mxu0 %v5889
        %6124 = vmatprep.subr.bf16.mxu0 %v5882
        %6125 = vmatpush2.bf16.msra.mxu0 %v5881
        %6126 = vmatprep.subr.bf16.mxu0 %v5874
        %6127 = vmatpush2.bf16.msra.mxu0 %v5873
        %6128 = vmatprep.subr.bf16.mxu0 %v5866
        %6129 = vmatpush2.bf16.msra.mxu0 %v5865
        %6130 = vmatprep.mubr.bf16.mxu0 %v5414
        %6131 = vmatmul.mubr.bf16.gmra.mxu0 %v5413
        %v6132 = vpop.f32.mrf.mxu0
        %v6133 = vadd.f32 0.0, %v6132
        %v6134 = vpop.f32.mrf.mxu0
        %v6135 = vadd.f32 0.0, %v6134
        %v6136 = vpop.f32.mrf.mxu0
        %v6137 = vadd.f32 0.0, %v6136
        %v6138 = vpop.f32.mrf.mxu0
        %v6139 = vadd.f32 0.0, %v6138
        %6140 = vdwg.mxu0
        %6141 = vmatprep.subr.bf16.mxu0 %v5860
        %6142 = vmatpush1.bf16.msra.mxu0 %v5859
        %6143 = vmatprep.subr.bf16.mxu0 %v5852
        %6144 = vmatpush1.bf16.msra.mxu0 %v5851
        %6145 = vmatprep.subr.bf16.mxu0 %v5844
        %6146 = vmatpush1.bf16.msra.mxu0 %v5843
        %6147 = vmatprep.subr.bf16.mxu0 %v5836
        %6148 = vmatpush1.bf16.msra.mxu0 %v5835
        %6149 = vmatprep.subr.bf16.mxu0 %v5828
        %6150 = vmatpush1.bf16.msra.mxu0 %v5827
        %6151 = vmatprep.subr.bf16.mxu0 %v5820
        %6152 = vmatpush1.bf16.msra.mxu0 %v5819
        %6153 = vmatprep.subr.bf16.mxu0 %v5812
        %6154 = vmatpush1.bf16.msra.mxu0 %v5811
        %6155 = vmatprep.subr.bf16.mxu0 %v5804
        %6156 = vmatpush1.bf16.msra.mxu0 %v5803
        %6157 = vmatprep.subr.bf16.mxu0 %v5924
        %6158 = vmatpush2.bf16.msra.mxu0 %v5923
        %6159 = vmatprep.subr.bf16.mxu0 %v5916
        %6160 = vmatpush2.bf16.msra.mxu0 %v5915
        %6161 = vmatprep.subr.bf16.mxu0 %v5908
        %6162 = vmatpush2.bf16.msra.mxu0 %v5907
        %6163 = vmatprep.subr.bf16.mxu0 %v5900
        %6164 = vmatpush2.bf16.msra.mxu0 %v5899
        %6165 = vmatprep.subr.bf16.mxu0 %v5892
        %6166 = vmatpush2.bf16.msra.mxu0 %v5891
        %6167 = vmatprep.subr.bf16.mxu0 %v5884
        %6168 = vmatpush2.bf16.msra.mxu0 %v5883
        %6169 = vmatprep.subr.bf16.mxu0 %v5876
        %6170 = vmatpush2.bf16.msra.mxu0 %v5875
        %6171 = vmatprep.subr.bf16.mxu0 %v5868
        %6172 = vmatpush2.bf16.msra.mxu0 %v5867
        %6173 = vmatprep.mubr.bf16.mxu0 %v5414
        %6174 = vmatmul.mubr.bf16.gmra.mxu0 %v5413
        %v6175 = vpop.f32.mrf.mxu0
        %v6176 = vadd.f32 0.0, %v6175
        %v6177 = vpop.f32.mrf.mxu0
        %v6178 = vadd.f32 0.0, %v6177
        %v6179 = vpop.f32.mrf.mxu0
        %v6180 = vadd.f32 0.0, %v6179
        %v6181 = vpop.f32.mrf.mxu0
        %v6182 = vadd.f32 0.0, %v6181
        %6183 = vdwg.mxu0
        %6184 = vmatprep.subr.bf16.mxu0 %v5862
        %6185 = vmatpush1.bf16.msra.mxu0 %v5861
        %6186 = vmatprep.subr.bf16.mxu0 %v5854
        %6187 = vmatpush1.bf16.msra.mxu0 %v5853
        %6188 = vmatprep.subr.bf16.mxu0 %v5846
        %6189 = vmatpush1.bf16.msra.mxu0 %v5845
        %6190 = vmatprep.subr.bf16.mxu0 %v5838
        %6191 = vmatpush1.bf16.msra.mxu0 %v5837
        %6192 = vmatprep.subr.bf16.mxu0 %v5830
        %6193 = vmatpush1.bf16.msra.mxu0 %v5829
        %6194 = vmatprep.subr.bf16.mxu0 %v5822
        %6195 = vmatpush1.bf16.msra.mxu0 %v5821
        %6196 = vmatprep.subr.bf16.mxu0 %v5814
        %6197 = vmatpush1.bf16.msra.mxu0 %v5813
        %6198 = vmatprep.subr.bf16.mxu0 %v5806
        %6199 = vmatpush1.bf16.msra.mxu0 %v5805
        %6200 = vmatprep.subr.bf16.mxu0 %v5926
        %6201 = vmatpush2.bf16.msra.mxu0 %v5925
        %6202 = vmatprep.subr.bf16.mxu0 %v5918
        %6203 = vmatpush2.bf16.msra.mxu0 %v5917
        %6204 = vmatprep.subr.bf16.mxu0 %v5910
        %6205 = vmatpush2.bf16.msra.mxu0 %v5909
        %6206 = vmatprep.subr.bf16.mxu0 %v5902
        %6207 = vmatpush2.bf16.msra.mxu0 %v5901
        %6208 = vmatprep.subr.bf16.mxu0 %v5894
        %6209 = vmatpush2.bf16.msra.mxu0 %v5893
        %6210 = vmatprep.subr.bf16.mxu0 %v5886
        %6211 = vmatpush2.bf16.msra.mxu0 %v5885
        %6212 = vmatprep.subr.bf16.mxu0 %v5878
        %6213 = vmatpush2.bf16.msra.mxu0 %v5877
        %6214 = vmatprep.subr.bf16.mxu0 %v5870
        %6215 = vmatpush2.bf16.msra.mxu0 %v5869
        %6216 = vmatprep.mubr.bf16.mxu0 %v5414
        %6217 = vmatmul.mubr.bf16.gmra.mxu0 %v5413
        %v6218 = vpop.f32.mrf.mxu0
        %v6219 = vadd.f32 0.0, %v6218
        %v6220 = vpop.f32.mrf.mxu0
        %v6221 = vadd.f32 0.0, %v6220
        %v6222 = vpop.f32.mrf.mxu0
        %v6223 = vadd.f32 0.0, %v6222
        %v6224 = vpop.f32.mrf.mxu0
        %v6225 = vadd.f32 0.0, %v6224
        %6226 = vdwg.mxu0
        %v6227 = vadd.s32 %v1059, 256
        %v6228 = vadd.s32 %v1059, 384
        %v6229 = vadd.s32 %v1059, 512
        %v6230 = vadd.s32 %v1059, 640
        %v6231 = vadd.s32 %v1059, 768
        %v6232 = vadd.s32 %v1059, 896
        %v6233 = vand.u32 %v1059, 31
        %v6234 = vand.u32 %v4384, 31
        %v6235 = vand.u32 %v6227, 31
        %v6236 = vand.u32 %v6228, 31
        %v6237 = vand.u32 %v6229, 31
        %v6238 = vand.u32 %v6230, 31
        %v6239 = vand.u32 %v6231, 31
        %v6240 = vand.u32 %v6232, 31
        %vm6241 = vcmp.ge.s32.totalorder %v6233, 1
        %vm6242 = vcmp.ge.s32.totalorder %v6234, 1
        %vm6243 = vcmp.ge.s32.totalorder %v6235, 1
        %vm6244 = vcmp.ge.s32.totalorder %v6236, 1
        %vm6245 = vcmp.ge.s32.totalorder %v6237, 1
        %vm6246 = vcmp.ge.s32.totalorder %v6238, 1
        %vm6247 = vcmp.ge.s32.totalorder %v6239, 1
        %vm6248 = vcmp.ge.s32.totalorder %v6240, 1
        %v6249 = vsel %vm6241, 1, 0
        %v6250 = vsel %vm6242, 1, 0
        %v6251 = vsel %vm6243, 1, 0
        %v6252 = vsel %vm6244, 1, 0
        %v6253 = vsel %vm6245, 1, 0
        %v6254 = vsel %vm6246, 1, 0
        %v6255 = vsel %vm6247, 1, 0
        %v6256 = vsel %vm6248, 1, 0
        %v6257 = vcvt.s32.f32 %v6249
        %v6258 = vcvt.s32.f32 %v6250
        %v6259 = vcvt.s32.f32 %v6251
        %v6260 = vcvt.s32.f32 %v6252
        %v6261 = vcvt.s32.f32 %v6253
        %v6262 = vcvt.s32.f32 %v6254
        %v6263 = vcvt.s32.f32 %v6255
        %v6264 = vcvt.s32.f32 %v6256
        %vm6265 = vcmp.lt.s32.totalorder %v6233, 31
        %vm6266 = vcmp.lt.s32.totalorder %v6234, 31
        %vm6267 = vcmp.lt.s32.totalorder %v6235, 31
        %vm6268 = vcmp.lt.s32.totalorder %v6236, 31
        %vm6269 = vcmp.lt.s32.totalorder %v6237, 31
        %vm6270 = vcmp.lt.s32.totalorder %v6238, 31
        %vm6271 = vcmp.lt.s32.totalorder %v6239, 31
        %vm6272 = vcmp.lt.s32.totalorder %v6240, 31
        %v6273 = vsel %vm6265, 1, 0
        %v6274 = vsel %vm6266, 1, 0
        %v6275 = vsel %vm6267, 1, 0
        %v6276 = vsel %vm6268, 1, 0
        %v6277 = vsel %vm6269, 1, 0
        %v6278 = vsel %vm6270, 1, 0
        %v6279 = vsel %vm6271, 1, 0
        %v6280 = vsel %vm6272, 1, 0
        %v6281 = vcvt.s32.f32 %v6273
        %v6282 = vcvt.s32.f32 %v6274
        %v6283 = vcvt.s32.f32 %v6275
        %v6284 = vcvt.s32.f32 %v6276
        %v6285 = vcvt.s32.f32 %v6277
        %v6286 = vcvt.s32.f32 %v6278
        %v6287 = vcvt.s32.f32 %v6279
        %v6288 = vcvt.s32.f32 %v6280
        %v6289 = vld [vmem:[%s51] sm:$0xff]
        %v6290 = vld [vmem:[%s53] sm:$0xff]
        %v6291 = vld [vmem:[%s55] sm:$0xf]
        %v6292 = vld [vmem:[%s57] sm:$0xff]
        %6309 = vrot.lane.b32.xlu0 %v6090, 33
        %v6310 = vpop.permute.xlu0 %6309
        %6311 = vrot.lane.b32.xlu0 %v6092, 33
        %v6312 = vpop.permute.xlu0 %6311
        %6313 = vrot.lane.b32.xlu0 %v6133, 33
        %v6314 = vpop.permute.xlu0 %6313
        %6315 = vrot.lane.b32.xlu0 %v6135, 33
        %v6316 = vpop.permute.xlu0 %6315
        %6317 = vrot.lane.b32.xlu0 %v6176, 33
        %v6318 = vpop.permute.xlu0 %6317
        %6319 = vrot.lane.b32.xlu0 %v6178, 33
        %v6320 = vpop.permute.xlu0 %6319
        %6321 = vrot.lane.b32.xlu0 %v6219, 33
        %v6322 = vpop.permute.xlu0 %6321
        %6323 = vrot.lane.b32.xlu0 %v6221, 33
        %v6324 = vpop.permute.xlu0 %6323
        %6325 = vrot.lane.b32.xlu0 %v6094, 33
        %v6326 = vpop.permute.xlu0 %6325
        %6327 = vrot.lane.b32.xlu0 %v6096, 33
        %v6328 = vpop.permute.xlu0 %6327
        %6329 = vrot.lane.b32.xlu0 %v6137, 33
        %v6330 = vpop.permute.xlu0 %6329
        %6331 = vrot.lane.b32.xlu0 %v6139, 33
        %v6332 = vpop.permute.xlu0 %6331
        %6333 = vrot.lane.b32.xlu0 %v6180, 33
        %v6334 = vpop.permute.xlu0 %6333
        %6335 = vrot.lane.b32.xlu0 %v6182, 33
        %v6336 = vpop.permute.xlu0 %6335
        %6337 = vrot.lane.b32.xlu0 %v6223, 33
        %v6338 = vpop.permute.xlu0 %6337
        %6339 = vrot.lane.b32.xlu0 %v6225, 33
        %v6340 = vpop.permute.xlu0 %6339
        %vm6341 = vcmask 269312
        %v6342 = vsel %vm6341, %v6310, %v6312
        %v6343 = vsel %vm6341, %v6312, %v6314
        %v6344 = vsel %vm6341, %v6314, %v6316
        %v6345 = vsel %vm6341, %v6316, %v6318
        %v6346 = vsel %vm6341, %v6318, %v6320
        %v6347 = vsel %vm6341, %v6320, %v6322
        %v6348 = vsel %vm6341, %v6322, %v6324
        %v6349 = vsel %vm6341, %v6326, %v6328
        %v6350 = vsel %vm6341, %v6328, %v6330
        %v6351 = vsel %vm6341, %v6330, %v6332
        %v6352 = vsel %vm6341, %v6332, %v6334
        %v6353 = vsel %vm6341, %v6334, %v6336
        %v6354 = vsel %vm6341, %v6336, %v6338
        %v6355 = vsel %vm6341, %v6338, %v6340
        %v6374 = vsel %vm6341, 0.0, %v6310
        %v6375 = vsel %vm6341, 0.0, %v6326
        %v6376 = vsel %vm6341, %v6324, 0.0
        %v6377 = vsel %vm6341, %v6340, 0.0
        %v6378 = vmul.f32 %v6374, %v6257
        %v6379 = vmul.f32 %v6342, %v6258
        %v6380 = vmul.f32 %v6343, %v6259
        %v6381 = vmul.f32 %v6344, %v6260
        %v6382 = vmul.f32 %v6345, %v6261
        %v6383 = vmul.f32 %v6346, %v6262
        %v6384 = vmul.f32 %v6347, %v6263
        %v6385 = vmul.f32 %v6348, %v6264
        %v6386 = vmul.f32 %v6375, %v6257
        %v6387 = vmul.f32 %v6349, %v6258
        %v6388 = vmul.f32 %v6350, %v6259
        %v6389 = vmul.f32 %v6351, %v6260
        %v6390 = vmul.f32 %v6352, %v6261
        %v6391 = vmul.f32 %v6353, %v6262
        %v6392 = vmul.f32 %v6354, %v6263
        %v6393 = vmul.f32 %v6355, %v6264
        %6402 = vrot.lane.b32.xlu0 %v6281, 2
        %v6403 = vpop.permute.xlu0 %6402
        %6404 = vrot.lane.b32.xlu0 %v6282, 2
        %v6405 = vpop.permute.xlu0 %6404
        %6406 = vrot.lane.b32.xlu0 %v6283, 2
        %v6407 = vpop.permute.xlu0 %6406
        %6408 = vrot.lane.b32.xlu0 %v6284, 2
        %v6409 = vpop.permute.xlu0 %6408
        %6410 = vrot.lane.b32.xlu0 %v6285, 2
        %v6411 = vpop.permute.xlu0 %6410
        %6412 = vrot.lane.b32.xlu0 %v6286, 2
        %v6413 = vpop.permute.xlu0 %6412
        %6414 = vrot.lane.b32.xlu0 %v6287, 2
        %v6415 = vpop.permute.xlu0 %6414
        %6416 = vrot.lane.b32.xlu0 %v6288, 2
        %v6417 = vpop.permute.xlu0 %6416
        %v6418 = vsel %vm4456, %v6403, %v6405
        %v6419 = vsel %vm4456, %v6405, %v6407
        %v6420 = vsel %vm4456, %v6407, %v6409
        %v6421 = vsel %vm4456, %v6409, %v6411
        %v6422 = vsel %vm4456, %v6411, %v6413
        %v6423 = vsel %vm4456, %v6413, %v6415
        %v6424 = vsel %vm4456, %v6415, %v6417
        %v6434 = vmul.f32 %v6374, %v6403
        %v6435 = vmul.f32 %v6342, %v6418
        %v6436 = vmul.f32 %v6343, %v6419
        %v6437 = vmul.f32 %v6344, %v6420
        %v6438 = vmul.f32 %v6345, %v6421
        %v6439 = vmul.f32 %v6346, %v6422
        %v6440 = vmul.f32 %v6347, %v6423
        %v6441 = vmul.f32 %v6348, %v6424
        %v6442 = vmul.f32 %v6376, %v6417
        %v6443 = vmul.f32 %v6375, %v6403
        %v6444 = vmul.f32 %v6349, %v6418
        %v6445 = vmul.f32 %v6350, %v6419
        %v6446 = vmul.f32 %v6351, %v6420
        %v6447 = vmul.f32 %v6352, %v6421
        %v6448 = vmul.f32 %v6353, %v6422
        %v6449 = vmul.f32 %v6354, %v6423
        %v6450 = vmul.f32 %v6355, %v6424
        %v6451 = vmul.f32 %v6377, %v6417
        %6460 = vrot.lane.b32.xlu0 %v6257, 32
        %v6461 = vpop.permute.xlu0 %6460
        %6462 = vrot.lane.b32.xlu0 %v6258, 32
        %v6463 = vpop.permute.xlu0 %6462
        %6464 = vrot.lane.b32.xlu0 %v6259, 32
        %v6465 = vpop.permute.xlu0 %6464
        %6466 = vrot.lane.b32.xlu0 %v6260, 32
        %v6467 = vpop.permute.xlu0 %6466
        %6468 = vrot.lane.b32.xlu0 %v6261, 32
        %v6469 = vpop.permute.xlu0 %6468
        %6470 = vrot.lane.b32.xlu0 %v6262, 32
        %v6471 = vpop.permute.xlu0 %6470
        %6472 = vrot.lane.b32.xlu0 %v6263, 32
        %v6473 = vpop.permute.xlu0 %6472
        %6474 = vrot.lane.b32.xlu0 %v6264, 32
        %v6475 = vpop.permute.xlu0 %6474
        %v6476 = vsel %vm2455, %v6461, %v6463
        %v6477 = vsel %vm2455, %v6463, %v6465
        %v6478 = vsel %vm2455, %v6465, %v6467
        %v6479 = vsel %vm2455, %v6467, %v6469
        %v6480 = vsel %vm2455, %v6469, %v6471
        %v6481 = vsel %vm2455, %v6471, %v6473
        %v6482 = vsel %vm2455, %v6473, %v6475
        %v6492 = vmul.f32 %v6374, %v6461
        %v6493 = vmul.f32 %v6342, %v6476
        %v6494 = vmul.f32 %v6343, %v6477
        %v6495 = vmul.f32 %v6344, %v6478
        %v6496 = vmul.f32 %v6345, %v6479
        %v6497 = vmul.f32 %v6346, %v6480
        %v6498 = vmul.f32 %v6347, %v6481
        %v6499 = vmul.f32 %v6348, %v6482
        %v6500 = vmul.f32 %v6376, %v6475
        %v6501 = vmul.f32 %v6375, %v6461
        %v6502 = vmul.f32 %v6349, %v6476
        %v6503 = vmul.f32 %v6350, %v6477
        %v6504 = vmul.f32 %v6351, %v6478
        %v6505 = vmul.f32 %v6352, %v6479
        %v6506 = vmul.f32 %v6353, %v6480
        %v6507 = vmul.f32 %v6354, %v6481
        %v6508 = vmul.f32 %v6355, %v6482
        %v6509 = vmul.f32 %v6377, %v6475
        %6510 = vrot.lane.b32.xlu0 %v6281, 34
        %v6511 = vpop.permute.xlu0 %6510
        %6512 = vrot.lane.b32.xlu0 %v6282, 34
        %v6513 = vpop.permute.xlu0 %6512
        %6514 = vrot.lane.b32.xlu0 %v6283, 34
        %v6515 = vpop.permute.xlu0 %6514
        %6516 = vrot.lane.b32.xlu0 %v6284, 34
        %v6517 = vpop.permute.xlu0 %6516
        %6518 = vrot.lane.b32.xlu0 %v6285, 34
        %v6519 = vpop.permute.xlu0 %6518
        %6520 = vrot.lane.b32.xlu0 %v6286, 34
        %v6521 = vpop.permute.xlu0 %6520
        %6522 = vrot.lane.b32.xlu0 %v6287, 34
        %v6523 = vpop.permute.xlu0 %6522
        %6524 = vrot.lane.b32.xlu0 %v6288, 34
        %v6525 = vpop.permute.xlu0 %6524
        %v6526 = vsel %vm4528, %v6511, %v6513
        %v6527 = vsel %vm4528, %v6513, %v6515
        %v6528 = vsel %vm4528, %v6515, %v6517
        %v6529 = vsel %vm4528, %v6517, %v6519
        %v6530 = vsel %vm4528, %v6519, %v6521
        %v6531 = vsel %vm4528, %v6521, %v6523
        %v6532 = vsel %vm4528, %v6523, %v6525
        %v6542 = vmul.f32 %v6374, %v6511
        %v6543 = vmul.f32 %v6342, %v6526
        %v6544 = vmul.f32 %v6343, %v6527
        %v6545 = vmul.f32 %v6344, %v6528
        %v6546 = vmul.f32 %v6345, %v6529
        %v6547 = vmul.f32 %v6346, %v6530
        %v6548 = vmul.f32 %v6347, %v6531
        %v6549 = vmul.f32 %v6348, %v6532
        %v6550 = vmul.f32 %v6376, %v6525
        %v6551 = vmul.f32 %v6375, %v6511
        %v6552 = vmul.f32 %v6349, %v6526
        %v6553 = vmul.f32 %v6350, %v6527
        %v6554 = vmul.f32 %v6351, %v6528
        %v6555 = vmul.f32 %v6352, %v6529
        %v6556 = vmul.f32 %v6353, %v6530
        %v6557 = vmul.f32 %v6354, %v6531
        %v6558 = vmul.f32 %v6355, %v6532
        %v6559 = vmul.f32 %v6377, %v6525
        %6560 = vrot.lane.b32.xlu0 %v6257, 64
        %v6561 = vpop.permute.xlu0 %6560
        %6562 = vrot.lane.b32.xlu0 %v6258, 64
        %v6563 = vpop.permute.xlu0 %6562
        %6564 = vrot.lane.b32.xlu0 %v6259, 64
        %v6565 = vpop.permute.xlu0 %6564
        %6566 = vrot.lane.b32.xlu0 %v6260, 64
        %v6567 = vpop.permute.xlu0 %6566
        %6568 = vrot.lane.b32.xlu0 %v6261, 64
        %v6569 = vpop.permute.xlu0 %6568
        %6570 = vrot.lane.b32.xlu0 %v6262, 64
        %v6571 = vpop.permute.xlu0 %6570
        %6572 = vrot.lane.b32.xlu0 %v6263, 64
        %v6573 = vpop.permute.xlu0 %6572
        %6574 = vrot.lane.b32.xlu0 %v6264, 64
        %v6575 = vpop.permute.xlu0 %6574
        %v6576 = vsel %vm3127, %v6561, %v6563
        %v6577 = vsel %vm3127, %v6563, %v6565
        %v6578 = vsel %vm3127, %v6565, %v6567
        %v6579 = vsel %vm3127, %v6567, %v6569
        %v6580 = vsel %vm3127, %v6569, %v6571
        %v6581 = vsel %vm3127, %v6571, %v6573
        %v6582 = vsel %vm3127, %v6573, %v6575
        %v6592 = vmul.f32 %v6374, %v6561
        %v6593 = vmul.f32 %v6342, %v6576
        %v6594 = vmul.f32 %v6343, %v6577
        %v6595 = vmul.f32 %v6344, %v6578
        %v6596 = vmul.f32 %v6345, %v6579
        %v6597 = vmul.f32 %v6346, %v6580
        %v6598 = vmul.f32 %v6347, %v6581
        %v6599 = vmul.f32 %v6348, %v6582
        %v6600 = vmul.f32 %v6376, %v6575
        %v6601 = vmul.f32 %v6375, %v6561
        %v6602 = vmul.f32 %v6349, %v6576
        %v6603 = vmul.f32 %v6350, %v6577
        %v6604 = vmul.f32 %v6351, %v6578
        %v6605 = vmul.f32 %v6352, %v6579
        %v6606 = vmul.f32 %v6353, %v6580
        %v6607 = vmul.f32 %v6354, %v6581
        %v6608 = vmul.f32 %v6355, %v6582
        %v6609 = vmul.f32 %v6377, %v6575
        %6610 = vrot.lane.b32.xlu0 %v6281, 66
        %v6611 = vpop.permute.xlu0 %6610
        %6612 = vrot.lane.b32.xlu0 %v6282, 66
        %v6613 = vpop.permute.xlu0 %6612
        %6614 = vrot.lane.b32.xlu0 %v6283, 66
        %v6615 = vpop.permute.xlu0 %6614
        %6616 = vrot.lane.b32.xlu0 %v6284, 66
        %v6617 = vpop.permute.xlu0 %6616
        %6618 = vrot.lane.b32.xlu0 %v6285, 66
        %v6619 = vpop.permute.xlu0 %6618
        %6620 = vrot.lane.b32.xlu0 %v6286, 66
        %v6621 = vpop.permute.xlu0 %6620
        %6622 = vrot.lane.b32.xlu0 %v6287, 66
        %v6623 = vpop.permute.xlu0 %6622
        %6624 = vrot.lane.b32.xlu0 %v6288, 66
        %v6625 = vpop.permute.xlu0 %6624
        %vm6626 = vcmask 539648
        %v6627 = vsel %vm6626, %v6611, %v6613
        %v6628 = vsel %vm6626, %v6613, %v6615
        %v6629 = vsel %vm6626, %v6615, %v6617
        %v6630 = vsel %vm6626, %v6617, %v6619
        %v6631 = vsel %vm6626, %v6619, %v6621
        %v6632 = vsel %vm6626, %v6621, %v6623
        %v6633 = vsel %vm6626, %v6623, %v6625
        %v6643 = vmul.f32 %v6374, %v6611
        %v6644 = vmul.f32 %v6342, %v6627
        %v6645 = vmul.f32 %v6343, %v6628
        %v6646 = vmul.f32 %v6344, %v6629
        %v6647 = vmul.f32 %v6345, %v6630
        %v6648 = vmul.f32 %v6346, %v6631
        %v6649 = vmul.f32 %v6347, %v6632
        %v6650 = vmul.f32 %v6348, %v6633
        %v6651 = vmul.f32 %v6376, %v6625
        %v6652 = vmul.f32 %v6375, %v6611
        %v6653 = vmul.f32 %v6349, %v6627
        %v6654 = vmul.f32 %v6350, %v6628
        %v6655 = vmul.f32 %v6351, %v6629
        %v6656 = vmul.f32 %v6352, %v6630
        %v6657 = vmul.f32 %v6353, %v6631
        %v6658 = vmul.f32 %v6354, %v6632
        %v6659 = vmul.f32 %v6355, %v6633
        %v6660 = vmul.f32 %v6377, %v6625
        %6665 = vrot.lane.b32.xlu0 %v6374, 127
        %v6666 = vpop.permute.xlu0 %6665
        %6667 = vrot.lane.b32.xlu0 %v6342, 127
        %v6668 = vpop.permute.xlu0 %6667
        %6669 = vrot.lane.b32.xlu0 %v6343, 127
        %v6670 = vpop.permute.xlu0 %6669
        %6671 = vrot.lane.b32.xlu0 %v6344, 127
        %v6672 = vpop.permute.xlu0 %6671
        %6673 = vrot.lane.b32.xlu0 %v6345, 127
        %v6674 = vpop.permute.xlu0 %6673
        %6675 = vrot.lane.b32.xlu0 %v6346, 127
        %v6676 = vpop.permute.xlu0 %6675
        %6677 = vrot.lane.b32.xlu0 %v6347, 127
        %v6678 = vpop.permute.xlu0 %6677
        %6679 = vrot.lane.b32.xlu0 %v6348, 127
        %v6680 = vpop.permute.xlu0 %6679
        %6681 = vrot.lane.b32.xlu0 %v6376, 127
        %v6682 = vpop.permute.xlu0 %6681
        %6683 = vrot.lane.b32.xlu0 %v6375, 127
        %v6684 = vpop.permute.xlu0 %6683
        %6685 = vrot.lane.b32.xlu0 %v6349, 127
        %v6686 = vpop.permute.xlu0 %6685
        %6687 = vrot.lane.b32.xlu0 %v6350, 127
        %v6688 = vpop.permute.xlu0 %6687
        %6689 = vrot.lane.b32.xlu0 %v6351, 127
        %v6690 = vpop.permute.xlu0 %6689
        %6691 = vrot.lane.b32.xlu0 %v6352, 127
        %v6692 = vpop.permute.xlu0 %6691
        %6693 = vrot.lane.b32.xlu0 %v6353, 127
        %v6694 = vpop.permute.xlu0 %6693
        %6695 = vrot.lane.b32.xlu0 %v6354, 127
        %v6696 = vpop.permute.xlu0 %6695
        %6697 = vrot.lane.b32.xlu0 %v6355, 127
        %v6698 = vpop.permute.xlu0 %6697
        %6699 = vrot.lane.b32.xlu0 %v6377, 127
        %v6700 = vpop.permute.xlu0 %6699
        %v6701 = vsel %vm4566, %v6666, %v6668
        %v6702 = vsel %vm4566, %v6668, %v6670
        %v6703 = vsel %vm4566, %v6670, %v6672
        %v6704 = vsel %vm4566, %v6672, %v6674
        %v6705 = vsel %vm4566, %v6674, %v6676
        %v6706 = vsel %vm4566, %v6676, %v6678
        %v6707 = vsel %vm4566, %v6678, %v6680
        %v6708 = vsel %vm4566, %v6680, %v6682
        %v6709 = vsel %vm4566, %v6684, %v6686
        %v6710 = vsel %vm4566, %v6686, %v6688
        %v6711 = vsel %vm4566, %v6688, %v6690
        %v6712 = vsel %vm4566, %v6690, %v6692
        %v6713 = vsel %vm4566, %v6692, %v6694
        %v6714 = vsel %vm4566, %v6694, %v6696
        %v6715 = vsel %vm4566, %v6696, %v6698
        %v6716 = vsel %vm4566, %v6698, %v6700
        %6751 = vrot.lane.b32.xlu0 %v6434, 126
        %v6752 = vpop.permute.xlu0 %6751
        %6753 = vrot.lane.b32.xlu0 %v6435, 126
        %v6754 = vpop.permute.xlu0 %6753
        %6755 = vrot.lane.b32.xlu0 %v6436, 126
        %v6756 = vpop.permute.xlu0 %6755
        %6757 = vrot.lane.b32.xlu0 %v6437, 126
        %v6758 = vpop.permute.xlu0 %6757
        %6759 = vrot.lane.b32.xlu0 %v6438, 126
        %v6760 = vpop.permute.xlu0 %6759
        %6761 = vrot.lane.b32.xlu0 %v6439, 126
        %v6762 = vpop.permute.xlu0 %6761
        %6763 = vrot.lane.b32.xlu0 %v6440, 126
        %v6764 = vpop.permute.xlu0 %6763
        %6765 = vrot.lane.b32.xlu0 %v6441, 126
        %v6766 = vpop.permute.xlu0 %6765
        %6767 = vrot.lane.b32.xlu0 %v6442, 126
        %v6768 = vpop.permute.xlu0 %6767
        %6769 = vrot.lane.b32.xlu0 %v6443, 126
        %v6770 = vpop.permute.xlu0 %6769
        %6771 = vrot.lane.b32.xlu0 %v6444, 126
        %v6772 = vpop.permute.xlu0 %6771
        %6773 = vrot.lane.b32.xlu0 %v6445, 126
        %v6774 = vpop.permute.xlu0 %6773
        %6775 = vrot.lane.b32.xlu0 %v6446, 126
        %v6776 = vpop.permute.xlu0 %6775
        %6777 = vrot.lane.b32.xlu0 %v6447, 126
        %v6778 = vpop.permute.xlu0 %6777
        %6779 = vrot.lane.b32.xlu0 %v6448, 126
        %v6780 = vpop.permute.xlu0 %6779
        %6781 = vrot.lane.b32.xlu0 %v6449, 126
        %v6782 = vpop.permute.xlu0 %6781
        %6783 = vrot.lane.b32.xlu0 %v6450, 126
        %v6784 = vpop.permute.xlu0 %6783
        %6785 = vrot.lane.b32.xlu0 %v6451, 126
        %v6786 = vpop.permute.xlu0 %6785
        %v6787 = vsel %vm4606, %v6752, %v6754
        %v6788 = vsel %vm4606, %v6754, %v6756
        %v6789 = vsel %vm4606, %v6756, %v6758
        %v6790 = vsel %vm4606, %v6758, %v6760
        %v6791 = vsel %vm4606, %v6760, %v6762
        %v6792 = vsel %vm4606, %v6762, %v6764
        %v6793 = vsel %vm4606, %v6764, %v6766
        %v6794 = vsel %vm4606, %v6766, %v6768
        %v6795 = vsel %vm4606, %v6770, %v6772
        %v6796 = vsel %vm4606, %v6772, %v6774
        %v6797 = vsel %vm4606, %v6774, %v6776
        %v6798 = vsel %vm4606, %v6776, %v6778
        %v6799 = vsel %vm4606, %v6778, %v6780
        %v6800 = vsel %vm4606, %v6780, %v6782
        %v6801 = vsel %vm4606, %v6782, %v6784
        %v6802 = vsel %vm4606, %v6784, %v6786
        %6837 = vrot.lane.b32.xlu0 %v6492, 96
        %v6838 = vpop.permute.xlu0 %6837
        %6839 = vrot.lane.b32.xlu0 %v6493, 96
        %v6840 = vpop.permute.xlu0 %6839
        %6841 = vrot.lane.b32.xlu0 %v6494, 96
        %v6842 = vpop.permute.xlu0 %6841
        %6843 = vrot.lane.b32.xlu0 %v6495, 96
        %v6844 = vpop.permute.xlu0 %6843
        %6845 = vrot.lane.b32.xlu0 %v6496, 96
        %v6846 = vpop.permute.xlu0 %6845
        %6847 = vrot.lane.b32.xlu0 %v6497, 96
        %v6848 = vpop.permute.xlu0 %6847
        %6849 = vrot.lane.b32.xlu0 %v6498, 96
        %v6850 = vpop.permute.xlu0 %6849
        %6851 = vrot.lane.b32.xlu0 %v6499, 96
        %v6852 = vpop.permute.xlu0 %6851
        %6853 = vrot.lane.b32.xlu0 %v6500, 96
        %v6854 = vpop.permute.xlu0 %6853
        %6855 = vrot.lane.b32.xlu0 %v6501, 96
        %v6856 = vpop.permute.xlu0 %6855
        %6857 = vrot.lane.b32.xlu0 %v6502, 96
        %v6858 = vpop.permute.xlu0 %6857
        %6859 = vrot.lane.b32.xlu0 %v6503, 96
        %v6860 = vpop.permute.xlu0 %6859
        %6861 = vrot.lane.b32.xlu0 %v6504, 96
        %v6862 = vpop.permute.xlu0 %6861
        %6863 = vrot.lane.b32.xlu0 %v6505, 96
        %v6864 = vpop.permute.xlu0 %6863
        %6865 = vrot.lane.b32.xlu0 %v6506, 96
        %v6866 = vpop.permute.xlu0 %6865
        %6867 = vrot.lane.b32.xlu0 %v6507, 96
        %v6868 = vpop.permute.xlu0 %6867
        %6869 = vrot.lane.b32.xlu0 %v6508, 96
        %v6870 = vpop.permute.xlu0 %6869
        %6871 = vrot.lane.b32.xlu0 %v6509, 96
        %v6872 = vpop.permute.xlu0 %6871
        %v6873 = vsel %vm4757, %v6838, %v6840
        %v6874 = vsel %vm4757, %v6840, %v6842
        %v6875 = vsel %vm4757, %v6842, %v6844
        %v6876 = vsel %vm4757, %v6844, %v6846
        %v6877 = vsel %vm4757, %v6846, %v6848
        %v6878 = vsel %vm4757, %v6848, %v6850
        %v6879 = vsel %vm4757, %v6850, %v6852
        %v6880 = vsel %vm4757, %v6852, %v6854
        %v6881 = vsel %vm4757, %v6856, %v6858
        %v6882 = vsel %vm4757, %v6858, %v6860
        %v6883 = vsel %vm4757, %v6860, %v6862
        %v6884 = vsel %vm4757, %v6862, %v6864
        %v6885 = vsel %vm4757, %v6864, %v6866
        %v6886 = vsel %vm4757, %v6866, %v6868
        %v6887 = vsel %vm4757, %v6868, %v6870
        %v6888 = vsel %vm4757, %v6870, %v6872
        %6905 = vrot.lane.b32.xlu0 %v6374, 95
        %v6906 = vpop.permute.xlu0 %6905
        %6907 = vrot.lane.b32.xlu0 %v6342, 95
        %v6908 = vpop.permute.xlu0 %6907
        %6909 = vrot.lane.b32.xlu0 %v6343, 95
        %v6910 = vpop.permute.xlu0 %6909
        %6911 = vrot.lane.b32.xlu0 %v6344, 95
        %v6912 = vpop.permute.xlu0 %6911
        %6913 = vrot.lane.b32.xlu0 %v6345, 95
        %v6914 = vpop.permute.xlu0 %6913
        %6915 = vrot.lane.b32.xlu0 %v6346, 95
        %v6916 = vpop.permute.xlu0 %6915
        %6917 = vrot.lane.b32.xlu0 %v6347, 95
        %v6918 = vpop.permute.xlu0 %6917
        %6919 = vrot.lane.b32.xlu0 %v6348, 95
        %v6920 = vpop.permute.xlu0 %6919
        %6921 = vrot.lane.b32.xlu0 %v6376, 95
        %v6922 = vpop.permute.xlu0 %6921
        %6923 = vrot.lane.b32.xlu0 %v6375, 95
        %v6924 = vpop.permute.xlu0 %6923
        %6925 = vrot.lane.b32.xlu0 %v6349, 95
        %v6926 = vpop.permute.xlu0 %6925
        %6927 = vrot.lane.b32.xlu0 %v6350, 95
        %v6928 = vpop.permute.xlu0 %6927
        %6929 = vrot.lane.b32.xlu0 %v6351, 95
        %v6930 = vpop.permute.xlu0 %6929
        %6931 = vrot.lane.b32.xlu0 %v6352, 95
        %v6932 = vpop.permute.xlu0 %6931
        %6933 = vrot.lane.b32.xlu0 %v6353, 95
        %v6934 = vpop.permute.xlu0 %6933
        %6935 = vrot.lane.b32.xlu0 %v6354, 95
        %v6936 = vpop.permute.xlu0 %6935
        %6937 = vrot.lane.b32.xlu0 %v6355, 95
        %v6938 = vpop.permute.xlu0 %6937
        %6939 = vrot.lane.b32.xlu0 %v6377, 95
        %v6940 = vpop.permute.xlu0 %6939
        %v6941 = vsel %vm4788, %v6906, %v6908
        %v6942 = vsel %vm4788, %v6908, %v6910
        %v6943 = vsel %vm4788, %v6910, %v6912
        %v6944 = vsel %vm4788, %v6912, %v6914
        %v6945 = vsel %vm4788, %v6914, %v6916
        %v6946 = vsel %vm4788, %v6916, %v6918
        %v6947 = vsel %vm4788, %v6918, %v6920
        %v6948 = vsel %vm4788, %v6920, %v6922
        %v6949 = vsel %vm4788, %v6924, %v6926
        %v6950 = vsel %vm4788, %v6926, %v6928
        %v6951 = vsel %vm4788, %v6928, %v6930
        %v6952 = vsel %vm4788, %v6930, %v6932
        %v6953 = vsel %vm4788, %v6932, %v6934
        %v6954 = vsel %vm4788, %v6934, %v6936
        %v6955 = vsel %vm4788, %v6936, %v6938
        %v6956 = vsel %vm4788, %v6938, %v6940
        %6991 = vrot.lane.b32.xlu0 %v6542, 94
        %v6992 = vpop.permute.xlu0 %6991
        %6993 = vrot.lane.b32.xlu0 %v6543, 94
        %v6994 = vpop.permute.xlu0 %6993
        %6995 = vrot.lane.b32.xlu0 %v6544, 94
        %v6996 = vpop.permute.xlu0 %6995
        %6997 = vrot.lane.b32.xlu0 %v6545, 94
        %v6998 = vpop.permute.xlu0 %6997
        %6999 = vrot.lane.b32.xlu0 %v6546, 94
        %v7000 = vpop.permute.xlu0 %6999
        %7001 = vrot.lane.b32.xlu0 %v6547, 94
        %v7002 = vpop.permute.xlu0 %7001
        %7003 = vrot.lane.b32.xlu0 %v6548, 94
        %v7004 = vpop.permute.xlu0 %7003
        %7005 = vrot.lane.b32.xlu0 %v6549, 94
        %v7006 = vpop.permute.xlu0 %7005
        %7007 = vrot.lane.b32.xlu0 %v6550, 94
        %v7008 = vpop.permute.xlu0 %7007
        %7009 = vrot.lane.b32.xlu0 %v6551, 94
        %v7010 = vpop.permute.xlu0 %7009
        %7011 = vrot.lane.b32.xlu0 %v6552, 94
        %v7012 = vpop.permute.xlu0 %7011
        %7013 = vrot.lane.b32.xlu0 %v6553, 94
        %v7014 = vpop.permute.xlu0 %7013
        %7015 = vrot.lane.b32.xlu0 %v6554, 94
        %v7016 = vpop.permute.xlu0 %7015
        %7017 = vrot.lane.b32.xlu0 %v6555, 94
        %v7018 = vpop.permute.xlu0 %7017
        %7019 = vrot.lane.b32.xlu0 %v6556, 94
        %v7020 = vpop.permute.xlu0 %7019
        %7021 = vrot.lane.b32.xlu0 %v6557, 94
        %v7022 = vpop.permute.xlu0 %7021
        %7023 = vrot.lane.b32.xlu0 %v6558, 94
        %v7024 = vpop.permute.xlu0 %7023
        %7025 = vrot.lane.b32.xlu0 %v6559, 94
        %v7026 = vpop.permute.xlu0 %7025
        %v7027 = vsel %vm4828, %v6992, %v6994
        %v7028 = vsel %vm4828, %v6994, %v6996
        %v7029 = vsel %vm4828, %v6996, %v6998
        %v7030 = vsel %vm4828, %v6998, %v7000
        %v7031 = vsel %vm4828, %v7000, %v7002
        %v7032 = vsel %vm4828, %v7002, %v7004
        %v7033 = vsel %vm4828, %v7004, %v7006
        %v7034 = vsel %vm4828, %v7006, %v7008
        %v7035 = vsel %vm4828, %v7010, %v7012
        %v7036 = vsel %vm4828, %v7012, %v7014
        %v7037 = vsel %vm4828, %v7014, %v7016
        %v7038 = vsel %vm4828, %v7016, %v7018
        %v7039 = vsel %vm4828, %v7018, %v7020
        %v7040 = vsel %vm4828, %v7020, %v7022
        %v7041 = vsel %vm4828, %v7022, %v7024
        %v7042 = vsel %vm4828, %v7024, %v7026
        %7077 = vrot.lane.b32.xlu0 %v6592, 64
        %v7078 = vpop.permute.xlu0 %7077
        %7079 = vrot.lane.b32.xlu0 %v6593, 64
        %v7080 = vpop.permute.xlu0 %7079
        %7081 = vrot.lane.b32.xlu0 %v6594, 64
        %v7082 = vpop.permute.xlu0 %7081
        %7083 = vrot.lane.b32.xlu0 %v6595, 64
        %v7084 = vpop.permute.xlu0 %7083
        %7085 = vrot.lane.b32.xlu0 %v6596, 64
        %v7086 = vpop.permute.xlu0 %7085
        %7087 = vrot.lane.b32.xlu0 %v6597, 64
        %v7088 = vpop.permute.xlu0 %7087
        %7089 = vrot.lane.b32.xlu0 %v6598, 64
        %v7090 = vpop.permute.xlu0 %7089
        %7091 = vrot.lane.b32.xlu0 %v6599, 64
        %v7092 = vpop.permute.xlu0 %7091
        %7093 = vrot.lane.b32.xlu0 %v6600, 64
        %v7094 = vpop.permute.xlu0 %7093
        %7095 = vrot.lane.b32.xlu0 %v6601, 64
        %v7096 = vpop.permute.xlu0 %7095
        %7097 = vrot.lane.b32.xlu0 %v6602, 64
        %v7098 = vpop.permute.xlu0 %7097
        %7099 = vrot.lane.b32.xlu0 %v6603, 64
        %v7100 = vpop.permute.xlu0 %7099
        %7101 = vrot.lane.b32.xlu0 %v6604, 64
        %v7102 = vpop.permute.xlu0 %7101
        %7103 = vrot.lane.b32.xlu0 %v6605, 64
        %v7104 = vpop.permute.xlu0 %7103
        %7105 = vrot.lane.b32.xlu0 %v6606, 64
        %v7106 = vpop.permute.xlu0 %7105
        %7107 = vrot.lane.b32.xlu0 %v6607, 64
        %v7108 = vpop.permute.xlu0 %7107
        %7109 = vrot.lane.b32.xlu0 %v6608, 64
        %v7110 = vpop.permute.xlu0 %7109
        %7111 = vrot.lane.b32.xlu0 %v6609, 64
        %v7112 = vpop.permute.xlu0 %7111
        %v7113 = vsel %vm3127, %v7078, %v7080
        %v7114 = vsel %vm3127, %v7080, %v7082
        %v7115 = vsel %vm3127, %v7082, %v7084
        %v7116 = vsel %vm3127, %v7084, %v7086
        %v7117 = vsel %vm3127, %v7086, %v7088
        %v7118 = vsel %vm3127, %v7088, %v7090
        %v7119 = vsel %vm3127, %v7090, %v7092
        %v7120 = vsel %vm3127, %v7092, %v7094
        %v7121 = vsel %vm3127, %v7096, %v7098
        %v7122 = vsel %vm3127, %v7098, %v7100
        %v7123 = vsel %vm3127, %v7100, %v7102
        %v7124 = vsel %vm3127, %v7102, %v7104
        %v7125 = vsel %vm3127, %v7104, %v7106
        %v7126 = vsel %vm3127, %v7106, %v7108
        %v7127 = vsel %vm3127, %v7108, %v7110
        %v7128 = vsel %vm3127, %v7110, %v7112
        %7145 = vrot.lane.b32.xlu0 %v6374, 63
        %v7146 = vpop.permute.xlu0 %7145
        %7147 = vrot.lane.b32.xlu0 %v6342, 63
        %v7148 = vpop.permute.xlu0 %7147
        %7149 = vrot.lane.b32.xlu0 %v6343, 63
        %v7150 = vpop.permute.xlu0 %7149
        %7151 = vrot.lane.b32.xlu0 %v6344, 63
        %v7152 = vpop.permute.xlu0 %7151
        %7153 = vrot.lane.b32.xlu0 %v6345, 63
        %v7154 = vpop.permute.xlu0 %7153
        %7155 = vrot.lane.b32.xlu0 %v6346, 63
        %v7156 = vpop.permute.xlu0 %7155
        %7157 = vrot.lane.b32.xlu0 %v6347, 63
        %v7158 = vpop.permute.xlu0 %7157
        %7159 = vrot.lane.b32.xlu0 %v6348, 63
        %v7160 = vpop.permute.xlu0 %7159
        %7161 = vrot.lane.b32.xlu0 %v6376, 63
        %v7162 = vpop.permute.xlu0 %7161
        %7163 = vrot.lane.b32.xlu0 %v6375, 63
        %v7164 = vpop.permute.xlu0 %7163
        %7165 = vrot.lane.b32.xlu0 %v6349, 63
        %v7166 = vpop.permute.xlu0 %7165
        %7167 = vrot.lane.b32.xlu0 %v6350, 63
        %v7168 = vpop.permute.xlu0 %7167
        %7169 = vrot.lane.b32.xlu0 %v6351, 63
        %v7170 = vpop.permute.xlu0 %7169
        %7171 = vrot.lane.b32.xlu0 %v6352, 63
        %v7172 = vpop.permute.xlu0 %7171
        %7173 = vrot.lane.b32.xlu0 %v6353, 63
        %v7174 = vpop.permute.xlu0 %7173
        %7175 = vrot.lane.b32.xlu0 %v6354, 63
        %v7176 = vpop.permute.xlu0 %7175
        %7177 = vrot.lane.b32.xlu0 %v6355, 63
        %v7178 = vpop.permute.xlu0 %7177
        %7179 = vrot.lane.b32.xlu0 %v6377, 63
        %v7180 = vpop.permute.xlu0 %7179
        %vm7181 = vcmask 515072
        %v7182 = vsel %vm7181, %v7146, %v7148
        %v7183 = vsel %vm7181, %v7148, %v7150
        %v7184 = vsel %vm7181, %v7150, %v7152
        %v7185 = vsel %vm7181, %v7152, %v7154
        %v7186 = vsel %vm7181, %v7154, %v7156
        %v7187 = vsel %vm7181, %v7156, %v7158
        %v7188 = vsel %vm7181, %v7158, %v7160
        %v7189 = vsel %vm7181, %v7160, %v7162
        %v7190 = vsel %vm7181, %v7164, %v7166
        %v7191 = vsel %vm7181, %v7166, %v7168
        %v7192 = vsel %vm7181, %v7168, %v7170
        %v7193 = vsel %vm7181, %v7170, %v7172
        %v7194 = vsel %vm7181, %v7172, %v7174
        %v7195 = vsel %vm7181, %v7174, %v7176
        %v7196 = vsel %vm7181, %v7176, %v7178
        %v7197 = vsel %vm7181, %v7178, %v7180
        %7232 = vrot.lane.b32.xlu0 %v6643, 62
        %v7233 = vpop.permute.xlu0 %7232
        %7234 = vrot.lane.b32.xlu0 %v6644, 62
        %v7235 = vpop.permute.xlu0 %7234
        %7236 = vrot.lane.b32.xlu0 %v6645, 62
        %v7237 = vpop.permute.xlu0 %7236
        %7238 = vrot.lane.b32.xlu0 %v6646, 62
        %v7239 = vpop.permute.xlu0 %7238
        %7240 = vrot.lane.b32.xlu0 %v6647, 62
        %v7241 = vpop.permute.xlu0 %7240
        %7242 = vrot.lane.b32.xlu0 %v6648, 62
        %v7243 = vpop.permute.xlu0 %7242
        %7244 = vrot.lane.b32.xlu0 %v6649, 62
        %v7245 = vpop.permute.xlu0 %7244
        %7246 = vrot.lane.b32.xlu0 %v6650, 62
        %v7247 = vpop.permute.xlu0 %7246
        %7248 = vrot.lane.b32.xlu0 %v6651, 62
        %v7249 = vpop.permute.xlu0 %7248
        %7250 = vrot.lane.b32.xlu0 %v6652, 62
        %v7251 = vpop.permute.xlu0 %7250
        %7252 = vrot.lane.b32.xlu0 %v6653, 62
        %v7253 = vpop.permute.xlu0 %7252
        %7254 = vrot.lane.b32.xlu0 %v6654, 62
        %v7255 = vpop.permute.xlu0 %7254
        %7256 = vrot.lane.b32.xlu0 %v6655, 62
        %v7257 = vpop.permute.xlu0 %7256
        %7258 = vrot.lane.b32.xlu0 %v6656, 62
        %v7259 = vpop.permute.xlu0 %7258
        %7260 = vrot.lane.b32.xlu0 %v6657, 62
        %v7261 = vpop.permute.xlu0 %7260
        %7262 = vrot.lane.b32.xlu0 %v6658, 62
        %v7263 = vpop.permute.xlu0 %7262
        %7264 = vrot.lane.b32.xlu0 %v6659, 62
        %v7265 = vpop.permute.xlu0 %7264
        %7266 = vrot.lane.b32.xlu0 %v6660, 62
        %v7267 = vpop.permute.xlu0 %7266
        %vm7268 = vcmask 506880
        %v7269 = vsel %vm7268, %v7233, %v7235
        %v7270 = vsel %vm7268, %v7235, %v7237
        %v7271 = vsel %vm7268, %v7237, %v7239
        %v7272 = vsel %vm7268, %v7239, %v7241
        %v7273 = vsel %vm7268, %v7241, %v7243
        %v7274 = vsel %vm7268, %v7243, %v7245
        %v7275 = vsel %vm7268, %v7245, %v7247
        %v7276 = vsel %vm7268, %v7247, %v7249
        %v7277 = vsel %vm7268, %v7251, %v7253
        %v7278 = vsel %vm7268, %v7253, %v7255
        %v7279 = vsel %vm7268, %v7255, %v7257
        %v7280 = vsel %vm7268, %v7257, %v7259
        %v7281 = vsel %vm7268, %v7259, %v7261
        %v7282 = vsel %vm7268, %v7261, %v7263
        %v7283 = vsel %vm7268, %v7263, %v7265
        %v7284 = vsel %vm7268, %v7265, %v7267
        %v7301 = vpack.c.bf16 %v6386, %v6378
        %v7302 = vpack.c.bf16 %v6387, %v6379
        %v7303 = vpack.c.bf16 %v6388, %v6380
        %v7304 = vpack.c.bf16 %v6389, %v6381
        %v7305 = vpack.c.bf16 %v6390, %v6382
        %v7306 = vpack.c.bf16 %v6391, %v6383
        %v7307 = vpack.c.bf16 %v6392, %v6384
        %v7308 = vpack.c.bf16 %v6393, %v6385
        %v7309 = vpack.c.bf16 %v6709, %v6701
        %v7310 = vpack.c.bf16 %v6710, %v6702
        %v7311 = vpack.c.bf16 %v6711, %v6703
        %v7312 = vpack.c.bf16 %v6712, %v6704
        %v7313 = vpack.c.bf16 %v6713, %v6705
        %v7314 = vpack.c.bf16 %v6714, %v6706
        %v7315 = vpack.c.bf16 %v6715, %v6707
        %v7316 = vpack.c.bf16 %v6716, %v6708
        %v7317 = vpack.c.bf16 %v6795, %v6787
        %v7318 = vpack.c.bf16 %v6796, %v6788
        %v7319 = vpack.c.bf16 %v6797, %v6789
        %v7320 = vpack.c.bf16 %v6798, %v6790
        %v7321 = vpack.c.bf16 %v6799, %v6791
        %v7322 = vpack.c.bf16 %v6800, %v6792
        %v7323 = vpack.c.bf16 %v6801, %v6793
        %v7324 = vpack.c.bf16 %v6802, %v6794
        %v7325 = vpack.c.bf16 %v6881, %v6873
        %v7326 = vpack.c.bf16 %v6882, %v6874
        %v7327 = vpack.c.bf16 %v6883, %v6875
        %v7328 = vpack.c.bf16 %v6884, %v6876
        %v7329 = vpack.c.bf16 %v6885, %v6877
        %v7330 = vpack.c.bf16 %v6886, %v6878
        %v7331 = vpack.c.bf16 %v6887, %v6879
        %v7332 = vpack.c.bf16 %v6888, %v6880
        %v7333 = vpack.c.bf16 %v6949, %v6941
        %v7334 = vpack.c.bf16 %v6950, %v6942
        %v7335 = vpack.c.bf16 %v6951, %v6943
        %v7336 = vpack.c.bf16 %v6952, %v6944
        %v7337 = vpack.c.bf16 %v6953, %v6945
        %v7338 = vpack.c.bf16 %v6954, %v6946
        %v7339 = vpack.c.bf16 %v6955, %v6947
        %v7340 = vpack.c.bf16 %v6956, %v6948
        %v7341 = vpack.c.bf16 %v7035, %v7027
        %v7342 = vpack.c.bf16 %v7036, %v7028
        %v7343 = vpack.c.bf16 %v7037, %v7029
        %v7344 = vpack.c.bf16 %v7038, %v7030
        %v7345 = vpack.c.bf16 %v7039, %v7031
        %v7346 = vpack.c.bf16 %v7040, %v7032
        %v7347 = vpack.c.bf16 %v7041, %v7033
        %v7348 = vpack.c.bf16 %v7042, %v7034
        %v7349 = vpack.c.bf16 %v7121, %v7113
        %v7350 = vpack.c.bf16 %v7122, %v7114
        %v7351 = vpack.c.bf16 %v7123, %v7115
        %v7352 = vpack.c.bf16 %v7124, %v7116
        %v7353 = vpack.c.bf16 %v7125, %v7117
        %v7354 = vpack.c.bf16 %v7126, %v7118
        %v7355 = vpack.c.bf16 %v7127, %v7119
        %v7356 = vpack.c.bf16 %v7128, %v7120
        %v7357 = vpack.c.bf16 %v7190, %v7182
        %v7358 = vpack.c.bf16 %v7191, %v7183
        %v7359 = vpack.c.bf16 %v7192, %v7184
        %v7360 = vpack.c.bf16 %v7193, %v7185
        %v7361 = vpack.c.bf16 %v7194, %v7186
        %v7362 = vpack.c.bf16 %v7195, %v7187
        %v7363 = vpack.c.bf16 %v7196, %v7188
        %v7364 = vpack.c.bf16 %v7197, %v7189
        %v7365 = vpack.c.bf16 %v7277, %v7269
        %v7366 = vpack.c.bf16 %v7278, %v7270
        %v7367 = vpack.c.bf16 %v7279, %v7271
        %v7368 = vpack.c.bf16 %v7280, %v7272
        %v7369 = vpack.c.bf16 %v7281, %v7273
        %v7370 = vpack.c.bf16 %v7282, %v7274
        %v7371 = vpack.c.bf16 %v7283, %v7275
        %v7372 = vpack.c.bf16 %v7284, %v7276
        %7374 = vset.pattern.permute.xlu0 0
        %7375 = vperm.xlu0 %7374, %v6290
        %v7376 = vpop.permute.xlu0 %7375
        %v7379 = vunpack.c.l.b16 %v6289
        %v7380 = vunpack.c.h.b16 %v6289
        %v7381 = vpack.c.b16 %v7379, %v7379
        %v7382 = vpack.c.b16 %v7380, %v7380
        %v7385 = vsel %vm3639, %v7382, 0
        %7387 = vmatprep.subr.bf16.mxu0 %v7358
        %7388 = vmatpush1.bf16.msra.mxu0 %v7357
        %7389 = vmatprep.subr.bf16.mxu0 %v7350
        %7390 = vmatpush1.bf16.msra.mxu0 %v7349
        %7391 = vmatprep.subr.bf16.mxu0 %v7342
        %7392 = vmatpush1.bf16.msra.mxu0 %v7341
        %7393 = vmatprep.subr.bf16.mxu0 %v7334
        %7394 = vmatpush1.bf16.msra.mxu0 %v7333
        %7395 = vmatprep.subr.bf16.mxu0 %v7326
        %7396 = vmatpush1.bf16.msra.mxu0 %v7325
        %7397 = vmatprep.subr.bf16.mxu0 %v7318
        %7398 = vmatpush1.bf16.msra.mxu0 %v7317
        %7399 = vmatprep.subr.bf16.mxu0 %v7310
        %7400 = vmatpush1.bf16.msra.mxu0 %v7309
        %7401 = vmatprep.subr.bf16.mxu0 %v7302
        %7402 = vmatpush1.bf16.msra.mxu0 %v7301
        %7403 = vmatprep.subr.bf16.mxu0 0
        %7404 = vmatpush2.bf16.msra.mxu0 0
        %7405 = vmatprep.subr.bf16.mxu0 0
        %7406 = vmatpush2.bf16.msra.mxu0 0
        %7407 = vmatprep.subr.bf16.mxu0 0
        %7408 = vmatpush2.bf16.msra.mxu0 0
        %7409 = vmatprep.subr.bf16.mxu0 0
        %7410 = vmatpush2.bf16.msra.mxu0 0
        %7411 = vmatprep.subr.bf16.mxu0 0
        %7412 = vmatpush2.bf16.msra.mxu0 0
        %7413 = vmatprep.subr.bf16.mxu0 0
        %7414 = vmatpush2.bf16.msra.mxu0 0
        %7415 = vmatprep.subr.bf16.mxu0 0
        %7416 = vmatpush2.bf16.msra.mxu0 0
        %7417 = vmatprep.subr.bf16.mxu0 %v7366
        %7418 = vmatpush2.bf16.msra.mxu0 %v7365
        %7419 = vmatprep.mubr.bf16.mxu0 %v7385
        %7420 = vmatmul.mubr.bf16.gmra.mxu0 %v7381
        %v7421 = vpop.f32.mrf.mxu0
        %v7422 = vadd.f32 %v7376, %v7421
        %v7423 = vpop.f32.mrf.mxu0
        %v7424 = vadd.f32 %v7376, %v7423
        %v7425 = vpop.f32.mrf.mxu0
        %v7426 = vpop.f32.mrf.mxu0
        %7427 = vdwg.mxu0
        %7428 = vmatprep.subr.bf16.mxu0 %v7360
        %7429 = vmatpush1.bf16.msra.mxu0 %v7359
        %7430 = vmatprep.subr.bf16.mxu0 %v7352
        %7431 = vmatpush1.bf16.msra.mxu0 %v7351
        %7432 = vmatprep.subr.bf16.mxu0 %v7344
        %7433 = vmatpush1.bf16.msra.mxu0 %v7343
        %7434 = vmatprep.subr.bf16.mxu0 %v7336
        %7435 = vmatpush1.bf16.msra.mxu0 %v7335
        %7436 = vmatprep.subr.bf16.mxu0 %v7328
        %7437 = vmatpush1.bf16.msra.mxu0 %v7327
        %7438 = vmatprep.subr.bf16.mxu0 %v7320
        %7439 = vmatpush1.bf16.msra.mxu0 %v7319
        %7440 = vmatprep.subr.bf16.mxu0 %v7312
        %7441 = vmatpush1.bf16.msra.mxu0 %v7311
        %7442 = vmatprep.subr.bf16.mxu0 %v7304
        %7443 = vmatpush1.bf16.msra.mxu0 %v7303
        %7444 = vmatprep.subr.bf16.mxu0 0
        %7445 = vmatpush2.bf16.msra.mxu0 0
        %7446 = vmatprep.subr.bf16.mxu0 0
        %7447 = vmatpush2.bf16.msra.mxu0 0
        %7448 = vmatprep.subr.bf16.mxu0 0
        %7449 = vmatpush2.bf16.msra.mxu0 0
        %7450 = vmatprep.subr.bf16.mxu0 0
        %7451 = vmatpush2.bf16.msra.mxu0 0
        %7452 = vmatprep.subr.bf16.mxu0 0
        %7453 = vmatpush2.bf16.msra.mxu0 0
        %7454 = vmatprep.subr.bf16.mxu0 0
        %7455 = vmatpush2.bf16.msra.mxu0 0
        %7456 = vmatprep.subr.bf16.mxu0 0
        %7457 = vmatpush2.bf16.msra.mxu0 0
        %7458 = vmatprep.subr.bf16.mxu0 %v7368
        %7459 = vmatpush2.bf16.msra.mxu0 %v7367
        %7460 = vmatprep.mubr.bf16.mxu0 %v7385
        %7461 = vmatmul.mubr.bf16.gmra.mxu0 %v7381
        %v7462 = vpop.f32.mrf.mxu0
        %v7463 = vadd.f32 %v7376, %v7462
        %v7464 = vpop.f32.mrf.mxu0
        %v7465 = vadd.f32 %v7376, %v7464
        %v7466 = vpop.f32.mrf.mxu0
        %v7467 = vpop.f32.mrf.mxu0
        %7468 = vdwg.mxu0
        %7469 = vmatprep.subr.bf16.mxu0 %v7362
        %7470 = vmatpush1.bf16.msra.mxu0 %v7361
        %7471 = vmatprep.subr.bf16.mxu0 %v7354
        %7472 = vmatpush1.bf16.msra.mxu0 %v7353
        %7473 = vmatprep.subr.bf16.mxu0 %v7346
        %7474 = vmatpush1.bf16.msra.mxu0 %v7345
        %7475 = vmatprep.subr.bf16.mxu0 %v7338
        %7476 = vmatpush1.bf16.msra.mxu0 %v7337
        %7477 = vmatprep.subr.bf16.mxu0 %v7330
        %7478 = vmatpush1.bf16.msra.mxu0 %v7329
        %7479 = vmatprep.subr.bf16.mxu0 %v7322
        %7480 = vmatpush1.bf16.msra.mxu0 %v7321
        %7481 = vmatprep.subr.bf16.mxu0 %v7314
        %7482 = vmatpush1.bf16.msra.mxu0 %v7313
        %7483 = vmatprep.subr.bf16.mxu0 %v7306
        %7484 = vmatpush1.bf16.msra.mxu0 %v7305
        %7485 = vmatprep.subr.bf16.mxu0 0
        %7486 = vmatpush2.bf16.msra.mxu0 0
        %7487 = vmatprep.subr.bf16.mxu0 0
        %7488 = vmatpush2.bf16.msra.mxu0 0
        %7489 = vmatprep.subr.bf16.mxu0 0
        %7490 = vmatpush2.bf16.msra.mxu0 0
        %7491 = vmatprep.subr.bf16.mxu0 0
        %7492 = vmatpush2.bf16.msra.mxu0 0
        %7493 = vmatprep.subr.bf16.mxu0 0
        %7494 = vmatpush2.bf16.msra.mxu0 0
        %7495 = vmatprep.subr.bf16.mxu0 0
        %7496 = vmatpush2.bf16.msra.mxu0 0
        %7497 = vmatprep.subr.bf16.mxu0 0
        %7498 = vmatpush2.bf16.msra.mxu0 0
        %7499 = vmatprep.subr.bf16.mxu0 %v7370
        %7500 = vmatpush2.bf16.msra.mxu0 %v7369
        %7501 = vmatprep.mubr.bf16.mxu0 %v7385
        %7502 = vmatmul.mubr.bf16.gmra.mxu0 %v7381
        %v7503 = vpop.f32.mrf.mxu0
        %v7504 = vadd.f32 %v7376, %v7503
        %v7505 = vpop.f32.mrf.mxu0
        %v7506 = vadd.f32 %v7376, %v7505
        %v7507 = vpop.f32.mrf.mxu0
        %v7508 = vpop.f32.mrf.mxu0
        %7509 = vdwg.mxu0
        %7510 = vmatprep.subr.bf16.mxu0 %v7364
        %7511 = vmatpush1.bf16.msra.mxu0 %v7363
        %7512 = vmatprep.subr.bf16.mxu0 %v7356
        %7513 = vmatpush1.bf16.msra.mxu0 %v7355
        %7514 = vmatprep.subr.bf16.mxu0 %v7348
        %7515 = vmatpush1.bf16.msra.mxu0 %v7347
        %7516 = vmatprep.subr.bf16.mxu0 %v7340
        %7517 = vmatpush1.bf16.msra.mxu0 %v7339
        %7518 = vmatprep.subr.bf16.mxu0 %v7332
        %7519 = vmatpush1.bf16.msra.mxu0 %v7331
        %7520 = vmatprep.subr.bf16.mxu0 %v7324
        %7521 = vmatpush1.bf16.msra.mxu0 %v7323
        %7522 = vmatprep.subr.bf16.mxu0 %v7316
        %7523 = vmatpush1.bf16.msra.mxu0 %v7315
        %7524 = vmatprep.subr.bf16.mxu0 %v7308
        %7525 = vmatpush1.bf16.msra.mxu0 %v7307
        %7526 = vmatprep.subr.bf16.mxu0 0
        %7527 = vmatpush2.bf16.msra.mxu0 0
        %7528 = vmatprep.subr.bf16.mxu0 0
        %7529 = vmatpush2.bf16.msra.mxu0 0
        %7530 = vmatprep.subr.bf16.mxu0 0
        %7531 = vmatpush2.bf16.msra.mxu0 0
        %7532 = vmatprep.subr.bf16.mxu0 0
        %7533 = vmatpush2.bf16.msra.mxu0 0
        %7534 = vmatprep.subr.bf16.mxu0 0
        %7535 = vmatpush2.bf16.msra.mxu0 0
        %7536 = vmatprep.subr.bf16.mxu0 0
        %7537 = vmatpush2.bf16.msra.mxu0 0
        %7538 = vmatprep.subr.bf16.mxu0 0
        %7539 = vmatpush2.bf16.msra.mxu0 0
        %7540 = vmatprep.subr.bf16.mxu0 %v7372
        %7541 = vmatpush2.bf16.msra.mxu0 %v7371
        %7542 = vmatprep.mubr.bf16.mxu0 %v7385
        %7543 = vmatmul.mubr.bf16.gmra.mxu0 %v7381
        %v7544 = vpop.f32.mrf.mxu0
        %v7545 = vadd.f32 %v7376, %v7544
        %v7546 = vpop.f32.mrf.mxu0
        %v7547 = vadd.f32 %v7376, %v7546
        %v7548 = vpop.f32.mrf.mxu0
        %v7549 = vpop.f32.mrf.mxu0
        %7550 = vdwg.mxu0
        %v7551 = vmax.f32 %v7422, 0.0
        %v7552 = vmax.f32 %v7424, 0.0
        %v7553 = vmax.f32 %v7463, 0.0
        %v7554 = vmax.f32 %v7465, 0.0
        %v7555 = vmax.f32 %v7504, 0.0
        %v7556 = vmax.f32 %v7506, 0.0
        %v7557 = vmax.f32 %v7545, 0.0
        %v7558 = vmax.f32 %v7547, 0.0
        %7567 = vrot.lane.b32.xlu0 %v7551, 33
        %v7568 = vpop.permute.xlu0 %7567
        %7569 = vrot.lane.b32.xlu0 %v7552, 33
        %v7570 = vpop.permute.xlu0 %7569
        %7571 = vrot.lane.b32.xlu0 %v7553, 33
        %v7572 = vpop.permute.xlu0 %7571
        %7573 = vrot.lane.b32.xlu0 %v7554, 33
        %v7574 = vpop.permute.xlu0 %7573
        %7575 = vrot.lane.b32.xlu0 %v7555, 33
        %v7576 = vpop.permute.xlu0 %7575
        %7577 = vrot.lane.b32.xlu0 %v7556, 33
        %v7578 = vpop.permute.xlu0 %7577
        %7579 = vrot.lane.b32.xlu0 %v7557, 33
        %v7580 = vpop.permute.xlu0 %7579
        %7581 = vrot.lane.b32.xlu0 %v7558, 33
        %v7582 = vpop.permute.xlu0 %7581
        %v7583 = vsel %vm6341, %v7568, %v7570
        %v7584 = vsel %vm6341, %v7570, %v7572
        %v7585 = vsel %vm6341, %v7572, %v7574
        %v7586 = vsel %vm6341, %v7574, %v7576
        %v7587 = vsel %vm6341, %v7576, %v7578
        %v7588 = vsel %vm6341, %v7578, %v7580
        %v7589 = vsel %vm6341, %v7580, %v7582
        %v7599 = vsel %vm6341, 0.0, %v7568
        %v7600 = vsel %vm6341, %v7582, 0.0
        %v7601 = vmul.f32 %v7599, %v6257
        %v7602 = vmul.f32 %v7583, %v6258
        %v7603 = vmul.f32 %v7584, %v6259
        %v7604 = vmul.f32 %v7585, %v6260
        %v7605 = vmul.f32 %v7586, %v6261
        %v7606 = vmul.f32 %v7587, %v6262
        %v7607 = vmul.f32 %v7588, %v6263
        %v7608 = vmul.f32 %v7589, %v6264
        %v7609 = vmul.f32 %v7599, %v6403
        %v7610 = vmul.f32 %v7583, %v6418
        %v7611 = vmul.f32 %v7584, %v6419
        %v7612 = vmul.f32 %v7585, %v6420
        %v7613 = vmul.f32 %v7586, %v6421
        %v7614 = vmul.f32 %v7587, %v6422
        %v7615 = vmul.f32 %v7588, %v6423
        %v7616 = vmul.f32 %v7589, %v6424
        %v7617 = vmul.f32 %v7600, %v6417
        %v7618 = vmul.f32 %v7599, %v6461
        %v7619 = vmul.f32 %v7583, %v6476
        %v7620 = vmul.f32 %v7584, %v6477
        %v7621 = vmul.f32 %v7585, %v6478
        %v7622 = vmul.f32 %v7586, %v6479
        %v7623 = vmul.f32 %v7587, %v6480
        %v7624 = vmul.f32 %v7588, %v6481
        %v7625 = vmul.f32 %v7589, %v6482
        %v7626 = vmul.f32 %v7600, %v6475
        %v7627 = vmul.f32 %v7599, %v6511
        %v7628 = vmul.f32 %v7583, %v6526
        %v7629 = vmul.f32 %v7584, %v6527
        %v7630 = vmul.f32 %v7585, %v6528
        %v7631 = vmul.f32 %v7586, %v6529
        %v7632 = vmul.f32 %v7587, %v6530
        %v7633 = vmul.f32 %v7588, %v6531
        %v7634 = vmul.f32 %v7589, %v6532
        %v7635 = vmul.f32 %v7600, %v6525
        %v7636 = vmul.f32 %v7599, %v6561
        %v7637 = vmul.f32 %v7583, %v6576
        %v7638 = vmul.f32 %v7584, %v6577
        %v7639 = vmul.f32 %v7585, %v6578
        %v7640 = vmul.f32 %v7586, %v6579
        %v7641 = vmul.f32 %v7587, %v6580
        %v7642 = vmul.f32 %v7588, %v6581
        %v7643 = vmul.f32 %v7589, %v6582
        %v7644 = vmul.f32 %v7600, %v6575
        %v7645 = vmul.f32 %v7599, %v6611
        %v7646 = vmul.f32 %v7583, %v6627
        %v7647 = vmul.f32 %v7584, %v6628
        %v7648 = vmul.f32 %v7585, %v6629
        %v7649 = vmul.f32 %v7586, %v6630
        %v7650 = vmul.f32 %v7587, %v6631
        %v7651 = vmul.f32 %v7588, %v6632
        %v7652 = vmul.f32 %v7589, %v6633
        %v7653 = vmul.f32 %v7600, %v6625
        %7656 = vrot.lane.b32.xlu0 %v7599, 127
        %v7657 = vpop.permute.xlu0 %7656
        %7658 = vrot.lane.b32.xlu0 %v7583, 127
        %v7659 = vpop.permute.xlu0 %7658
        %7660 = vrot.lane.b32.xlu0 %v7584, 127
        %v7661 = vpop.permute.xlu0 %7660
        %7662 = vrot.lane.b32.xlu0 %v7585, 127
        %v7663 = vpop.permute.xlu0 %7662
        %7664 = vrot.lane.b32.xlu0 %v7586, 127
        %v7665 = vpop.permute.xlu0 %7664
        %7666 = vrot.lane.b32.xlu0 %v7587, 127
        %v7667 = vpop.permute.xlu0 %7666
        %7668 = vrot.lane.b32.xlu0 %v7588, 127
        %v7669 = vpop.permute.xlu0 %7668
        %7670 = vrot.lane.b32.xlu0 %v7589, 127
        %v7671 = vpop.permute.xlu0 %7670
        %7672 = vrot.lane.b32.xlu0 %v7600, 127
        %v7673 = vpop.permute.xlu0 %7672
        %v7674 = vsel %vm4566, %v7657, %v7659
        %v7675 = vsel %vm4566, %v7659, %v7661
        %v7676 = vsel %vm4566, %v7661, %v7663
        %v7677 = vsel %vm4566, %v7663, %v7665
        %v7678 = vsel %vm4566, %v7665, %v7667
        %v7679 = vsel %vm4566, %v7667, %v7669
        %v7680 = vsel %vm4566, %v7669, %v7671
        %v7681 = vsel %vm4566, %v7671, %v7673
        %7699 = vrot.lane.b32.xlu0 %v7609, 126
        %v7700 = vpop.permute.xlu0 %7699
        %7701 = vrot.lane.b32.xlu0 %v7610, 126
        %v7702 = vpop.permute.xlu0 %7701
        %7703 = vrot.lane.b32.xlu0 %v7611, 126
        %v7704 = vpop.permute.xlu0 %7703
        %7705 = vrot.lane.b32.xlu0 %v7612, 126
        %v7706 = vpop.permute.xlu0 %7705
        %7707 = vrot.lane.b32.xlu0 %v7613, 126
        %v7708 = vpop.permute.xlu0 %7707
        %7709 = vrot.lane.b32.xlu0 %v7614, 126
        %v7710 = vpop.permute.xlu0 %7709
        %7711 = vrot.lane.b32.xlu0 %v7615, 126
        %v7712 = vpop.permute.xlu0 %7711
        %7713 = vrot.lane.b32.xlu0 %v7616, 126
        %v7714 = vpop.permute.xlu0 %7713
        %7715 = vrot.lane.b32.xlu0 %v7617, 126
        %v7716 = vpop.permute.xlu0 %7715
        %v7717 = vsel %vm4606, %v7700, %v7702
        %v7718 = vsel %vm4606, %v7702, %v7704
        %v7719 = vsel %vm4606, %v7704, %v7706
        %v7720 = vsel %vm4606, %v7706, %v7708
        %v7721 = vsel %vm4606, %v7708, %v7710
        %v7722 = vsel %vm4606, %v7710, %v7712
        %v7723 = vsel %vm4606, %v7712, %v7714
        %v7724 = vsel %vm4606, %v7714, %v7716
        %7742 = vrot.lane.b32.xlu0 %v7618, 96
        %v7743 = vpop.permute.xlu0 %7742
        %7744 = vrot.lane.b32.xlu0 %v7619, 96
        %v7745 = vpop.permute.xlu0 %7744
        %7746 = vrot.lane.b32.xlu0 %v7620, 96
        %v7747 = vpop.permute.xlu0 %7746
        %7748 = vrot.lane.b32.xlu0 %v7621, 96
        %v7749 = vpop.permute.xlu0 %7748
        %7750 = vrot.lane.b32.xlu0 %v7622, 96
        %v7751 = vpop.permute.xlu0 %7750
        %7752 = vrot.lane.b32.xlu0 %v7623, 96
        %v7753 = vpop.permute.xlu0 %7752
        %7754 = vrot.lane.b32.xlu0 %v7624, 96
        %v7755 = vpop.permute.xlu0 %7754
        %7756 = vrot.lane.b32.xlu0 %v7625, 96
        %v7757 = vpop.permute.xlu0 %7756
        %7758 = vrot.lane.b32.xlu0 %v7626, 96
        %v7759 = vpop.permute.xlu0 %7758
        %v7760 = vsel %vm4757, %v7743, %v7745
        %v7761 = vsel %vm4757, %v7745, %v7747
        %v7762 = vsel %vm4757, %v7747, %v7749
        %v7763 = vsel %vm4757, %v7749, %v7751
        %v7764 = vsel %vm4757, %v7751, %v7753
        %v7765 = vsel %vm4757, %v7753, %v7755
        %v7766 = vsel %vm4757, %v7755, %v7757
        %v7767 = vsel %vm4757, %v7757, %v7759
        %7776 = vrot.lane.b32.xlu0 %v7599, 95
        %v7777 = vpop.permute.xlu0 %7776
        %7778 = vrot.lane.b32.xlu0 %v7583, 95
        %v7779 = vpop.permute.xlu0 %7778
        %7780 = vrot.lane.b32.xlu0 %v7584, 95
        %v7781 = vpop.permute.xlu0 %7780
        %7782 = vrot.lane.b32.xlu0 %v7585, 95
        %v7783 = vpop.permute.xlu0 %7782
        %7784 = vrot.lane.b32.xlu0 %v7586, 95
        %v7785 = vpop.permute.xlu0 %7784
        %7786 = vrot.lane.b32.xlu0 %v7587, 95
        %v7787 = vpop.permute.xlu0 %7786
        %7788 = vrot.lane.b32.xlu0 %v7588, 95
        %v7789 = vpop.permute.xlu0 %7788
        %7790 = vrot.lane.b32.xlu0 %v7589, 95
        %v7791 = vpop.permute.xlu0 %7790
        %7792 = vrot.lane.b32.xlu0 %v7600, 95
        %v7793 = vpop.permute.xlu0 %7792
        %v7794 = vsel %vm4788, %v7777, %v7779
        %v7795 = vsel %vm4788, %v7779, %v7781
        %v7796 = vsel %vm4788, %v7781, %v7783
        %v7797 = vsel %vm4788, %v7783, %v7785
        %v7798 = vsel %vm4788, %v7785, %v7787
        %v7799 = vsel %vm4788, %v7787, %v7789
        %v7800 = vsel %vm4788, %v7789, %v7791
        %v7801 = vsel %vm4788, %v7791, %v7793
        %7819 = vrot.lane.b32.xlu0 %v7627, 94
        %v7820 = vpop.permute.xlu0 %7819
        %7821 = vrot.lane.b32.xlu0 %v7628, 94
        %v7822 = vpop.permute.xlu0 %7821
        %7823 = vrot.lane.b32.xlu0 %v7629, 94
        %v7824 = vpop.permute.xlu0 %7823
        %7825 = vrot.lane.b32.xlu0 %v7630, 94
        %v7826 = vpop.permute.xlu0 %7825
        %7827 = vrot.lane.b32.xlu0 %v7631, 94
        %v7828 = vpop.permute.xlu0 %7827
        %7829 = vrot.lane.b32.xlu0 %v7632, 94
        %v7830 = vpop.permute.xlu0 %7829
        %7831 = vrot.lane.b32.xlu0 %v7633, 94
        %v7832 = vpop.permute.xlu0 %7831
        %7833 = vrot.lane.b32.xlu0 %v7634, 94
        %v7834 = vpop.permute.xlu0 %7833
        %7835 = vrot.lane.b32.xlu0 %v7635, 94
        %v7836 = vpop.permute.xlu0 %7835
        %v7837 = vsel %vm4828, %v7820, %v7822
        %v7838 = vsel %vm4828, %v7822, %v7824
        %v7839 = vsel %vm4828, %v7824, %v7826
        %v7840 = vsel %vm4828, %v7826, %v7828
        %v7841 = vsel %vm4828, %v7828, %v7830
        %v7842 = vsel %vm4828, %v7830, %v7832
        %v7843 = vsel %vm4828, %v7832, %v7834
        %v7844 = vsel %vm4828, %v7834, %v7836
        %7862 = vrot.lane.b32.xlu0 %v7636, 64
        %v7863 = vpop.permute.xlu0 %7862
        %7864 = vrot.lane.b32.xlu0 %v7637, 64
        %v7865 = vpop.permute.xlu0 %7864
        %7866 = vrot.lane.b32.xlu0 %v7638, 64
        %v7867 = vpop.permute.xlu0 %7866
        %7868 = vrot.lane.b32.xlu0 %v7639, 64
        %v7869 = vpop.permute.xlu0 %7868
        %7870 = vrot.lane.b32.xlu0 %v7640, 64
        %v7871 = vpop.permute.xlu0 %7870
        %7872 = vrot.lane.b32.xlu0 %v7641, 64
        %v7873 = vpop.permute.xlu0 %7872
        %7874 = vrot.lane.b32.xlu0 %v7642, 64
        %v7875 = vpop.permute.xlu0 %7874
        %7876 = vrot.lane.b32.xlu0 %v7643, 64
        %v7877 = vpop.permute.xlu0 %7876
        %7878 = vrot.lane.b32.xlu0 %v7644, 64
        %v7879 = vpop.permute.xlu0 %7878
        %v7880 = vsel %vm3127, %v7863, %v7865
        %v7881 = vsel %vm3127, %v7865, %v7867
        %v7882 = vsel %vm3127, %v7867, %v7869
        %v7883 = vsel %vm3127, %v7869, %v7871
        %v7884 = vsel %vm3127, %v7871, %v7873
        %v7885 = vsel %vm3127, %v7873, %v7875
        %v7886 = vsel %vm3127, %v7875, %v7877
        %v7887 = vsel %vm3127, %v7877, %v7879
        %7896 = vrot.lane.b32.xlu0 %v7599, 63
        %v7897 = vpop.permute.xlu0 %7896
        %7898 = vrot.lane.b32.xlu0 %v7583, 63
        %v7899 = vpop.permute.xlu0 %7898
        %7900 = vrot.lane.b32.xlu0 %v7584, 63
        %v7901 = vpop.permute.xlu0 %7900
        %7902 = vrot.lane.b32.xlu0 %v7585, 63
        %v7903 = vpop.permute.xlu0 %7902
        %7904 = vrot.lane.b32.xlu0 %v7586, 63
        %v7905 = vpop.permute.xlu0 %7904
        %7906 = vrot.lane.b32.xlu0 %v7587, 63
        %v7907 = vpop.permute.xlu0 %7906
        %7908 = vrot.lane.b32.xlu0 %v7588, 63
        %v7909 = vpop.permute.xlu0 %7908
        %7910 = vrot.lane.b32.xlu0 %v7589, 63
        %v7911 = vpop.permute.xlu0 %7910
        %7912 = vrot.lane.b32.xlu0 %v7600, 63
        %v7913 = vpop.permute.xlu0 %7912
        %v7914 = vsel %vm7181, %v7897, %v7899
        %v7915 = vsel %vm7181, %v7899, %v7901
        %v7916 = vsel %vm7181, %v7901, %v7903
        %v7917 = vsel %vm7181, %v7903, %v7905
        %v7918 = vsel %vm7181, %v7905, %v7907
        %v7919 = vsel %vm7181, %v7907, %v7909
        %v7920 = vsel %vm7181, %v7909, %v7911
        %v7921 = vsel %vm7181, %v7911, %v7913
        %7939 = vrot.lane.b32.xlu0 %v7645, 62
        %v7940 = vpop.permute.xlu0 %7939
        %7941 = vrot.lane.b32.xlu0 %v7646, 62
        %v7942 = vpop.permute.xlu0 %7941
        %7943 = vrot.lane.b32.xlu0 %v7647, 62
        %v7944 = vpop.permute.xlu0 %7943
        %7945 = vrot.lane.b32.xlu0 %v7648, 62
        %v7946 = vpop.permute.xlu0 %7945
        %7947 = vrot.lane.b32.xlu0 %v7649, 62
        %v7948 = vpop.permute.xlu0 %7947
        %7949 = vrot.lane.b32.xlu0 %v7650, 62
        %v7950 = vpop.permute.xlu0 %7949
        %7951 = vrot.lane.b32.xlu0 %v7651, 62
        %v7952 = vpop.permute.xlu0 %7951
        %7953 = vrot.lane.b32.xlu0 %v7652, 62
        %v7954 = vpop.permute.xlu0 %7953
        %7955 = vrot.lane.b32.xlu0 %v7653, 62
        %v7956 = vpop.permute.xlu0 %7955
        %v7957 = vsel %vm7268, %v7940, %v7942
        %v7958 = vsel %vm7268, %v7942, %v7944
        %v7959 = vsel %vm7268, %v7944, %v7946
        %v7960 = vsel %vm7268, %v7946, %v7948
        %v7961 = vsel %vm7268, %v7948, %v7950
        %v7962 = vsel %vm7268, %v7950, %v7952
        %v7963 = vsel %vm7268, %v7952, %v7954
        %v7964 = vsel %vm7268, %v7954, %v7956
        %v7973 = vpack.c.bf16 %v7674, %v7601
        %v7974 = vpack.c.bf16 %v7675, %v7602
        %v7975 = vpack.c.bf16 %v7676, %v7603
        %v7976 = vpack.c.bf16 %v7677, %v7604
        %v7977 = vpack.c.bf16 %v7678, %v7605
        %v7978 = vpack.c.bf16 %v7679, %v7606
        %v7979 = vpack.c.bf16 %v7680, %v7607
        %v7980 = vpack.c.bf16 %v7681, %v7608
        %v7981 = vpack.c.bf16 %v7760, %v7717
        %v7982 = vpack.c.bf16 %v7761, %v7718
        %v7983 = vpack.c.bf16 %v7762, %v7719
        %v7984 = vpack.c.bf16 %v7763, %v7720
        %v7985 = vpack.c.bf16 %v7764, %v7721
        %v7986 = vpack.c.bf16 %v7765, %v7722
        %v7987 = vpack.c.bf16 %v7766, %v7723
        %v7988 = vpack.c.bf16 %v7767, %v7724
        %v7989 = vpack.c.bf16 %v7837, %v7794
        %v7990 = vpack.c.bf16 %v7838, %v7795
        %v7991 = vpack.c.bf16 %v7839, %v7796
        %v7992 = vpack.c.bf16 %v7840, %v7797
        %v7993 = vpack.c.bf16 %v7841, %v7798
        %v7994 = vpack.c.bf16 %v7842, %v7799
        %v7995 = vpack.c.bf16 %v7843, %v7800
        %v7996 = vpack.c.bf16 %v7844, %v7801
        %v7997 = vpack.c.bf16 %v7914, %v7880
        %v7998 = vpack.c.bf16 %v7915, %v7881
        %v7999 = vpack.c.bf16 %v7916, %v7882
        %v8000 = vpack.c.bf16 %v7917, %v7883
        %v8001 = vpack.c.bf16 %v7918, %v7884
        %v8002 = vpack.c.bf16 %v7919, %v7885
        %v8003 = vpack.c.bf16 %v7920, %v7886
        %v8004 = vpack.c.bf16 %v7921, %v7887
        %v8005 = vpack.c.bf16 %v7957, %v7957
        %v8006 = vpack.c.bf16 %v7958, %v7958
        %v8007 = vpack.c.bf16 %v7959, %v7959
        %v8008 = vpack.c.bf16 %v7960, %v7960
        %v8009 = vpack.c.bf16 %v7961, %v7961
        %v8010 = vpack.c.bf16 %v7962, %v7962
        %v8011 = vpack.c.bf16 %v7963, %v7963
        %v8012 = vpack.c.bf16 %v7964, %v7964
        %8014 = vset.pattern.permute.xlu0 0
        %8015 = vperm.xlu0 %8014, %v6292
        %v8016 = vpop.permute.xlu0 %8015
        %vm8018 = vcmask 588800
        %v8020 = vsel %vm8018, %v6291, 0
        %v8023 = vsel %vm4892, %v8005, 0
        %v8026 = vsel %vm4892, %v8006, 0
        %v8029 = vsel %vm4892, %v8007, 0
        %v8032 = vsel %vm4892, %v8008, 0
        %v8035 = vsel %vm4892, %v8009, 0
        %v8038 = vsel %vm4892, %v8010, 0
        %v8041 = vsel %vm4892, %v8011, 0
        %v8044 = vsel %vm4892, %v8012, 0
        %8046 = vmatprep.subr.bf16.mxu0 0
        %8047 = vmatpush1.bf16.msra.mxu0 0
        %8048 = vmatprep.subr.bf16.mxu0 0
        %8049 = vmatpush1.bf16.msra.mxu0 0
        %8050 = vmatprep.subr.bf16.mxu0 0
        %8051 = vmatpush1.bf16.msra.mxu0 0
        %8052 = vmatprep.subr.bf16.mxu0 %v8026
        %8053 = vmatpush1.bf16.msra.mxu0 %v8023
        %8054 = vmatprep.subr.bf16.mxu0 %v7998
        %8055 = vmatpush1.bf16.msra.mxu0 %v7997
        %8056 = vmatprep.subr.bf16.mxu0 %v7990
        %8057 = vmatpush1.bf16.msra.mxu0 %v7989
        %8058 = vmatprep.subr.bf16.mxu0 %v7982
        %8059 = vmatpush1.bf16.msra.mxu0 %v7981
        %8060 = vmatprep.subr.bf16.mxu0 %v7974
        %8061 = vmatpush1.bf16.msra.mxu0 %v7973
        %8062 = vmatprep.subr.bf16.mxu0 0
        %8063 = vmatpush2.bf16.msra.mxu0 0
        %8064 = vmatprep.subr.bf16.mxu0 0
        %8065 = vmatpush2.bf16.msra.mxu0 0
        %8066 = vmatprep.subr.bf16.mxu0 0
        %8067 = vmatpush2.bf16.msra.mxu0 0
        %8068 = vmatprep.subr.bf16.mxu0 0
        %8069 = vmatpush2.bf16.msra.mxu0 0
        %8070 = vmatprep.subr.bf16.mxu0 0
        %8071 = vmatpush2.bf16.msra.mxu0 0
        %8072 = vmatprep.subr.bf16.mxu0 0
        %8073 = vmatpush2.bf16.msra.mxu0 0
        %8074 = vmatprep.subr.bf16.mxu0 0
        %8075 = vmatpush2.bf16.msra.mxu0 0
        %8076 = vmatprep.subr.bf16.mxu0 0
        %8077 = vmatpush2.bf16.msra.mxu0 0
        %8078 = vmatprep.mubr.bf16.mxu0 0
        %8079 = vmatmul.mubr.bf16.gmra.mxu0 %v8020
        %v8080 = vpop.f32.mrf.mxu0
        %v8081 = vadd.f32 %v8016, %v8080
        %v8082 = vpop.f32.mrf.mxu0
        %v8083 = vadd.f32 %v8016, %v8082
        %v8084 = vpop.f32.mrf.mxu0
        %v8085 = vpop.f32.mrf.mxu0
        %8086 = vdwg.mxu0
        %8087 = vmatprep.subr.bf16.mxu0 0
        %8088 = vmatpush1.bf16.msra.mxu0 0
        %8089 = vmatprep.subr.bf16.mxu0 0
        %8090 = vmatpush1.bf16.msra.mxu0 0
        %8091 = vmatprep.subr.bf16.mxu0 0
        %8092 = vmatpush1.bf16.msra.mxu0 0
        %8093 = vmatprep.subr.bf16.mxu0 %v8032
        %8094 = vmatpush1.bf16.msra.mxu0 %v8029
        %8095 = vmatprep.subr.bf16.mxu0 %v8000
        %8096 = vmatpush1.bf16.msra.mxu0 %v7999
        %8097 = vmatprep.subr.bf16.mxu0 %v7992
        %8098 = vmatpush1.bf16.msra.mxu0 %v7991
        %8099 = vmatprep.subr.bf16.mxu0 %v7984
        %8100 = vmatpush1.bf16.msra.mxu0 %v7983
        %8101 = vmatprep.subr.bf16.mxu0 %v7976
        %8102 = vmatpush1.bf16.msra.mxu0 %v7975
        %8103 = vmatprep.subr.bf16.mxu0 0
        %8104 = vmatpush2.bf16.msra.mxu0 0
        %8105 = vmatprep.subr.bf16.mxu0 0
        %8106 = vmatpush2.bf16.msra.mxu0 0
        %8107 = vmatprep.subr.bf16.mxu0 0
        %8108 = vmatpush2.bf16.msra.mxu0 0
        %8109 = vmatprep.subr.bf16.mxu0 0
        %8110 = vmatpush2.bf16.msra.mxu0 0
        %8111 = vmatprep.subr.bf16.mxu0 0
        %8112 = vmatpush2.bf16.msra.mxu0 0
        %8113 = vmatprep.subr.bf16.mxu0 0
        %8114 = vmatpush2.bf16.msra.mxu0 0
        %8115 = vmatprep.subr.bf16.mxu0 0
        %8116 = vmatpush2.bf16.msra.mxu0 0
        %8117 = vmatprep.subr.bf16.mxu0 0
        %8118 = vmatpush2.bf16.msra.mxu0 0
        %8119 = vmatprep.mubr.bf16.mxu0 0
        %8120 = vmatmul.mubr.bf16.gmra.mxu0 %v8020
        %v8121 = vpop.f32.mrf.mxu0
        %v8122 = vadd.f32 %v8016, %v8121
        %v8123 = vpop.f32.mrf.mxu0
        %v8124 = vadd.f32 %v8016, %v8123
        %v8125 = vpop.f32.mrf.mxu0
        %v8126 = vpop.f32.mrf.mxu0
        %8127 = vdwg.mxu0
        %8128 = vmatprep.subr.bf16.mxu0 0
        %8129 = vmatpush1.bf16.msra.mxu0 0
        %8130 = vmatprep.subr.bf16.mxu0 0
        %8131 = vmatpush1.bf16.msra.mxu0 0
        %8132 = vmatprep.subr.bf16.mxu0 0
        %8133 = vmatpush1.bf16.msra.mxu0 0
        %8134 = vmatprep.subr.bf16.mxu0 %v8038
        %8135 = vmatpush1.bf16.msra.mxu0 %v8035
        %8136 = vmatprep.subr.bf16.mxu0 %v8002
        %8137 = vmatpush1.bf16.msra.mxu0 %v8001
        %8138 = vmatprep.subr.bf16.mxu0 %v7994
        %8139 = vmatpush1.bf16.msra.mxu0 %v7993
        %8140 = vmatprep.subr.bf16.mxu0 %v7986
        %8141 = vmatpush1.bf16.msra.mxu0 %v7985
        %8142 = vmatprep.subr.bf16.mxu0 %v7978
        %8143 = vmatpush1.bf16.msra.mxu0 %v7977
        %8144 = vmatprep.subr.bf16.mxu0 0
        %8145 = vmatpush2.bf16.msra.mxu0 0
        %8146 = vmatprep.subr.bf16.mxu0 0
        %8147 = vmatpush2.bf16.msra.mxu0 0
        %8148 = vmatprep.subr.bf16.mxu0 0
        %8149 = vmatpush2.bf16.msra.mxu0 0
        %8150 = vmatprep.subr.bf16.mxu0 0
        %8151 = vmatpush2.bf16.msra.mxu0 0
        %8152 = vmatprep.subr.bf16.mxu0 0
        %8153 = vmatpush2.bf16.msra.mxu0 0
        %8154 = vmatprep.subr.bf16.mxu0 0
        %8155 = vmatpush2.bf16.msra.mxu0 0
        %8156 = vmatprep.subr.bf16.mxu0 0
        %8157 = vmatpush2.bf16.msra.mxu0 0
        %8158 = vmatprep.subr.bf16.mxu0 0
        %8159 = vmatpush2.bf16.msra.mxu0 0
        %8160 = vmatprep.mubr.bf16.mxu0 0
        %8161 = vmatmul.mubr.bf16.gmra.mxu0 %v8020
        %v8162 = vpop.f32.mrf.mxu0
        %v8163 = vadd.f32 %v8016, %v8162
        %v8164 = vpop.f32.mrf.mxu0
        %v8165 = vadd.f32 %v8016, %v8164
        %v8166 = vpop.f32.mrf.mxu0
        %v8167 = vpop.f32.mrf.mxu0
        %8168 = vdwg.mxu0
        %8169 = vmatprep.subr.bf16.mxu0 0
        %8170 = vmatpush1.bf16.msra.mxu0 0
        %8171 = vmatprep.subr.bf16.mxu0 0
        %8172 = vmatpush1.bf16.msra.mxu0 0
        %8173 = vmatprep.subr.bf16.mxu0 0
        %8174 = vmatpush1.bf16.msra.mxu0 0
        %8175 = vmatprep.subr.bf16.mxu0 %v8044
        %8176 = vmatpush1.bf16.msra.mxu0 %v8041
        %8177 = vmatprep.subr.bf16.mxu0 %v8004
        %8178 = vmatpush1.bf16.msra.mxu0 %v8003
        %8179 = vmatprep.subr.bf16.mxu0 %v7996
        %8180 = vmatpush1.bf16.msra.mxu0 %v7995
        %8181 = vmatprep.subr.bf16.mxu0 %v7988
        %8182 = vmatpush1.bf16.msra.mxu0 %v7987
        %8183 = vmatprep.subr.bf16.mxu0 %v7980
        %8184 = vmatpush1.bf16.msra.mxu0 %v7979
        %8185 = vmatprep.subr.bf16.mxu0 0
        %8186 = vmatpush2.bf16.msra.mxu0 0
        %8187 = vmatprep.subr.bf16.mxu0 0
        %8188 = vmatpush2.bf16.msra.mxu0 0
        %8189 = vmatprep.subr.bf16.mxu0 0
        %8190 = vmatpush2.bf16.msra.mxu0 0
        %8191 = vmatprep.subr.bf16.mxu0 0
        %8192 = vmatpush2.bf16.msra.mxu0 0
        %8193 = vmatprep.subr.bf16.mxu0 0
        %8194 = vmatpush2.bf16.msra.mxu0 0
        %8195 = vmatprep.subr.bf16.mxu0 0
        %8196 = vmatpush2.bf16.msra.mxu0 0
        %8197 = vmatprep.subr.bf16.mxu0 0
        %8198 = vmatpush2.bf16.msra.mxu0 0
        %8199 = vmatprep.subr.bf16.mxu0 0
        %8200 = vmatpush2.bf16.msra.mxu0 0
        %8201 = vmatprep.mubr.bf16.mxu0 0
        %8202 = vmatmul.mubr.bf16.gmra.mxu0 %v8020
        %v8203 = vpop.f32.mrf.mxu0
        %v8204 = vadd.f32 %v8016, %v8203
        %v8205 = vpop.f32.mrf.mxu0
        %v8206 = vadd.f32 %v8016, %v8205
        %v8207 = vpop.f32.mrf.mxu0
        %v8208 = vpop.f32.mrf.mxu0
        %8209 = vdwg.mxu0
        %v8210 = vmax.f32 %v8081, 0.0
        %v8211 = vmax.f32 %v8083, 0.0
        %v8212 = vmax.f32 %v8122, 0.0
        %v8213 = vmax.f32 %v8124, 0.0
        %v8214 = vmax.f32 %v8163, 0.0
        %v8215 = vmax.f32 %v8165, 0.0
        %v8216 = vmax.f32 %v8204, 0.0
        %v8217 = vmax.f32 %v8206, 0.0
        %8218 = vst [vmem:[%s983] sm:$0xff] %v8210
        %8219 = vst [vmem:[%s983 + $0x8] sm:$0xff] %v8211
        %8220 = vst [vmem:[%s983 + $0x10] sm:$0xff] %v8212
        %8221 = vst [vmem:[%s983 + $0x18] sm:$0xff] %v8213
        %8222 = vst [vmem:[%s983 + $0x20] sm:$0xff] %v8214
        %8223 = vst [vmem:[%s983 + $0x28] sm:$0xff] %v8215
        %8224 = vst [vmem:[%s983 + $0x30] sm:$0xff] %v8216
        %8225 = vst [vmem:[%s983 + $0x38] sm:$0xff] %v8217
        %s8226 = sand.u32 %s717, 1
        %s8227 = scalar_lea.sflag [#allocation4], %s8226
        %s8228 = sand.u32 %s717, 1
        %s8229 = smul.addr %s8228, 64
        %s8230 = scalar_lea.vmem [#allocation7], %s8229
        // Predicated region
        $region145: #{tpu_custom_call.1} parent=135 // pred_check
          %p8231 = pneg %p727
        $region146: #{tpu_custom_call.1} parent=135 // pred_check_branch
          %8233 = sbr.rel (%p8231) target = $region148
        $region147: #{tpu_custom_call.1} parent=135 // pred_region
          %s8235 = ssub.s32 1024, 1024
          %8236 = vsyncadd %s8227, %s8235
          %s8237 = smul.addr %s75, 8
          %s8238 = smul.addr %s8237, 128
          %s8239 = scalar_lea.hbm %s59, %s8238
          %s8241 = sshll.u32 %s8230, 4
          %s8242 = int_to_ptr.vmem [resolvable:$true] %s8241
          %8244 = dma.vmem_to_hbm [thread:$0]  %s8242, 1024, %s8239, %s8227
        $region148: #{tpu_custom_call.1} parent=135 // pred_fallthru
          _
      $region136: #{tpu_custom_call.1} parent=5 // pred_fallthru
        _
      %p8245 = scmp.le.s32.totalorder 2, %s70
      // Predicated region
      $region149: #{tpu_custom_call.1} parent=5 // pred_check
        %p8246 = pneg %p8245
      $region150: #{tpu_custom_call.1} parent=5 // pred_check_branch
        %8248 = sbr.rel (%p8246) target = $region152
      $region151: #{tpu_custom_call.1} parent=5 // pred_region
        %s8249 = ssub.s32 %s70, 2
        // Predicated region
        $region153: #{tpu_custom_call.1} parent=151 // pred_check
          %p8250 = pneg %p733
        $region154: #{tpu_custom_call.1} parent=151 // pred_check_branch
          %8252 = sbr.rel (%p8250) target = $region156
        $region155: #{tpu_custom_call.1} parent=151 // pred_region
          %s8253 = sand.u32 %s718, 1
          %s8254 = scalar_lea.sflag [#allocation4], %s8253
          %s8255 = sand.u32 %s718, 1
          %s8256 = smul.addr %s8255, 64
          %s8257 = scalar_lea.vmem [#allocation7], %s8256
          %8258 = dma.done %s8254, 1024
        $region156: #{tpu_custom_call.1} parent=151 // pred_fallthru
          _
      $region152: #{tpu_custom_call.1} parent=5 // pred_fallthru
        _
    $region6: #{tpu_custom_call.1} parent=1 // loop_footer
      %s74 = sadd.s32 1, %s70
    $region7: #{tpu_custom_call.1} parent=1 // loop_footer_branch
      %69 = sbr.rel target = $region3
    $region8: #{tpu_custom_call.1} parent=1 // loop_exit
      _
    %8259 = vsyncpa [#allocation3], 1
    %s8260 = scalar_lea.sflag [#allocation3], 1
    %8261 = vsyncpa %s8260, 1
    %8262 = vsyncpa [#allocation6], 1
    %8263 = vsyncpa [#allocation4], 1
    %s8264 = scalar_lea.sflag [#allocation4], 1
    %8265 = vsyncpa %s8264, 1

</llo_original>
